<compile_context>
chip_gen: v7x
topology: tpu7x:2x2x1
jax: 0.10.0
libtpu: 0.0.40
codegen_flags: <defaults>
</compile_context>

<pallas_src>
import functools
import math

import jax
import jax.numpy as jnp
from jax.experimental import pallas as pl
from jax.experimental.pallas import tpu as pltpu


# ----------------------------- Pallas kernel --------------------------------

def _fused_attn_kernel(x_ref, cos_ref, sina_ref, sinb_ref, bias_ref,
                       wqkv_ref, wo_ref, o_ref, *,
                       num_heads, num_kv_heads, head_dim, chunk_len,
                       compute_dtype, approx_recip):
    """One grid step == one batch row x one fused block of chunks.

    hidden -> fused QKV proj -> packed RoPE -> per-chunk (block-diag causal)
    GQA attention -> fused output projection.
    """
    _, Tblk, H = x_ref.shape
    D = head_dim
    D2 = D // 2
    Nh = num_heads
    Nkv = num_kv_heads
    G = Nh // Nkv
    Tc = chunk_len
    C = Tblk // Tc
    Wtot = (Nh + 2 * Nkv) * D
    cd = compute_dtype

    # ---- fused QKV projection: one full-width MXU matmul (K=H, N=(Nh+2Nkv)*D) ----
    x2 = x_ref[...].reshape(Tblk, H).astype(cd)
    qkv = jnp.dot(x2, wqkv_ref[...], preferred_element_type=jnp.float32)   # (Tblk, Wtot)

    # ---- packed RoPE: two XLU rolls + precomputed tables ----
    # Tables carry the rotate-half sign, the 1/sqrt(D) query scale, and are
    # identity (cos=1, sin=0) on the V lanes, so a single fused update covers
    # Q, K and V at full 256-lane density.
    roll_l = pltpu.roll(qkv, Wtot - D2, axis=1)     # lane j <- x[j + D/2]
    roll_r = pltpu.roll(qkv, D2, axis=1)            # lane j <- x[j - D/2]
    qkv = qkv * cos_ref[...] + roll_l * sina_ref[...] + roll_r * sinb_ref[...]
    qkv_c = qkv.astype(cd)

    # ---- split heads / chunks (leading-dim reshapes of static lane slices) ----
    def chunked(slot):                              # packed head-slot -> (C, Tc, D)
        return qkv_c[:, slot * D:(slot + 1) * D].reshape(C, Tc, D)

    # GQA without repeat_kv: stack the G query heads of a kv group as extra rows.
    q_grp = []
    for n in range(Nkv):
        qg = jnp.stack([chunked(n * G + g) for g in range(G)], axis=1)     # (C, G, Tc, D)
        q_grp.append(qg.reshape(C, G * Tc, D))
    qh = jnp.stack(q_grp, axis=0).reshape(Nkv * C, G * Tc, D)
    kh = jnp.stack([chunked(Nh + n) for n in range(Nkv)], axis=0).reshape(Nkv * C, Tc, D)
    vh = jnp.stack([chunked(Nh + Nkv + n) for n in range(Nkv)], axis=0).reshape(Nkv * C, Tc, D)

    # ---- block-diagonal causal attention: only the Tc-wide diagonal band ----
    # 1/sqrt(D) already folded into q via the RoPE tables.
    s = jnp.einsum('bqd,bkd->bqk', qh, kh,
                   preferred_element_type=jnp.float32)                     # (Nkv*C, G*Tc, Tc)
    s = s + bias_ref[...]                                                  # additive causal bias
    m = jnp.max(s, axis=-1, keepdims=True)
    p = jnp.exp(s - m)
    l = jnp.sum(p, axis=-1, keepdims=True)
    if approx_recip:
        p = p * pl.reciprocal(l, approx=True)                              # EUP slot
    else:
        p = p / l                                                          # exact (f32 check path)
    o = jnp.einsum('bqk,bkd->bqd', p.astype(cd), vh,
                   preferred_element_type=jnp.float32)                     # (Nkv*C, G*Tc, D)

    # ---- reassemble a lane-dense (Tblk, Nh*D) tile and fuse the O-projection ----
    o4 = o.reshape(Nkv, C, G * Tc, D)
    cols = []
    for n in range(Nkv):
        for g in range(G):
            cols.append(o4[n, :, g * Tc:(g + 1) * Tc, :].reshape(Tblk, D))
    o_packed = jnp.concatenate(cols, axis=-1).astype(cd)                   # (Tblk, Nh*D)
    out = jnp.dot(o_packed, wo_ref[...], preferred_element_type=jnp.float32)
    o_ref[...] = out.astype(o_ref.dtype).reshape(1, Tblk, H)


# ----------------------------- host-side helpers -----------------------------

def _build_rope_tables(cos, sin, num_heads, num_kv_heads, head_dim):
    """Tile cos/sin over the packed QKV lane layout; fold rotate-half sign and
    the 1/sqrt(D) query scale into the tables; V lanes pass through."""
    D = head_dim
    D2 = D // 2
    n_rot = num_heads + num_kv_heads
    n_slots = num_heads + 2 * num_kv_heads
    Wtot = n_slots * D
    lane = jnp.arange(Wtot)
    j = lane % D
    slot = lane // D
    is_qk = slot < n_rot
    is_q = slot < num_heads
    first = j < D2
    cos_f = cos[:, j]                                  # (S, Wtot)
    sin_f = sin[:, j]
    cos_t = jnp.where(is_qk[None, :], cos_f, 1.0)
    sina_t = jnp.where((is_qk & first)[None, :], -sin_f, 0.0)
    sinb_t = jnp.where((is_qk & ~first)[None, :], sin_f, 0.0)
    qscale = jnp.where(is_q, 1.0 / math.sqrt(D), 1.0)[None, :]
    return ((cos_t * qscale).astype(jnp.float32),
            (sina_t * qscale).astype(jnp.float32),
            (sinb_t * qscale).astype(jnp.float32))


def _build_causal_bias(group_size, chunk_len):
    """Additive causal bias shared by every chunk: rows are the G stacked query
    heads of one chunk (g*Tc + t_q), columns are the Tc keys of that chunk."""
    row = jnp.arange(group_size * chunk_len)[:, None] % chunk_len
    col = jnp.arange(chunk_len)[None, :]
    return jnp.where(col <= row, 0.0, -1e30).astype(jnp.float32)


def _default_vmem_limit():
    # Generation-aware: ~45% of physical VMEM (v5e/v6e: 128 MiB, v7x: 64 MiB).
    cap = 64 * 1024 * 1024
    try:
        info = pltpu.get_tpu_info()
        cap = int(getattr(info, "vmem_capacity_bytes", cap))
    except Exception:
        pass
    return min(int(cap * 0.45), 100 * 1024 * 1024)


def _estimate_step_vmem(Tblk, H, Wtot, NhD, Tc, Nh, w_itemsize):
    f32 = 4
    io_blocks = 2 * (2 * Tblk * H * f32 + 3 * Tblk * Wtot * f32)   # double-buffered blocks
    weights = 2 * (H * Wtot + NhD * H) * w_itemsize                # (TODO: single-buffer)
    temps = (4 * Tblk * Wtot * f32 + 3 * Tblk * Wtot * w_itemsize
             + 2 * Nh * Tblk * Tc * f32 + 3 * Tblk * NhD * f32)
    return io_blocks + weights + temps


def _auto_chunks_per_step(B, mini, Tc, H, Wtot, NhD, Nh, w_itemsize, vmem_limit):
    budget = 0.7 * vmem_limit
    best = 1
    for cps in range(1, mini + 1):
        if mini % cps:
            continue
        if B == 1 and mini > 1 and mini // cps < 2:
            continue            # keep >=2 grid steps for megacore only when B == 1
        Tblk = cps * Tc
        if Tblk % 8:
            continue
        if _estimate_step_vmem(Tblk, H, Wtot, NhD, Tc, Nh, w_itemsize) <= budget:
            best = cps
    return best


# ----------------------------- public wrapper --------------------------------

def llama_sdpa_attention_pallas(x, cos, sin, wq, wk, wv, wo, *,
                                num_heads, num_kv_heads, head_dim, mini,
                                chunks_per_step=None,
                                compute_dtype=jnp.bfloat16,
                                vmem_limit_bytes=None):
    B, S, H = x.shape
    assert S % mini == 0
    Tc = S // mini
    D = head_dim
    Nh, Nkv = num_heads, num_kv_heads
    G = Nh // Nkv
    Wtot = (Nh + 2 * Nkv) * D
    NhD = Nh * D

    w_itemsize = jnp.dtype(compute_dtype).itemsize
    if vmem_limit_bytes is None:
        vmem_limit_bytes = _default_vmem_limit()

    if chunks_per_step is None:
        chunks_per_step = _auto_chunks_per_step(
            B, mini, Tc, H, Wtot, NhD, Nh, w_itemsize, vmem_limit_bytes)
    assert mini % chunks_per_step == 0
    n_steps = mini // chunks_per_step
    Tblk = chunks_per_step * Tc
    assert Tblk % 8 == 0, "fused block length must be a multiple of 8 sublanes"

    # Host-side precompute: fused QKV weight, compute-dtype weights, RoPE tables
    # (sign + query scale folded), and the per-chunk causal bias.
    w_qkv = jnp.concatenate([wq, wk, wv], axis=1).astype(compute_dtype)    # (H, Wtot)
    wo_c = wo.astype(compute_dtype)                                        # (Nh*D, H)
    cos_t, sina_t, sinb_t = _build_rope_tables(cos, sin, Nh, Nkv, D)       # (S, Wtot) each
    attn_bias = _build_causal_bias(G, Tc)                                  # (G*Tc, Tc)

    kernel = functools.partial(
        _fused_attn_kernel, num_heads=Nh, num_kv_heads=Nkv, head_dim=D,
        chunk_len=Tc, compute_dtype=compute_dtype,
        approx_recip=(compute_dtype != jnp.float32))

    return pl.pallas_call(
        kernel,
        out_shape=jax.ShapeDtypeStruct((B, S, H), x.dtype),
        grid_spec=pltpu.PrefetchScalarGridSpec(
            num_scalar_prefetch=0,
            grid=(B, n_steps),
            in_specs=[
                pl.BlockSpec((1, Tblk, H), lambda b, i: (b, i, 0)),        # hidden block
                pl.BlockSpec((Tblk, Wtot), lambda b, i: (i, 0)),           # cos table slab
                pl.BlockSpec((Tblk, Wtot), lambda b, i: (i, 0)),           # sinA table slab
                pl.BlockSpec((Tblk, Wtot), lambda b, i: (i, 0)),           # sinB table slab
                pl.BlockSpec((G * Tc, Tc), lambda b, i: (0, 0)),           # causal bias
                pl.BlockSpec((H, Wtot), lambda b, i: (0, 0)),              # fused W_qkv^T
                pl.BlockSpec((NhD, H), lambda b, i: (0, 0)),               # Wo^T
            ],
            out_specs=pl.BlockSpec((1, Tblk, H), lambda b, i: (b, i, 0)),
        ),
        compiler_params=pltpu.CompilerParams(
            dimension_semantics=("parallel", "parallel"),
            vmem_limit_bytes=vmem_limit_bytes),
    )(x, cos_t, sina_t, sinb_t, attn_bias, w_qkv, wo_c)


# ------------------------- pure-JAX reference --------------------------------

def _rotate_half(x):
    d = x.shape[-1]
    return jnp.concatenate([-x[..., d // 2:], x[..., : d // 2]], axis=-1)


def _reference(x, cos, sin, wq, wk, wv, wo, *, num_heads, num_kv_heads, head_dim, mini):
    B, S, H = x.shape
    Tc = S // mini
    D = head_dim
    G = num_heads // num_kv_heads
    outs = []
    for i in range(mini):
        xc = x[:, i * Tc:(i + 1) * Tc]
        cc = cos[i * Tc:(i + 1) * Tc][None, :, None, :]
        sc = sin[i * Tc:(i + 1) * Tc][None, :, None, :]
        q = (xc @ wq).reshape(B, Tc, num_heads, D)
        k = (xc @ wk).reshape(B, Tc, num_kv_heads, D)
        v = (xc @ wv).reshape(B, Tc, num_kv_heads, D)
        q = q * cc + _rotate_half(q) * sc
        k = k * cc + _rotate_half(k) * sc
        k = jnp.repeat(k, G, axis=2)
        v = jnp.repeat(v, G, axis=2)
        q, k, v = (t.transpose(0, 2, 1, 3) for t in (q, k, v))            # (B, Nh, Tc, D)
        s = jnp.einsum('bhqd,bhkd->bhqk', q, k) / (D ** 0.5)
        mask = jnp.tril(jnp.ones((Tc, Tc), dtype=bool))
        s = jnp.where(mask[None, None], s, -1e30)
        p = jax.nn.softmax(s, axis=-1)
        o = jnp.einsum('bhqk,bhkd->bhqd', p, v)
        o = o.transpose(0, 2, 1, 3).reshape(B, Tc, num_heads * D)
        outs.append(o @ wo)
    return jnp.concatenate(outs, axis=1)


# --------------------------------- main ---------------------------------------

if __name__ == "__main__":
    B = 2
    S = 128                 # seq; divisible by mini=16 -> chunk length 8
    H = 128                 # hidden_size
    NUM_HEADS = 4
    HEAD_DIM = 32           # num_heads * head_dim == hidden_size
    NUM_KV_HEADS = 2        # num_key_value_groups = 2
    MINI = 16
    ROPE_THETA = 10000.0

    key = jax.random.PRNGKey(0)
    kx, kq, kk, kv, ko = jax.random.split(key, 5)

    x = jax.random.normal(kx, (B, S, H), dtype=jnp.float32)
    wq = 0.02 * jax.random.normal(kq, (H, NUM_HEADS * HEAD_DIM), dtype=jnp.float32)
    wk = 0.02 * jax.random.normal(kk, (H, NUM_KV_HEADS * HEAD_DIM), dtype=jnp.float32)
    wv = 0.02 * jax.random.normal(kv, (H, NUM_KV_HEADS * HEAD_DIM), dtype=jnp.float32)
    wo = 0.02 * jax.random.normal(ko, (NUM_HEADS * HEAD_DIM, H), dtype=jnp.float32)

    # Llama rotary embedding (position_ids = arange(S), same for every batch row)
    inv_freq = 1.0 / (ROPE_THETA ** (jnp.arange(0, HEAD_DIM, 2, dtype=jnp.float32) / HEAD_DIM))
    pos = jnp.arange(S, dtype=jnp.float32)
    freqs = pos[:, None] * inv_freq[None, :]
    emb = jnp.concatenate([freqs, freqs], axis=-1)      # (S, HEAD_DIM)
    cos = jnp.cos(emb)
    sin = jnp.sin(emb)

    common = dict(num_heads=NUM_HEADS, num_kv_heads=NUM_KV_HEADS,
                  head_dim=HEAD_DIM, mini=MINI)

    ref = _reference(x, cos, sin, wq, wk, wv, wo, **common)

    # f32 path: tight numerical check against the reference
    out_f32 = llama_sdpa_attention_pallas(x, cos, sin, wq, wk, wv, wo,
                                          compute_dtype=jnp.float32, **common)
    out_f32 = jax.block_until_ready(out_f32)
    assert out_f32.shape == (B, S, H)
    err32 = float(jnp.max(jnp.abs(out_f32 - ref)))
    assert err32 < 5e-4, f"f32 path max abs err {err32}"

    # bf16-on-MXU path (default): looser tolerance
    out_bf16 = llama_sdpa_attention_pallas(x, cos, sin, wq, wk, wv, wo,
                                           compute_dtype=jnp.bfloat16, **common)
    out_bf16 = jax.block_until_ready(out_bf16)
    errbf = float(jnp.max(jnp.abs(out_bf16 - ref)))
    assert jnp.allclose(out_bf16, ref, atol=2e-2, rtol=2e-2), \
        f"bf16 path max abs err {errbf}"

    print("KERNEL_OK")
</pallas_src>

<mosaic_0001>
module attributes {stable_mosaic.version = 11 : i64} {
  func.func @_fused_attn_kernel(%arg0: i32, %arg1: i32, %arg2: memref<1x128x128xf32, #tpu.memory_space<vmem>>, %arg3: memref<128x256xf32, #tpu.memory_space<vmem>>, %arg4: memref<128x256xf32, #tpu.memory_space<vmem>>, %arg5: memref<128x256xf32, #tpu.memory_space<vmem>>, %arg6: memref<16x8xf32, #tpu.memory_space<vmem>>, %arg7: memref<128x256xf32, #tpu.memory_space<vmem>>, %arg8: memref<128x128xf32, #tpu.memory_space<vmem>>, %arg9: memref<1x128x128xf32, #tpu.memory_space<vmem>>) attributes {dimension_semantics = [#tpu.dimension_semantics<parallel>, #tpu.dimension_semantics<parallel>], iteration_bounds = array<i64: 2, 1>, scalar_prefetch = 0 : i64, scratch_operands = 0 : i64, tpu.core_type = #tpu.core_type<tc>, window_params = [{transform_indices = @transform_0, window_bounds = array<i64: 1, 128, 128>}, {transform_indices = @transform_1, window_bounds = array<i64: 128, 256>}, {transform_indices = @transform_2, window_bounds = array<i64: 128, 256>}, {transform_indices = @transform_3, window_bounds = array<i64: 128, 256>}, {pipeline_mode = #tpu.pipeline_mode<synchronous>, transform_indices = @transform_4, window_bounds = array<i64: 16, 8>}, {pipeline_mode = #tpu.pipeline_mode<synchronous>, transform_indices = @transform_5, window_bounds = array<i64: 128, 256>}, {pipeline_mode = #tpu.pipeline_mode<synchronous>, transform_indices = @transform_6, window_bounds = array<i64: 128, 128>}, {transform_indices = @transform_7, window_bounds = array<i64: 1, 128, 128>}]} {
    %c0 = arith.constant 0 : index
    %c0_0 = arith.constant 0 : index
    %c0_1 = arith.constant 0 : index
    %0 = vector.load %arg2[%c0, %c0_0, %c0_1] : memref<1x128x128xf32, #tpu.memory_space<vmem>>, vector<1x128x128xf32>
    %1 = vector.shape_cast %0 : vector<1x128x128xf32> to vector<128x128xf32>
    %c0_2 = arith.constant 0 : index
    %c0_3 = arith.constant 0 : index
    %2 = vector.load %arg7[%c0_2, %c0_3] : memref<128x256xf32, #tpu.memory_space<vmem>>, vector<128x256xf32>
    %cst = arith.constant dense<0.000000e+00> : vector<128x256xf32>
    %3 = tpu.matmul %1, %2, %cst {dimension_numbers = #tpu.dot_dimension_numbers<[1], [0], [0], [1], [0, 0, 1, 1], [], []>} : vector<128x128xf32>, vector<128x256xf32>, vector<128x256xf32> -> vector<128x256xf32>
    %c240_i32 = arith.constant 240 : i32
    %4 = tpu.dynamic_rotate %3 by %c240_i32 dim 1 : vector<128x256xf32>, i32 -> vector<128x256xf32>
    %c16_i32 = arith.constant 16 : i32
    %5 = tpu.dynamic_rotate %3 by %c16_i32 dim 1 : vector<128x256xf32>, i32 -> vector<128x256xf32>
    %c0_4 = arith.constant 0 : index
    %c0_5 = arith.constant 0 : index
    %6 = vector.load %arg3[%c0_4, %c0_5] : memref<128x256xf32, #tpu.memory_space<vmem>>, vector<128x256xf32>
    %7 = arith.mulf %3, %6 : vector<128x256xf32>
    %c0_6 = arith.constant 0 : index
    %c0_7 = arith.constant 0 : index
    %8 = vector.load %arg4[%c0_6, %c0_7] : memref<128x256xf32, #tpu.memory_space<vmem>>, vector<128x256xf32>
    %9 = arith.mulf %4, %8 : vector<128x256xf32>
    %10 = arith.addf %7, %9 : vector<128x256xf32>
    %c0_8 = arith.constant 0 : index
    %c0_9 = arith.constant 0 : index
    %11 = vector.load %arg5[%c0_8, %c0_9] : memref<128x256xf32, #tpu.memory_space<vmem>>, vector<128x256xf32>
    %12 = arith.mulf %5, %11 : vector<128x256xf32>
    %13 = arith.addf %10, %12 : vector<128x256xf32>
    %14 = vector.extract_strided_slice %13 {offsets = [0, 0], sizes = [128, 32], strides = [1, 1]} : vector<128x256xf32> to vector<128x32xf32>
    %15 = vector.shape_cast %14 : vector<128x32xf32> to vector<16x8x32xf32>
    %16 = vector.extract_strided_slice %13 {offsets = [0, 32], sizes = [128, 32], strides = [1, 1]} : vector<128x256xf32> to vector<128x32xf32>
    %17 = vector.shape_cast %16 : vector<128x32xf32> to vector<16x8x32xf32>
    %18 = vector.shape_cast %15 : vector<16x8x32xf32> to vector<16x1x8x32xf32>
    %19 = vector.shape_cast %17 : vector<16x8x32xf32> to vector<16x1x8x32xf32>
    %20 = tpu.concatenate %18, %19 in 1 : vector<16x1x8x32xf32>, vector<16x1x8x32xf32> -> vector<16x2x8x32xf32>
    %21 = vector.shape_cast %20 : vector<16x2x8x32xf32> to vector<16x16x32xf32>
    %22 = vector.extract_strided_slice %13 {offsets = [0, 64], sizes = [128, 32], strides = [1, 1]} : vector<128x256xf32> to vector<128x32xf32>
    %23 = vector.shape_cast %22 : vector<128x32xf32> to vector<16x8x32xf32>
    %24 = vector.extract_strided_slice %13 {offsets = [0, 96], sizes = [128, 32], strides = [1, 1]} : vector<128x256xf32> to vector<128x32xf32>
    %25 = vector.shape_cast %24 : vector<128x32xf32> to vector<16x8x32xf32>
    %26 = vector.shape_cast %23 : vector<16x8x32xf32> to vector<16x1x8x32xf32>
    %27 = vector.shape_cast %25 : vector<16x8x32xf32> to vector<16x1x8x32xf32>
    %28 = tpu.concatenate %26, %27 in 1 : vector<16x1x8x32xf32>, vector<16x1x8x32xf32> -> vector<16x2x8x32xf32>
    %29 = vector.shape_cast %28 : vector<16x2x8x32xf32> to vector<16x16x32xf32>
    %30 = vector.shape_cast %21 : vector<16x16x32xf32> to vector<1x16x16x32xf32>
    %31 = vector.shape_cast %29 : vector<16x16x32xf32> to vector<1x16x16x32xf32>
    %32 = tpu.concatenate %30, %31 in 0 : vector<1x16x16x32xf32>, vector<1x16x16x32xf32> -> vector<2x16x16x32xf32>
    %33 = vector.shape_cast %32 : vector<2x16x16x32xf32> to vector<32x16x32xf32>
    %34 = vector.extract_strided_slice %13 {offsets = [0, 128], sizes = [128, 32], strides = [1, 1]} : vector<128x256xf32> to vector<128x32xf32>
    %35 = vector.shape_cast %34 : vector<128x32xf32> to vector<16x8x32xf32>
    %36 = vector.extract_strided_slice %13 {offsets = [0, 160], sizes = [128, 32], strides = [1, 1]} : vector<128x256xf32> to vector<128x32xf32>
    %37 = vector.shape_cast %36 : vector<128x32xf32> to vector<16x8x32xf32>
    %38 = vector.shape_cast %35 : vector<16x8x32xf32> to vector<1x16x8x32xf32>
    %39 = vector.shape_cast %37 : vector<16x8x32xf32> to vector<1x16x8x32xf32>
    %40 = tpu.concatenate %38, %39 in 0 : vector<1x16x8x32xf32>, vector<1x16x8x32xf32> -> vector<2x16x8x32xf32>
    %41 = vector.shape_cast %40 : vector<2x16x8x32xf32> to vector<32x8x32xf32>
    %42 = vector.extract_strided_slice %13 {offsets = [0, 192], sizes = [128, 32], strides = [1, 1]} : vector<128x256xf32> to vector<128x32xf32>
    %43 = vector.shape_cast %42 : vector<128x32xf32> to vector<16x8x32xf32>
    %44 = vector.extract_strided_slice %13 {offsets = [0, 224], sizes = [128, 32], strides = [1, 1]} : vector<128x256xf32> to vector<128x32xf32>
    %45 = vector.shape_cast %44 : vector<128x32xf32> to vector<16x8x32xf32>
    %46 = vector.shape_cast %43 : vector<16x8x32xf32> to vector<1x16x8x32xf32>
    %47 = vector.shape_cast %45 : vector<16x8x32xf32> to vector<1x16x8x32xf32>
    %48 = tpu.concatenate %46, %47 in 0 : vector<1x16x8x32xf32>, vector<1x16x8x32xf32> -> vector<2x16x8x32xf32>
    %49 = vector.shape_cast %48 : vector<2x16x8x32xf32> to vector<32x8x32xf32>
    "tpu.trace_start"() <{level = 10 : i32, message = "bqd,bkd->bqk"}> : () -> ()
    %cst_10 = arith.constant dense<0.000000e+00> : vector<32x16x8xf32>
    %50 = tpu.matmul %33, %41, %cst_10 {dimension_numbers = #tpu.dot_dimension_numbers<[2], [2], [1], [1], [0, 0, 0, 1, 1, 1], [0], [0]>} : vector<32x16x32xf32>, vector<32x8x32xf32>, vector<32x16x8xf32> -> vector<32x16x8xf32>
    "tpu.trace_stop"() : () -> ()
    %c0_11 = arith.constant 0 : index
    %c0_12 = arith.constant 0 : index
    %51 = vector.load %arg6[%c0_11, %c0_12] : memref<16x8xf32, #tpu.memory_space<vmem>>, vector<16x8xf32>
    %52 = vector.shape_cast %51 : vector<16x8xf32> to vector<1x16x8xf32>
    %53 = vector.broadcast %52 : vector<1x16x8xf32> to vector<32x16x8xf32>
    %54 = arith.addf %50, %53 : vector<32x16x8xf32>
    %cst_13 = arith.constant dense<0xFF800000> : vector<32x16xf32>
    %55 = vector.multi_reduction <maximumf>, %54, %cst_13 [2] : vector<32x16x8xf32> to vector<32x16xf32>
    %56 = vector.shape_cast %55 : vector<32x16xf32> to vector<32x16x1xf32>
    %57 = vector.broadcast %56 : vector<32x16x1xf32> to vector<32x16x8xf32>
    %58 = arith.subf %54, %57 : vector<32x16x8xf32>
    %59 = math.exp %58 : vector<32x16x8xf32>
    %cst_14 = arith.constant dense<0.000000e+00> : vector<32x16xf32>
    %60 = vector.multi_reduction <add>, %59, %cst_14 [2] : vector<32x16x8xf32> to vector<32x16xf32>
    %61 = vector.shape_cast %60 : vector<32x16xf32> to vector<32x16x1xf32>
    %62 = vector.broadcast %61 : vector<32x16x1xf32> to vector<32x16x8xf32>
    %63 = arith.divf %59, %62 : vector<32x16x8xf32>
    "tpu.trace_start"() <{level = 10 : i32, message = "bqk,bkd->bqd"}> : () -> ()
    %cst_15 = arith.constant dense<0.000000e+00> : vector<32x16x32xf32>
    %64 = tpu.matmul %63, %49, %cst_15 {dimension_numbers = #tpu.dot_dimension_numbers<[2], [1], [1], [2], [0, 0, 0, 1, 1, 2], [0], [0]>} : vector<32x16x8xf32>, vector<32x8x32xf32>, vector<32x16x32xf32> -> vector<32x16x32xf32>
    "tpu.trace_stop"() : () -> ()
    %65 = vector.shape_cast %64 : vector<32x16x32xf32> to vector<2x16x16x32xf32>
    %66 = vector.extract_strided_slice %65 {offsets = [0, 0, 0, 0], sizes = [1, 16, 8, 32], strides = [1, 1, 1, 1]} : vector<2x16x16x32xf32> to vector<1x16x8x32xf32>
    %67 = vector.shape_cast %66 : vector<1x16x8x32xf32> to vector<16x8x32xf32>
    %68 = vector.shape_cast %67 : vector<16x8x32xf32> to vector<128x32xf32>
    %69 = vector.extract_strided_slice %65 {offsets = [0, 0, 8, 0], sizes = [1, 16, 8, 32], strides = [1, 1, 1, 1]} : vector<2x16x16x32xf32> to vector<1x16x8x32xf32>
    %70 = vector.shape_cast %69 : vector<1x16x8x32xf32> to vector<16x8x32xf32>
    %71 = vector.shape_cast %70 : vector<16x8x32xf32> to vector<128x32xf32>
    %72 = vector.extract_strided_slice %65 {offsets = [1, 0, 0, 0], sizes = [1, 16, 8, 32], strides = [1, 1, 1, 1]} : vector<2x16x16x32xf32> to vector<1x16x8x32xf32>
    %73 = vector.shape_cast %72 : vector<1x16x8x32xf32> to vector<16x8x32xf32>
    %74 = vector.shape_cast %73 : vector<16x8x32xf32> to vector<128x32xf32>
    %75 = vector.extract_strided_slice %65 {offsets = [1, 0, 8, 0], sizes = [1, 16, 8, 32], strides = [1, 1, 1, 1]} : vector<2x16x16x32xf32> to vector<1x16x8x32xf32>
    %76 = vector.shape_cast %75 : vector<1x16x8x32xf32> to vector<16x8x32xf32>
    %77 = vector.shape_cast %76 : vector<16x8x32xf32> to vector<128x32xf32>
    %78 = tpu.concatenate %68, %71, %74, %77 in 1 : vector<128x32xf32>, vector<128x32xf32>, vector<128x32xf32>, vector<128x32xf32> -> vector<128x128xf32>
    %c0_16 = arith.constant 0 : index
    %c0_17 = arith.constant 0 : index
    %79 = vector.load %arg8[%c0_16, %c0_17] : memref<128x128xf32, #tpu.memory_space<vmem>>, vector<128x128xf32>
    %cst_18 = arith.constant dense<0.000000e+00> : vector<128x128xf32>
    %80 = tpu.matmul %78, %79, %cst_18 {dimension_numbers = #tpu.dot_dimension_numbers<[1], [0], [0], [1], [0, 0, 1, 1], [], []>} : vector<128x128xf32>, vector<128x128xf32>, vector<128x128xf32> -> vector<128x128xf32>
    %81 = vector.shape_cast %80 : vector<128x128xf32> to vector<1x128x128xf32>
    %c0_19 = arith.constant 0 : index
    %c0_20 = arith.constant 0 : index
    %c0_21 = arith.constant 0 : index
    %82 = vector.load %arg9[%c0_19, %c0_20, %c0_21] : memref<1x128x128xf32, #tpu.memory_space<vmem>>, vector<1x128x128xf32>
    tpu.vector_store %arg9[%c0_19, %c0_20, %c0_21], %81 {strides = array<i32>} : memref<1x128x128xf32, #tpu.memory_space<vmem>>, vector<1x128x128xf32>,
    return
  }
  func.func @transform_0(%arg0: i32, %arg1: i32) -> (i32, i32, i32) {
    %c0_i32 = arith.constant 0 : i32
    %c0_i32_0 = arith.constant 0 : i32
    return %arg0, %arg1, %c0_i32 : i32, i32, i32
  }
  func.func @transform_1(%arg0: i32, %arg1: i32) -> (i32, i32) {
    %c0_i32 = arith.constant 0 : i32
    %c0_i32_0 = arith.constant 0 : i32
    return %arg1, %c0_i32 : i32, i32
  }
  func.func @transform_2(%arg0: i32, %arg1: i32) -> (i32, i32) {
    %c0_i32 = arith.constant 0 : i32
    %c0_i32_0 = arith.constant 0 : i32
    return %arg1, %c0_i32 : i32, i32
  }
  func.func @transform_3(%arg0: i32, %arg1: i32) -> (i32, i32) {
    %c0_i32 = arith.constant 0 : i32
    %c0_i32_0 = arith.constant 0 : i32
    return %arg1, %c0_i32 : i32, i32
  }
  func.func @transform_4(%arg0: i32, %arg1: i32) -> (i32, i32) {
    %c0_i32 = arith.constant 0 : i32
    %c0_i32_0 = arith.constant 0 : i32
    %c0_i32_1 = arith.constant 0 : i32
    return %c0_i32, %c0_i32_0 : i32, i32
  }
  func.func @transform_5(%arg0: i32, %arg1: i32) -> (i32, i32) {
    %c0_i32 = arith.constant 0 : i32
    %c0_i32_0 = arith.constant 0 : i32
    %c0_i32_1 = arith.constant 0 : i32
    return %c0_i32, %c0_i32_0 : i32, i32
  }
  func.func @transform_6(%arg0: i32, %arg1: i32) -> (i32, i32) {
    %c0_i32 = arith.constant 0 : i32
    %c0_i32_0 = arith.constant 0 : i32
    %c0_i32_1 = arith.constant 0 : i32
    return %c0_i32, %c0_i32_0 : i32, i32
  }
  func.func @transform_7(%arg0: i32, %arg1: i32) -> (i32, i32, i32) {
    %c0_i32 = arith.constant 0 : i32
    %c0_i32_0 = arith.constant 0 : i32
    return %arg0, %arg1, %c0_i32 : i32, i32, i32
  }
}

</mosaic_0001>

<llo_original>
// kernel: tpu_custom_call.1
$region0: #{tpu_custom_call.1}
  #allocation0 [shape = 'u32[]', space=smem, size = 0x4, offset = 0x4, fixed_abs, tag = 'smem constant byte address 0x4 - core index']
  #allocation1 [shape = 'u32[144,128]{1,0:T(1,128)}', space=vmem, size = 0x12000, scoped, tag = 'internal scratch']
  %s0 = inlined_call_operand.hbm [shape: f32[2,128,128], index: 0, kind: input, shape index: {}]
  %s1 = inlined_call_operand.hbm [shape: f32[128,256], index: 1, kind: input, shape index: {}]
  %s2 = inlined_call_operand.hbm [shape: f32[128,256], index: 2, kind: input, shape index: {}]
  %s3 = inlined_call_operand.hbm [shape: f32[128,256], index: 3, kind: input, shape index: {}]
  %s4 = inlined_call_operand.vmem [shape: f32[16,8], index: 4, kind: input, shape index: {}]
  %s5 = inlined_call_operand.hbm [shape: f32[128,256], index: 5, kind: input, shape index: {}]
  %s6 = inlined_call_operand.hbm [shape: f32[128,128], index: 6, kind: input, shape index: {}]
  %s7 = inlined_call_operand.hbm [shape: f32[2,128,128], index: 7, kind: output, shape index: {}]
  %s8 = sld [smem:[#allocation0]]
  $region85: #{tpu_custom_call.1} parent=0
    _
  %s10 = ssub.s32 1, %s8
  %s11 = scalar_select 0, %s10, %s8
  $region1: #{tpu_custom_call.1} parent=0
    #allocation2 [shape = 'u8[131072]{0}', space=vmem, size = 0x20000, scoped, tag = 'input window, operand 0']
    #allocation3 [shape = 's32[2]{0}', space=sflag, size = 0x8, scoped, tag = 'scoped memory for tpu_custom_call.1']
    #allocation4 [shape = 's32[2]{0}', space=sflag, size = 0x8, scoped, tag = 'scoped memory for tpu_custom_call.1']
    #allocation5 [shape = 'u8[131072]{0}', space=vmem, size = 0x20000, scoped, tag = 'input window, operand 1, single buffered']
    #allocation6 [shape = 's32[1]{0}', space=sflag, size = 0x4, scoped, tag = 'scoped memory for tpu_custom_call.1']
    #allocation7 [shape = 'u8[131072]{0}', space=vmem, size = 0x20000, scoped, tag = 'input window, operand 2, single buffered']
    #allocation8 [shape = 'u8[131072]{0}', space=vmem, size = 0x20000, scoped, tag = 'input window, operand 3, single buffered']
    #allocation9 [shape = 's32[1]{0}', space=sflag, size = 0x4, scoped, tag = 'scoped memory for tpu_custom_call.1']
    #allocation10 [shape = 'u8[131072]{0}', space=vmem, size = 0x20000, scoped, tag = 'input window, operand 5, single buffered']
    #allocation11 [shape = 'u8[65536]{0}', space=vmem, size = 0x10000, scoped, tag = 'input window, operand 6, single buffered']
    #allocation12 [shape = 's32[1]{0}', space=sflag, size = 0x4, scoped, tag = 'scoped memory for tpu_custom_call.1']
    #allocation13 [shape = 'u8[131072]{0}', space=vmem, size = 0x20000, scoped, tag = 'output window, operand 0']
    %12 = vsyncpa [#allocation3], 0
    %s13 = scalar_lea.sflag [#allocation3], 1
    %14 = vsyncpa %s13, 0
    %15 = vsyncpa [#allocation6], 0
    %16 = vsyncpa [#allocation9], 0
    %17 = vsyncpa [#allocation12], 0
    %18 = vsyncpa [#allocation4], 0
    %s19 = scalar_lea.sflag [#allocation4], 1
    %20 = vsyncpa %s19, 0
    loop: start=0, step=1, limit=4
    $region2: #{tpu_custom_call.1} parent=1 // loop_pre_header
      _
    $region3: #{tpu_custom_call.1} parent=1 // loop_header
      %s22 = sphi 0, %s26
      %p23 = scmp.ge.s32.totalorder %s22, 4
      %s29 = sphi 0, %s41
      %s30 = sphi 0, %s37
      %s31 = sphi 0, %s29
      %s32 = sphi 0, %s30
      %s33 = sphi 0, %s31
      %s34 = sphi 0, %s32
      %s46 = sphi 0, %s48
      %s49 = sphi 0, %s46
      %s50 = sphi 0, %s49
      %s66 = sphi 0, %s50
      %s72 = sphi 0, %s74
      %s75 = sphi 0, %s72
      %s76 = sphi 0, %s75
      %s92 = sphi 0, %s76
      %s98 = sphi 0, %s100
      %s101 = sphi 0, %s98
      %s102 = sphi 0, %s101
      %s118 = sphi 0, %s102
      %s124 = sphi 0, %s126
      %s127 = sphi 0, %s124
      %s128 = sphi 0, %s127
      %s144 = sphi 0, %s128
      %s148 = sphi 0, %s148
      %s150 = sphi 0, %s148
      %s151 = sphi 0, %s150
      %s165 = sphi 0, %s151
      %s169 = sphi 0, %s169
      %s171 = sphi 0, %s169
      %s172 = sphi 0, %s171
      %s186 = sphi 0, %s172
      %s190 = sphi 0, %s190
      %s192 = sphi 0, %s190
      %s193 = sphi 0, %s192
      %s207 = sphi 0, %s193
      %s215 = sphi 0, %s217
      %s218 = sphi 0, %s215
      %s219 = sphi 0, %s218
      %s235 = sphi 0, %s219
    $region4: #{tpu_custom_call.1} parent=1 // loop_header_branch
      %25 = sbr.rel (%p23) target = $region8
    $region5: #{tpu_custom_call.1} parent=1 // loop_body
      %s27 = ssub.s32 %s22, 1
      %s28 = ssub.s32 %s22, 2
      %s35 = sadd.s32 1, %s30
      %p36 = scmp.ge.s32.totalorder %s35, 1
      %s37 = scalar_select %p36, 0, %s35
      %s38 = sadd.s32 1, %s29
      %s39 = scalar_select %p36, %s38, %s29
      %p40 = scmp.ge.s32.totalorder %s39, 2
      %s41 = scalar_select %p40, 0, %s39
      %s42 = ssub.s32 %s29, %s41
      %s43 = ssub.s32 %s30, %s37
      %s44 = sor.u32 %s42, %s43
      %p45 = scmp.eq.s32.totalorder %s44, 0
      %s47 = sadd.s32 %s46, 1
      %s48 = scalar_select %p45, %s46, %s47
      %p51 = pneg %p45
      %p52 = scmp.eq.s32.totalorder %s22, 1
      %p53 = por %p51, %p52
      %p54 = scmp.ne.s32.totalorder %s46, %s49
      %p55 = scmp.eq.s32.totalorder %s22, 0
      %p56 = por %p54, %p55
      %p57 = scmp.ne.s32.totalorder %s46, %s49
      %p58 = scmp.eq.s32.totalorder %s27, 1
      %p59 = por %p57, %p58
      %p60 = scmp.ne.s32.totalorder %s49, %s50
      %p61 = scmp.eq.s32.totalorder %s27, 0
      %p62 = por %p60, %p61
      %p63 = scmp.ne.s32.totalorder %s49, %s50
      %p64 = scmp.eq.s32.totalorder %s28, 1
      %p65 = por %p63, %p64
      %p67 = scmp.ne.s32.totalorder %s50, %s66
      %p68 = scmp.eq.s32.totalorder %s28, 0
      %p69 = por %p67, %p68
      %s70 = ssub.s32 %s30, %s37
      %p71 = scmp.eq.s32.totalorder %s70, 0
      %s73 = sadd.s32 %s72, 1
      %s74 = scalar_select %p71, %s72, %s73
      %p77 = pneg %p71
      %p78 = scmp.eq.s32.totalorder %s22, 1
      %p79 = por %p77, %p78
      %p80 = scmp.ne.s32.totalorder %s72, %s75
      %p81 = scmp.eq.s32.totalorder %s22, 0
      %p82 = por %p80, %p81
      %p83 = scmp.ne.s32.totalorder %s72, %s75
      %p84 = scmp.eq.s32.totalorder %s27, 1
      %p85 = por %p83, %p84
      %p86 = scmp.ne.s32.totalorder %s75, %s76
      %p87 = scmp.eq.s32.totalorder %s27, 0
      %p88 = por %p86, %p87
      %p89 = scmp.ne.s32.totalorder %s75, %s76
      %p90 = scmp.eq.s32.totalorder %s28, 1
      %p91 = por %p89, %p90
      %p93 = scmp.ne.s32.totalorder %s76, %s92
      %p94 = scmp.eq.s32.totalorder %s28, 0
      %p95 = por %p93, %p94
      %s96 = ssub.s32 %s30, %s37
      %p97 = scmp.eq.s32.totalorder %s96, 0
      %s99 = sadd.s32 %s98, 1
      %s100 = scalar_select %p97, %s98, %s99
      %p103 = pneg %p97
      %p104 = scmp.eq.s32.totalorder %s22, 1
      %p105 = por %p103, %p104
      %p106 = scmp.ne.s32.totalorder %s98, %s101
      %p107 = scmp.eq.s32.totalorder %s22, 0
      %p108 = por %p106, %p107
      %p109 = scmp.ne.s32.totalorder %s98, %s101
      %p110 = scmp.eq.s32.totalorder %s27, 1
      %p111 = por %p109, %p110
      %p112 = scmp.ne.s32.totalorder %s101, %s102
      %p113 = scmp.eq.s32.totalorder %s27, 0
      %p114 = por %p112, %p113
      %p115 = scmp.ne.s32.totalorder %s101, %s102
      %p116 = scmp.eq.s32.totalorder %s28, 1
      %p117 = por %p115, %p116
      %p119 = scmp.ne.s32.totalorder %s102, %s118
      %p120 = scmp.eq.s32.totalorder %s28, 0
      %p121 = por %p119, %p120
      %s122 = ssub.s32 %s30, %s37
      %p123 = scmp.eq.s32.totalorder %s122, 0
      %s125 = sadd.s32 %s124, 1
      %s126 = scalar_select %p123, %s124, %s125
      %p129 = pneg %p123
      %p130 = scmp.eq.s32.totalorder %s22, 1
      %p131 = por %p129, %p130
      %p132 = scmp.ne.s32.totalorder %s124, %s127
      %p133 = scmp.eq.s32.totalorder %s22, 0
      %p134 = por %p132, %p133
      %p135 = scmp.ne.s32.totalorder %s124, %s127
      %p136 = scmp.eq.s32.totalorder %s27, 1
      %p137 = por %p135, %p136
      %p138 = scmp.ne.s32.totalorder %s127, %s128
      %p139 = scmp.eq.s32.totalorder %s27, 0
      %p140 = por %p138, %p139
      %p141 = scmp.ne.s32.totalorder %s127, %s128
      %p142 = scmp.eq.s32.totalorder %s28, 1
      %p143 = por %p141, %p142
      %p145 = scmp.ne.s32.totalorder %s128, %s144
      %p146 = scmp.eq.s32.totalorder %s28, 0
      %p147 = por %p145, %p146
      %s149 = sadd.s32 %s148, 1
      %p152 = scmp.eq.s32.totalorder %s22, 1
      %p153 = scmp.ne.s32.totalorder %s148, %s150
      %p154 = scmp.eq.s32.totalorder %s22, 0
      %p155 = por %p153, %p154
      %p156 = scmp.ne.s32.totalorder %s148, %s150
      %p157 = scmp.eq.s32.totalorder %s27, 1
      %p158 = por %p156, %p157
      %p159 = scmp.ne.s32.totalorder %s150, %s151
      %p160 = scmp.eq.s32.totalorder %s27, 0
      %p161 = por %p159, %p160
      %p162 = scmp.ne.s32.totalorder %s150, %s151
      %p163 = scmp.eq.s32.totalorder %s28, 1
      %p164 = por %p162, %p163
      %p166 = scmp.ne.s32.totalorder %s151, %s165
      %p167 = scmp.eq.s32.totalorder %s28, 0
      %p168 = por %p166, %p167
      %s170 = sadd.s32 %s169, 1
      %p173 = scmp.eq.s32.totalorder %s22, 1
      %p174 = scmp.ne.s32.totalorder %s169, %s171
      %p175 = scmp.eq.s32.totalorder %s22, 0
      %p176 = por %p174, %p175
      %p177 = scmp.ne.s32.totalorder %s169, %s171
      %p178 = scmp.eq.s32.totalorder %s27, 1
      %p179 = por %p177, %p178
      %p180 = scmp.ne.s32.totalorder %s171, %s172
      %p181 = scmp.eq.s32.totalorder %s27, 0
      %p182 = por %p180, %p181
      %p183 = scmp.ne.s32.totalorder %s171, %s172
      %p184 = scmp.eq.s32.totalorder %s28, 1
      %p185 = por %p183, %p184
      %p187 = scmp.ne.s32.totalorder %s172, %s186
      %p188 = scmp.eq.s32.totalorder %s28, 0
      %p189 = por %p187, %p188
      %s191 = sadd.s32 %s190, 1
      %p194 = scmp.eq.s32.totalorder %s22, 1
      %p195 = scmp.ne.s32.totalorder %s190, %s192
      %p196 = scmp.eq.s32.totalorder %s22, 0
      %p197 = por %p195, %p196
      %p198 = scmp.ne.s32.totalorder %s190, %s192
      %p199 = scmp.eq.s32.totalorder %s27, 1
      %p200 = por %p198, %p199
      %p201 = scmp.ne.s32.totalorder %s192, %s193
      %p202 = scmp.eq.s32.totalorder %s27, 0
      %p203 = por %p201, %p202
      %p204 = scmp.ne.s32.totalorder %s192, %s193
      %p205 = scmp.eq.s32.totalorder %s28, 1
      %p206 = por %p204, %p205
      %p208 = scmp.ne.s32.totalorder %s193, %s207
      %p209 = scmp.eq.s32.totalorder %s28, 0
      %p210 = por %p208, %p209
      %s211 = ssub.s32 %s29, %s41
      %s212 = ssub.s32 %s30, %s37
      %s213 = sor.u32 %s211, %s212
      %p214 = scmp.eq.s32.totalorder %s213, 0
      %s216 = sadd.s32 %s215, 1
      %s217 = scalar_select %p214, %s215, %s216
      %p220 = pneg %p214
      %p221 = scmp.eq.s32.totalorder %s22, 1
      %p222 = por %p220, %p221
      %p223 = scmp.ne.s32.totalorder %s215, %s218
      %p224 = scmp.eq.s32.totalorder %s22, 0
      %p225 = por %p223, %p224
      %p226 = scmp.ne.s32.totalorder %s215, %s218
      %p227 = scmp.eq.s32.totalorder %s27, 1
      %p228 = por %p226, %p227
      %p229 = scmp.ne.s32.totalorder %s218, %s219
      %p230 = scmp.eq.s32.totalorder %s27, 0
      %p231 = por %p229, %p230
      %p232 = scmp.ne.s32.totalorder %s218, %s219
      %p233 = scmp.eq.s32.totalorder %s28, 1
      %p234 = por %p232, %p233
      %p236 = scmp.ne.s32.totalorder %s219, %s235
      %p237 = scmp.eq.s32.totalorder %s28, 0
      %p238 = por %p236, %p237
      %p239 = scmp.le.s32.totalorder 1, %s22
      %p240 = scmp.lt.s32.totalorder %s22, 3
      %p241 = pnand %p239, %p240
      %p242 = pneg %p241
      // Predicated region
      $region9: #{tpu_custom_call.1} parent=5 // pred_check
        _
      $region10: #{tpu_custom_call.1} parent=5 // pred_check_branch
        %244 = sbr.rel (%p241) target = $region12
      $region11: #{tpu_custom_call.1} parent=5 // pred_region
        %s245 = ssub.s32 %s22, 1
        // Predicated region
        $region13: #{tpu_custom_call.1} parent=11 // pred_check
          %p246 = pneg %p88
        $region14: #{tpu_custom_call.1} parent=11 // pred_check_branch
          %248 = sbr.rel (%p246) target = $region16
        $region15: #{tpu_custom_call.1} parent=11 // pred_region
          %s249 = smul.u32 16, %s32
          %s251 = ssub.s32 4096, 4096
          %252 = vsyncadd [#allocation6], %s251
          %s253 = smul.addr %s249, 2
          %s254 = smul.addr %s253, 128
          %s255 = scalar_lea.hbm %s1, %s254
          %s256 = sshll.u32 [#allocation5], 4
          %s257 = int_to_ptr.vmem [resolvable:$true] %s256
          %262 = dma.hbm_to_vmem [thread:$0]  %s255, 4096, %s257, [#allocation6], 256, 256, 16
        $region16: #{tpu_custom_call.1} parent=11 // pred_fallthru
          _
        // Predicated region
        $region17: #{tpu_custom_call.1} parent=11 // pred_check
          %p263 = pneg %p114
        $region18: #{tpu_custom_call.1} parent=11 // pred_check_branch
          %265 = sbr.rel (%p263) target = $region20
        $region19: #{tpu_custom_call.1} parent=11 // pred_region
          %s266 = smul.u32 16, %s32
          %s268 = ssub.s32 4096, 4096
          %269 = vsyncadd [#allocation6], %s268
          %s270 = smul.addr %s266, 2
          %s271 = smul.addr %s270, 128
          %s272 = scalar_lea.hbm %s2, %s271
          %s273 = sshll.u32 [#allocation7], 4
          %s274 = int_to_ptr.vmem [resolvable:$true] %s273
          %279 = dma.hbm_to_vmem [thread:$0]  %s272, 4096, %s274, [#allocation6], 256, 256, 16
        $region20: #{tpu_custom_call.1} parent=11 // pred_fallthru
          _
        // Predicated region
        $region21: #{tpu_custom_call.1} parent=11 // pred_check
          %p280 = pneg %p140
        $region22: #{tpu_custom_call.1} parent=11 // pred_check_branch
          %282 = sbr.rel (%p280) target = $region24
        $region23: #{tpu_custom_call.1} parent=11 // pred_region
          %s283 = smul.u32 16, %s32
          %s285 = ssub.s32 4096, 4096
          %286 = vsyncadd [#allocation9], %s285
          %s287 = smul.addr %s283, 2
          %s288 = smul.addr %s287, 128
          %s289 = scalar_lea.hbm %s3, %s288
          %s290 = sshll.u32 [#allocation8], 4
          %s291 = int_to_ptr.vmem [resolvable:$true] %s290
          %296 = dma.hbm_to_vmem [thread:$0]  %s289, 4096, %s291, [#allocation9], 256, 256, 16
        $region24: #{tpu_custom_call.1} parent=11 // pred_fallthru
          _
        // Predicated region
        $region25: #{tpu_custom_call.1} parent=11 // pred_check
          %p297 = pneg %p161
        $region26: #{tpu_custom_call.1} parent=11 // pred_check_branch
          %299 = sbr.rel (%p297) target = $region28
        $region27: #{tpu_custom_call.1} parent=11 // pred_region
          _
        $region28: #{tpu_custom_call.1} parent=11 // pred_fallthru
          _
        // Predicated region
        $region29: #{tpu_custom_call.1} parent=11 // pred_check
          %p300 = pneg %p182
        $region30: #{tpu_custom_call.1} parent=11 // pred_check_branch
          %302 = sbr.rel (%p300) target = $region32
        $region31: #{tpu_custom_call.1} parent=11 // pred_region
          %s304 = ssub.s32 4096, 4096
          %305 = vsyncadd [#allocation9], %s304
          %s306 = sshll.u32 [#allocation10], 4
          %s307 = int_to_ptr.vmem [resolvable:$true] %s306
          %312 = dma.hbm_to_vmem [thread:$0]  %s5, 4096, %s307, [#allocation9], 256, 256, 16
        $region32: #{tpu_custom_call.1} parent=11 // pred_fallthru
          _
        // Predicated region
        $region33: #{tpu_custom_call.1} parent=11 // pred_check
          %p313 = pneg %p203
        $region34: #{tpu_custom_call.1} parent=11 // pred_check_branch
          %315 = sbr.rel (%p313) target = $region36
        $region35: #{tpu_custom_call.1} parent=11 // pred_region
          %s317 = ssub.s32 2048, 2048
          %318 = vsyncadd [#allocation12], %s317
          %s319 = sshll.u32 [#allocation11], 4
          %s320 = int_to_ptr.vmem [resolvable:$true] %s319
          %325 = dma.hbm_to_vmem [thread:$0]  %s6, 2048, %s320, [#allocation12], 128, 128, 8
        $region36: #{tpu_custom_call.1} parent=11 // pred_fallthru
          _
      $region12: #{tpu_custom_call.1} parent=5 // pred_fallthru
        _
      %p326 = scmp.lt.s32.totalorder %s22, 2
      // Predicated region
      $region37: #{tpu_custom_call.1} parent=5 // pred_check
        %p327 = pneg %p326
      $region38: #{tpu_custom_call.1} parent=5 // pred_check_branch
        %329 = sbr.rel (%p327) target = $region40
      $region39: #{tpu_custom_call.1} parent=5 // pred_region
        // Predicated region
        $region41: #{tpu_custom_call.1} parent=39 // pred_check
          %p330 = pneg %p56
        $region42: #{tpu_custom_call.1} parent=39 // pred_check_branch
          %332 = sbr.rel (%p330) target = $region44
        $region43: #{tpu_custom_call.1} parent=39 // pred_region
          %s333 = sand.u32 %s46, 1
          %s334 = scalar_lea.sflag [#allocation3], %s333
          %s335 = sand.u32 %s46, 1
          %s336 = smul.addr %s335, 128
          %s337 = scalar_lea.vmem [#allocation2], %s336
          %s338 = smul.u32 16, %s30
          %s340 = ssub.s32 2048, 2048
          %341 = vsyncadd %s334, %s340
          %s342 = smul.addr %s29, 16
          %s343 = sadd.s32 %s338, %s342
          %s344 = smul.addr %s343, 128
          %s345 = scalar_lea.hbm %s0, %s344
          %s346 = sshll.u32 %s337, 4
          %s347 = int_to_ptr.vmem [resolvable:$true] %s346
          %352 = dma.hbm_to_vmem [thread:$0]  %s345, 2048, %s347, %s334, 128, 128, 8
        $region44: #{tpu_custom_call.1} parent=39 // pred_fallthru
          _
      $region40: #{tpu_custom_call.1} parent=5 // pred_fallthru
        _
      %p353 = scmp.le.s32.totalorder 1, %s22
      %p354 = scmp.lt.s32.totalorder %s22, 3
      %p355 = pnand %p353, %p354
      %p356 = pneg %p355
      // Predicated region
      $region45: #{tpu_custom_call.1} parent=5 // pred_check
        _
      $region46: #{tpu_custom_call.1} parent=5 // pred_check_branch
        %358 = sbr.rel (%p355) target = $region48
      $region47: #{tpu_custom_call.1} parent=5 // pred_region
        %s359 = ssub.s32 %s22, 1
        %s360 = sand.u32 %s49, 1
        %s361 = scalar_lea.sflag [#allocation3], %s360
        %s362 = sand.u32 %s49, 1
        %s363 = smul.addr %s362, 128
        %s364 = scalar_lea.vmem [#allocation2], %s363
        // Predicated region
        $region49: #{tpu_custom_call.1} parent=47 // pred_check
          %p365 = pneg %p62
        $region50: #{tpu_custom_call.1} parent=47 // pred_check_branch
          %367 = sbr.rel (%p365) target = $region52
        $region51: #{tpu_custom_call.1} parent=47 // pred_region
          %368 = dma.done %s361, 2048
        $region52: #{tpu_custom_call.1} parent=47 // pred_fallthru
          _
        // Predicated region
        $region53: #{tpu_custom_call.1} parent=47 // pred_check
          %p369 = pneg %p88
        $region54: #{tpu_custom_call.1} parent=47 // pred_check_branch
          %371 = sbr.rel (%p369) target = $region56
        $region55: #{tpu_custom_call.1} parent=47 // pred_region
          %372 = dma.done [#allocation6], 4096
        $region56: #{tpu_custom_call.1} parent=47 // pred_fallthru
          _
        // Predicated region
        $region57: #{tpu_custom_call.1} parent=47 // pred_check
          %p373 = pneg %p114
        $region58: #{tpu_custom_call.1} parent=47 // pred_check_branch
          %375 = sbr.rel (%p373) target = $region60
        $region59: #{tpu_custom_call.1} parent=47 // pred_region
          %376 = dma.done [#allocation6], 4096
        $region60: #{tpu_custom_call.1} parent=47 // pred_fallthru
          _
        // Predicated region
        $region61: #{tpu_custom_call.1} parent=47 // pred_check
          %p377 = pneg %p140
        $region62: #{tpu_custom_call.1} parent=47 // pred_check_branch
          %379 = sbr.rel (%p377) target = $region64
        $region63: #{tpu_custom_call.1} parent=47 // pred_region
          %380 = dma.done [#allocation9], 4096
        $region64: #{tpu_custom_call.1} parent=47 // pred_fallthru
          _
        // Predicated region
        $region65: #{tpu_custom_call.1} parent=47 // pred_check
          %p381 = pneg %p182
        $region66: #{tpu_custom_call.1} parent=47 // pred_check_branch
          %383 = sbr.rel (%p381) target = $region68
        $region67: #{tpu_custom_call.1} parent=47 // pred_region
          %384 = dma.done [#allocation9], 4096
        $region68: #{tpu_custom_call.1} parent=47 // pred_fallthru
          _
        // Predicated region
        $region69: #{tpu_custom_call.1} parent=47 // pred_check
          %p385 = pneg %p203
        $region70: #{tpu_custom_call.1} parent=47 // pred_check_branch
          %387 = sbr.rel (%p385) target = $region72
        $region71: #{tpu_custom_call.1} parent=47 // pred_region
          %388 = dma.done [#allocation12], 2048
        $region72: #{tpu_custom_call.1} parent=47 // pred_fallthru
          _
        %s389 = sand.u32 %s49, 1
        %s390 = scalar_lea.sflag [#allocation3], %s389
        %s391 = sand.u32 %s49, 1
        %s392 = smul.addr %s391, 128
        %s393 = scalar_lea.vmem [#allocation2], %s392
        %p394 = pneg %p62
        %p395 = pneg %p59
        %p396 = pneg %p88
        %p397 = pneg %p85
        %p398 = pneg %p114
        %p399 = pneg %p111
        %p400 = pneg %p140
        %p401 = pneg %p137
        %p402 = pneg %p161
        %p403 = pneg %p158
        %p404 = pneg %p182
        %p405 = pneg %p179
        %p406 = pneg %p203
        %p407 = pneg %p200
        %p408 = pneg %p231
        %p409 = pneg %p228
        %s410 = sand.u32 %s218, 1
        %s411 = scalar_lea.sflag [#allocation4], %s410
        %s412 = sand.u32 %s218, 1
        %s413 = smul.addr %s412, 128
        %s414 = scalar_lea.vmem [#allocation13], %s413
        %s415 = smul.u32 16, %s32
        %s416 = smul.u32 16, %s32
        %s417 = smul.u32 16, %s32
        %s418 = smul.u32 16, %s32
        %s419 = smul.u32 16, %s32
        %v420 = vld [vmem:[%s364] sm:$0xff]
        %v421 = vld [vmem:[%s364 + $0x8] sm:$0xff]
        %v422 = vld [vmem:[%s364 + $0x10] sm:$0xff]
        %v423 = vld [vmem:[%s364 + $0x18] sm:$0xff]
        %v424 = vld [vmem:[%s364 + $0x20] sm:$0xff]
        %v425 = vld [vmem:[%s364 + $0x28] sm:$0xff]
        %v426 = vld [vmem:[%s364 + $0x30] sm:$0xff]
        %v427 = vld [vmem:[%s364 + $0x38] sm:$0xff]
        %v428 = vld [vmem:[%s364 + $0x40] sm:$0xff]
        %v429 = vld [vmem:[%s364 + $0x48] sm:$0xff]
        %v430 = vld [vmem:[%s364 + $0x50] sm:$0xff]
        %v431 = vld [vmem:[%s364 + $0x58] sm:$0xff]
        %v432 = vld [vmem:[%s364 + $0x60] sm:$0xff]
        %v433 = vld [vmem:[%s364 + $0x68] sm:$0xff]
        %v434 = vld [vmem:[%s364 + $0x70] sm:$0xff]
        %v435 = vld [vmem:[%s364 + $0x78] sm:$0xff]
        %v436 = vld [vmem:[#allocation10] sm:$0xff]
        %v437 = vld [vmem:[#allocation10 + $0x8] sm:$0xff]
        %v438 = vld [vmem:[#allocation10 + $0x10] sm:$0xff]
        %v439 = vld [vmem:[#allocation10 + $0x18] sm:$0xff]
        %v440 = vld [vmem:[#allocation10 + $0x20] sm:$0xff]
        %v441 = vld [vmem:[#allocation10 + $0x28] sm:$0xff]
        %v442 = vld [vmem:[#allocation10 + $0x30] sm:$0xff]
        %v443 = vld [vmem:[#allocation10 + $0x38] sm:$0xff]
        %v444 = vld [vmem:[#allocation10 + $0x40] sm:$0xff]
        %v445 = vld [vmem:[#allocation10 + $0x48] sm:$0xff]
        %v446 = vld [vmem:[#allocation10 + $0x50] sm:$0xff]
        %v447 = vld [vmem:[#allocation10 + $0x58] sm:$0xff]
        %v448 = vld [vmem:[#allocation10 + $0x60] sm:$0xff]
        %v449 = vld [vmem:[#allocation10 + $0x68] sm:$0xff]
        %v450 = vld [vmem:[#allocation10 + $0x70] sm:$0xff]
        %v451 = vld [vmem:[#allocation10 + $0x78] sm:$0xff]
        %v452 = vld [vmem:[#allocation10 + $0x80] sm:$0xff]
        %v453 = vld [vmem:[#allocation10 + $0x88] sm:$0xff]
        %v454 = vld [vmem:[#allocation10 + $0x90] sm:$0xff]
        %v455 = vld [vmem:[#allocation10 + $0x98] sm:$0xff]
        %v456 = vld [vmem:[#allocation10 + $0xa0] sm:$0xff]
        %v457 = vld [vmem:[#allocation10 + $0xa8] sm:$0xff]
        %v458 = vld [vmem:[#allocation10 + $0xb0] sm:$0xff]
        %v459 = vld [vmem:[#allocation10 + $0xb8] sm:$0xff]
        %v460 = vld [vmem:[#allocation10 + $0xc0] sm:$0xff]
        %v461 = vld [vmem:[#allocation10 + $0xc8] sm:$0xff]
        %v462 = vld [vmem:[#allocation10 + $0xd0] sm:$0xff]
        %v463 = vld [vmem:[#allocation10 + $0xd8] sm:$0xff]
        %v464 = vld [vmem:[#allocation10 + $0xe0] sm:$0xff]
        %v465 = vld [vmem:[#allocation10 + $0xe8] sm:$0xff]
        %v466 = vld [vmem:[#allocation10 + $0xf0] sm:$0xff]
        %v467 = vld [vmem:[#allocation10 + $0xf8] sm:$0xff]
        %468 = vmatprep.subr.mxu0 %v437
        %469 = vmatpush1.msra.mxu0 %v436
        %470 = vmatprep.subr.mxu0 %v439
        %471 = vmatpush1.msra.mxu0 %v438
        %472 = vmatprep.subr.mxu0 %v441
        %473 = vmatpush1.msra.mxu0 %v440
        %474 = vmatprep.subr.mxu0 %v443
        %475 = vmatpush1.msra.mxu0 %v442
        %476 = vmatprep.subr.mxu0 %v445
        %477 = vmatpush1.msra.mxu0 %v444
        %478 = vmatprep.subr.mxu0 %v447
        %479 = vmatpush1.msra.mxu0 %v446
        %480 = vmatprep.subr.mxu0 %v449
        %481 = vmatpush1.msra.mxu0 %v448
        %482 = vmatprep.subr.mxu0 %v451
        %483 = vmatpush1.msra.mxu0 %v450
        %484 = vmatprep.subr.mxu0 %v453
        %485 = vmatpush1.msra.mxu0 %v452
        %486 = vmatprep.subr.mxu0 %v455
        %487 = vmatpush1.msra.mxu0 %v454
        %488 = vmatprep.subr.mxu0 %v457
        %489 = vmatpush1.msra.mxu0 %v456
        %490 = vmatprep.subr.mxu0 %v459
        %491 = vmatpush1.msra.mxu0 %v458
        %492 = vmatprep.subr.mxu0 %v461
        %493 = vmatpush1.msra.mxu0 %v460
        %494 = vmatprep.subr.mxu0 %v463
        %495 = vmatpush1.msra.mxu0 %v462
        %496 = vmatprep.subr.mxu0 %v465
        %497 = vmatpush1.msra.mxu0 %v464
        %498 = vmatprep.subr.mxu0 %v467
        %499 = vmatpush1.msra.mxu0 %v466
        %500 = vmatprep.subr.mxu0 0.0
        %501 = vmatpush1.msra.mxu0 0.0
        %502 = vmatprep.subr.mxu0 0.0
        %503 = vmatpush1.msra.mxu0 0.0
        %504 = vmatprep.subr.mxu0 0.0
        %505 = vmatpush1.msra.mxu0 0.0
        %506 = vmatprep.subr.mxu0 0.0
        %507 = vmatpush1.msra.mxu0 0.0
        %508 = vmatprep.subr.mxu0 0.0
        %509 = vmatpush1.msra.mxu0 0.0
        %510 = vmatprep.subr.mxu0 0.0
        %511 = vmatpush1.msra.mxu0 0.0
        %512 = vmatprep.subr.mxu0 0.0
        %513 = vmatpush1.msra.mxu0 0.0
        %514 = vmatprep.subr.mxu0 0.0
        %515 = vmatpush1.msra.mxu0 0.0
        %516 = vmatprep.subr.mxu0 0.0
        %517 = vmatpush1.msra.mxu0 0.0
        %518 = vmatprep.subr.mxu0 0.0
        %519 = vmatpush1.msra.mxu0 0.0
        %520 = vmatprep.subr.mxu0 0.0
        %521 = vmatpush1.msra.mxu0 0.0
        %522 = vmatprep.subr.mxu0 0.0
        %523 = vmatpush1.msra.mxu0 0.0
        %524 = vmatprep.subr.mxu0 0.0
        %525 = vmatpush1.msra.mxu0 0.0
        %526 = vmatprep.subr.mxu0 0.0
        %527 = vmatpush1.msra.mxu0 0.0
        %528 = vmatprep.subr.mxu0 0.0
        %529 = vmatpush1.msra.mxu0 0.0
        %530 = vmatprep.subr.mxu0 0.0
        %531 = vmatpush1.msra.mxu0 0.0
        %532 = vmatprep.mubr.f32.mxu0 0.0
        %533 = vmatmul.mubr.f32.gmra.mrb[0].mxu0 %v420
        %v534 = vpop.f32.mrb[0].mxu0
        %v535 = vadd.f32 0.0, %v534
        %v536 = vpop.f32.mrb[0].mxu0
        %v537 = vadd.f32 0.0, %v536
        %538 = vmatprep.mubr.f32.mxu0 0.0
        %539 = vmatmul.mubr.f32.gmra.mrb[0].mxu0 %v421
        %v540 = vpop.f32.mrb[0].mxu0
        %v541 = vadd.f32 0.0, %v540
        %v542 = vpop.f32.mrb[0].mxu0
        %v543 = vadd.f32 0.0, %v542
        %544 = vmatprep.mubr.f32.mxu0 0.0
        %545 = vmatmul.mubr.f32.gmra.mrb[0].mxu0 %v422
        %v546 = vpop.f32.mrb[0].mxu0
        %v547 = vadd.f32 0.0, %v546
        %v548 = vpop.f32.mrb[0].mxu0
        %v549 = vadd.f32 0.0, %v548
        %550 = vmatprep.mubr.f32.mxu0 0.0
        %551 = vmatmul.mubr.f32.gmra.mrb[0].mxu0 %v423
        %v552 = vpop.f32.mrb[0].mxu0
        %v553 = vadd.f32 0.0, %v552
        %v554 = vpop.f32.mrb[0].mxu0
        %v555 = vadd.f32 0.0, %v554
        %556 = vmatprep.mubr.f32.mxu0 0.0
        %557 = vmatmul.mubr.f32.gmra.mrb[0].mxu0 %v424
        %v558 = vpop.f32.mrb[0].mxu0
        %v559 = vadd.f32 0.0, %v558
        %v560 = vpop.f32.mrb[0].mxu0
        %v561 = vadd.f32 0.0, %v560
        %562 = vmatprep.mubr.f32.mxu0 0.0
        %563 = vmatmul.mubr.f32.gmra.mrb[0].mxu0 %v425
        %v564 = vpop.f32.mrb[0].mxu0
        %v565 = vadd.f32 0.0, %v564
        %v566 = vpop.f32.mrb[0].mxu0
        %v567 = vadd.f32 0.0, %v566
        %568 = vmatprep.mubr.f32.mxu0 0.0
        %569 = vmatmul.mubr.f32.gmra.mrb[0].mxu0 %v426
        %v570 = vpop.f32.mrb[0].mxu0
        %v571 = vadd.f32 0.0, %v570
        %v572 = vpop.f32.mrb[0].mxu0
        %v573 = vadd.f32 0.0, %v572
        %574 = vmatprep.mubr.f32.mxu0 0.0
        %575 = vmatmul.mubr.f32.gmra.mrb[0].mxu0 %v427
        %v576 = vpop.f32.mrb[0].mxu0
        %v577 = vadd.f32 0.0, %v576
        %v578 = vpop.f32.mrb[0].mxu0
        %v579 = vadd.f32 0.0, %v578
        %580 = vmatprep.mubr.f32.mxu0 0.0
        %581 = vmatmul.mubr.f32.gmra.mrb[0].mxu0 %v428
        %v582 = vpop.f32.mrb[0].mxu0
        %v583 = vadd.f32 0.0, %v582
        %v584 = vpop.f32.mrb[0].mxu0
        %v585 = vadd.f32 0.0, %v584
        %586 = vmatprep.mubr.f32.mxu0 0.0
        %587 = vmatmul.mubr.f32.gmra.mrb[0].mxu0 %v429
        %v588 = vpop.f32.mrb[0].mxu0
        %v589 = vadd.f32 0.0, %v588
        %v590 = vpop.f32.mrb[0].mxu0
        %v591 = vadd.f32 0.0, %v590
        %592 = vmatprep.mubr.f32.mxu0 0.0
        %593 = vmatmul.mubr.f32.gmra.mrb[0].mxu0 %v430
        %v594 = vpop.f32.mrb[0].mxu0
        %v595 = vadd.f32 0.0, %v594
        %v596 = vpop.f32.mrb[0].mxu0
        %v597 = vadd.f32 0.0, %v596
        %598 = vmatprep.mubr.f32.mxu0 0.0
        %599 = vmatmul.mubr.f32.gmra.mrb[0].mxu0 %v431
        %v600 = vpop.f32.mrb[0].mxu0
        %v601 = vadd.f32 0.0, %v600
        %v602 = vpop.f32.mrb[0].mxu0
        %v603 = vadd.f32 0.0, %v602
        %604 = vmatprep.mubr.f32.mxu0 0.0
        %605 = vmatmul.mubr.f32.gmra.mrb[0].mxu0 %v432
        %v606 = vpop.f32.mrb[0].mxu0
        %v607 = vadd.f32 0.0, %v606
        %v608 = vpop.f32.mrb[0].mxu0
        %v609 = vadd.f32 0.0, %v608
        %610 = vmatprep.mubr.f32.mxu0 0.0
        %611 = vmatmul.mubr.f32.gmra.mrb[0].mxu0 %v433
        %v612 = vpop.f32.mrb[0].mxu0
        %v613 = vadd.f32 0.0, %v612
        %v614 = vpop.f32.mrb[0].mxu0
        %v615 = vadd.f32 0.0, %v614
        %616 = vmatprep.mubr.f32.mxu0 0.0
        %617 = vmatmul.mubr.f32.gmra.mrb[0].mxu0 %v434
        %v618 = vpop.f32.mrb[0].mxu0
        %v619 = vadd.f32 0.0, %v618
        %v620 = vpop.f32.mrb[0].mxu0
        %v621 = vadd.f32 0.0, %v620
        %622 = vmatprep.mubr.f32.mxu0 0.0
        %623 = vmatmul.mubr.f32.gmra.mrb[0].mxu0 %v435
        %v624 = vpop.f32.mrb[0].mxu0
        %v625 = vadd.f32 0.0, %v624
        %v626 = vpop.f32.mrb[0].mxu0
        %v627 = vadd.f32 0.0, %v626
        %628 = vdwg.mxu0
        %629 = vrot.lane.b32.xlu0 %v535, 112
        %v630 = vpop.permute.xlu0 %629
        %631 = vrot.lane.b32.xlu0 %v541, 112
        %v632 = vpop.permute.xlu0 %631
        %633 = vrot.lane.b32.xlu0 %v547, 112
        %v634 = vpop.permute.xlu0 %633
        %635 = vrot.lane.b32.xlu0 %v553, 112
        %v636 = vpop.permute.xlu0 %635
        %637 = vrot.lane.b32.xlu0 %v559, 112
        %v638 = vpop.permute.xlu0 %637
        %639 = vrot.lane.b32.xlu0 %v565, 112
        %v640 = vpop.permute.xlu0 %639
        %641 = vrot.lane.b32.xlu0 %v571, 112
        %v642 = vpop.permute.xlu0 %641
        %643 = vrot.lane.b32.xlu0 %v577, 112
        %v644 = vpop.permute.xlu0 %643
        %645 = vrot.lane.b32.xlu0 %v583, 112
        %v646 = vpop.permute.xlu0 %645
        %647 = vrot.lane.b32.xlu0 %v589, 112
        %v648 = vpop.permute.xlu0 %647
        %649 = vrot.lane.b32.xlu0 %v595, 112
        %v650 = vpop.permute.xlu0 %649
        %651 = vrot.lane.b32.xlu0 %v601, 112
        %v652 = vpop.permute.xlu0 %651
        %653 = vrot.lane.b32.xlu0 %v607, 112
        %v654 = vpop.permute.xlu0 %653
        %655 = vrot.lane.b32.xlu0 %v613, 112
        %v656 = vpop.permute.xlu0 %655
        %657 = vrot.lane.b32.xlu0 %v619, 112
        %v658 = vpop.permute.xlu0 %657
        %659 = vrot.lane.b32.xlu0 %v625, 112
        %v660 = vpop.permute.xlu0 %659
        %661 = vrot.lane.b32.xlu0 %v537, 112
        %v662 = vpop.permute.xlu0 %661
        %663 = vrot.lane.b32.xlu0 %v543, 112
        %v664 = vpop.permute.xlu0 %663
        %665 = vrot.lane.b32.xlu0 %v549, 112
        %v666 = vpop.permute.xlu0 %665
        %667 = vrot.lane.b32.xlu0 %v555, 112
        %v668 = vpop.permute.xlu0 %667
        %669 = vrot.lane.b32.xlu0 %v561, 112
        %v670 = vpop.permute.xlu0 %669
        %671 = vrot.lane.b32.xlu0 %v567, 112
        %v672 = vpop.permute.xlu0 %671
        %673 = vrot.lane.b32.xlu0 %v573, 112
        %v674 = vpop.permute.xlu0 %673
        %675 = vrot.lane.b32.xlu0 %v579, 112
        %v676 = vpop.permute.xlu0 %675
        %677 = vrot.lane.b32.xlu0 %v585, 112
        %v678 = vpop.permute.xlu0 %677
        %679 = vrot.lane.b32.xlu0 %v591, 112
        %v680 = vpop.permute.xlu0 %679
        %681 = vrot.lane.b32.xlu0 %v597, 112
        %v682 = vpop.permute.xlu0 %681
        %683 = vrot.lane.b32.xlu0 %v603, 112
        %v684 = vpop.permute.xlu0 %683
        %685 = vrot.lane.b32.xlu0 %v609, 112
        %v686 = vpop.permute.xlu0 %685
        %687 = vrot.lane.b32.xlu0 %v615, 112
        %v688 = vpop.permute.xlu0 %687
        %689 = vrot.lane.b32.xlu0 %v621, 112
        %v690 = vpop.permute.xlu0 %689
        %691 = vrot.lane.b32.xlu0 %v627, 112
        %v692 = vpop.permute.xlu0 %691
        %v693 = vlaneseq
        %v694 = vand.u32 %v693, 127
        %vm695 = vcmp.lt.s32.totalorder %v694, 112
        %v696 = vsel %vm695, %v630, %v662
        %v697 = vsel %vm695, %v632, %v664
        %v698 = vsel %vm695, %v634, %v666
        %v699 = vsel %vm695, %v636, %v668
        %v700 = vsel %vm695, %v638, %v670
        %v701 = vsel %vm695, %v640, %v672
        %v702 = vsel %vm695, %v642, %v674
        %v703 = vsel %vm695, %v644, %v676
        %v704 = vsel %vm695, %v646, %v678
        %v705 = vsel %vm695, %v648, %v680
        %v706 = vsel %vm695, %v650, %v682
        %v707 = vsel %vm695, %v652, %v684
        %v708 = vsel %vm695, %v654, %v686
        %v709 = vsel %vm695, %v656, %v688
        %v710 = vsel %vm695, %v658, %v690
        %v711 = vsel %vm695, %v660, %v692
        %v712 = vsel %vm695, %v662, %v630
        %v713 = vsel %vm695, %v664, %v632
        %v714 = vsel %vm695, %v666, %v634
        %v715 = vsel %vm695, %v668, %v636
        %v716 = vsel %vm695, %v670, %v638
        %v717 = vsel %vm695, %v672, %v640
        %v718 = vsel %vm695, %v674, %v642
        %v719 = vsel %vm695, %v676, %v644
        %v720 = vsel %vm695, %v678, %v646
        %v721 = vsel %vm695, %v680, %v648
        %v722 = vsel %vm695, %v682, %v650
        %v723 = vsel %vm695, %v684, %v652
        %v724 = vsel %vm695, %v686, %v654
        %v725 = vsel %vm695, %v688, %v656
        %v726 = vsel %vm695, %v690, %v658
        %v727 = vsel %vm695, %v692, %v660
        %728 = vrot.lane.b32.xlu0 %v535, 16
        %v729 = vpop.permute.xlu0 %728
        %730 = vrot.lane.b32.xlu0 %v541, 16
        %v731 = vpop.permute.xlu0 %730
        %732 = vrot.lane.b32.xlu0 %v547, 16
        %v733 = vpop.permute.xlu0 %732
        %734 = vrot.lane.b32.xlu0 %v553, 16
        %v735 = vpop.permute.xlu0 %734
        %736 = vrot.lane.b32.xlu0 %v559, 16
        %v737 = vpop.permute.xlu0 %736
        %738 = vrot.lane.b32.xlu0 %v565, 16
        %v739 = vpop.permute.xlu0 %738
        %740 = vrot.lane.b32.xlu0 %v571, 16
        %v741 = vpop.permute.xlu0 %740
        %742 = vrot.lane.b32.xlu0 %v577, 16
        %v743 = vpop.permute.xlu0 %742
        %744 = vrot.lane.b32.xlu0 %v583, 16
        %v745 = vpop.permute.xlu0 %744
        %746 = vrot.lane.b32.xlu0 %v589, 16
        %v747 = vpop.permute.xlu0 %746
        %748 = vrot.lane.b32.xlu0 %v595, 16
        %v749 = vpop.permute.xlu0 %748
        %750 = vrot.lane.b32.xlu0 %v601, 16
        %v751 = vpop.permute.xlu0 %750
        %752 = vrot.lane.b32.xlu0 %v607, 16
        %v753 = vpop.permute.xlu0 %752
        %754 = vrot.lane.b32.xlu0 %v613, 16
        %v755 = vpop.permute.xlu0 %754
        %756 = vrot.lane.b32.xlu0 %v619, 16
        %v757 = vpop.permute.xlu0 %756
        %758 = vrot.lane.b32.xlu0 %v625, 16
        %v759 = vpop.permute.xlu0 %758
        %760 = vrot.lane.b32.xlu0 %v537, 16
        %v761 = vpop.permute.xlu0 %760
        %762 = vrot.lane.b32.xlu0 %v543, 16
        %v763 = vpop.permute.xlu0 %762
        %764 = vrot.lane.b32.xlu0 %v549, 16
        %v765 = vpop.permute.xlu0 %764
        %766 = vrot.lane.b32.xlu0 %v555, 16
        %v767 = vpop.permute.xlu0 %766
        %768 = vrot.lane.b32.xlu0 %v561, 16
        %v769 = vpop.permute.xlu0 %768
        %770 = vrot.lane.b32.xlu0 %v567, 16
        %v771 = vpop.permute.xlu0 %770
        %772 = vrot.lane.b32.xlu0 %v573, 16
        %v773 = vpop.permute.xlu0 %772
        %774 = vrot.lane.b32.xlu0 %v579, 16
        %v775 = vpop.permute.xlu0 %774
        %776 = vrot.lane.b32.xlu0 %v585, 16
        %v777 = vpop.permute.xlu0 %776
        %778 = vrot.lane.b32.xlu0 %v591, 16
        %v779 = vpop.permute.xlu0 %778
        %780 = vrot.lane.b32.xlu0 %v597, 16
        %v781 = vpop.permute.xlu0 %780
        %782 = vrot.lane.b32.xlu0 %v603, 16
        %v783 = vpop.permute.xlu0 %782
        %784 = vrot.lane.b32.xlu0 %v609, 16
        %v785 = vpop.permute.xlu0 %784
        %786 = vrot.lane.b32.xlu0 %v615, 16
        %v787 = vpop.permute.xlu0 %786
        %788 = vrot.lane.b32.xlu0 %v621, 16
        %v789 = vpop.permute.xlu0 %788
        %790 = vrot.lane.b32.xlu0 %v627, 16
        %v791 = vpop.permute.xlu0 %790
        %vm792 = vcmp.lt.s32.totalorder %v694, 16
        %v793 = vsel %vm792, %v729, %v761
        %v794 = vsel %vm792, %v731, %v763
        %v795 = vsel %vm792, %v733, %v765
        %v796 = vsel %vm792, %v735, %v767
        %v797 = vsel %vm792, %v737, %v769
        %v798 = vsel %vm792, %v739, %v771
        %v799 = vsel %vm792, %v741, %v773
        %v800 = vsel %vm792, %v743, %v775
        %v801 = vsel %vm792, %v745, %v777
        %v802 = vsel %vm792, %v747, %v779
        %v803 = vsel %vm792, %v749, %v781
        %v804 = vsel %vm792, %v751, %v783
        %v805 = vsel %vm792, %v753, %v785
        %v806 = vsel %vm792, %v755, %v787
        %v807 = vsel %vm792, %v757, %v789
        %v808 = vsel %vm792, %v759, %v791
        %v809 = vsel %vm792, %v761, %v729
        %v810 = vsel %vm792, %v763, %v731
        %v811 = vsel %vm792, %v765, %v733
        %v812 = vsel %vm792, %v767, %v735
        %v813 = vsel %vm792, %v769, %v737
        %v814 = vsel %vm792, %v771, %v739
        %v815 = vsel %vm792, %v773, %v741
        %v816 = vsel %vm792, %v775, %v743
        %v817 = vsel %vm792, %v777, %v745
        %v818 = vsel %vm792, %v779, %v747
        %v819 = vsel %vm792, %v781, %v749
        %v820 = vsel %vm792, %v783, %v751
        %v821 = vsel %vm792, %v785, %v753
        %v822 = vsel %vm792, %v787, %v755
        %v823 = vsel %vm792, %v789, %v757
        %v824 = vsel %vm792, %v791, %v759
        %v825 = vld [vmem:[#allocation5] sm:$0xff]
        %v826 = vld [vmem:[#allocation5 + $0x8] sm:$0xff]
        %v827 = vld [vmem:[#allocation5 + $0x10] sm:$0xff]
        %v828 = vld [vmem:[#allocation5 + $0x18] sm:$0xff]
        %v829 = vld [vmem:[#allocation5 + $0x20] sm:$0xff]
        %v830 = vld [vmem:[#allocation5 + $0x28] sm:$0xff]
        %v831 = vld [vmem:[#allocation5 + $0x30] sm:$0xff]
        %v832 = vld [vmem:[#allocation5 + $0x38] sm:$0xff]
        %v833 = vld [vmem:[#allocation5 + $0x40] sm:$0xff]
        %v834 = vld [vmem:[#allocation5 + $0x48] sm:$0xff]
        %v835 = vld [vmem:[#allocation5 + $0x50] sm:$0xff]
        %v836 = vld [vmem:[#allocation5 + $0x58] sm:$0xff]
        %v837 = vld [vmem:[#allocation5 + $0x60] sm:$0xff]
        %v838 = vld [vmem:[#allocation5 + $0x68] sm:$0xff]
        %v839 = vld [vmem:[#allocation5 + $0x70] sm:$0xff]
        %v840 = vld [vmem:[#allocation5 + $0x78] sm:$0xff]
        %v841 = vld [vmem:[#allocation5 + $0x80] sm:$0xff]
        %v842 = vld [vmem:[#allocation5 + $0x88] sm:$0xff]
        %v843 = vld [vmem:[#allocation5 + $0x90] sm:$0xff]
        %v844 = vld [vmem:[#allocation5 + $0x98] sm:$0xff]
        %v845 = vld [vmem:[#allocation5 + $0xa0] sm:$0xff]
        %v846 = vld [vmem:[#allocation5 + $0xa8] sm:$0xff]
        %v847 = vld [vmem:[#allocation5 + $0xb0] sm:$0xff]
        %v848 = vld [vmem:[#allocation5 + $0xb8] sm:$0xff]
        %v849 = vld [vmem:[#allocation5 + $0xc0] sm:$0xff]
        %v850 = vld [vmem:[#allocation5 + $0xc8] sm:$0xff]
        %v851 = vld [vmem:[#allocation5 + $0xd0] sm:$0xff]
        %v852 = vld [vmem:[#allocation5 + $0xd8] sm:$0xff]
        %v853 = vld [vmem:[#allocation5 + $0xe0] sm:$0xff]
        %v854 = vld [vmem:[#allocation5 + $0xe8] sm:$0xff]
        %v855 = vld [vmem:[#allocation5 + $0xf0] sm:$0xff]
        %v856 = vld [vmem:[#allocation5 + $0xf8] sm:$0xff]
        %v857 = vmul.f32 %v535, %v825
        %v858 = vmul.f32 %v537, %v826
        %v859 = vmul.f32 %v541, %v827
        %v860 = vmul.f32 %v543, %v828
        %v861 = vmul.f32 %v547, %v829
        %v862 = vmul.f32 %v549, %v830
        %v863 = vmul.f32 %v553, %v831
        %v864 = vmul.f32 %v555, %v832
        %v865 = vmul.f32 %v559, %v833
        %v866 = vmul.f32 %v561, %v834
        %v867 = vmul.f32 %v565, %v835
        %v868 = vmul.f32 %v567, %v836
        %v869 = vmul.f32 %v571, %v837
        %v870 = vmul.f32 %v573, %v838
        %v871 = vmul.f32 %v577, %v839
        %v872 = vmul.f32 %v579, %v840
        %v873 = vmul.f32 %v583, %v841
        %v874 = vmul.f32 %v585, %v842
        %v875 = vmul.f32 %v589, %v843
        %v876 = vmul.f32 %v591, %v844
        %v877 = vmul.f32 %v595, %v845
        %v878 = vmul.f32 %v597, %v846
        %v879 = vmul.f32 %v601, %v847
        %v880 = vmul.f32 %v603, %v848
        %v881 = vmul.f32 %v607, %v849
        %v882 = vmul.f32 %v609, %v850
        %v883 = vmul.f32 %v613, %v851
        %v884 = vmul.f32 %v615, %v852
        %v885 = vmul.f32 %v619, %v853
        %v886 = vmul.f32 %v621, %v854
        %v887 = vmul.f32 %v625, %v855
        %v888 = vmul.f32 %v627, %v856
        %v889 = vld [vmem:[#allocation7] sm:$0xff]
        %v890 = vld [vmem:[#allocation7 + $0x8] sm:$0xff]
        %v891 = vld [vmem:[#allocation7 + $0x10] sm:$0xff]
        %v892 = vld [vmem:[#allocation7 + $0x18] sm:$0xff]
        %v893 = vld [vmem:[#allocation7 + $0x20] sm:$0xff]
        %v894 = vld [vmem:[#allocation7 + $0x28] sm:$0xff]
        %v895 = vld [vmem:[#allocation7 + $0x30] sm:$0xff]
        %v896 = vld [vmem:[#allocation7 + $0x38] sm:$0xff]
        %v897 = vld [vmem:[#allocation7 + $0x40] sm:$0xff]
        %v898 = vld [vmem:[#allocation7 + $0x48] sm:$0xff]
        %v899 = vld [vmem:[#allocation7 + $0x50] sm:$0xff]
        %v900 = vld [vmem:[#allocation7 + $0x58] sm:$0xff]
        %v901 = vld [vmem:[#allocation7 + $0x60] sm:$0xff]
        %v902 = vld [vmem:[#allocation7 + $0x68] sm:$0xff]
        %v903 = vld [vmem:[#allocation7 + $0x70] sm:$0xff]
        %v904 = vld [vmem:[#allocation7 + $0x78] sm:$0xff]
        %v905 = vld [vmem:[#allocation7 + $0x80] sm:$0xff]
        %v906 = vld [vmem:[#allocation7 + $0x88] sm:$0xff]
        %v907 = vld [vmem:[#allocation7 + $0x90] sm:$0xff]
        %v908 = vld [vmem:[#allocation7 + $0x98] sm:$0xff]
        %v909 = vld [vmem:[#allocation7 + $0xa0] sm:$0xff]
        %v910 = vld [vmem:[#allocation7 + $0xa8] sm:$0xff]
        %v911 = vld [vmem:[#allocation7 + $0xb0] sm:$0xff]
        %v912 = vld [vmem:[#allocation7 + $0xb8] sm:$0xff]
        %v913 = vld [vmem:[#allocation7 + $0xc0] sm:$0xff]
        %v914 = vld [vmem:[#allocation7 + $0xc8] sm:$0xff]
        %v915 = vld [vmem:[#allocation7 + $0xd0] sm:$0xff]
        %v916 = vld [vmem:[#allocation7 + $0xd8] sm:$0xff]
        %v917 = vld [vmem:[#allocation7 + $0xe0] sm:$0xff]
        %v918 = vld [vmem:[#allocation7 + $0xe8] sm:$0xff]
        %v919 = vld [vmem:[#allocation7 + $0xf0] sm:$0xff]
        %v920 = vld [vmem:[#allocation7 + $0xf8] sm:$0xff]
        %v921 = vmul.f32 %v696, %v889
        %v922 = vmul.f32 %v712, %v890
        %v923 = vmul.f32 %v697, %v891
        %v924 = vmul.f32 %v713, %v892
        %v925 = vmul.f32 %v698, %v893
        %v926 = vmul.f32 %v714, %v894
        %v927 = vmul.f32 %v699, %v895
        %v928 = vmul.f32 %v715, %v896
        %v929 = vmul.f32 %v700, %v897
        %v930 = vmul.f32 %v716, %v898
        %v931 = vmul.f32 %v701, %v899
        %v932 = vmul.f32 %v717, %v900
        %v933 = vmul.f32 %v702, %v901
        %v934 = vmul.f32 %v718, %v902
        %v935 = vmul.f32 %v703, %v903
        %v936 = vmul.f32 %v719, %v904
        %v937 = vmul.f32 %v704, %v905
        %v938 = vmul.f32 %v720, %v906
        %v939 = vmul.f32 %v705, %v907
        %v940 = vmul.f32 %v721, %v908
        %v941 = vmul.f32 %v706, %v909
        %v942 = vmul.f32 %v722, %v910
        %v943 = vmul.f32 %v707, %v911
        %v944 = vmul.f32 %v723, %v912
        %v945 = vmul.f32 %v708, %v913
        %v946 = vmul.f32 %v724, %v914
        %v947 = vmul.f32 %v709, %v915
        %v948 = vmul.f32 %v725, %v916
        %v949 = vmul.f32 %v710, %v917
        %v950 = vmul.f32 %v726, %v918
        %v951 = vmul.f32 %v711, %v919
        %v952 = vmul.f32 %v727, %v920
        %v953 = vadd.f32 %v857, %v921
        %v954 = vadd.f32 %v858, %v922
        %v955 = vadd.f32 %v859, %v923
        %v956 = vadd.f32 %v860, %v924
        %v957 = vadd.f32 %v861, %v925
        %v958 = vadd.f32 %v862, %v926
        %v959 = vadd.f32 %v863, %v927
        %v960 = vadd.f32 %v864, %v928
        %v961 = vadd.f32 %v865, %v929
        %v962 = vadd.f32 %v866, %v930
        %v963 = vadd.f32 %v867, %v931
        %v964 = vadd.f32 %v868, %v932
        %v965 = vadd.f32 %v869, %v933
        %v966 = vadd.f32 %v870, %v934
        %v967 = vadd.f32 %v871, %v935
        %v968 = vadd.f32 %v872, %v936
        %v969 = vadd.f32 %v873, %v937
        %v970 = vadd.f32 %v874, %v938
        %v971 = vadd.f32 %v875, %v939
        %v972 = vadd.f32 %v876, %v940
        %v973 = vadd.f32 %v877, %v941
        %v974 = vadd.f32 %v878, %v942
        %v975 = vadd.f32 %v879, %v943
        %v976 = vadd.f32 %v880, %v944
        %v977 = vadd.f32 %v881, %v945
        %v978 = vadd.f32 %v882, %v946
        %v979 = vadd.f32 %v883, %v947
        %v980 = vadd.f32 %v884, %v948
        %v981 = vadd.f32 %v885, %v949
        %v982 = vadd.f32 %v886, %v950
        %v983 = vadd.f32 %v887, %v951
        %v984 = vadd.f32 %v888, %v952
        %v985 = vld [vmem:[#allocation8] sm:$0xff]
        %v986 = vld [vmem:[#allocation8 + $0x8] sm:$0xff]
        %v987 = vld [vmem:[#allocation8 + $0x10] sm:$0xff]
        %v988 = vld [vmem:[#allocation8 + $0x18] sm:$0xff]
        %v989 = vld [vmem:[#allocation8 + $0x20] sm:$0xff]
        %v990 = vld [vmem:[#allocation8 + $0x28] sm:$0xff]
        %v991 = vld [vmem:[#allocation8 + $0x30] sm:$0xff]
        %v992 = vld [vmem:[#allocation8 + $0x38] sm:$0xff]
        %v993 = vld [vmem:[#allocation8 + $0x40] sm:$0xff]
        %v994 = vld [vmem:[#allocation8 + $0x48] sm:$0xff]
        %v995 = vld [vmem:[#allocation8 + $0x50] sm:$0xff]
        %v996 = vld [vmem:[#allocation8 + $0x58] sm:$0xff]
        %v997 = vld [vmem:[#allocation8 + $0x60] sm:$0xff]
        %v998 = vld [vmem:[#allocation8 + $0x68] sm:$0xff]
        %v999 = vld [vmem:[#allocation8 + $0x70] sm:$0xff]
        %v1000 = vld [vmem:[#allocation8 + $0x78] sm:$0xff]
        %v1001 = vld [vmem:[#allocation8 + $0x80] sm:$0xff]
        %v1002 = vld [vmem:[#allocation8 + $0x88] sm:$0xff]
        %v1003 = vld [vmem:[#allocation8 + $0x90] sm:$0xff]
        %v1004 = vld [vmem:[#allocation8 + $0x98] sm:$0xff]
        %v1005 = vld [vmem:[#allocation8 + $0xa0] sm:$0xff]
        %v1006 = vld [vmem:[#allocation8 + $0xa8] sm:$0xff]
        %v1007 = vld [vmem:[#allocation8 + $0xb0] sm:$0xff]
        %v1008 = vld [vmem:[#allocation8 + $0xb8] sm:$0xff]
        %v1009 = vld [vmem:[#allocation8 + $0xc0] sm:$0xff]
        %v1010 = vld [vmem:[#allocation8 + $0xc8] sm:$0xff]
        %v1011 = vld [vmem:[#allocation8 + $0xd0] sm:$0xff]
        %v1012 = vld [vmem:[#allocation8 + $0xd8] sm:$0xff]
        %v1013 = vld [vmem:[#allocation8 + $0xe0] sm:$0xff]
        %v1014 = vld [vmem:[#allocation8 + $0xe8] sm:$0xff]
        %v1015 = vld [vmem:[#allocation8 + $0xf0] sm:$0xff]
        %v1016 = vld [vmem:[#allocation8 + $0xf8] sm:$0xff]
        %v1017 = vmul.f32 %v809, %v985
        %v1018 = vmul.f32 %v793, %v986
        %v1019 = vmul.f32 %v810, %v987
        %v1020 = vmul.f32 %v794, %v988
        %v1021 = vmul.f32 %v811, %v989
        %v1022 = vmul.f32 %v795, %v990
        %v1023 = vmul.f32 %v812, %v991
        %v1024 = vmul.f32 %v796, %v992
        %v1025 = vmul.f32 %v813, %v993
        %v1026 = vmul.f32 %v797, %v994
        %v1027 = vmul.f32 %v814, %v995
        %v1028 = vmul.f32 %v798, %v996
        %v1029 = vmul.f32 %v815, %v997
        %v1030 = vmul.f32 %v799, %v998
        %v1031 = vmul.f32 %v816, %v999
        %v1032 = vmul.f32 %v800, %v1000
        %v1033 = vmul.f32 %v817, %v1001
        %v1034 = vmul.f32 %v801, %v1002
        %v1035 = vmul.f32 %v818, %v1003
        %v1036 = vmul.f32 %v802, %v1004
        %v1037 = vmul.f32 %v819, %v1005
        %v1038 = vmul.f32 %v803, %v1006
        %v1039 = vmul.f32 %v820, %v1007
        %v1040 = vmul.f32 %v804, %v1008
        %v1041 = vmul.f32 %v821, %v1009
        %v1042 = vmul.f32 %v805, %v1010
        %v1043 = vmul.f32 %v822, %v1011
        %v1044 = vmul.f32 %v806, %v1012
        %v1045 = vmul.f32 %v823, %v1013
        %v1046 = vmul.f32 %v807, %v1014
        %v1047 = vmul.f32 %v824, %v1015
        %v1048 = vmul.f32 %v808, %v1016
        %v1049 = vadd.f32 %v953, %v1017
        %v1050 = vadd.f32 %v954, %v1018
        %v1051 = vadd.f32 %v955, %v1019
        %v1052 = vadd.f32 %v956, %v1020
        %v1053 = vadd.f32 %v957, %v1021
        %v1054 = vadd.f32 %v958, %v1022
        %v1055 = vadd.f32 %v959, %v1023
        %v1056 = vadd.f32 %v960, %v1024
        %v1057 = vadd.f32 %v961, %v1025
        %v1058 = vadd.f32 %v962, %v1026
        %v1059 = vadd.f32 %v963, %v1027
        %v1060 = vadd.f32 %v964, %v1028
        %v1061 = vadd.f32 %v965, %v1029
        %v1062 = vadd.f32 %v966, %v1030
        %v1063 = vadd.f32 %v967, %v1031
        %v1064 = vadd.f32 %v968, %v1032
        %v1065 = vadd.f32 %v969, %v1033
        %v1066 = vadd.f32 %v970, %v1034
        %v1067 = vadd.f32 %v971, %v1035
        %v1068 = vadd.f32 %v972, %v1036
        %v1069 = vadd.f32 %v973, %v1037
        %v1070 = vadd.f32 %v974, %v1038
        %v1071 = vadd.f32 %v975, %v1039
        %v1072 = vadd.f32 %v976, %v1040
        %v1073 = vadd.f32 %v977, %v1041
        %v1074 = vadd.f32 %v978, %v1042
        %v1075 = vadd.f32 %v979, %v1043
        %v1076 = vadd.f32 %v980, %v1044
        %v1077 = vadd.f32 %v981, %v1045
        %v1078 = vadd.f32 %v982, %v1046
        %v1079 = vadd.f32 %v983, %v1047
        %v1080 = vadd.f32 %v984, %v1048
        %1097 = vrot.lane.b32.xlu0 %v1049, 96
        %v1098 = vpop.permute.xlu0 %1097
        %1099 = vrot.lane.b32.xlu0 %v1051, 96
        %v1100 = vpop.permute.xlu0 %1099
        %1101 = vrot.lane.b32.xlu0 %v1053, 96
        %v1102 = vpop.permute.xlu0 %1101
        %1103 = vrot.lane.b32.xlu0 %v1055, 96
        %v1104 = vpop.permute.xlu0 %1103
        %1105 = vrot.lane.b32.xlu0 %v1057, 96
        %v1106 = vpop.permute.xlu0 %1105
        %1107 = vrot.lane.b32.xlu0 %v1059, 96
        %v1108 = vpop.permute.xlu0 %1107
        %1109 = vrot.lane.b32.xlu0 %v1061, 96
        %v1110 = vpop.permute.xlu0 %1109
        %1111 = vrot.lane.b32.xlu0 %v1063, 96
        %v1112 = vpop.permute.xlu0 %1111
        %1113 = vrot.lane.b32.xlu0 %v1065, 96
        %v1114 = vpop.permute.xlu0 %1113
        %1115 = vrot.lane.b32.xlu0 %v1067, 96
        %v1116 = vpop.permute.xlu0 %1115
        %1117 = vrot.lane.b32.xlu0 %v1069, 96
        %v1118 = vpop.permute.xlu0 %1117
        %1119 = vrot.lane.b32.xlu0 %v1071, 96
        %v1120 = vpop.permute.xlu0 %1119
        %1121 = vrot.lane.b32.xlu0 %v1073, 96
        %v1122 = vpop.permute.xlu0 %1121
        %1123 = vrot.lane.b32.xlu0 %v1075, 96
        %v1124 = vpop.permute.xlu0 %1123
        %1125 = vrot.lane.b32.xlu0 %v1077, 96
        %v1126 = vpop.permute.xlu0 %1125
        %1127 = vrot.lane.b32.xlu0 %v1079, 96
        %v1128 = vpop.permute.xlu0 %1127
        %1129 = vrot.lane.b32.xlu0 %v1049, 64
        %v1130 = vpop.permute.xlu0 %1129
        %1131 = vrot.lane.b32.xlu0 %v1098, 64
        %v1132 = vpop.permute.xlu0 %1131
        %1133 = vrot.lane.b32.xlu0 %v1051, 64
        %v1134 = vpop.permute.xlu0 %1133
        %1135 = vrot.lane.b32.xlu0 %v1100, 64
        %v1136 = vpop.permute.xlu0 %1135
        %1137 = vrot.lane.b32.xlu0 %v1053, 64
        %v1138 = vpop.permute.xlu0 %1137
        %1139 = vrot.lane.b32.xlu0 %v1102, 64
        %v1140 = vpop.permute.xlu0 %1139
        %1141 = vrot.lane.b32.xlu0 %v1055, 64
        %v1142 = vpop.permute.xlu0 %1141
        %1143 = vrot.lane.b32.xlu0 %v1104, 64
        %v1144 = vpop.permute.xlu0 %1143
        %1145 = vrot.lane.b32.xlu0 %v1057, 64
        %v1146 = vpop.permute.xlu0 %1145
        %1147 = vrot.lane.b32.xlu0 %v1106, 64
        %v1148 = vpop.permute.xlu0 %1147
        %1149 = vrot.lane.b32.xlu0 %v1059, 64
        %v1150 = vpop.permute.xlu0 %1149
        %1151 = vrot.lane.b32.xlu0 %v1108, 64
        %v1152 = vpop.permute.xlu0 %1151
        %1153 = vrot.lane.b32.xlu0 %v1061, 64
        %v1154 = vpop.permute.xlu0 %1153
        %1155 = vrot.lane.b32.xlu0 %v1110, 64
        %v1156 = vpop.permute.xlu0 %1155
        %1157 = vrot.lane.b32.xlu0 %v1063, 64
        %v1158 = vpop.permute.xlu0 %1157
        %1159 = vrot.lane.b32.xlu0 %v1112, 64
        %v1160 = vpop.permute.xlu0 %1159
        %1161 = vrot.lane.b32.xlu0 %v1065, 64
        %v1162 = vpop.permute.xlu0 %1161
        %1163 = vrot.lane.b32.xlu0 %v1114, 64
        %v1164 = vpop.permute.xlu0 %1163
        %1165 = vrot.lane.b32.xlu0 %v1067, 64
        %v1166 = vpop.permute.xlu0 %1165
        %1167 = vrot.lane.b32.xlu0 %v1116, 64
        %v1168 = vpop.permute.xlu0 %1167
        %1169 = vrot.lane.b32.xlu0 %v1069, 64
        %v1170 = vpop.permute.xlu0 %1169
        %1171 = vrot.lane.b32.xlu0 %v1118, 64
        %v1172 = vpop.permute.xlu0 %1171
        %1173 = vrot.lane.b32.xlu0 %v1071, 64
        %v1174 = vpop.permute.xlu0 %1173
        %1175 = vrot.lane.b32.xlu0 %v1120, 64
        %v1176 = vpop.permute.xlu0 %1175
        %1177 = vrot.lane.b32.xlu0 %v1073, 64
        %v1178 = vpop.permute.xlu0 %1177
        %1179 = vrot.lane.b32.xlu0 %v1122, 64
        %v1180 = vpop.permute.xlu0 %1179
        %1181 = vrot.lane.b32.xlu0 %v1075, 64
        %v1182 = vpop.permute.xlu0 %1181
        %1183 = vrot.lane.b32.xlu0 %v1124, 64
        %v1184 = vpop.permute.xlu0 %1183
        %1185 = vrot.lane.b32.xlu0 %v1077, 64
        %v1186 = vpop.permute.xlu0 %1185
        %1187 = vrot.lane.b32.xlu0 %v1126, 64
        %v1188 = vpop.permute.xlu0 %1187
        %1189 = vrot.lane.b32.xlu0 %v1079, 64
        %v1190 = vpop.permute.xlu0 %1189
        %1191 = vrot.lane.b32.xlu0 %v1128, 64
        %v1192 = vpop.permute.xlu0 %1191
        %1209 = vrot.lane.b32.xlu0 %v1050, 96
        %v1210 = vpop.permute.xlu0 %1209
        %1211 = vrot.lane.b32.xlu0 %v1052, 96
        %v1212 = vpop.permute.xlu0 %1211
        %1213 = vrot.lane.b32.xlu0 %v1054, 96
        %v1214 = vpop.permute.xlu0 %1213
        %1215 = vrot.lane.b32.xlu0 %v1056, 96
        %v1216 = vpop.permute.xlu0 %1215
        %1217 = vrot.lane.b32.xlu0 %v1058, 96
        %v1218 = vpop.permute.xlu0 %1217
        %1219 = vrot.lane.b32.xlu0 %v1060, 96
        %v1220 = vpop.permute.xlu0 %1219
        %1221 = vrot.lane.b32.xlu0 %v1062, 96
        %v1222 = vpop.permute.xlu0 %1221
        %1223 = vrot.lane.b32.xlu0 %v1064, 96
        %v1224 = vpop.permute.xlu0 %1223
        %1225 = vrot.lane.b32.xlu0 %v1066, 96
        %v1226 = vpop.permute.xlu0 %1225
        %1227 = vrot.lane.b32.xlu0 %v1068, 96
        %v1228 = vpop.permute.xlu0 %1227
        %1229 = vrot.lane.b32.xlu0 %v1070, 96
        %v1230 = vpop.permute.xlu0 %1229
        %1231 = vrot.lane.b32.xlu0 %v1072, 96
        %v1232 = vpop.permute.xlu0 %1231
        %1233 = vrot.lane.b32.xlu0 %v1074, 96
        %v1234 = vpop.permute.xlu0 %1233
        %1235 = vrot.lane.b32.xlu0 %v1076, 96
        %v1236 = vpop.permute.xlu0 %1235
        %1237 = vrot.lane.b32.xlu0 %v1078, 96
        %v1238 = vpop.permute.xlu0 %1237
        %1239 = vrot.lane.b32.xlu0 %v1080, 96
        %v1240 = vpop.permute.xlu0 %1239
        %v1241 = vld [vmem:[%s4] sm:$0xff]
        %v1242 = vld [vmem:[%s4 + $0x8] sm:$0xff]
        %vm1243 = vcmask 261120
        %v1244 = vsel %vm1243, %v1049, 0
        %v1246 = vsel %vm1243, %v1098, 0
        %v1248 = vsel %vm1243, %v1050, 0
        %1250 = vmatprep.subr.mxu0 0.0
        %1251 = vmatpush1.xpose.msra.mxu0 %v1248
        %1252 = vmatprep.subr.mxu0 0.0
        %1253 = vmatpush1.xpose.msra.mxu0 0.0
        %1254 = vmatprep.subr.mxu0 0.0
        %1255 = vmatpush1.xpose.msra.mxu0 0.0
        %1256 = vmatprep.subr.mxu0 0.0
        %1257 = vmatpush1.xpose.msra.mxu0 0.0
        %1258 = vmatprep.subr.mxu0 0.0
        %1259 = vmatpush1.xpose.msra.mxu0 0.0
        %1260 = vmatprep.subr.mxu0 0.0
        %1261 = vmatpush1.xpose.msra.mxu0 0.0
        %1262 = vmatprep.subr.mxu0 0.0
        %1263 = vmatpush1.xpose.msra.mxu0 0.0
        %1264 = vmatprep.subr.mxu0 0.0
        %1265 = vmatpush1.xpose.msra.mxu0 0.0
        %1266 = vmatprep.subr.mxu0 0.0
        %1267 = vmatpush1.xpose.msra.mxu0 0.0
        %1268 = vmatprep.subr.mxu0 0.0
        %1269 = vmatpush1.xpose.msra.mxu0 0.0
        %1270 = vmatprep.subr.mxu0 0.0
        %1271 = vmatpush1.xpose.msra.mxu0 0.0
        %1272 = vmatprep.subr.mxu0 0.0
        %1273 = vmatpush1.xpose.msra.mxu0 0.0
        %1274 = vmatprep.subr.mxu0 0.0
        %1275 = vmatpush1.xpose.msra.mxu0 0.0
        %1276 = vmatprep.subr.mxu0 0.0
        %1277 = vmatpush1.xpose.msra.mxu0 0.0
        %1278 = vmatprep.subr.mxu0 0.0
        %1279 = vmatpush1.xpose.msra.mxu0 0.0
        %1280 = vmatprep.subr.mxu0 0.0
        %1281 = vmatpush1.xpose.msra.mxu0 0.0
        %1282 = vmatprep.subr.mxu0 0.0
        %1283 = vmatpush1.xpose.msra.mxu0 0.0
        %1284 = vmatprep.subr.mxu0 0.0
        %1285 = vmatpush1.xpose.msra.mxu0 0.0
        %1286 = vmatprep.subr.mxu0 0.0
        %1287 = vmatpush1.xpose.msra.mxu0 0.0
        %1288 = vmatprep.subr.mxu0 0.0
        %1289 = vmatpush1.xpose.msra.mxu0 0.0
        %1290 = vmatprep.subr.mxu0 0.0
        %1291 = vmatpush1.xpose.msra.mxu0 0.0
        %1292 = vmatprep.subr.mxu0 0.0
        %1293 = vmatpush1.xpose.msra.mxu0 0.0
        %1294 = vmatprep.subr.mxu0 0.0
        %1295 = vmatpush1.xpose.msra.mxu0 0.0
        %1296 = vmatprep.subr.mxu0 0.0
        %1297 = vmatpush1.xpose.msra.mxu0 0.0
        %1298 = vmatprep.subr.mxu0 0.0
        %1299 = vmatpush1.xpose.msra.mxu0 0.0
        %1300 = vmatprep.subr.mxu0 0.0
        %1301 = vmatpush1.xpose.msra.mxu0 0.0
        %1302 = vmatprep.subr.mxu0 0.0
        %1303 = vmatpush1.xpose.msra.mxu0 0.0
        %1304 = vmatprep.subr.mxu0 0.0
        %1305 = vmatpush1.xpose.msra.mxu0 0.0
        %1306 = vmatprep.subr.mxu0 0.0
        %1307 = vmatpush1.xpose.msra.mxu0 0.0
        %1308 = vmatprep.subr.mxu0 0.0
        %1309 = vmatpush1.xpose.msra.mxu0 0.0
        %1310 = vmatprep.subr.mxu0 0.0
        %1311 = vmatpush1.xpose.msra.mxu0 0.0
        %1312 = vmatprep.subr.mxu0 0.0
        %1313 = vmatpush1.xpose.msra.mxu0 0.0
        %1314 = vmatprep.mubr.f32.mxu0 0.0
        %1315 = vmatmul.mubr.f32.gmra.mrb[0].mxu0 %v1244
        %v1316 = vpop.f32.mrb[0].mxu0
        %v1317 = vadd.f32 %v1241, %v1316
        %v1318 = vpop.f32.mrb[0].mxu0
        %1319 = vmatprep.mubr.f32.mxu0 0.0
        %1320 = vmatmul.mubr.f32.gmra.mrb[0].mxu0 %v1246
        %v1321 = vpop.f32.mrb[0].mxu0
        %v1322 = vadd.f32 %v1242, %v1321
        %v1323 = vpop.f32.mrb[0].mxu0
        %1324 = vdwg.mxu0
        %v1325 = vsel %vm1243, %v1051, 0
        %v1327 = vsel %vm1243, %v1100, 0
        %v1329 = vsel %vm1243, %v1052, 0
        %1331 = vmatprep.subr.mxu0 0.0
        %1332 = vmatpush1.xpose.msra.mxu0 %v1329
        %1333 = vmatprep.subr.mxu0 0.0
        %1334 = vmatpush1.xpose.msra.mxu0 0.0
        %1335 = vmatprep.subr.mxu0 0.0
        %1336 = vmatpush1.xpose.msra.mxu0 0.0
        %1337 = vmatprep.subr.mxu0 0.0
        %1338 = vmatpush1.xpose.msra.mxu0 0.0
        %1339 = vmatprep.subr.mxu0 0.0
        %1340 = vmatpush1.xpose.msra.mxu0 0.0
        %1341 = vmatprep.subr.mxu0 0.0
        %1342 = vmatpush1.xpose.msra.mxu0 0.0
        %1343 = vmatprep.subr.mxu0 0.0
        %1344 = vmatpush1.xpose.msra.mxu0 0.0
        %1345 = vmatprep.subr.mxu0 0.0
        %1346 = vmatpush1.xpose.msra.mxu0 0.0
        %1347 = vmatprep.subr.mxu0 0.0
        %1348 = vmatpush1.xpose.msra.mxu0 0.0
        %1349 = vmatprep.subr.mxu0 0.0
        %1350 = vmatpush1.xpose.msra.mxu0 0.0
        %1351 = vmatprep.subr.mxu0 0.0
        %1352 = vmatpush1.xpose.msra.mxu0 0.0
        %1353 = vmatprep.subr.mxu0 0.0
        %1354 = vmatpush1.xpose.msra.mxu0 0.0
        %1355 = vmatprep.subr.mxu0 0.0
        %1356 = vmatpush1.xpose.msra.mxu0 0.0
        %1357 = vmatprep.subr.mxu0 0.0
        %1358 = vmatpush1.xpose.msra.mxu0 0.0
        %1359 = vmatprep.subr.mxu0 0.0
        %1360 = vmatpush1.xpose.msra.mxu0 0.0
        %1361 = vmatprep.subr.mxu0 0.0
        %1362 = vmatpush1.xpose.msra.mxu0 0.0
        %1363 = vmatprep.subr.mxu0 0.0
        %1364 = vmatpush1.xpose.msra.mxu0 0.0
        %1365 = vmatprep.subr.mxu0 0.0
        %1366 = vmatpush1.xpose.msra.mxu0 0.0
        %1367 = vmatprep.subr.mxu0 0.0
        %1368 = vmatpush1.xpose.msra.mxu0 0.0
        %1369 = vmatprep.subr.mxu0 0.0
        %1370 = vmatpush1.xpose.msra.mxu0 0.0
        %1371 = vmatprep.subr.mxu0 0.0
        %1372 = vmatpush1.xpose.msra.mxu0 0.0
        %1373 = vmatprep.subr.mxu0 0.0
        %1374 = vmatpush1.xpose.msra.mxu0 0.0
        %1375 = vmatprep.subr.mxu0 0.0
        %1376 = vmatpush1.xpose.msra.mxu0 0.0
        %1377 = vmatprep.subr.mxu0 0.0
        %1378 = vmatpush1.xpose.msra.mxu0 0.0
        %1379 = vmatprep.subr.mxu0 0.0
        %1380 = vmatpush1.xpose.msra.mxu0 0.0
        %1381 = vmatprep.subr.mxu0 0.0
        %1382 = vmatpush1.xpose.msra.mxu0 0.0
        %1383 = vmatprep.subr.mxu0 0.0
        %1384 = vmatpush1.xpose.msra.mxu0 0.0
        %1385 = vmatprep.subr.mxu0 0.0
        %1386 = vmatpush1.xpose.msra.mxu0 0.0
        %1387 = vmatprep.subr.mxu0 0.0
        %1388 = vmatpush1.xpose.msra.mxu0 0.0
        %1389 = vmatprep.subr.mxu0 0.0
        %1390 = vmatpush1.xpose.msra.mxu0 0.0
        %1391 = vmatprep.subr.mxu0 0.0
        %1392 = vmatpush1.xpose.msra.mxu0 0.0
        %1393 = vmatprep.subr.mxu0 0.0
        %1394 = vmatpush1.xpose.msra.mxu0 0.0
        %1395 = vmatprep.mubr.f32.mxu0 0.0
        %1396 = vmatmul.mubr.f32.gmra.mrb[0].mxu0 %v1325
        %v1397 = vpop.f32.mrb[0].mxu0
        %v1398 = vadd.f32 %v1241, %v1397
        %v1399 = vpop.f32.mrb[0].mxu0
        %1400 = vmatprep.mubr.f32.mxu0 0.0
        %1401 = vmatmul.mubr.f32.gmra.mrb[0].mxu0 %v1327
        %v1402 = vpop.f32.mrb[0].mxu0
        %v1403 = vadd.f32 %v1242, %v1402
        %v1404 = vpop.f32.mrb[0].mxu0
        %1405 = vdwg.mxu0
        %v1406 = vsel %vm1243, %v1053, 0
        %v1408 = vsel %vm1243, %v1102, 0
        %v1410 = vsel %vm1243, %v1054, 0
        %1412 = vmatprep.subr.mxu0 0.0
        %1413 = vmatpush1.xpose.msra.mxu0 %v1410
        %1414 = vmatprep.subr.mxu0 0.0
        %1415 = vmatpush1.xpose.msra.mxu0 0.0
        %1416 = vmatprep.subr.mxu0 0.0
        %1417 = vmatpush1.xpose.msra.mxu0 0.0
        %1418 = vmatprep.subr.mxu0 0.0
        %1419 = vmatpush1.xpose.msra.mxu0 0.0
        %1420 = vmatprep.subr.mxu0 0.0
        %1421 = vmatpush1.xpose.msra.mxu0 0.0
        %1422 = vmatprep.subr.mxu0 0.0
        %1423 = vmatpush1.xpose.msra.mxu0 0.0
        %1424 = vmatprep.subr.mxu0 0.0
        %1425 = vmatpush1.xpose.msra.mxu0 0.0
        %1426 = vmatprep.subr.mxu0 0.0
        %1427 = vmatpush1.xpose.msra.mxu0 0.0
        %1428 = vmatprep.subr.mxu0 0.0
        %1429 = vmatpush1.xpose.msra.mxu0 0.0
        %1430 = vmatprep.subr.mxu0 0.0
        %1431 = vmatpush1.xpose.msra.mxu0 0.0
        %1432 = vmatprep.subr.mxu0 0.0
        %1433 = vmatpush1.xpose.msra.mxu0 0.0
        %1434 = vmatprep.subr.mxu0 0.0
        %1435 = vmatpush1.xpose.msra.mxu0 0.0
        %1436 = vmatprep.subr.mxu0 0.0
        %1437 = vmatpush1.xpose.msra.mxu0 0.0
        %1438 = vmatprep.subr.mxu0 0.0
        %1439 = vmatpush1.xpose.msra.mxu0 0.0
        %1440 = vmatprep.subr.mxu0 0.0
        %1441 = vmatpush1.xpose.msra.mxu0 0.0
        %1442 = vmatprep.subr.mxu0 0.0
        %1443 = vmatpush1.xpose.msra.mxu0 0.0
        %1444 = vmatprep.subr.mxu0 0.0
        %1445 = vmatpush1.xpose.msra.mxu0 0.0
        %1446 = vmatprep.subr.mxu0 0.0
        %1447 = vmatpush1.xpose.msra.mxu0 0.0
        %1448 = vmatprep.subr.mxu0 0.0
        %1449 = vmatpush1.xpose.msra.mxu0 0.0
        %1450 = vmatprep.subr.mxu0 0.0
        %1451 = vmatpush1.xpose.msra.mxu0 0.0
        %1452 = vmatprep.subr.mxu0 0.0
        %1453 = vmatpush1.xpose.msra.mxu0 0.0
        %1454 = vmatprep.subr.mxu0 0.0
        %1455 = vmatpush1.xpose.msra.mxu0 0.0
        %1456 = vmatprep.subr.mxu0 0.0
        %1457 = vmatpush1.xpose.msra.mxu0 0.0
        %1458 = vmatprep.subr.mxu0 0.0
        %1459 = vmatpush1.xpose.msra.mxu0 0.0
        %1460 = vmatprep.subr.mxu0 0.0
        %1461 = vmatpush1.xpose.msra.mxu0 0.0
        %1462 = vmatprep.subr.mxu0 0.0
        %1463 = vmatpush1.xpose.msra.mxu0 0.0
        %1464 = vmatprep.subr.mxu0 0.0
        %1465 = vmatpush1.xpose.msra.mxu0 0.0
        %1466 = vmatprep.subr.mxu0 0.0
        %1467 = vmatpush1.xpose.msra.mxu0 0.0
        %1468 = vmatprep.subr.mxu0 0.0
        %1469 = vmatpush1.xpose.msra.mxu0 0.0
        %1470 = vmatprep.subr.mxu0 0.0
        %1471 = vmatpush1.xpose.msra.mxu0 0.0
        %1472 = vmatprep.subr.mxu0 0.0
        %1473 = vmatpush1.xpose.msra.mxu0 0.0
        %1474 = vmatprep.subr.mxu0 0.0
        %1475 = vmatpush1.xpose.msra.mxu0 0.0
        %1476 = vmatprep.mubr.f32.mxu0 0.0
        %1477 = vmatmul.mubr.f32.gmra.mrb[0].mxu0 %v1406
        %v1478 = vpop.f32.mrb[0].mxu0
        %v1479 = vadd.f32 %v1241, %v1478
        %v1480 = vpop.f32.mrb[0].mxu0
        %1481 = vmatprep.mubr.f32.mxu0 0.0
        %1482 = vmatmul.mubr.f32.gmra.mrb[0].mxu0 %v1408
        %v1483 = vpop.f32.mrb[0].mxu0
        %v1484 = vadd.f32 %v1242, %v1483
        %v1485 = vpop.f32.mrb[0].mxu0
        %1486 = vdwg.mxu0
        %v1487 = vsel %vm1243, %v1055, 0
        %v1489 = vsel %vm1243, %v1104, 0
        %v1491 = vsel %vm1243, %v1056, 0
        %1493 = vmatprep.subr.mxu0 0.0
        %1494 = vmatpush1.xpose.msra.mxu0 %v1491
        %1495 = vmatprep.subr.mxu0 0.0
        %1496 = vmatpush1.xpose.msra.mxu0 0.0
        %1497 = vmatprep.subr.mxu0 0.0
        %1498 = vmatpush1.xpose.msra.mxu0 0.0
        %1499 = vmatprep.subr.mxu0 0.0
        %1500 = vmatpush1.xpose.msra.mxu0 0.0
        %1501 = vmatprep.subr.mxu0 0.0
        %1502 = vmatpush1.xpose.msra.mxu0 0.0
        %1503 = vmatprep.subr.mxu0 0.0
        %1504 = vmatpush1.xpose.msra.mxu0 0.0
        %1505 = vmatprep.subr.mxu0 0.0
        %1506 = vmatpush1.xpose.msra.mxu0 0.0
        %1507 = vmatprep.subr.mxu0 0.0
        %1508 = vmatpush1.xpose.msra.mxu0 0.0
        %1509 = vmatprep.subr.mxu0 0.0
        %1510 = vmatpush1.xpose.msra.mxu0 0.0
        %1511 = vmatprep.subr.mxu0 0.0
        %1512 = vmatpush1.xpose.msra.mxu0 0.0
        %1513 = vmatprep.subr.mxu0 0.0
        %1514 = vmatpush1.xpose.msra.mxu0 0.0
        %1515 = vmatprep.subr.mxu0 0.0
        %1516 = vmatpush1.xpose.msra.mxu0 0.0
        %1517 = vmatprep.subr.mxu0 0.0
        %1518 = vmatpush1.xpose.msra.mxu0 0.0
        %1519 = vmatprep.subr.mxu0 0.0
        %1520 = vmatpush1.xpose.msra.mxu0 0.0
        %1521 = vmatprep.subr.mxu0 0.0
        %1522 = vmatpush1.xpose.msra.mxu0 0.0
        %1523 = vmatprep.subr.mxu0 0.0
        %1524 = vmatpush1.xpose.msra.mxu0 0.0
        %1525 = vmatprep.subr.mxu0 0.0
        %1526 = vmatpush1.xpose.msra.mxu0 0.0
        %1527 = vmatprep.subr.mxu0 0.0
        %1528 = vmatpush1.xpose.msra.mxu0 0.0
        %1529 = vmatprep.subr.mxu0 0.0
        %1530 = vmatpush1.xpose.msra.mxu0 0.0
        %1531 = vmatprep.subr.mxu0 0.0
        %1532 = vmatpush1.xpose.msra.mxu0 0.0
        %1533 = vmatprep.subr.mxu0 0.0
        %1534 = vmatpush1.xpose.msra.mxu0 0.0
        %1535 = vmatprep.subr.mxu0 0.0
        %1536 = vmatpush1.xpose.msra.mxu0 0.0
        %1537 = vmatprep.subr.mxu0 0.0
        %1538 = vmatpush1.xpose.msra.mxu0 0.0
        %1539 = vmatprep.subr.mxu0 0.0
        %1540 = vmatpush1.xpose.msra.mxu0 0.0
        %1541 = vmatprep.subr.mxu0 0.0
        %1542 = vmatpush1.xpose.msra.mxu0 0.0
        %1543 = vmatprep.subr.mxu0 0.0
        %1544 = vmatpush1.xpose.msra.mxu0 0.0
        %1545 = vmatprep.subr.mxu0 0.0
        %1546 = vmatpush1.xpose.msra.mxu0 0.0
        %1547 = vmatprep.subr.mxu0 0.0
        %1548 = vmatpush1.xpose.msra.mxu0 0.0
        %1549 = vmatprep.subr.mxu0 0.0
        %1550 = vmatpush1.xpose.msra.mxu0 0.0
        %1551 = vmatprep.subr.mxu0 0.0
        %1552 = vmatpush1.xpose.msra.mxu0 0.0
        %1553 = vmatprep.subr.mxu0 0.0
        %1554 = vmatpush1.xpose.msra.mxu0 0.0
        %1555 = vmatprep.subr.mxu0 0.0
        %1556 = vmatpush1.xpose.msra.mxu0 0.0
        %1557 = vmatprep.mubr.f32.mxu0 0.0
        %1558 = vmatmul.mubr.f32.gmra.mrb[0].mxu0 %v1487
        %v1559 = vpop.f32.mrb[0].mxu0
        %v1560 = vadd.f32 %v1241, %v1559
        %v1561 = vpop.f32.mrb[0].mxu0
        %1562 = vmatprep.mubr.f32.mxu0 0.0
        %1563 = vmatmul.mubr.f32.gmra.mrb[0].mxu0 %v1489
        %v1564 = vpop.f32.mrb[0].mxu0
        %v1565 = vadd.f32 %v1242, %v1564
        %v1566 = vpop.f32.mrb[0].mxu0
        %1567 = vdwg.mxu0
        %v1568 = vsel %vm1243, %v1057, 0
        %v1570 = vsel %vm1243, %v1106, 0
        %v1572 = vsel %vm1243, %v1058, 0
        %1574 = vmatprep.subr.mxu0 0.0
        %1575 = vmatpush1.xpose.msra.mxu0 %v1572
        %1576 = vmatprep.subr.mxu0 0.0
        %1577 = vmatpush1.xpose.msra.mxu0 0.0
        %1578 = vmatprep.subr.mxu0 0.0
        %1579 = vmatpush1.xpose.msra.mxu0 0.0
        %1580 = vmatprep.subr.mxu0 0.0
        %1581 = vmatpush1.xpose.msra.mxu0 0.0
        %1582 = vmatprep.subr.mxu0 0.0
        %1583 = vmatpush1.xpose.msra.mxu0 0.0
        %1584 = vmatprep.subr.mxu0 0.0
        %1585 = vmatpush1.xpose.msra.mxu0 0.0
        %1586 = vmatprep.subr.mxu0 0.0
        %1587 = vmatpush1.xpose.msra.mxu0 0.0
        %1588 = vmatprep.subr.mxu0 0.0
        %1589 = vmatpush1.xpose.msra.mxu0 0.0
        %1590 = vmatprep.subr.mxu0 0.0
        %1591 = vmatpush1.xpose.msra.mxu0 0.0
        %1592 = vmatprep.subr.mxu0 0.0
        %1593 = vmatpush1.xpose.msra.mxu0 0.0
        %1594 = vmatprep.subr.mxu0 0.0
        %1595 = vmatpush1.xpose.msra.mxu0 0.0
        %1596 = vmatprep.subr.mxu0 0.0
        %1597 = vmatpush1.xpose.msra.mxu0 0.0
        %1598 = vmatprep.subr.mxu0 0.0
        %1599 = vmatpush1.xpose.msra.mxu0 0.0
        %1600 = vmatprep.subr.mxu0 0.0
        %1601 = vmatpush1.xpose.msra.mxu0 0.0
        %1602 = vmatprep.subr.mxu0 0.0
        %1603 = vmatpush1.xpose.msra.mxu0 0.0
        %1604 = vmatprep.subr.mxu0 0.0
        %1605 = vmatpush1.xpose.msra.mxu0 0.0
        %1606 = vmatprep.subr.mxu0 0.0
        %1607 = vmatpush1.xpose.msra.mxu0 0.0
        %1608 = vmatprep.subr.mxu0 0.0
        %1609 = vmatpush1.xpose.msra.mxu0 0.0
        %1610 = vmatprep.subr.mxu0 0.0
        %1611 = vmatpush1.xpose.msra.mxu0 0.0
        %1612 = vmatprep.subr.mxu0 0.0
        %1613 = vmatpush1.xpose.msra.mxu0 0.0
        %1614 = vmatprep.subr.mxu0 0.0
        %1615 = vmatpush1.xpose.msra.mxu0 0.0
        %1616 = vmatprep.subr.mxu0 0.0
        %1617 = vmatpush1.xpose.msra.mxu0 0.0
        %1618 = vmatprep.subr.mxu0 0.0
        %1619 = vmatpush1.xpose.msra.mxu0 0.0
        %1620 = vmatprep.subr.mxu0 0.0
        %1621 = vmatpush1.xpose.msra.mxu0 0.0
        %1622 = vmatprep.subr.mxu0 0.0
        %1623 = vmatpush1.xpose.msra.mxu0 0.0
        %1624 = vmatprep.subr.mxu0 0.0
        %1625 = vmatpush1.xpose.msra.mxu0 0.0
        %1626 = vmatprep.subr.mxu0 0.0
        %1627 = vmatpush1.xpose.msra.mxu0 0.0
        %1628 = vmatprep.subr.mxu0 0.0
        %1629 = vmatpush1.xpose.msra.mxu0 0.0
        %1630 = vmatprep.subr.mxu0 0.0
        %1631 = vmatpush1.xpose.msra.mxu0 0.0
        %1632 = vmatprep.subr.mxu0 0.0
        %1633 = vmatpush1.xpose.msra.mxu0 0.0
        %1634 = vmatprep.subr.mxu0 0.0
        %1635 = vmatpush1.xpose.msra.mxu0 0.0
        %1636 = vmatprep.subr.mxu0 0.0
        %1637 = vmatpush1.xpose.msra.mxu0 0.0
        %1638 = vmatprep.mubr.f32.mxu0 0.0
        %1639 = vmatmul.mubr.f32.gmra.mrb[0].mxu0 %v1568
        %v1640 = vpop.f32.mrb[0].mxu0
        %v1641 = vadd.f32 %v1241, %v1640
        %v1642 = vpop.f32.mrb[0].mxu0
        %1643 = vmatprep.mubr.f32.mxu0 0.0
        %1644 = vmatmul.mubr.f32.gmra.mrb[0].mxu0 %v1570
        %v1645 = vpop.f32.mrb[0].mxu0
        %v1646 = vadd.f32 %v1242, %v1645
        %v1647 = vpop.f32.mrb[0].mxu0
        %1648 = vdwg.mxu0
        %v1649 = vsel %vm1243, %v1059, 0
        %v1651 = vsel %vm1243, %v1108, 0
        %v1653 = vsel %vm1243, %v1060, 0
        %1655 = vmatprep.subr.mxu0 0.0
        %1656 = vmatpush1.xpose.msra.mxu0 %v1653
        %1657 = vmatprep.subr.mxu0 0.0
        %1658 = vmatpush1.xpose.msra.mxu0 0.0
        %1659 = vmatprep.subr.mxu0 0.0
        %1660 = vmatpush1.xpose.msra.mxu0 0.0
        %1661 = vmatprep.subr.mxu0 0.0
        %1662 = vmatpush1.xpose.msra.mxu0 0.0
        %1663 = vmatprep.subr.mxu0 0.0
        %1664 = vmatpush1.xpose.msra.mxu0 0.0
        %1665 = vmatprep.subr.mxu0 0.0
        %1666 = vmatpush1.xpose.msra.mxu0 0.0
        %1667 = vmatprep.subr.mxu0 0.0
        %1668 = vmatpush1.xpose.msra.mxu0 0.0
        %1669 = vmatprep.subr.mxu0 0.0
        %1670 = vmatpush1.xpose.msra.mxu0 0.0
        %1671 = vmatprep.subr.mxu0 0.0
        %1672 = vmatpush1.xpose.msra.mxu0 0.0
        %1673 = vmatprep.subr.mxu0 0.0
        %1674 = vmatpush1.xpose.msra.mxu0 0.0
        %1675 = vmatprep.subr.mxu0 0.0
        %1676 = vmatpush1.xpose.msra.mxu0 0.0
        %1677 = vmatprep.subr.mxu0 0.0
        %1678 = vmatpush1.xpose.msra.mxu0 0.0
        %1679 = vmatprep.subr.mxu0 0.0
        %1680 = vmatpush1.xpose.msra.mxu0 0.0
        %1681 = vmatprep.subr.mxu0 0.0
        %1682 = vmatpush1.xpose.msra.mxu0 0.0
        %1683 = vmatprep.subr.mxu0 0.0
        %1684 = vmatpush1.xpose.msra.mxu0 0.0
        %1685 = vmatprep.subr.mxu0 0.0
        %1686 = vmatpush1.xpose.msra.mxu0 0.0
        %1687 = vmatprep.subr.mxu0 0.0
        %1688 = vmatpush1.xpose.msra.mxu0 0.0
        %1689 = vmatprep.subr.mxu0 0.0
        %1690 = vmatpush1.xpose.msra.mxu0 0.0
        %1691 = vmatprep.subr.mxu0 0.0
        %1692 = vmatpush1.xpose.msra.mxu0 0.0
        %1693 = vmatprep.subr.mxu0 0.0
        %1694 = vmatpush1.xpose.msra.mxu0 0.0
        %1695 = vmatprep.subr.mxu0 0.0
        %1696 = vmatpush1.xpose.msra.mxu0 0.0
        %1697 = vmatprep.subr.mxu0 0.0
        %1698 = vmatpush1.xpose.msra.mxu0 0.0
        %1699 = vmatprep.subr.mxu0 0.0
        %1700 = vmatpush1.xpose.msra.mxu0 0.0
        %1701 = vmatprep.subr.mxu0 0.0
        %1702 = vmatpush1.xpose.msra.mxu0 0.0
        %1703 = vmatprep.subr.mxu0 0.0
        %1704 = vmatpush1.xpose.msra.mxu0 0.0
        %1705 = vmatprep.subr.mxu0 0.0
        %1706 = vmatpush1.xpose.msra.mxu0 0.0
        %1707 = vmatprep.subr.mxu0 0.0
        %1708 = vmatpush1.xpose.msra.mxu0 0.0
        %1709 = vmatprep.subr.mxu0 0.0
        %1710 = vmatpush1.xpose.msra.mxu0 0.0
        %1711 = vmatprep.subr.mxu0 0.0
        %1712 = vmatpush1.xpose.msra.mxu0 0.0
        %1713 = vmatprep.subr.mxu0 0.0
        %1714 = vmatpush1.xpose.msra.mxu0 0.0
        %1715 = vmatprep.subr.mxu0 0.0
        %1716 = vmatpush1.xpose.msra.mxu0 0.0
        %1717 = vmatprep.subr.mxu0 0.0
        %1718 = vmatpush1.xpose.msra.mxu0 0.0
        %1719 = vmatprep.mubr.f32.mxu0 0.0
        %1720 = vmatmul.mubr.f32.gmra.mrb[0].mxu0 %v1649
        %v1721 = vpop.f32.mrb[0].mxu0
        %v1722 = vadd.f32 %v1241, %v1721
        %v1723 = vpop.f32.mrb[0].mxu0
        %1724 = vmatprep.mubr.f32.mxu0 0.0
        %1725 = vmatmul.mubr.f32.gmra.mrb[0].mxu0 %v1651
        %v1726 = vpop.f32.mrb[0].mxu0
        %v1727 = vadd.f32 %v1242, %v1726
        %v1728 = vpop.f32.mrb[0].mxu0
        %1729 = vdwg.mxu0
        %v1730 = vsel %vm1243, %v1061, 0
        %v1732 = vsel %vm1243, %v1110, 0
        %v1734 = vsel %vm1243, %v1062, 0
        %1736 = vmatprep.subr.mxu0 0.0
        %1737 = vmatpush1.xpose.msra.mxu0 %v1734
        %1738 = vmatprep.subr.mxu0 0.0
        %1739 = vmatpush1.xpose.msra.mxu0 0.0
        %1740 = vmatprep.subr.mxu0 0.0
        %1741 = vmatpush1.xpose.msra.mxu0 0.0
        %1742 = vmatprep.subr.mxu0 0.0
        %1743 = vmatpush1.xpose.msra.mxu0 0.0
        %1744 = vmatprep.subr.mxu0 0.0
        %1745 = vmatpush1.xpose.msra.mxu0 0.0
        %1746 = vmatprep.subr.mxu0 0.0
        %1747 = vmatpush1.xpose.msra.mxu0 0.0
        %1748 = vmatprep.subr.mxu0 0.0
        %1749 = vmatpush1.xpose.msra.mxu0 0.0
        %1750 = vmatprep.subr.mxu0 0.0
        %1751 = vmatpush1.xpose.msra.mxu0 0.0
        %1752 = vmatprep.subr.mxu0 0.0
        %1753 = vmatpush1.xpose.msra.mxu0 0.0
        %1754 = vmatprep.subr.mxu0 0.0
        %1755 = vmatpush1.xpose.msra.mxu0 0.0
        %1756 = vmatprep.subr.mxu0 0.0
        %1757 = vmatpush1.xpose.msra.mxu0 0.0
        %1758 = vmatprep.subr.mxu0 0.0
        %1759 = vmatpush1.xpose.msra.mxu0 0.0
        %1760 = vmatprep.subr.mxu0 0.0
        %1761 = vmatpush1.xpose.msra.mxu0 0.0
        %1762 = vmatprep.subr.mxu0 0.0
        %1763 = vmatpush1.xpose.msra.mxu0 0.0
        %1764 = vmatprep.subr.mxu0 0.0
        %1765 = vmatpush1.xpose.msra.mxu0 0.0
        %1766 = vmatprep.subr.mxu0 0.0
        %1767 = vmatpush1.xpose.msra.mxu0 0.0
        %1768 = vmatprep.subr.mxu0 0.0
        %1769 = vmatpush1.xpose.msra.mxu0 0.0
        %1770 = vmatprep.subr.mxu0 0.0
        %1771 = vmatpush1.xpose.msra.mxu0 0.0
        %1772 = vmatprep.subr.mxu0 0.0
        %1773 = vmatpush1.xpose.msra.mxu0 0.0
        %1774 = vmatprep.subr.mxu0 0.0
        %1775 = vmatpush1.xpose.msra.mxu0 0.0
        %1776 = vmatprep.subr.mxu0 0.0
        %1777 = vmatpush1.xpose.msra.mxu0 0.0
        %1778 = vmatprep.subr.mxu0 0.0
        %1779 = vmatpush1.xpose.msra.mxu0 0.0
        %1780 = vmatprep.subr.mxu0 0.0
        %1781 = vmatpush1.xpose.msra.mxu0 0.0
        %1782 = vmatprep.subr.mxu0 0.0
        %1783 = vmatpush1.xpose.msra.mxu0 0.0
        %1784 = vmatprep.subr.mxu0 0.0
        %1785 = vmatpush1.xpose.msra.mxu0 0.0
        %1786 = vmatprep.subr.mxu0 0.0
        %1787 = vmatpush1.xpose.msra.mxu0 0.0
        %1788 = vmatprep.subr.mxu0 0.0
        %1789 = vmatpush1.xpose.msra.mxu0 0.0
        %1790 = vmatprep.subr.mxu0 0.0
        %1791 = vmatpush1.xpose.msra.mxu0 0.0
        %1792 = vmatprep.subr.mxu0 0.0
        %1793 = vmatpush1.xpose.msra.mxu0 0.0
        %1794 = vmatprep.subr.mxu0 0.0
        %1795 = vmatpush1.xpose.msra.mxu0 0.0
        %1796 = vmatprep.subr.mxu0 0.0
        %1797 = vmatpush1.xpose.msra.mxu0 0.0
        %1798 = vmatprep.subr.mxu0 0.0
        %1799 = vmatpush1.xpose.msra.mxu0 0.0
        %1800 = vmatprep.mubr.f32.mxu0 0.0
        %1801 = vmatmul.mubr.f32.gmra.mrb[0].mxu0 %v1730
        %v1802 = vpop.f32.mrb[0].mxu0
        %v1803 = vadd.f32 %v1241, %v1802
        %v1804 = vpop.f32.mrb[0].mxu0
        %1805 = vmatprep.mubr.f32.mxu0 0.0
        %1806 = vmatmul.mubr.f32.gmra.mrb[0].mxu0 %v1732
        %v1807 = vpop.f32.mrb[0].mxu0
        %v1808 = vadd.f32 %v1242, %v1807
        %v1809 = vpop.f32.mrb[0].mxu0
        %1810 = vdwg.mxu0
        %v1811 = vsel %vm1243, %v1063, 0
        %v1813 = vsel %vm1243, %v1112, 0
        %v1815 = vsel %vm1243, %v1064, 0
        %1817 = vmatprep.subr.mxu0 0.0
        %1818 = vmatpush1.xpose.msra.mxu0 %v1815
        %1819 = vmatprep.subr.mxu0 0.0
        %1820 = vmatpush1.xpose.msra.mxu0 0.0
        %1821 = vmatprep.subr.mxu0 0.0
        %1822 = vmatpush1.xpose.msra.mxu0 0.0
        %1823 = vmatprep.subr.mxu0 0.0
        %1824 = vmatpush1.xpose.msra.mxu0 0.0
        %1825 = vmatprep.subr.mxu0 0.0
        %1826 = vmatpush1.xpose.msra.mxu0 0.0
        %1827 = vmatprep.subr.mxu0 0.0
        %1828 = vmatpush1.xpose.msra.mxu0 0.0
        %1829 = vmatprep.subr.mxu0 0.0
        %1830 = vmatpush1.xpose.msra.mxu0 0.0
        %1831 = vmatprep.subr.mxu0 0.0
        %1832 = vmatpush1.xpose.msra.mxu0 0.0
        %1833 = vmatprep.subr.mxu0 0.0
        %1834 = vmatpush1.xpose.msra.mxu0 0.0
        %1835 = vmatprep.subr.mxu0 0.0
        %1836 = vmatpush1.xpose.msra.mxu0 0.0
        %1837 = vmatprep.subr.mxu0 0.0
        %1838 = vmatpush1.xpose.msra.mxu0 0.0
        %1839 = vmatprep.subr.mxu0 0.0
        %1840 = vmatpush1.xpose.msra.mxu0 0.0
        %1841 = vmatprep.subr.mxu0 0.0
        %1842 = vmatpush1.xpose.msra.mxu0 0.0
        %1843 = vmatprep.subr.mxu0 0.0
        %1844 = vmatpush1.xpose.msra.mxu0 0.0
        %1845 = vmatprep.subr.mxu0 0.0
        %1846 = vmatpush1.xpose.msra.mxu0 0.0
        %1847 = vmatprep.subr.mxu0 0.0
        %1848 = vmatpush1.xpose.msra.mxu0 0.0
        %1849 = vmatprep.subr.mxu0 0.0
        %1850 = vmatpush1.xpose.msra.mxu0 0.0
        %1851 = vmatprep.subr.mxu0 0.0
        %1852 = vmatpush1.xpose.msra.mxu0 0.0
        %1853 = vmatprep.subr.mxu0 0.0
        %1854 = vmatpush1.xpose.msra.mxu0 0.0
        %1855 = vmatprep.subr.mxu0 0.0
        %1856 = vmatpush1.xpose.msra.mxu0 0.0
        %1857 = vmatprep.subr.mxu0 0.0
        %1858 = vmatpush1.xpose.msra.mxu0 0.0
        %1859 = vmatprep.subr.mxu0 0.0
        %1860 = vmatpush1.xpose.msra.mxu0 0.0
        %1861 = vmatprep.subr.mxu0 0.0
        %1862 = vmatpush1.xpose.msra.mxu0 0.0
        %1863 = vmatprep.subr.mxu0 0.0
        %1864 = vmatpush1.xpose.msra.mxu0 0.0
        %1865 = vmatprep.subr.mxu0 0.0
        %1866 = vmatpush1.xpose.msra.mxu0 0.0
        %1867 = vmatprep.subr.mxu0 0.0
        %1868 = vmatpush1.xpose.msra.mxu0 0.0
        %1869 = vmatprep.subr.mxu0 0.0
        %1870 = vmatpush1.xpose.msra.mxu0 0.0
        %1871 = vmatprep.subr.mxu0 0.0
        %1872 = vmatpush1.xpose.msra.mxu0 0.0
        %1873 = vmatprep.subr.mxu0 0.0
        %1874 = vmatpush1.xpose.msra.mxu0 0.0
        %1875 = vmatprep.subr.mxu0 0.0
        %1876 = vmatpush1.xpose.msra.mxu0 0.0
        %1877 = vmatprep.subr.mxu0 0.0
        %1878 = vmatpush1.xpose.msra.mxu0 0.0
        %1879 = vmatprep.subr.mxu0 0.0
        %1880 = vmatpush1.xpose.msra.mxu0 0.0
        %1881 = vmatprep.mubr.f32.mxu0 0.0
        %1882 = vmatmul.mubr.f32.gmra.mrb[0].mxu0 %v1811
        %v1883 = vpop.f32.mrb[0].mxu0
        %v1884 = vadd.f32 %v1241, %v1883
        %v1885 = vpop.f32.mrb[0].mxu0
        %1886 = vmatprep.mubr.f32.mxu0 0.0
        %1887 = vmatmul.mubr.f32.gmra.mrb[0].mxu0 %v1813
        %v1888 = vpop.f32.mrb[0].mxu0
        %v1889 = vadd.f32 %v1242, %v1888
        %v1890 = vpop.f32.mrb[0].mxu0
        %1891 = vdwg.mxu0
        %v1892 = vsel %vm1243, %v1065, 0
        %v1894 = vsel %vm1243, %v1114, 0
        %v1896 = vsel %vm1243, %v1066, 0
        %1898 = vmatprep.subr.mxu0 0.0
        %1899 = vmatpush1.xpose.msra.mxu0 %v1896
        %1900 = vmatprep.subr.mxu0 0.0
        %1901 = vmatpush1.xpose.msra.mxu0 0.0
        %1902 = vmatprep.subr.mxu0 0.0
        %1903 = vmatpush1.xpose.msra.mxu0 0.0
        %1904 = vmatprep.subr.mxu0 0.0
        %1905 = vmatpush1.xpose.msra.mxu0 0.0
        %1906 = vmatprep.subr.mxu0 0.0
        %1907 = vmatpush1.xpose.msra.mxu0 0.0
        %1908 = vmatprep.subr.mxu0 0.0
        %1909 = vmatpush1.xpose.msra.mxu0 0.0
        %1910 = vmatprep.subr.mxu0 0.0
        %1911 = vmatpush1.xpose.msra.mxu0 0.0
        %1912 = vmatprep.subr.mxu0 0.0
        %1913 = vmatpush1.xpose.msra.mxu0 0.0
        %1914 = vmatprep.subr.mxu0 0.0
        %1915 = vmatpush1.xpose.msra.mxu0 0.0
        %1916 = vmatprep.subr.mxu0 0.0
        %1917 = vmatpush1.xpose.msra.mxu0 0.0
        %1918 = vmatprep.subr.mxu0 0.0
        %1919 = vmatpush1.xpose.msra.mxu0 0.0
        %1920 = vmatprep.subr.mxu0 0.0
        %1921 = vmatpush1.xpose.msra.mxu0 0.0
        %1922 = vmatprep.subr.mxu0 0.0
        %1923 = vmatpush1.xpose.msra.mxu0 0.0
        %1924 = vmatprep.subr.mxu0 0.0
        %1925 = vmatpush1.xpose.msra.mxu0 0.0
        %1926 = vmatprep.subr.mxu0 0.0
        %1927 = vmatpush1.xpose.msra.mxu0 0.0
        %1928 = vmatprep.subr.mxu0 0.0
        %1929 = vmatpush1.xpose.msra.mxu0 0.0
        %1930 = vmatprep.subr.mxu0 0.0
        %1931 = vmatpush1.xpose.msra.mxu0 0.0
        %1932 = vmatprep.subr.mxu0 0.0
        %1933 = vmatpush1.xpose.msra.mxu0 0.0
        %1934 = vmatprep.subr.mxu0 0.0
        %1935 = vmatpush1.xpose.msra.mxu0 0.0
        %1936 = vmatprep.subr.mxu0 0.0
        %1937 = vmatpush1.xpose.msra.mxu0 0.0
        %1938 = vmatprep.subr.mxu0 0.0
        %1939 = vmatpush1.xpose.msra.mxu0 0.0
        %1940 = vmatprep.subr.mxu0 0.0
        %1941 = vmatpush1.xpose.msra.mxu0 0.0
        %1942 = vmatprep.subr.mxu0 0.0
        %1943 = vmatpush1.xpose.msra.mxu0 0.0
        %1944 = vmatprep.subr.mxu0 0.0
        %1945 = vmatpush1.xpose.msra.mxu0 0.0
        %1946 = vmatprep.subr.mxu0 0.0
        %1947 = vmatpush1.xpose.msra.mxu0 0.0
        %1948 = vmatprep.subr.mxu0 0.0
        %1949 = vmatpush1.xpose.msra.mxu0 0.0
        %1950 = vmatprep.subr.mxu0 0.0
        %1951 = vmatpush1.xpose.msra.mxu0 0.0
        %1952 = vmatprep.subr.mxu0 0.0
        %1953 = vmatpush1.xpose.msra.mxu0 0.0
        %1954 = vmatprep.subr.mxu0 0.0
        %1955 = vmatpush1.xpose.msra.mxu0 0.0
        %1956 = vmatprep.subr.mxu0 0.0
        %1957 = vmatpush1.xpose.msra.mxu0 0.0
        %1958 = vmatprep.subr.mxu0 0.0
        %1959 = vmatpush1.xpose.msra.mxu0 0.0
        %1960 = vmatprep.subr.mxu0 0.0
        %1961 = vmatpush1.xpose.msra.mxu0 0.0
        %1962 = vmatprep.mubr.f32.mxu0 0.0
        %1963 = vmatmul.mubr.f32.gmra.mrb[0].mxu0 %v1892
        %v1964 = vpop.f32.mrb[0].mxu0
        %v1965 = vadd.f32 %v1241, %v1964
        %v1966 = vpop.f32.mrb[0].mxu0
        %1967 = vmatprep.mubr.f32.mxu0 0.0
        %1968 = vmatmul.mubr.f32.gmra.mrb[0].mxu0 %v1894
        %v1969 = vpop.f32.mrb[0].mxu0
        %v1970 = vadd.f32 %v1242, %v1969
        %v1971 = vpop.f32.mrb[0].mxu0
        %1972 = vdwg.mxu0
        %v1973 = vsel %vm1243, %v1067, 0
        %v1975 = vsel %vm1243, %v1116, 0
        %v1977 = vsel %vm1243, %v1068, 0
        %1979 = vmatprep.subr.mxu0 0.0
        %1980 = vmatpush1.xpose.msra.mxu0 %v1977
        %1981 = vmatprep.subr.mxu0 0.0
        %1982 = vmatpush1.xpose.msra.mxu0 0.0
        %1983 = vmatprep.subr.mxu0 0.0
        %1984 = vmatpush1.xpose.msra.mxu0 0.0
        %1985 = vmatprep.subr.mxu0 0.0
        %1986 = vmatpush1.xpose.msra.mxu0 0.0
        %1987 = vmatprep.subr.mxu0 0.0
        %1988 = vmatpush1.xpose.msra.mxu0 0.0
        %1989 = vmatprep.subr.mxu0 0.0
        %1990 = vmatpush1.xpose.msra.mxu0 0.0
        %1991 = vmatprep.subr.mxu0 0.0
        %1992 = vmatpush1.xpose.msra.mxu0 0.0
        %1993 = vmatprep.subr.mxu0 0.0
        %1994 = vmatpush1.xpose.msra.mxu0 0.0
        %1995 = vmatprep.subr.mxu0 0.0
        %1996 = vmatpush1.xpose.msra.mxu0 0.0
        %1997 = vmatprep.subr.mxu0 0.0
        %1998 = vmatpush1.xpose.msra.mxu0 0.0
        %1999 = vmatprep.subr.mxu0 0.0
        %2000 = vmatpush1.xpose.msra.mxu0 0.0
        %2001 = vmatprep.subr.mxu0 0.0
        %2002 = vmatpush1.xpose.msra.mxu0 0.0
        %2003 = vmatprep.subr.mxu0 0.0
        %2004 = vmatpush1.xpose.msra.mxu0 0.0
        %2005 = vmatprep.subr.mxu0 0.0
        %2006 = vmatpush1.xpose.msra.mxu0 0.0
        %2007 = vmatprep.subr.mxu0 0.0
        %2008 = vmatpush1.xpose.msra.mxu0 0.0
        %2009 = vmatprep.subr.mxu0 0.0
        %2010 = vmatpush1.xpose.msra.mxu0 0.0
        %2011 = vmatprep.subr.mxu0 0.0
        %2012 = vmatpush1.xpose.msra.mxu0 0.0
        %2013 = vmatprep.subr.mxu0 0.0
        %2014 = vmatpush1.xpose.msra.mxu0 0.0
        %2015 = vmatprep.subr.mxu0 0.0
        %2016 = vmatpush1.xpose.msra.mxu0 0.0
        %2017 = vmatprep.subr.mxu0 0.0
        %2018 = vmatpush1.xpose.msra.mxu0 0.0
        %2019 = vmatprep.subr.mxu0 0.0
        %2020 = vmatpush1.xpose.msra.mxu0 0.0
        %2021 = vmatprep.subr.mxu0 0.0
        %2022 = vmatpush1.xpose.msra.mxu0 0.0
        %2023 = vmatprep.subr.mxu0 0.0
        %2024 = vmatpush1.xpose.msra.mxu0 0.0
        %2025 = vmatprep.subr.mxu0 0.0
        %2026 = vmatpush1.xpose.msra.mxu0 0.0
        %2027 = vmatprep.subr.mxu0 0.0
        %2028 = vmatpush1.xpose.msra.mxu0 0.0
        %2029 = vmatprep.subr.mxu0 0.0
        %2030 = vmatpush1.xpose.msra.mxu0 0.0
        %2031 = vmatprep.subr.mxu0 0.0
        %2032 = vmatpush1.xpose.msra.mxu0 0.0
        %2033 = vmatprep.subr.mxu0 0.0
        %2034 = vmatpush1.xpose.msra.mxu0 0.0
        %2035 = vmatprep.subr.mxu0 0.0
        %2036 = vmatpush1.xpose.msra.mxu0 0.0
        %2037 = vmatprep.subr.mxu0 0.0
        %2038 = vmatpush1.xpose.msra.mxu0 0.0
        %2039 = vmatprep.subr.mxu0 0.0
        %2040 = vmatpush1.xpose.msra.mxu0 0.0
        %2041 = vmatprep.subr.mxu0 0.0
        %2042 = vmatpush1.xpose.msra.mxu0 0.0
        %2043 = vmatprep.mubr.f32.mxu0 0.0
        %2044 = vmatmul.mubr.f32.gmra.mrb[0].mxu0 %v1973
        %v2045 = vpop.f32.mrb[0].mxu0
        %v2046 = vadd.f32 %v1241, %v2045
        %v2047 = vpop.f32.mrb[0].mxu0
        %2048 = vmatprep.mubr.f32.mxu0 0.0
        %2049 = vmatmul.mubr.f32.gmra.mrb[0].mxu0 %v1975
        %v2050 = vpop.f32.mrb[0].mxu0
        %v2051 = vadd.f32 %v1242, %v2050
        %v2052 = vpop.f32.mrb[0].mxu0
        %2053 = vdwg.mxu0
        %v2054 = vsel %vm1243, %v1069, 0
        %v2056 = vsel %vm1243, %v1118, 0
        %v2058 = vsel %vm1243, %v1070, 0
        %2060 = vmatprep.subr.mxu0 0.0
        %2061 = vmatpush1.xpose.msra.mxu0 %v2058
        %2062 = vmatprep.subr.mxu0 0.0
        %2063 = vmatpush1.xpose.msra.mxu0 0.0
        %2064 = vmatprep.subr.mxu0 0.0
        %2065 = vmatpush1.xpose.msra.mxu0 0.0
        %2066 = vmatprep.subr.mxu0 0.0
        %2067 = vmatpush1.xpose.msra.mxu0 0.0
        %2068 = vmatprep.subr.mxu0 0.0
        %2069 = vmatpush1.xpose.msra.mxu0 0.0
        %2070 = vmatprep.subr.mxu0 0.0
        %2071 = vmatpush1.xpose.msra.mxu0 0.0
        %2072 = vmatprep.subr.mxu0 0.0
        %2073 = vmatpush1.xpose.msra.mxu0 0.0
        %2074 = vmatprep.subr.mxu0 0.0
        %2075 = vmatpush1.xpose.msra.mxu0 0.0
        %2076 = vmatprep.subr.mxu0 0.0
        %2077 = vmatpush1.xpose.msra.mxu0 0.0
        %2078 = vmatprep.subr.mxu0 0.0
        %2079 = vmatpush1.xpose.msra.mxu0 0.0
        %2080 = vmatprep.subr.mxu0 0.0
        %2081 = vmatpush1.xpose.msra.mxu0 0.0
        %2082 = vmatprep.subr.mxu0 0.0
        %2083 = vmatpush1.xpose.msra.mxu0 0.0
        %2084 = vmatprep.subr.mxu0 0.0
        %2085 = vmatpush1.xpose.msra.mxu0 0.0
        %2086 = vmatprep.subr.mxu0 0.0
        %2087 = vmatpush1.xpose.msra.mxu0 0.0
        %2088 = vmatprep.subr.mxu0 0.0
        %2089 = vmatpush1.xpose.msra.mxu0 0.0
        %2090 = vmatprep.subr.mxu0 0.0
        %2091 = vmatpush1.xpose.msra.mxu0 0.0
        %2092 = vmatprep.subr.mxu0 0.0
        %2093 = vmatpush1.xpose.msra.mxu0 0.0
        %2094 = vmatprep.subr.mxu0 0.0
        %2095 = vmatpush1.xpose.msra.mxu0 0.0
        %2096 = vmatprep.subr.mxu0 0.0
        %2097 = vmatpush1.xpose.msra.mxu0 0.0
        %2098 = vmatprep.subr.mxu0 0.0
        %2099 = vmatpush1.xpose.msra.mxu0 0.0
        %2100 = vmatprep.subr.mxu0 0.0
        %2101 = vmatpush1.xpose.msra.mxu0 0.0
        %2102 = vmatprep.subr.mxu0 0.0
        %2103 = vmatpush1.xpose.msra.mxu0 0.0
        %2104 = vmatprep.subr.mxu0 0.0
        %2105 = vmatpush1.xpose.msra.mxu0 0.0
        %2106 = vmatprep.subr.mxu0 0.0
        %2107 = vmatpush1.xpose.msra.mxu0 0.0
        %2108 = vmatprep.subr.mxu0 0.0
        %2109 = vmatpush1.xpose.msra.mxu0 0.0
        %2110 = vmatprep.subr.mxu0 0.0
        %2111 = vmatpush1.xpose.msra.mxu0 0.0
        %2112 = vmatprep.subr.mxu0 0.0
        %2113 = vmatpush1.xpose.msra.mxu0 0.0
        %2114 = vmatprep.subr.mxu0 0.0
        %2115 = vmatpush1.xpose.msra.mxu0 0.0
        %2116 = vmatprep.subr.mxu0 0.0
        %2117 = vmatpush1.xpose.msra.mxu0 0.0
        %2118 = vmatprep.subr.mxu0 0.0
        %2119 = vmatpush1.xpose.msra.mxu0 0.0
        %2120 = vmatprep.subr.mxu0 0.0
        %2121 = vmatpush1.xpose.msra.mxu0 0.0
        %2122 = vmatprep.subr.mxu0 0.0
        %2123 = vmatpush1.xpose.msra.mxu0 0.0
        %2124 = vmatprep.mubr.f32.mxu0 0.0
        %2125 = vmatmul.mubr.f32.gmra.mrb[0].mxu0 %v2054
        %v2126 = vpop.f32.mrb[0].mxu0
        %v2127 = vadd.f32 %v1241, %v2126
        %v2128 = vpop.f32.mrb[0].mxu0
        %2129 = vmatprep.mubr.f32.mxu0 0.0
        %2130 = vmatmul.mubr.f32.gmra.mrb[0].mxu0 %v2056
        %v2131 = vpop.f32.mrb[0].mxu0
        %v2132 = vadd.f32 %v1242, %v2131
        %v2133 = vpop.f32.mrb[0].mxu0
        %2134 = vdwg.mxu0
        %v2135 = vsel %vm1243, %v1071, 0
        %v2137 = vsel %vm1243, %v1120, 0
        %v2139 = vsel %vm1243, %v1072, 0
        %2141 = vmatprep.subr.mxu0 0.0
        %2142 = vmatpush1.xpose.msra.mxu0 %v2139
        %2143 = vmatprep.subr.mxu0 0.0
        %2144 = vmatpush1.xpose.msra.mxu0 0.0
        %2145 = vmatprep.subr.mxu0 0.0
        %2146 = vmatpush1.xpose.msra.mxu0 0.0
        %2147 = vmatprep.subr.mxu0 0.0
        %2148 = vmatpush1.xpose.msra.mxu0 0.0
        %2149 = vmatprep.subr.mxu0 0.0
        %2150 = vmatpush1.xpose.msra.mxu0 0.0
        %2151 = vmatprep.subr.mxu0 0.0
        %2152 = vmatpush1.xpose.msra.mxu0 0.0
        %2153 = vmatprep.subr.mxu0 0.0
        %2154 = vmatpush1.xpose.msra.mxu0 0.0
        %2155 = vmatprep.subr.mxu0 0.0
        %2156 = vmatpush1.xpose.msra.mxu0 0.0
        %2157 = vmatprep.subr.mxu0 0.0
        %2158 = vmatpush1.xpose.msra.mxu0 0.0
        %2159 = vmatprep.subr.mxu0 0.0
        %2160 = vmatpush1.xpose.msra.mxu0 0.0
        %2161 = vmatprep.subr.mxu0 0.0
        %2162 = vmatpush1.xpose.msra.mxu0 0.0
        %2163 = vmatprep.subr.mxu0 0.0
        %2164 = vmatpush1.xpose.msra.mxu0 0.0
        %2165 = vmatprep.subr.mxu0 0.0
        %2166 = vmatpush1.xpose.msra.mxu0 0.0
        %2167 = vmatprep.subr.mxu0 0.0
        %2168 = vmatpush1.xpose.msra.mxu0 0.0
        %2169 = vmatprep.subr.mxu0 0.0
        %2170 = vmatpush1.xpose.msra.mxu0 0.0
        %2171 = vmatprep.subr.mxu0 0.0
        %2172 = vmatpush1.xpose.msra.mxu0 0.0
        %2173 = vmatprep.subr.mxu0 0.0
        %2174 = vmatpush1.xpose.msra.mxu0 0.0
        %2175 = vmatprep.subr.mxu0 0.0
        %2176 = vmatpush1.xpose.msra.mxu0 0.0
        %2177 = vmatprep.subr.mxu0 0.0
        %2178 = vmatpush1.xpose.msra.mxu0 0.0
        %2179 = vmatprep.subr.mxu0 0.0
        %2180 = vmatpush1.xpose.msra.mxu0 0.0
        %2181 = vmatprep.subr.mxu0 0.0
        %2182 = vmatpush1.xpose.msra.mxu0 0.0
        %2183 = vmatprep.subr.mxu0 0.0
        %2184 = vmatpush1.xpose.msra.mxu0 0.0
        %2185 = vmatprep.subr.mxu0 0.0
        %2186 = vmatpush1.xpose.msra.mxu0 0.0
        %2187 = vmatprep.subr.mxu0 0.0
        %2188 = vmatpush1.xpose.msra.mxu0 0.0
        %2189 = vmatprep.subr.mxu0 0.0
        %2190 = vmatpush1.xpose.msra.mxu0 0.0
        %2191 = vmatprep.subr.mxu0 0.0
        %2192 = vmatpush1.xpose.msra.mxu0 0.0
        %2193 = vmatprep.subr.mxu0 0.0
        %2194 = vmatpush1.xpose.msra.mxu0 0.0
        %2195 = vmatprep.subr.mxu0 0.0
        %2196 = vmatpush1.xpose.msra.mxu0 0.0
        %2197 = vmatprep.subr.mxu0 0.0
        %2198 = vmatpush1.xpose.msra.mxu0 0.0
        %2199 = vmatprep.subr.mxu0 0.0
        %2200 = vmatpush1.xpose.msra.mxu0 0.0
        %2201 = vmatprep.subr.mxu0 0.0
        %2202 = vmatpush1.xpose.msra.mxu0 0.0
        %2203 = vmatprep.subr.mxu0 0.0
        %2204 = vmatpush1.xpose.msra.mxu0 0.0
        %2205 = vmatprep.mubr.f32.mxu0 0.0
        %2206 = vmatmul.mubr.f32.gmra.mrb[0].mxu0 %v2135
        %v2207 = vpop.f32.mrb[0].mxu0
        %v2208 = vadd.f32 %v1241, %v2207
        %v2209 = vpop.f32.mrb[0].mxu0
        %2210 = vmatprep.mubr.f32.mxu0 0.0
        %2211 = vmatmul.mubr.f32.gmra.mrb[0].mxu0 %v2137
        %v2212 = vpop.f32.mrb[0].mxu0
        %v2213 = vadd.f32 %v1242, %v2212
        %v2214 = vpop.f32.mrb[0].mxu0
        %2215 = vdwg.mxu0
        %v2216 = vsel %vm1243, %v1073, 0
        %v2218 = vsel %vm1243, %v1122, 0
        %v2220 = vsel %vm1243, %v1074, 0
        %2222 = vmatprep.subr.mxu0 0.0
        %2223 = vmatpush1.xpose.msra.mxu0 %v2220
        %2224 = vmatprep.subr.mxu0 0.0
        %2225 = vmatpush1.xpose.msra.mxu0 0.0
        %2226 = vmatprep.subr.mxu0 0.0
        %2227 = vmatpush1.xpose.msra.mxu0 0.0
        %2228 = vmatprep.subr.mxu0 0.0
        %2229 = vmatpush1.xpose.msra.mxu0 0.0
        %2230 = vmatprep.subr.mxu0 0.0
        %2231 = vmatpush1.xpose.msra.mxu0 0.0
        %2232 = vmatprep.subr.mxu0 0.0
        %2233 = vmatpush1.xpose.msra.mxu0 0.0
        %2234 = vmatprep.subr.mxu0 0.0
        %2235 = vmatpush1.xpose.msra.mxu0 0.0
        %2236 = vmatprep.subr.mxu0 0.0
        %2237 = vmatpush1.xpose.msra.mxu0 0.0
        %2238 = vmatprep.subr.mxu0 0.0
        %2239 = vmatpush1.xpose.msra.mxu0 0.0
        %2240 = vmatprep.subr.mxu0 0.0
        %2241 = vmatpush1.xpose.msra.mxu0 0.0
        %2242 = vmatprep.subr.mxu0 0.0
        %2243 = vmatpush1.xpose.msra.mxu0 0.0
        %2244 = vmatprep.subr.mxu0 0.0
        %2245 = vmatpush1.xpose.msra.mxu0 0.0
        %2246 = vmatprep.subr.mxu0 0.0
        %2247 = vmatpush1.xpose.msra.mxu0 0.0
        %2248 = vmatprep.subr.mxu0 0.0
        %2249 = vmatpush1.xpose.msra.mxu0 0.0
        %2250 = vmatprep.subr.mxu0 0.0
        %2251 = vmatpush1.xpose.msra.mxu0 0.0
        %2252 = vmatprep.subr.mxu0 0.0
        %2253 = vmatpush1.xpose.msra.mxu0 0.0
        %2254 = vmatprep.subr.mxu0 0.0
        %2255 = vmatpush1.xpose.msra.mxu0 0.0
        %2256 = vmatprep.subr.mxu0 0.0
        %2257 = vmatpush1.xpose.msra.mxu0 0.0
        %2258 = vmatprep.subr.mxu0 0.0
        %2259 = vmatpush1.xpose.msra.mxu0 0.0
        %2260 = vmatprep.subr.mxu0 0.0
        %2261 = vmatpush1.xpose.msra.mxu0 0.0
        %2262 = vmatprep.subr.mxu0 0.0
        %2263 = vmatpush1.xpose.msra.mxu0 0.0
        %2264 = vmatprep.subr.mxu0 0.0
        %2265 = vmatpush1.xpose.msra.mxu0 0.0
        %2266 = vmatprep.subr.mxu0 0.0
        %2267 = vmatpush1.xpose.msra.mxu0 0.0
        %2268 = vmatprep.subr.mxu0 0.0
        %2269 = vmatpush1.xpose.msra.mxu0 0.0
        %2270 = vmatprep.subr.mxu0 0.0
        %2271 = vmatpush1.xpose.msra.mxu0 0.0
        %2272 = vmatprep.subr.mxu0 0.0
        %2273 = vmatpush1.xpose.msra.mxu0 0.0
        %2274 = vmatprep.subr.mxu0 0.0
        %2275 = vmatpush1.xpose.msra.mxu0 0.0
        %2276 = vmatprep.subr.mxu0 0.0
        %2277 = vmatpush1.xpose.msra.mxu0 0.0
        %2278 = vmatprep.subr.mxu0 0.0
        %2279 = vmatpush1.xpose.msra.mxu0 0.0
        %2280 = vmatprep.subr.mxu0 0.0
        %2281 = vmatpush1.xpose.msra.mxu0 0.0
        %2282 = vmatprep.subr.mxu0 0.0
        %2283 = vmatpush1.xpose.msra.mxu0 0.0
        %2284 = vmatprep.subr.mxu0 0.0
        %2285 = vmatpush1.xpose.msra.mxu0 0.0
        %2286 = vmatprep.mubr.f32.mxu0 0.0
        %2287 = vmatmul.mubr.f32.gmra.mrb[0].mxu0 %v2216
        %v2288 = vpop.f32.mrb[0].mxu0
        %v2289 = vadd.f32 %v1241, %v2288
        %v2290 = vpop.f32.mrb[0].mxu0
        %2291 = vmatprep.mubr.f32.mxu0 0.0
        %2292 = vmatmul.mubr.f32.gmra.mrb[0].mxu0 %v2218
        %v2293 = vpop.f32.mrb[0].mxu0
        %v2294 = vadd.f32 %v1242, %v2293
        %v2295 = vpop.f32.mrb[0].mxu0
        %2296 = vdwg.mxu0
        %v2297 = vsel %vm1243, %v1075, 0
        %v2299 = vsel %vm1243, %v1124, 0
        %v2301 = vsel %vm1243, %v1076, 0
        %2303 = vmatprep.subr.mxu0 0.0
        %2304 = vmatpush1.xpose.msra.mxu0 %v2301
        %2305 = vmatprep.subr.mxu0 0.0
        %2306 = vmatpush1.xpose.msra.mxu0 0.0
        %2307 = vmatprep.subr.mxu0 0.0
        %2308 = vmatpush1.xpose.msra.mxu0 0.0
        %2309 = vmatprep.subr.mxu0 0.0
        %2310 = vmatpush1.xpose.msra.mxu0 0.0
        %2311 = vmatprep.subr.mxu0 0.0
        %2312 = vmatpush1.xpose.msra.mxu0 0.0
        %2313 = vmatprep.subr.mxu0 0.0
        %2314 = vmatpush1.xpose.msra.mxu0 0.0
        %2315 = vmatprep.subr.mxu0 0.0
        %2316 = vmatpush1.xpose.msra.mxu0 0.0
        %2317 = vmatprep.subr.mxu0 0.0
        %2318 = vmatpush1.xpose.msra.mxu0 0.0
        %2319 = vmatprep.subr.mxu0 0.0
        %2320 = vmatpush1.xpose.msra.mxu0 0.0
        %2321 = vmatprep.subr.mxu0 0.0
        %2322 = vmatpush1.xpose.msra.mxu0 0.0
        %2323 = vmatprep.subr.mxu0 0.0
        %2324 = vmatpush1.xpose.msra.mxu0 0.0
        %2325 = vmatprep.subr.mxu0 0.0
        %2326 = vmatpush1.xpose.msra.mxu0 0.0
        %2327 = vmatprep.subr.mxu0 0.0
        %2328 = vmatpush1.xpose.msra.mxu0 0.0
        %2329 = vmatprep.subr.mxu0 0.0
        %2330 = vmatpush1.xpose.msra.mxu0 0.0
        %2331 = vmatprep.subr.mxu0 0.0
        %2332 = vmatpush1.xpose.msra.mxu0 0.0
        %2333 = vmatprep.subr.mxu0 0.0
        %2334 = vmatpush1.xpose.msra.mxu0 0.0
        %2335 = vmatprep.subr.mxu0 0.0
        %2336 = vmatpush1.xpose.msra.mxu0 0.0
        %2337 = vmatprep.subr.mxu0 0.0
        %2338 = vmatpush1.xpose.msra.mxu0 0.0
        %2339 = vmatprep.subr.mxu0 0.0
        %2340 = vmatpush1.xpose.msra.mxu0 0.0
        %2341 = vmatprep.subr.mxu0 0.0
        %2342 = vmatpush1.xpose.msra.mxu0 0.0
        %2343 = vmatprep.subr.mxu0 0.0
        %2344 = vmatpush1.xpose.msra.mxu0 0.0
        %2345 = vmatprep.subr.mxu0 0.0
        %2346 = vmatpush1.xpose.msra.mxu0 0.0
        %2347 = vmatprep.subr.mxu0 0.0
        %2348 = vmatpush1.xpose.msra.mxu0 0.0
        %2349 = vmatprep.subr.mxu0 0.0
        %2350 = vmatpush1.xpose.msra.mxu0 0.0
        %2351 = vmatprep.subr.mxu0 0.0
        %2352 = vmatpush1.xpose.msra.mxu0 0.0
        %2353 = vmatprep.subr.mxu0 0.0
        %2354 = vmatpush1.xpose.msra.mxu0 0.0
        %2355 = vmatprep.subr.mxu0 0.0
        %2356 = vmatpush1.xpose.msra.mxu0 0.0
        %2357 = vmatprep.subr.mxu0 0.0
        %2358 = vmatpush1.xpose.msra.mxu0 0.0
        %2359 = vmatprep.subr.mxu0 0.0
        %2360 = vmatpush1.xpose.msra.mxu0 0.0
        %2361 = vmatprep.subr.mxu0 0.0
        %2362 = vmatpush1.xpose.msra.mxu0 0.0
        %2363 = vmatprep.subr.mxu0 0.0
        %2364 = vmatpush1.xpose.msra.mxu0 0.0
        %2365 = vmatprep.subr.mxu0 0.0
        %2366 = vmatpush1.xpose.msra.mxu0 0.0
        %2367 = vmatprep.mubr.f32.mxu0 0.0
        %2368 = vmatmul.mubr.f32.gmra.mrb[0].mxu0 %v2297
        %v2369 = vpop.f32.mrb[0].mxu0
        %v2370 = vadd.f32 %v1241, %v2369
        %v2371 = vpop.f32.mrb[0].mxu0
        %2372 = vmatprep.mubr.f32.mxu0 0.0
        %2373 = vmatmul.mubr.f32.gmra.mrb[0].mxu0 %v2299
        %v2374 = vpop.f32.mrb[0].mxu0
        %v2375 = vadd.f32 %v1242, %v2374
        %v2376 = vpop.f32.mrb[0].mxu0
        %2377 = vdwg.mxu0
        %v2378 = vsel %vm1243, %v1077, 0
        %v2380 = vsel %vm1243, %v1126, 0
        %v2382 = vsel %vm1243, %v1078, 0
        %2384 = vmatprep.subr.mxu0 0.0
        %2385 = vmatpush1.xpose.msra.mxu0 %v2382
        %2386 = vmatprep.subr.mxu0 0.0
        %2387 = vmatpush1.xpose.msra.mxu0 0.0
        %2388 = vmatprep.subr.mxu0 0.0
        %2389 = vmatpush1.xpose.msra.mxu0 0.0
        %2390 = vmatprep.subr.mxu0 0.0
        %2391 = vmatpush1.xpose.msra.mxu0 0.0
        %2392 = vmatprep.subr.mxu0 0.0
        %2393 = vmatpush1.xpose.msra.mxu0 0.0
        %2394 = vmatprep.subr.mxu0 0.0
        %2395 = vmatpush1.xpose.msra.mxu0 0.0
        %2396 = vmatprep.subr.mxu0 0.0
        %2397 = vmatpush1.xpose.msra.mxu0 0.0
        %2398 = vmatprep.subr.mxu0 0.0
        %2399 = vmatpush1.xpose.msra.mxu0 0.0
        %2400 = vmatprep.subr.mxu0 0.0
        %2401 = vmatpush1.xpose.msra.mxu0 0.0
        %2402 = vmatprep.subr.mxu0 0.0
        %2403 = vmatpush1.xpose.msra.mxu0 0.0
        %2404 = vmatprep.subr.mxu0 0.0
        %2405 = vmatpush1.xpose.msra.mxu0 0.0
        %2406 = vmatprep.subr.mxu0 0.0
        %2407 = vmatpush1.xpose.msra.mxu0 0.0
        %2408 = vmatprep.subr.mxu0 0.0
        %2409 = vmatpush1.xpose.msra.mxu0 0.0
        %2410 = vmatprep.subr.mxu0 0.0
        %2411 = vmatpush1.xpose.msra.mxu0 0.0
        %2412 = vmatprep.subr.mxu0 0.0
        %2413 = vmatpush1.xpose.msra.mxu0 0.0
        %2414 = vmatprep.subr.mxu0 0.0
        %2415 = vmatpush1.xpose.msra.mxu0 0.0
        %2416 = vmatprep.subr.mxu0 0.0
        %2417 = vmatpush1.xpose.msra.mxu0 0.0
        %2418 = vmatprep.subr.mxu0 0.0
        %2419 = vmatpush1.xpose.msra.mxu0 0.0
        %2420 = vmatprep.subr.mxu0 0.0
        %2421 = vmatpush1.xpose.msra.mxu0 0.0
        %2422 = vmatprep.subr.mxu0 0.0
        %2423 = vmatpush1.xpose.msra.mxu0 0.0
        %2424 = vmatprep.subr.mxu0 0.0
        %2425 = vmatpush1.xpose.msra.mxu0 0.0
        %2426 = vmatprep.subr.mxu0 0.0
        %2427 = vmatpush1.xpose.msra.mxu0 0.0
        %2428 = vmatprep.subr.mxu0 0.0
        %2429 = vmatpush1.xpose.msra.mxu0 0.0
        %2430 = vmatprep.subr.mxu0 0.0
        %2431 = vmatpush1.xpose.msra.mxu0 0.0
        %2432 = vmatprep.subr.mxu0 0.0
        %2433 = vmatpush1.xpose.msra.mxu0 0.0
        %2434 = vmatprep.subr.mxu0 0.0
        %2435 = vmatpush1.xpose.msra.mxu0 0.0
        %2436 = vmatprep.subr.mxu0 0.0
        %2437 = vmatpush1.xpose.msra.mxu0 0.0
        %2438 = vmatprep.subr.mxu0 0.0
        %2439 = vmatpush1.xpose.msra.mxu0 0.0
        %2440 = vmatprep.subr.mxu0 0.0
        %2441 = vmatpush1.xpose.msra.mxu0 0.0
        %2442 = vmatprep.subr.mxu0 0.0
        %2443 = vmatpush1.xpose.msra.mxu0 0.0
        %2444 = vmatprep.subr.mxu0 0.0
        %2445 = vmatpush1.xpose.msra.mxu0 0.0
        %2446 = vmatprep.subr.mxu0 0.0
        %2447 = vmatpush1.xpose.msra.mxu0 0.0
        %2448 = vmatprep.mubr.f32.mxu0 0.0
        %2449 = vmatmul.mubr.f32.gmra.mrb[0].mxu0 %v2378
        %v2450 = vpop.f32.mrb[0].mxu0
        %v2451 = vadd.f32 %v1241, %v2450
        %v2452 = vpop.f32.mrb[0].mxu0
        %2453 = vmatprep.mubr.f32.mxu0 0.0
        %2454 = vmatmul.mubr.f32.gmra.mrb[0].mxu0 %v2380
        %v2455 = vpop.f32.mrb[0].mxu0
        %v2456 = vadd.f32 %v1242, %v2455
        %v2457 = vpop.f32.mrb[0].mxu0
        %2458 = vdwg.mxu0
        %v2459 = vsel %vm1243, %v1079, 0
        %v2461 = vsel %vm1243, %v1128, 0
        %v2463 = vsel %vm1243, %v1080, 0
        %2465 = vmatprep.subr.mxu0 0.0
        %2466 = vmatpush1.xpose.msra.mxu0 %v2463
        %2467 = vmatprep.subr.mxu0 0.0
        %2468 = vmatpush1.xpose.msra.mxu0 0.0
        %2469 = vmatprep.subr.mxu0 0.0
        %2470 = vmatpush1.xpose.msra.mxu0 0.0
        %2471 = vmatprep.subr.mxu0 0.0
        %2472 = vmatpush1.xpose.msra.mxu0 0.0
        %2473 = vmatprep.subr.mxu0 0.0
        %2474 = vmatpush1.xpose.msra.mxu0 0.0
        %2475 = vmatprep.subr.mxu0 0.0
        %2476 = vmatpush1.xpose.msra.mxu0 0.0
        %2477 = vmatprep.subr.mxu0 0.0
        %2478 = vmatpush1.xpose.msra.mxu0 0.0
        %2479 = vmatprep.subr.mxu0 0.0
        %2480 = vmatpush1.xpose.msra.mxu0 0.0
        %2481 = vmatprep.subr.mxu0 0.0
        %2482 = vmatpush1.xpose.msra.mxu0 0.0
        %2483 = vmatprep.subr.mxu0 0.0
        %2484 = vmatpush1.xpose.msra.mxu0 0.0
        %2485 = vmatprep.subr.mxu0 0.0
        %2486 = vmatpush1.xpose.msra.mxu0 0.0
        %2487 = vmatprep.subr.mxu0 0.0
        %2488 = vmatpush1.xpose.msra.mxu0 0.0
        %2489 = vmatprep.subr.mxu0 0.0
        %2490 = vmatpush1.xpose.msra.mxu0 0.0
        %2491 = vmatprep.subr.mxu0 0.0
        %2492 = vmatpush1.xpose.msra.mxu0 0.0
        %2493 = vmatprep.subr.mxu0 0.0
        %2494 = vmatpush1.xpose.msra.mxu0 0.0
        %2495 = vmatprep.subr.mxu0 0.0
        %2496 = vmatpush1.xpose.msra.mxu0 0.0
        %2497 = vmatprep.subr.mxu0 0.0
        %2498 = vmatpush1.xpose.msra.mxu0 0.0
        %2499 = vmatprep.subr.mxu0 0.0
        %2500 = vmatpush1.xpose.msra.mxu0 0.0
        %2501 = vmatprep.subr.mxu0 0.0
        %2502 = vmatpush1.xpose.msra.mxu0 0.0
        %2503 = vmatprep.subr.mxu0 0.0
        %2504 = vmatpush1.xpose.msra.mxu0 0.0
        %2505 = vmatprep.subr.mxu0 0.0
        %2506 = vmatpush1.xpose.msra.mxu0 0.0
        %2507 = vmatprep.subr.mxu0 0.0
        %2508 = vmatpush1.xpose.msra.mxu0 0.0
        %2509 = vmatprep.subr.mxu0 0.0
        %2510 = vmatpush1.xpose.msra.mxu0 0.0
        %2511 = vmatprep.subr.mxu0 0.0
        %2512 = vmatpush1.xpose.msra.mxu0 0.0
        %2513 = vmatprep.subr.mxu0 0.0
        %2514 = vmatpush1.xpose.msra.mxu0 0.0
        %2515 = vmatprep.subr.mxu0 0.0
        %2516 = vmatpush1.xpose.msra.mxu0 0.0
        %2517 = vmatprep.subr.mxu0 0.0
        %2518 = vmatpush1.xpose.msra.mxu0 0.0
        %2519 = vmatprep.subr.mxu0 0.0
        %2520 = vmatpush1.xpose.msra.mxu0 0.0
        %2521 = vmatprep.subr.mxu0 0.0
        %2522 = vmatpush1.xpose.msra.mxu0 0.0
        %2523 = vmatprep.subr.mxu0 0.0
        %2524 = vmatpush1.xpose.msra.mxu0 0.0
        %2525 = vmatprep.subr.mxu0 0.0
        %2526 = vmatpush1.xpose.msra.mxu0 0.0
        %2527 = vmatprep.subr.mxu0 0.0
        %2528 = vmatpush1.xpose.msra.mxu0 0.0
        %2529 = vmatprep.mubr.f32.mxu0 0.0
        %2530 = vmatmul.mubr.f32.gmra.mrb[0].mxu0 %v2459
        %v2531 = vpop.f32.mrb[0].mxu0
        %v2532 = vadd.f32 %v1241, %v2531
        %v2533 = vpop.f32.mrb[0].mxu0
        %2534 = vmatprep.mubr.f32.mxu0 0.0
        %2535 = vmatmul.mubr.f32.gmra.mrb[0].mxu0 %v2461
        %v2536 = vpop.f32.mrb[0].mxu0
        %v2537 = vadd.f32 %v1242, %v2536
        %v2538 = vpop.f32.mrb[0].mxu0
        %2539 = vdwg.mxu0
        %v2540 = vsel %vm1243, %v1130, 0
        %v2542 = vsel %vm1243, %v1132, 0
        %v2544 = vsel %vm1243, %v1210, 0
        %2546 = vmatprep.subr.mxu0 0.0
        %2547 = vmatpush1.xpose.msra.mxu0 %v2544
        %2548 = vmatprep.subr.mxu0 0.0
        %2549 = vmatpush1.xpose.msra.mxu0 0.0
        %2550 = vmatprep.subr.mxu0 0.0
        %2551 = vmatpush1.xpose.msra.mxu0 0.0
        %2552 = vmatprep.subr.mxu0 0.0
        %2553 = vmatpush1.xpose.msra.mxu0 0.0
        %2554 = vmatprep.subr.mxu0 0.0
        %2555 = vmatpush1.xpose.msra.mxu0 0.0
        %2556 = vmatprep.subr.mxu0 0.0
        %2557 = vmatpush1.xpose.msra.mxu0 0.0
        %2558 = vmatprep.subr.mxu0 0.0
        %2559 = vmatpush1.xpose.msra.mxu0 0.0
        %2560 = vmatprep.subr.mxu0 0.0
        %2561 = vmatpush1.xpose.msra.mxu0 0.0
        %2562 = vmatprep.subr.mxu0 0.0
        %2563 = vmatpush1.xpose.msra.mxu0 0.0
        %2564 = vmatprep.subr.mxu0 0.0
        %2565 = vmatpush1.xpose.msra.mxu0 0.0
        %2566 = vmatprep.subr.mxu0 0.0
        %2567 = vmatpush1.xpose.msra.mxu0 0.0
        %2568 = vmatprep.subr.mxu0 0.0
        %2569 = vmatpush1.xpose.msra.mxu0 0.0
        %2570 = vmatprep.subr.mxu0 0.0
        %2571 = vmatpush1.xpose.msra.mxu0 0.0
        %2572 = vmatprep.subr.mxu0 0.0
        %2573 = vmatpush1.xpose.msra.mxu0 0.0
        %2574 = vmatprep.subr.mxu0 0.0
        %2575 = vmatpush1.xpose.msra.mxu0 0.0
        %2576 = vmatprep.subr.mxu0 0.0
        %2577 = vmatpush1.xpose.msra.mxu0 0.0
        %2578 = vmatprep.subr.mxu0 0.0
        %2579 = vmatpush1.xpose.msra.mxu0 0.0
        %2580 = vmatprep.subr.mxu0 0.0
        %2581 = vmatpush1.xpose.msra.mxu0 0.0
        %2582 = vmatprep.subr.mxu0 0.0
        %2583 = vmatpush1.xpose.msra.mxu0 0.0
        %2584 = vmatprep.subr.mxu0 0.0
        %2585 = vmatpush1.xpose.msra.mxu0 0.0
        %2586 = vmatprep.subr.mxu0 0.0
        %2587 = vmatpush1.xpose.msra.mxu0 0.0
        %2588 = vmatprep.subr.mxu0 0.0
        %2589 = vmatpush1.xpose.msra.mxu0 0.0
        %2590 = vmatprep.subr.mxu0 0.0
        %2591 = vmatpush1.xpose.msra.mxu0 0.0
        %2592 = vmatprep.subr.mxu0 0.0
        %2593 = vmatpush1.xpose.msra.mxu0 0.0
        %2594 = vmatprep.subr.mxu0 0.0
        %2595 = vmatpush1.xpose.msra.mxu0 0.0
        %2596 = vmatprep.subr.mxu0 0.0
        %2597 = vmatpush1.xpose.msra.mxu0 0.0
        %2598 = vmatprep.subr.mxu0 0.0
        %2599 = vmatpush1.xpose.msra.mxu0 0.0
        %2600 = vmatprep.subr.mxu0 0.0
        %2601 = vmatpush1.xpose.msra.mxu0 0.0
        %2602 = vmatprep.subr.mxu0 0.0
        %2603 = vmatpush1.xpose.msra.mxu0 0.0
        %2604 = vmatprep.subr.mxu0 0.0
        %2605 = vmatpush1.xpose.msra.mxu0 0.0
        %2606 = vmatprep.subr.mxu0 0.0
        %2607 = vmatpush1.xpose.msra.mxu0 0.0
        %2608 = vmatprep.subr.mxu0 0.0
        %2609 = vmatpush1.xpose.msra.mxu0 0.0
        %2610 = vmatprep.mubr.f32.mxu0 0.0
        %2611 = vmatmul.mubr.f32.gmra.mrb[0].mxu0 %v2540
        %v2612 = vpop.f32.mrb[0].mxu0
        %v2613 = vadd.f32 %v1241, %v2612
        %v2614 = vpop.f32.mrb[0].mxu0
        %2615 = vmatprep.mubr.f32.mxu0 0.0
        %2616 = vmatmul.mubr.f32.gmra.mrb[0].mxu0 %v2542
        %v2617 = vpop.f32.mrb[0].mxu0
        %v2618 = vadd.f32 %v1242, %v2617
        %v2619 = vpop.f32.mrb[0].mxu0
        %2620 = vdwg.mxu0
        %v2621 = vsel %vm1243, %v1134, 0
        %v2623 = vsel %vm1243, %v1136, 0
        %v2625 = vsel %vm1243, %v1212, 0
        %2627 = vmatprep.subr.mxu0 0.0
        %2628 = vmatpush1.xpose.msra.mxu0 %v2625
        %2629 = vmatprep.subr.mxu0 0.0
        %2630 = vmatpush1.xpose.msra.mxu0 0.0
        %2631 = vmatprep.subr.mxu0 0.0
        %2632 = vmatpush1.xpose.msra.mxu0 0.0
        %2633 = vmatprep.subr.mxu0 0.0
        %2634 = vmatpush1.xpose.msra.mxu0 0.0
        %2635 = vmatprep.subr.mxu0 0.0
        %2636 = vmatpush1.xpose.msra.mxu0 0.0
        %2637 = vmatprep.subr.mxu0 0.0
        %2638 = vmatpush1.xpose.msra.mxu0 0.0
        %2639 = vmatprep.subr.mxu0 0.0
        %2640 = vmatpush1.xpose.msra.mxu0 0.0
        %2641 = vmatprep.subr.mxu0 0.0
        %2642 = vmatpush1.xpose.msra.mxu0 0.0
        %2643 = vmatprep.subr.mxu0 0.0
        %2644 = vmatpush1.xpose.msra.mxu0 0.0
        %2645 = vmatprep.subr.mxu0 0.0
        %2646 = vmatpush1.xpose.msra.mxu0 0.0
        %2647 = vmatprep.subr.mxu0 0.0
        %2648 = vmatpush1.xpose.msra.mxu0 0.0
        %2649 = vmatprep.subr.mxu0 0.0
        %2650 = vmatpush1.xpose.msra.mxu0 0.0
        %2651 = vmatprep.subr.mxu0 0.0
        %2652 = vmatpush1.xpose.msra.mxu0 0.0
        %2653 = vmatprep.subr.mxu0 0.0
        %2654 = vmatpush1.xpose.msra.mxu0 0.0
        %2655 = vmatprep.subr.mxu0 0.0
        %2656 = vmatpush1.xpose.msra.mxu0 0.0
        %2657 = vmatprep.subr.mxu0 0.0
        %2658 = vmatpush1.xpose.msra.mxu0 0.0
        %2659 = vmatprep.subr.mxu0 0.0
        %2660 = vmatpush1.xpose.msra.mxu0 0.0
        %2661 = vmatprep.subr.mxu0 0.0
        %2662 = vmatpush1.xpose.msra.mxu0 0.0
        %2663 = vmatprep.subr.mxu0 0.0
        %2664 = vmatpush1.xpose.msra.mxu0 0.0
        %2665 = vmatprep.subr.mxu0 0.0
        %2666 = vmatpush1.xpose.msra.mxu0 0.0
        %2667 = vmatprep.subr.mxu0 0.0
        %2668 = vmatpush1.xpose.msra.mxu0 0.0
        %2669 = vmatprep.subr.mxu0 0.0
        %2670 = vmatpush1.xpose.msra.mxu0 0.0
        %2671 = vmatprep.subr.mxu0 0.0
        %2672 = vmatpush1.xpose.msra.mxu0 0.0
        %2673 = vmatprep.subr.mxu0 0.0
        %2674 = vmatpush1.xpose.msra.mxu0 0.0
        %2675 = vmatprep.subr.mxu0 0.0
        %2676 = vmatpush1.xpose.msra.mxu0 0.0
        %2677 = vmatprep.subr.mxu0 0.0
        %2678 = vmatpush1.xpose.msra.mxu0 0.0
        %2679 = vmatprep.subr.mxu0 0.0
        %2680 = vmatpush1.xpose.msra.mxu0 0.0
        %2681 = vmatprep.subr.mxu0 0.0
        %2682 = vmatpush1.xpose.msra.mxu0 0.0
        %2683 = vmatprep.subr.mxu0 0.0
        %2684 = vmatpush1.xpose.msra.mxu0 0.0
        %2685 = vmatprep.subr.mxu0 0.0
        %2686 = vmatpush1.xpose.msra.mxu0 0.0
        %2687 = vmatprep.subr.mxu0 0.0
        %2688 = vmatpush1.xpose.msra.mxu0 0.0
        %2689 = vmatprep.subr.mxu0 0.0
        %2690 = vmatpush1.xpose.msra.mxu0 0.0
        %2691 = vmatprep.mubr.f32.mxu0 0.0
        %2692 = vmatmul.mubr.f32.gmra.mrb[0].mxu0 %v2621
        %v2693 = vpop.f32.mrb[0].mxu0
        %v2694 = vadd.f32 %v1241, %v2693
        %v2695 = vpop.f32.mrb[0].mxu0
        %2696 = vmatprep.mubr.f32.mxu0 0.0
        %2697 = vmatmul.mubr.f32.gmra.mrb[0].mxu0 %v2623
        %v2698 = vpop.f32.mrb[0].mxu0
        %v2699 = vadd.f32 %v1242, %v2698
        %v2700 = vpop.f32.mrb[0].mxu0
        %2701 = vdwg.mxu0
        %v2702 = vsel %vm1243, %v1138, 0
        %v2704 = vsel %vm1243, %v1140, 0
        %v2706 = vsel %vm1243, %v1214, 0
        %2708 = vmatprep.subr.mxu0 0.0
        %2709 = vmatpush1.xpose.msra.mxu0 %v2706
        %2710 = vmatprep.subr.mxu0 0.0
        %2711 = vmatpush1.xpose.msra.mxu0 0.0
        %2712 = vmatprep.subr.mxu0 0.0
        %2713 = vmatpush1.xpose.msra.mxu0 0.0
        %2714 = vmatprep.subr.mxu0 0.0
        %2715 = vmatpush1.xpose.msra.mxu0 0.0
        %2716 = vmatprep.subr.mxu0 0.0
        %2717 = vmatpush1.xpose.msra.mxu0 0.0
        %2718 = vmatprep.subr.mxu0 0.0
        %2719 = vmatpush1.xpose.msra.mxu0 0.0
        %2720 = vmatprep.subr.mxu0 0.0
        %2721 = vmatpush1.xpose.msra.mxu0 0.0
        %2722 = vmatprep.subr.mxu0 0.0
        %2723 = vmatpush1.xpose.msra.mxu0 0.0
        %2724 = vmatprep.subr.mxu0 0.0
        %2725 = vmatpush1.xpose.msra.mxu0 0.0
        %2726 = vmatprep.subr.mxu0 0.0
        %2727 = vmatpush1.xpose.msra.mxu0 0.0
        %2728 = vmatprep.subr.mxu0 0.0
        %2729 = vmatpush1.xpose.msra.mxu0 0.0
        %2730 = vmatprep.subr.mxu0 0.0
        %2731 = vmatpush1.xpose.msra.mxu0 0.0
        %2732 = vmatprep.subr.mxu0 0.0
        %2733 = vmatpush1.xpose.msra.mxu0 0.0
        %2734 = vmatprep.subr.mxu0 0.0
        %2735 = vmatpush1.xpose.msra.mxu0 0.0
        %2736 = vmatprep.subr.mxu0 0.0
        %2737 = vmatpush1.xpose.msra.mxu0 0.0
        %2738 = vmatprep.subr.mxu0 0.0
        %2739 = vmatpush1.xpose.msra.mxu0 0.0
        %2740 = vmatprep.subr.mxu0 0.0
        %2741 = vmatpush1.xpose.msra.mxu0 0.0
        %2742 = vmatprep.subr.mxu0 0.0
        %2743 = vmatpush1.xpose.msra.mxu0 0.0
        %2744 = vmatprep.subr.mxu0 0.0
        %2745 = vmatpush1.xpose.msra.mxu0 0.0
        %2746 = vmatprep.subr.mxu0 0.0
        %2747 = vmatpush1.xpose.msra.mxu0 0.0
        %2748 = vmatprep.subr.mxu0 0.0
        %2749 = vmatpush1.xpose.msra.mxu0 0.0
        %2750 = vmatprep.subr.mxu0 0.0
        %2751 = vmatpush1.xpose.msra.mxu0 0.0
        %2752 = vmatprep.subr.mxu0 0.0
        %2753 = vmatpush1.xpose.msra.mxu0 0.0
        %2754 = vmatprep.subr.mxu0 0.0
        %2755 = vmatpush1.xpose.msra.mxu0 0.0
        %2756 = vmatprep.subr.mxu0 0.0
        %2757 = vmatpush1.xpose.msra.mxu0 0.0
        %2758 = vmatprep.subr.mxu0 0.0
        %2759 = vmatpush1.xpose.msra.mxu0 0.0
        %2760 = vmatprep.subr.mxu0 0.0
        %2761 = vmatpush1.xpose.msra.mxu0 0.0
        %2762 = vmatprep.subr.mxu0 0.0
        %2763 = vmatpush1.xpose.msra.mxu0 0.0
        %2764 = vmatprep.subr.mxu0 0.0
        %2765 = vmatpush1.xpose.msra.mxu0 0.0
        %2766 = vmatprep.subr.mxu0 0.0
        %2767 = vmatpush1.xpose.msra.mxu0 0.0
        %2768 = vmatprep.subr.mxu0 0.0
        %2769 = vmatpush1.xpose.msra.mxu0 0.0
        %2770 = vmatprep.subr.mxu0 0.0
        %2771 = vmatpush1.xpose.msra.mxu0 0.0
        %2772 = vmatprep.mubr.f32.mxu0 0.0
        %2773 = vmatmul.mubr.f32.gmra.mrb[0].mxu0 %v2702
        %v2774 = vpop.f32.mrb[0].mxu0
        %v2775 = vadd.f32 %v1241, %v2774
        %v2776 = vpop.f32.mrb[0].mxu0
        %2777 = vmatprep.mubr.f32.mxu0 0.0
        %2778 = vmatmul.mubr.f32.gmra.mrb[0].mxu0 %v2704
        %v2779 = vpop.f32.mrb[0].mxu0
        %v2780 = vadd.f32 %v1242, %v2779
        %v2781 = vpop.f32.mrb[0].mxu0
        %2782 = vdwg.mxu0
        %v2783 = vsel %vm1243, %v1142, 0
        %v2785 = vsel %vm1243, %v1144, 0
        %v2787 = vsel %vm1243, %v1216, 0
        %2789 = vmatprep.subr.mxu0 0.0
        %2790 = vmatpush1.xpose.msra.mxu0 %v2787
        %2791 = vmatprep.subr.mxu0 0.0
        %2792 = vmatpush1.xpose.msra.mxu0 0.0
        %2793 = vmatprep.subr.mxu0 0.0
        %2794 = vmatpush1.xpose.msra.mxu0 0.0
        %2795 = vmatprep.subr.mxu0 0.0
        %2796 = vmatpush1.xpose.msra.mxu0 0.0
        %2797 = vmatprep.subr.mxu0 0.0
        %2798 = vmatpush1.xpose.msra.mxu0 0.0
        %2799 = vmatprep.subr.mxu0 0.0
        %2800 = vmatpush1.xpose.msra.mxu0 0.0
        %2801 = vmatprep.subr.mxu0 0.0
        %2802 = vmatpush1.xpose.msra.mxu0 0.0
        %2803 = vmatprep.subr.mxu0 0.0
        %2804 = vmatpush1.xpose.msra.mxu0 0.0
        %2805 = vmatprep.subr.mxu0 0.0
        %2806 = vmatpush1.xpose.msra.mxu0 0.0
        %2807 = vmatprep.subr.mxu0 0.0
        %2808 = vmatpush1.xpose.msra.mxu0 0.0
        %2809 = vmatprep.subr.mxu0 0.0
        %2810 = vmatpush1.xpose.msra.mxu0 0.0
        %2811 = vmatprep.subr.mxu0 0.0
        %2812 = vmatpush1.xpose.msra.mxu0 0.0
        %2813 = vmatprep.subr.mxu0 0.0
        %2814 = vmatpush1.xpose.msra.mxu0 0.0
        %2815 = vmatprep.subr.mxu0 0.0
        %2816 = vmatpush1.xpose.msra.mxu0 0.0
        %2817 = vmatprep.subr.mxu0 0.0
        %2818 = vmatpush1.xpose.msra.mxu0 0.0
        %2819 = vmatprep.subr.mxu0 0.0
        %2820 = vmatpush1.xpose.msra.mxu0 0.0
        %2821 = vmatprep.subr.mxu0 0.0
        %2822 = vmatpush1.xpose.msra.mxu0 0.0
        %2823 = vmatprep.subr.mxu0 0.0
        %2824 = vmatpush1.xpose.msra.mxu0 0.0
        %2825 = vmatprep.subr.mxu0 0.0
        %2826 = vmatpush1.xpose.msra.mxu0 0.0
        %2827 = vmatprep.subr.mxu0 0.0
        %2828 = vmatpush1.xpose.msra.mxu0 0.0
        %2829 = vmatprep.subr.mxu0 0.0
        %2830 = vmatpush1.xpose.msra.mxu0 0.0
        %2831 = vmatprep.subr.mxu0 0.0
        %2832 = vmatpush1.xpose.msra.mxu0 0.0
        %2833 = vmatprep.subr.mxu0 0.0
        %2834 = vmatpush1.xpose.msra.mxu0 0.0
        %2835 = vmatprep.subr.mxu0 0.0
        %2836 = vmatpush1.xpose.msra.mxu0 0.0
        %2837 = vmatprep.subr.mxu0 0.0
        %2838 = vmatpush1.xpose.msra.mxu0 0.0
        %2839 = vmatprep.subr.mxu0 0.0
        %2840 = vmatpush1.xpose.msra.mxu0 0.0
        %2841 = vmatprep.subr.mxu0 0.0
        %2842 = vmatpush1.xpose.msra.mxu0 0.0
        %2843 = vmatprep.subr.mxu0 0.0
        %2844 = vmatpush1.xpose.msra.mxu0 0.0
        %2845 = vmatprep.subr.mxu0 0.0
        %2846 = vmatpush1.xpose.msra.mxu0 0.0
        %2847 = vmatprep.subr.mxu0 0.0
        %2848 = vmatpush1.xpose.msra.mxu0 0.0
        %2849 = vmatprep.subr.mxu0 0.0
        %2850 = vmatpush1.xpose.msra.mxu0 0.0
        %2851 = vmatprep.subr.mxu0 0.0
        %2852 = vmatpush1.xpose.msra.mxu0 0.0
        %2853 = vmatprep.mubr.f32.mxu0 0.0
        %2854 = vmatmul.mubr.f32.gmra.mrb[0].mxu0 %v2783
        %v2855 = vpop.f32.mrb[0].mxu0
        %v2856 = vadd.f32 %v1241, %v2855
        %v2857 = vpop.f32.mrb[0].mxu0
        %2858 = vmatprep.mubr.f32.mxu0 0.0
        %2859 = vmatmul.mubr.f32.gmra.mrb[0].mxu0 %v2785
        %v2860 = vpop.f32.mrb[0].mxu0
        %v2861 = vadd.f32 %v1242, %v2860
        %v2862 = vpop.f32.mrb[0].mxu0
        %2863 = vdwg.mxu0
        %v2864 = vsel %vm1243, %v1146, 0
        %v2866 = vsel %vm1243, %v1148, 0
        %v2868 = vsel %vm1243, %v1218, 0
        %2870 = vmatprep.subr.mxu0 0.0
        %2871 = vmatpush1.xpose.msra.mxu0 %v2868
        %2872 = vmatprep.subr.mxu0 0.0
        %2873 = vmatpush1.xpose.msra.mxu0 0.0
        %2874 = vmatprep.subr.mxu0 0.0
        %2875 = vmatpush1.xpose.msra.mxu0 0.0
        %2876 = vmatprep.subr.mxu0 0.0
        %2877 = vmatpush1.xpose.msra.mxu0 0.0
        %2878 = vmatprep.subr.mxu0 0.0
        %2879 = vmatpush1.xpose.msra.mxu0 0.0
        %2880 = vmatprep.subr.mxu0 0.0
        %2881 = vmatpush1.xpose.msra.mxu0 0.0
        %2882 = vmatprep.subr.mxu0 0.0
        %2883 = vmatpush1.xpose.msra.mxu0 0.0
        %2884 = vmatprep.subr.mxu0 0.0
        %2885 = vmatpush1.xpose.msra.mxu0 0.0
        %2886 = vmatprep.subr.mxu0 0.0
        %2887 = vmatpush1.xpose.msra.mxu0 0.0
        %2888 = vmatprep.subr.mxu0 0.0
        %2889 = vmatpush1.xpose.msra.mxu0 0.0
        %2890 = vmatprep.subr.mxu0 0.0
        %2891 = vmatpush1.xpose.msra.mxu0 0.0
        %2892 = vmatprep.subr.mxu0 0.0
        %2893 = vmatpush1.xpose.msra.mxu0 0.0
        %2894 = vmatprep.subr.mxu0 0.0
        %2895 = vmatpush1.xpose.msra.mxu0 0.0
        %2896 = vmatprep.subr.mxu0 0.0
        %2897 = vmatpush1.xpose.msra.mxu0 0.0
        %2898 = vmatprep.subr.mxu0 0.0
        %2899 = vmatpush1.xpose.msra.mxu0 0.0
        %2900 = vmatprep.subr.mxu0 0.0
        %2901 = vmatpush1.xpose.msra.mxu0 0.0
        %2902 = vmatprep.subr.mxu0 0.0
        %2903 = vmatpush1.xpose.msra.mxu0 0.0
        %2904 = vmatprep.subr.mxu0 0.0
        %2905 = vmatpush1.xpose.msra.mxu0 0.0
        %2906 = vmatprep.subr.mxu0 0.0
        %2907 = vmatpush1.xpose.msra.mxu0 0.0
        %2908 = vmatprep.subr.mxu0 0.0
        %2909 = vmatpush1.xpose.msra.mxu0 0.0
        %2910 = vmatprep.subr.mxu0 0.0
        %2911 = vmatpush1.xpose.msra.mxu0 0.0
        %2912 = vmatprep.subr.mxu0 0.0
        %2913 = vmatpush1.xpose.msra.mxu0 0.0
        %2914 = vmatprep.subr.mxu0 0.0
        %2915 = vmatpush1.xpose.msra.mxu0 0.0
        %2916 = vmatprep.subr.mxu0 0.0
        %2917 = vmatpush1.xpose.msra.mxu0 0.0
        %2918 = vmatprep.subr.mxu0 0.0
        %2919 = vmatpush1.xpose.msra.mxu0 0.0
        %2920 = vmatprep.subr.mxu0 0.0
        %2921 = vmatpush1.xpose.msra.mxu0 0.0
        %2922 = vmatprep.subr.mxu0 0.0
        %2923 = vmatpush1.xpose.msra.mxu0 0.0
        %2924 = vmatprep.subr.mxu0 0.0
        %2925 = vmatpush1.xpose.msra.mxu0 0.0
        %2926 = vmatprep.subr.mxu0 0.0
        %2927 = vmatpush1.xpose.msra.mxu0 0.0
        %2928 = vmatprep.subr.mxu0 0.0
        %2929 = vmatpush1.xpose.msra.mxu0 0.0
        %2930 = vmatprep.subr.mxu0 0.0
        %2931 = vmatpush1.xpose.msra.mxu0 0.0
        %2932 = vmatprep.subr.mxu0 0.0
        %2933 = vmatpush1.xpose.msra.mxu0 0.0
        %2934 = vmatprep.mubr.f32.mxu0 0.0
        %2935 = vmatmul.mubr.f32.gmra.mrb[0].mxu0 %v2864
        %v2936 = vpop.f32.mrb[0].mxu0
        %v2937 = vadd.f32 %v1241, %v2936
        %v2938 = vpop.f32.mrb[0].mxu0
        %2939 = vmatprep.mubr.f32.mxu0 0.0
        %2940 = vmatmul.mubr.f32.gmra.mrb[0].mxu0 %v2866
        %v2941 = vpop.f32.mrb[0].mxu0
        %v2942 = vadd.f32 %v1242, %v2941
        %v2943 = vpop.f32.mrb[0].mxu0
        %2944 = vdwg.mxu0
        %v2945 = vsel %vm1243, %v1150, 0
        %v2947 = vsel %vm1243, %v1152, 0
        %v2949 = vsel %vm1243, %v1220, 0
        %2951 = vmatprep.subr.mxu0 0.0
        %2952 = vmatpush1.xpose.msra.mxu0 %v2949
        %2953 = vmatprep.subr.mxu0 0.0
        %2954 = vmatpush1.xpose.msra.mxu0 0.0
        %2955 = vmatprep.subr.mxu0 0.0
        %2956 = vmatpush1.xpose.msra.mxu0 0.0
        %2957 = vmatprep.subr.mxu0 0.0
        %2958 = vmatpush1.xpose.msra.mxu0 0.0
        %2959 = vmatprep.subr.mxu0 0.0
        %2960 = vmatpush1.xpose.msra.mxu0 0.0
        %2961 = vmatprep.subr.mxu0 0.0
        %2962 = vmatpush1.xpose.msra.mxu0 0.0
        %2963 = vmatprep.subr.mxu0 0.0
        %2964 = vmatpush1.xpose.msra.mxu0 0.0
        %2965 = vmatprep.subr.mxu0 0.0
        %2966 = vmatpush1.xpose.msra.mxu0 0.0
        %2967 = vmatprep.subr.mxu0 0.0
        %2968 = vmatpush1.xpose.msra.mxu0 0.0
        %2969 = vmatprep.subr.mxu0 0.0
        %2970 = vmatpush1.xpose.msra.mxu0 0.0
        %2971 = vmatprep.subr.mxu0 0.0
        %2972 = vmatpush1.xpose.msra.mxu0 0.0
        %2973 = vmatprep.subr.mxu0 0.0
        %2974 = vmatpush1.xpose.msra.mxu0 0.0
        %2975 = vmatprep.subr.mxu0 0.0
        %2976 = vmatpush1.xpose.msra.mxu0 0.0
        %2977 = vmatprep.subr.mxu0 0.0
        %2978 = vmatpush1.xpose.msra.mxu0 0.0
        %2979 = vmatprep.subr.mxu0 0.0
        %2980 = vmatpush1.xpose.msra.mxu0 0.0
        %2981 = vmatprep.subr.mxu0 0.0
        %2982 = vmatpush1.xpose.msra.mxu0 0.0
        %2983 = vmatprep.subr.mxu0 0.0
        %2984 = vmatpush1.xpose.msra.mxu0 0.0
        %2985 = vmatprep.subr.mxu0 0.0
        %2986 = vmatpush1.xpose.msra.mxu0 0.0
        %2987 = vmatprep.subr.mxu0 0.0
        %2988 = vmatpush1.xpose.msra.mxu0 0.0
        %2989 = vmatprep.subr.mxu0 0.0
        %2990 = vmatpush1.xpose.msra.mxu0 0.0
        %2991 = vmatprep.subr.mxu0 0.0
        %2992 = vmatpush1.xpose.msra.mxu0 0.0
        %2993 = vmatprep.subr.mxu0 0.0
        %2994 = vmatpush1.xpose.msra.mxu0 0.0
        %2995 = vmatprep.subr.mxu0 0.0
        %2996 = vmatpush1.xpose.msra.mxu0 0.0
        %2997 = vmatprep.subr.mxu0 0.0
        %2998 = vmatpush1.xpose.msra.mxu0 0.0
        %2999 = vmatprep.subr.mxu0 0.0
        %3000 = vmatpush1.xpose.msra.mxu0 0.0
        %3001 = vmatprep.subr.mxu0 0.0
        %3002 = vmatpush1.xpose.msra.mxu0 0.0
        %3003 = vmatprep.subr.mxu0 0.0
        %3004 = vmatpush1.xpose.msra.mxu0 0.0
        %3005 = vmatprep.subr.mxu0 0.0
        %3006 = vmatpush1.xpose.msra.mxu0 0.0
        %3007 = vmatprep.subr.mxu0 0.0
        %3008 = vmatpush1.xpose.msra.mxu0 0.0
        %3009 = vmatprep.subr.mxu0 0.0
        %3010 = vmatpush1.xpose.msra.mxu0 0.0
        %3011 = vmatprep.subr.mxu0 0.0
        %3012 = vmatpush1.xpose.msra.mxu0 0.0
        %3013 = vmatprep.subr.mxu0 0.0
        %3014 = vmatpush1.xpose.msra.mxu0 0.0
        %3015 = vmatprep.mubr.f32.mxu0 0.0
        %3016 = vmatmul.mubr.f32.gmra.mrb[0].mxu0 %v2945
        %v3017 = vpop.f32.mrb[0].mxu0
        %v3018 = vadd.f32 %v1241, %v3017
        %v3019 = vpop.f32.mrb[0].mxu0
        %3020 = vmatprep.mubr.f32.mxu0 0.0
        %3021 = vmatmul.mubr.f32.gmra.mrb[0].mxu0 %v2947
        %v3022 = vpop.f32.mrb[0].mxu0
        %v3023 = vadd.f32 %v1242, %v3022
        %v3024 = vpop.f32.mrb[0].mxu0
        %3025 = vdwg.mxu0
        %v3026 = vsel %vm1243, %v1154, 0
        %v3028 = vsel %vm1243, %v1156, 0
        %v3030 = vsel %vm1243, %v1222, 0
        %3032 = vmatprep.subr.mxu0 0.0
        %3033 = vmatpush1.xpose.msra.mxu0 %v3030
        %3034 = vmatprep.subr.mxu0 0.0
        %3035 = vmatpush1.xpose.msra.mxu0 0.0
        %3036 = vmatprep.subr.mxu0 0.0
        %3037 = vmatpush1.xpose.msra.mxu0 0.0
        %3038 = vmatprep.subr.mxu0 0.0
        %3039 = vmatpush1.xpose.msra.mxu0 0.0
        %3040 = vmatprep.subr.mxu0 0.0
        %3041 = vmatpush1.xpose.msra.mxu0 0.0
        %3042 = vmatprep.subr.mxu0 0.0
        %3043 = vmatpush1.xpose.msra.mxu0 0.0
        %3044 = vmatprep.subr.mxu0 0.0
        %3045 = vmatpush1.xpose.msra.mxu0 0.0
        %3046 = vmatprep.subr.mxu0 0.0
        %3047 = vmatpush1.xpose.msra.mxu0 0.0
        %3048 = vmatprep.subr.mxu0 0.0
        %3049 = vmatpush1.xpose.msra.mxu0 0.0
        %3050 = vmatprep.subr.mxu0 0.0
        %3051 = vmatpush1.xpose.msra.mxu0 0.0
        %3052 = vmatprep.subr.mxu0 0.0
        %3053 = vmatpush1.xpose.msra.mxu0 0.0
        %3054 = vmatprep.subr.mxu0 0.0
        %3055 = vmatpush1.xpose.msra.mxu0 0.0
        %3056 = vmatprep.subr.mxu0 0.0
        %3057 = vmatpush1.xpose.msra.mxu0 0.0
        %3058 = vmatprep.subr.mxu0 0.0
        %3059 = vmatpush1.xpose.msra.mxu0 0.0
        %3060 = vmatprep.subr.mxu0 0.0
        %3061 = vmatpush1.xpose.msra.mxu0 0.0
        %3062 = vmatprep.subr.mxu0 0.0
        %3063 = vmatpush1.xpose.msra.mxu0 0.0
        %3064 = vmatprep.subr.mxu0 0.0
        %3065 = vmatpush1.xpose.msra.mxu0 0.0
        %3066 = vmatprep.subr.mxu0 0.0
        %3067 = vmatpush1.xpose.msra.mxu0 0.0
        %3068 = vmatprep.subr.mxu0 0.0
        %3069 = vmatpush1.xpose.msra.mxu0 0.0
        %3070 = vmatprep.subr.mxu0 0.0
        %3071 = vmatpush1.xpose.msra.mxu0 0.0
        %3072 = vmatprep.subr.mxu0 0.0
        %3073 = vmatpush1.xpose.msra.mxu0 0.0
        %3074 = vmatprep.subr.mxu0 0.0
        %3075 = vmatpush1.xpose.msra.mxu0 0.0
        %3076 = vmatprep.subr.mxu0 0.0
        %3077 = vmatpush1.xpose.msra.mxu0 0.0
        %3078 = vmatprep.subr.mxu0 0.0
        %3079 = vmatpush1.xpose.msra.mxu0 0.0
        %3080 = vmatprep.subr.mxu0 0.0
        %3081 = vmatpush1.xpose.msra.mxu0 0.0
        %3082 = vmatprep.subr.mxu0 0.0
        %3083 = vmatpush1.xpose.msra.mxu0 0.0
        %3084 = vmatprep.subr.mxu0 0.0
        %3085 = vmatpush1.xpose.msra.mxu0 0.0
        %3086 = vmatprep.subr.mxu0 0.0
        %3087 = vmatpush1.xpose.msra.mxu0 0.0
        %3088 = vmatprep.subr.mxu0 0.0
        %3089 = vmatpush1.xpose.msra.mxu0 0.0
        %3090 = vmatprep.subr.mxu0 0.0
        %3091 = vmatpush1.xpose.msra.mxu0 0.0
        %3092 = vmatprep.subr.mxu0 0.0
        %3093 = vmatpush1.xpose.msra.mxu0 0.0
        %3094 = vmatprep.subr.mxu0 0.0
        %3095 = vmatpush1.xpose.msra.mxu0 0.0
        %3096 = vmatprep.mubr.f32.mxu0 0.0
        %3097 = vmatmul.mubr.f32.gmra.mrb[0].mxu0 %v3026
        %v3098 = vpop.f32.mrb[0].mxu0
        %v3099 = vadd.f32 %v1241, %v3098
        %v3100 = vpop.f32.mrb[0].mxu0
        %3101 = vmatprep.mubr.f32.mxu0 0.0
        %3102 = vmatmul.mubr.f32.gmra.mrb[0].mxu0 %v3028
        %v3103 = vpop.f32.mrb[0].mxu0
        %v3104 = vadd.f32 %v1242, %v3103
        %v3105 = vpop.f32.mrb[0].mxu0
        %3106 = vdwg.mxu0
        %v3107 = vsel %vm1243, %v1158, 0
        %v3109 = vsel %vm1243, %v1160, 0
        %v3111 = vsel %vm1243, %v1224, 0
        %3113 = vmatprep.subr.mxu0 0.0
        %3114 = vmatpush1.xpose.msra.mxu0 %v3111
        %3115 = vmatprep.subr.mxu0 0.0
        %3116 = vmatpush1.xpose.msra.mxu0 0.0
        %3117 = vmatprep.subr.mxu0 0.0
        %3118 = vmatpush1.xpose.msra.mxu0 0.0
        %3119 = vmatprep.subr.mxu0 0.0
        %3120 = vmatpush1.xpose.msra.mxu0 0.0
        %3121 = vmatprep.subr.mxu0 0.0
        %3122 = vmatpush1.xpose.msra.mxu0 0.0
        %3123 = vmatprep.subr.mxu0 0.0
        %3124 = vmatpush1.xpose.msra.mxu0 0.0
        %3125 = vmatprep.subr.mxu0 0.0
        %3126 = vmatpush1.xpose.msra.mxu0 0.0
        %3127 = vmatprep.subr.mxu0 0.0
        %3128 = vmatpush1.xpose.msra.mxu0 0.0
        %3129 = vmatprep.subr.mxu0 0.0
        %3130 = vmatpush1.xpose.msra.mxu0 0.0
        %3131 = vmatprep.subr.mxu0 0.0
        %3132 = vmatpush1.xpose.msra.mxu0 0.0
        %3133 = vmatprep.subr.mxu0 0.0
        %3134 = vmatpush1.xpose.msra.mxu0 0.0
        %3135 = vmatprep.subr.mxu0 0.0
        %3136 = vmatpush1.xpose.msra.mxu0 0.0
        %3137 = vmatprep.subr.mxu0 0.0
        %3138 = vmatpush1.xpose.msra.mxu0 0.0
        %3139 = vmatprep.subr.mxu0 0.0
        %3140 = vmatpush1.xpose.msra.mxu0 0.0
        %3141 = vmatprep.subr.mxu0 0.0
        %3142 = vmatpush1.xpose.msra.mxu0 0.0
        %3143 = vmatprep.subr.mxu0 0.0
        %3144 = vmatpush1.xpose.msra.mxu0 0.0
        %3145 = vmatprep.subr.mxu0 0.0
        %3146 = vmatpush1.xpose.msra.mxu0 0.0
        %3147 = vmatprep.subr.mxu0 0.0
        %3148 = vmatpush1.xpose.msra.mxu0 0.0
        %3149 = vmatprep.subr.mxu0 0.0
        %3150 = vmatpush1.xpose.msra.mxu0 0.0
        %3151 = vmatprep.subr.mxu0 0.0
        %3152 = vmatpush1.xpose.msra.mxu0 0.0
        %3153 = vmatprep.subr.mxu0 0.0
        %3154 = vmatpush1.xpose.msra.mxu0 0.0
        %3155 = vmatprep.subr.mxu0 0.0
        %3156 = vmatpush1.xpose.msra.mxu0 0.0
        %3157 = vmatprep.subr.mxu0 0.0
        %3158 = vmatpush1.xpose.msra.mxu0 0.0
        %3159 = vmatprep.subr.mxu0 0.0
        %3160 = vmatpush1.xpose.msra.mxu0 0.0
        %3161 = vmatprep.subr.mxu0 0.0
        %3162 = vmatpush1.xpose.msra.mxu0 0.0
        %3163 = vmatprep.subr.mxu0 0.0
        %3164 = vmatpush1.xpose.msra.mxu0 0.0
        %3165 = vmatprep.subr.mxu0 0.0
        %3166 = vmatpush1.xpose.msra.mxu0 0.0
        %3167 = vmatprep.subr.mxu0 0.0
        %3168 = vmatpush1.xpose.msra.mxu0 0.0
        %3169 = vmatprep.subr.mxu0 0.0
        %3170 = vmatpush1.xpose.msra.mxu0 0.0
        %3171 = vmatprep.subr.mxu0 0.0
        %3172 = vmatpush1.xpose.msra.mxu0 0.0
        %3173 = vmatprep.subr.mxu0 0.0
        %3174 = vmatpush1.xpose.msra.mxu0 0.0
        %3175 = vmatprep.subr.mxu0 0.0
        %3176 = vmatpush1.xpose.msra.mxu0 0.0
        %3177 = vmatprep.mubr.f32.mxu0 0.0
        %3178 = vmatmul.mubr.f32.gmra.mrb[0].mxu0 %v3107
        %v3179 = vpop.f32.mrb[0].mxu0
        %v3180 = vadd.f32 %v1241, %v3179
        %v3181 = vpop.f32.mrb[0].mxu0
        %3182 = vmatprep.mubr.f32.mxu0 0.0
        %3183 = vmatmul.mubr.f32.gmra.mrb[0].mxu0 %v3109
        %v3184 = vpop.f32.mrb[0].mxu0
        %v3185 = vadd.f32 %v1242, %v3184
        %v3186 = vpop.f32.mrb[0].mxu0
        %3187 = vdwg.mxu0
        %v3188 = vsel %vm1243, %v1162, 0
        %v3190 = vsel %vm1243, %v1164, 0
        %v3192 = vsel %vm1243, %v1226, 0
        %3194 = vmatprep.subr.mxu0 0.0
        %3195 = vmatpush1.xpose.msra.mxu0 %v3192
        %3196 = vmatprep.subr.mxu0 0.0
        %3197 = vmatpush1.xpose.msra.mxu0 0.0
        %3198 = vmatprep.subr.mxu0 0.0
        %3199 = vmatpush1.xpose.msra.mxu0 0.0
        %3200 = vmatprep.subr.mxu0 0.0
        %3201 = vmatpush1.xpose.msra.mxu0 0.0
        %3202 = vmatprep.subr.mxu0 0.0
        %3203 = vmatpush1.xpose.msra.mxu0 0.0
        %3204 = vmatprep.subr.mxu0 0.0
        %3205 = vmatpush1.xpose.msra.mxu0 0.0
        %3206 = vmatprep.subr.mxu0 0.0
        %3207 = vmatpush1.xpose.msra.mxu0 0.0
        %3208 = vmatprep.subr.mxu0 0.0
        %3209 = vmatpush1.xpose.msra.mxu0 0.0
        %3210 = vmatprep.subr.mxu0 0.0
        %3211 = vmatpush1.xpose.msra.mxu0 0.0
        %3212 = vmatprep.subr.mxu0 0.0
        %3213 = vmatpush1.xpose.msra.mxu0 0.0
        %3214 = vmatprep.subr.mxu0 0.0
        %3215 = vmatpush1.xpose.msra.mxu0 0.0
        %3216 = vmatprep.subr.mxu0 0.0
        %3217 = vmatpush1.xpose.msra.mxu0 0.0
        %3218 = vmatprep.subr.mxu0 0.0
        %3219 = vmatpush1.xpose.msra.mxu0 0.0
        %3220 = vmatprep.subr.mxu0 0.0
        %3221 = vmatpush1.xpose.msra.mxu0 0.0
        %3222 = vmatprep.subr.mxu0 0.0
        %3223 = vmatpush1.xpose.msra.mxu0 0.0
        %3224 = vmatprep.subr.mxu0 0.0
        %3225 = vmatpush1.xpose.msra.mxu0 0.0
        %3226 = vmatprep.subr.mxu0 0.0
        %3227 = vmatpush1.xpose.msra.mxu0 0.0
        %3228 = vmatprep.subr.mxu0 0.0
        %3229 = vmatpush1.xpose.msra.mxu0 0.0
        %3230 = vmatprep.subr.mxu0 0.0
        %3231 = vmatpush1.xpose.msra.mxu0 0.0
        %3232 = vmatprep.subr.mxu0 0.0
        %3233 = vmatpush1.xpose.msra.mxu0 0.0
        %3234 = vmatprep.subr.mxu0 0.0
        %3235 = vmatpush1.xpose.msra.mxu0 0.0
        %3236 = vmatprep.subr.mxu0 0.0
        %3237 = vmatpush1.xpose.msra.mxu0 0.0
        %3238 = vmatprep.subr.mxu0 0.0
        %3239 = vmatpush1.xpose.msra.mxu0 0.0
        %3240 = vmatprep.subr.mxu0 0.0
        %3241 = vmatpush1.xpose.msra.mxu0 0.0
        %3242 = vmatprep.subr.mxu0 0.0
        %3243 = vmatpush1.xpose.msra.mxu0 0.0
        %3244 = vmatprep.subr.mxu0 0.0
        %3245 = vmatpush1.xpose.msra.mxu0 0.0
        %3246 = vmatprep.subr.mxu0 0.0
        %3247 = vmatpush1.xpose.msra.mxu0 0.0
        %3248 = vmatprep.subr.mxu0 0.0
        %3249 = vmatpush1.xpose.msra.mxu0 0.0
        %3250 = vmatprep.subr.mxu0 0.0
        %3251 = vmatpush1.xpose.msra.mxu0 0.0
        %3252 = vmatprep.subr.mxu0 0.0
        %3253 = vmatpush1.xpose.msra.mxu0 0.0
        %3254 = vmatprep.subr.mxu0 0.0
        %3255 = vmatpush1.xpose.msra.mxu0 0.0
        %3256 = vmatprep.subr.mxu0 0.0
        %3257 = vmatpush1.xpose.msra.mxu0 0.0
        %3258 = vmatprep.mubr.f32.mxu0 0.0
        %3259 = vmatmul.mubr.f32.gmra.mrb[0].mxu0 %v3188
        %v3260 = vpop.f32.mrb[0].mxu0
        %v3261 = vadd.f32 %v1241, %v3260
        %v3262 = vpop.f32.mrb[0].mxu0
        %3263 = vmatprep.mubr.f32.mxu0 0.0
        %3264 = vmatmul.mubr.f32.gmra.mrb[0].mxu0 %v3190
        %v3265 = vpop.f32.mrb[0].mxu0
        %v3266 = vadd.f32 %v1242, %v3265
        %v3267 = vpop.f32.mrb[0].mxu0
        %3268 = vdwg.mxu0
        %v3269 = vsel %vm1243, %v1166, 0
        %v3271 = vsel %vm1243, %v1168, 0
        %v3273 = vsel %vm1243, %v1228, 0
        %3275 = vmatprep.subr.mxu0 0.0
        %3276 = vmatpush1.xpose.msra.mxu0 %v3273
        %3277 = vmatprep.subr.mxu0 0.0
        %3278 = vmatpush1.xpose.msra.mxu0 0.0
        %3279 = vmatprep.subr.mxu0 0.0
        %3280 = vmatpush1.xpose.msra.mxu0 0.0
        %3281 = vmatprep.subr.mxu0 0.0
        %3282 = vmatpush1.xpose.msra.mxu0 0.0
        %3283 = vmatprep.subr.mxu0 0.0
        %3284 = vmatpush1.xpose.msra.mxu0 0.0
        %3285 = vmatprep.subr.mxu0 0.0
        %3286 = vmatpush1.xpose.msra.mxu0 0.0
        %3287 = vmatprep.subr.mxu0 0.0
        %3288 = vmatpush1.xpose.msra.mxu0 0.0
        %3289 = vmatprep.subr.mxu0 0.0
        %3290 = vmatpush1.xpose.msra.mxu0 0.0
        %3291 = vmatprep.subr.mxu0 0.0
        %3292 = vmatpush1.xpose.msra.mxu0 0.0
        %3293 = vmatprep.subr.mxu0 0.0
        %3294 = vmatpush1.xpose.msra.mxu0 0.0
        %3295 = vmatprep.subr.mxu0 0.0
        %3296 = vmatpush1.xpose.msra.mxu0 0.0
        %3297 = vmatprep.subr.mxu0 0.0
        %3298 = vmatpush1.xpose.msra.mxu0 0.0
        %3299 = vmatprep.subr.mxu0 0.0
        %3300 = vmatpush1.xpose.msra.mxu0 0.0
        %3301 = vmatprep.subr.mxu0 0.0
        %3302 = vmatpush1.xpose.msra.mxu0 0.0
        %3303 = vmatprep.subr.mxu0 0.0
        %3304 = vmatpush1.xpose.msra.mxu0 0.0
        %3305 = vmatprep.subr.mxu0 0.0
        %3306 = vmatpush1.xpose.msra.mxu0 0.0
        %3307 = vmatprep.subr.mxu0 0.0
        %3308 = vmatpush1.xpose.msra.mxu0 0.0
        %3309 = vmatprep.subr.mxu0 0.0
        %3310 = vmatpush1.xpose.msra.mxu0 0.0
        %3311 = vmatprep.subr.mxu0 0.0
        %3312 = vmatpush1.xpose.msra.mxu0 0.0
        %3313 = vmatprep.subr.mxu0 0.0
        %3314 = vmatpush1.xpose.msra.mxu0 0.0
        %3315 = vmatprep.subr.mxu0 0.0
        %3316 = vmatpush1.xpose.msra.mxu0 0.0
        %3317 = vmatprep.subr.mxu0 0.0
        %3318 = vmatpush1.xpose.msra.mxu0 0.0
        %3319 = vmatprep.subr.mxu0 0.0
        %3320 = vmatpush1.xpose.msra.mxu0 0.0
        %3321 = vmatprep.subr.mxu0 0.0
        %3322 = vmatpush1.xpose.msra.mxu0 0.0
        %3323 = vmatprep.subr.mxu0 0.0
        %3324 = vmatpush1.xpose.msra.mxu0 0.0
        %3325 = vmatprep.subr.mxu0 0.0
        %3326 = vmatpush1.xpose.msra.mxu0 0.0
        %3327 = vmatprep.subr.mxu0 0.0
        %3328 = vmatpush1.xpose.msra.mxu0 0.0
        %3329 = vmatprep.subr.mxu0 0.0
        %3330 = vmatpush1.xpose.msra.mxu0 0.0
        %3331 = vmatprep.subr.mxu0 0.0
        %3332 = vmatpush1.xpose.msra.mxu0 0.0
        %3333 = vmatprep.subr.mxu0 0.0
        %3334 = vmatpush1.xpose.msra.mxu0 0.0
        %3335 = vmatprep.subr.mxu0 0.0
        %3336 = vmatpush1.xpose.msra.mxu0 0.0
        %3337 = vmatprep.subr.mxu0 0.0
        %3338 = vmatpush1.xpose.msra.mxu0 0.0
        %3339 = vmatprep.mubr.f32.mxu0 0.0
        %3340 = vmatmul.mubr.f32.gmra.mrb[0].mxu0 %v3269
        %v3341 = vpop.f32.mrb[0].mxu0
        %v3342 = vadd.f32 %v1241, %v3341
        %v3343 = vpop.f32.mrb[0].mxu0
        %3344 = vmatprep.mubr.f32.mxu0 0.0
        %3345 = vmatmul.mubr.f32.gmra.mrb[0].mxu0 %v3271
        %v3346 = vpop.f32.mrb[0].mxu0
        %v3347 = vadd.f32 %v1242, %v3346
        %v3348 = vpop.f32.mrb[0].mxu0
        %3349 = vdwg.mxu0
        %v3350 = vsel %vm1243, %v1170, 0
        %v3352 = vsel %vm1243, %v1172, 0
        %v3354 = vsel %vm1243, %v1230, 0
        %3356 = vmatprep.subr.mxu0 0.0
        %3357 = vmatpush1.xpose.msra.mxu0 %v3354
        %3358 = vmatprep.subr.mxu0 0.0
        %3359 = vmatpush1.xpose.msra.mxu0 0.0
        %3360 = vmatprep.subr.mxu0 0.0
        %3361 = vmatpush1.xpose.msra.mxu0 0.0
        %3362 = vmatprep.subr.mxu0 0.0
        %3363 = vmatpush1.xpose.msra.mxu0 0.0
        %3364 = vmatprep.subr.mxu0 0.0
        %3365 = vmatpush1.xpose.msra.mxu0 0.0
        %3366 = vmatprep.subr.mxu0 0.0
        %3367 = vmatpush1.xpose.msra.mxu0 0.0
        %3368 = vmatprep.subr.mxu0 0.0
        %3369 = vmatpush1.xpose.msra.mxu0 0.0
        %3370 = vmatprep.subr.mxu0 0.0
        %3371 = vmatpush1.xpose.msra.mxu0 0.0
        %3372 = vmatprep.subr.mxu0 0.0
        %3373 = vmatpush1.xpose.msra.mxu0 0.0
        %3374 = vmatprep.subr.mxu0 0.0
        %3375 = vmatpush1.xpose.msra.mxu0 0.0
        %3376 = vmatprep.subr.mxu0 0.0
        %3377 = vmatpush1.xpose.msra.mxu0 0.0
        %3378 = vmatprep.subr.mxu0 0.0
        %3379 = vmatpush1.xpose.msra.mxu0 0.0
        %3380 = vmatprep.subr.mxu0 0.0
        %3381 = vmatpush1.xpose.msra.mxu0 0.0
        %3382 = vmatprep.subr.mxu0 0.0
        %3383 = vmatpush1.xpose.msra.mxu0 0.0
        %3384 = vmatprep.subr.mxu0 0.0
        %3385 = vmatpush1.xpose.msra.mxu0 0.0
        %3386 = vmatprep.subr.mxu0 0.0
        %3387 = vmatpush1.xpose.msra.mxu0 0.0
        %3388 = vmatprep.subr.mxu0 0.0
        %3389 = vmatpush1.xpose.msra.mxu0 0.0
        %3390 = vmatprep.subr.mxu0 0.0
        %3391 = vmatpush1.xpose.msra.mxu0 0.0
        %3392 = vmatprep.subr.mxu0 0.0
        %3393 = vmatpush1.xpose.msra.mxu0 0.0
        %3394 = vmatprep.subr.mxu0 0.0
        %3395 = vmatpush1.xpose.msra.mxu0 0.0
        %3396 = vmatprep.subr.mxu0 0.0
        %3397 = vmatpush1.xpose.msra.mxu0 0.0
        %3398 = vmatprep.subr.mxu0 0.0
        %3399 = vmatpush1.xpose.msra.mxu0 0.0
        %3400 = vmatprep.subr.mxu0 0.0
        %3401 = vmatpush1.xpose.msra.mxu0 0.0
        %3402 = vmatprep.subr.mxu0 0.0
        %3403 = vmatpush1.xpose.msra.mxu0 0.0
        %3404 = vmatprep.subr.mxu0 0.0
        %3405 = vmatpush1.xpose.msra.mxu0 0.0
        %3406 = vmatprep.subr.mxu0 0.0
        %3407 = vmatpush1.xpose.msra.mxu0 0.0
        %3408 = vmatprep.subr.mxu0 0.0
        %3409 = vmatpush1.xpose.msra.mxu0 0.0
        %3410 = vmatprep.subr.mxu0 0.0
        %3411 = vmatpush1.xpose.msra.mxu0 0.0
        %3412 = vmatprep.subr.mxu0 0.0
        %3413 = vmatpush1.xpose.msra.mxu0 0.0
        %3414 = vmatprep.subr.mxu0 0.0
        %3415 = vmatpush1.xpose.msra.mxu0 0.0
        %3416 = vmatprep.subr.mxu0 0.0
        %3417 = vmatpush1.xpose.msra.mxu0 0.0
        %3418 = vmatprep.subr.mxu0 0.0
        %3419 = vmatpush1.xpose.msra.mxu0 0.0
        %3420 = vmatprep.mubr.f32.mxu0 0.0
        %3421 = vmatmul.mubr.f32.gmra.mrb[0].mxu0 %v3350
        %v3422 = vpop.f32.mrb[0].mxu0
        %v3423 = vadd.f32 %v1241, %v3422
        %v3424 = vpop.f32.mrb[0].mxu0
        %3425 = vmatprep.mubr.f32.mxu0 0.0
        %3426 = vmatmul.mubr.f32.gmra.mrb[0].mxu0 %v3352
        %v3427 = vpop.f32.mrb[0].mxu0
        %v3428 = vadd.f32 %v1242, %v3427
        %v3429 = vpop.f32.mrb[0].mxu0
        %3430 = vdwg.mxu0
        %v3431 = vsel %vm1243, %v1174, 0
        %v3433 = vsel %vm1243, %v1176, 0
        %v3435 = vsel %vm1243, %v1232, 0
        %3437 = vmatprep.subr.mxu0 0.0
        %3438 = vmatpush1.xpose.msra.mxu0 %v3435
        %3439 = vmatprep.subr.mxu0 0.0
        %3440 = vmatpush1.xpose.msra.mxu0 0.0
        %3441 = vmatprep.subr.mxu0 0.0
        %3442 = vmatpush1.xpose.msra.mxu0 0.0
        %3443 = vmatprep.subr.mxu0 0.0
        %3444 = vmatpush1.xpose.msra.mxu0 0.0
        %3445 = vmatprep.subr.mxu0 0.0
        %3446 = vmatpush1.xpose.msra.mxu0 0.0
        %3447 = vmatprep.subr.mxu0 0.0
        %3448 = vmatpush1.xpose.msra.mxu0 0.0
        %3449 = vmatprep.subr.mxu0 0.0
        %3450 = vmatpush1.xpose.msra.mxu0 0.0
        %3451 = vmatprep.subr.mxu0 0.0
        %3452 = vmatpush1.xpose.msra.mxu0 0.0
        %3453 = vmatprep.subr.mxu0 0.0
        %3454 = vmatpush1.xpose.msra.mxu0 0.0
        %3455 = vmatprep.subr.mxu0 0.0
        %3456 = vmatpush1.xpose.msra.mxu0 0.0
        %3457 = vmatprep.subr.mxu0 0.0
        %3458 = vmatpush1.xpose.msra.mxu0 0.0
        %3459 = vmatprep.subr.mxu0 0.0
        %3460 = vmatpush1.xpose.msra.mxu0 0.0
        %3461 = vmatprep.subr.mxu0 0.0
        %3462 = vmatpush1.xpose.msra.mxu0 0.0
        %3463 = vmatprep.subr.mxu0 0.0
        %3464 = vmatpush1.xpose.msra.mxu0 0.0
        %3465 = vmatprep.subr.mxu0 0.0
        %3466 = vmatpush1.xpose.msra.mxu0 0.0
        %3467 = vmatprep.subr.mxu0 0.0
        %3468 = vmatpush1.xpose.msra.mxu0 0.0
        %3469 = vmatprep.subr.mxu0 0.0
        %3470 = vmatpush1.xpose.msra.mxu0 0.0
        %3471 = vmatprep.subr.mxu0 0.0
        %3472 = vmatpush1.xpose.msra.mxu0 0.0
        %3473 = vmatprep.subr.mxu0 0.0
        %3474 = vmatpush1.xpose.msra.mxu0 0.0
        %3475 = vmatprep.subr.mxu0 0.0
        %3476 = vmatpush1.xpose.msra.mxu0 0.0
        %3477 = vmatprep.subr.mxu0 0.0
        %3478 = vmatpush1.xpose.msra.mxu0 0.0
        %3479 = vmatprep.subr.mxu0 0.0
        %3480 = vmatpush1.xpose.msra.mxu0 0.0
        %3481 = vmatprep.subr.mxu0 0.0
        %3482 = vmatpush1.xpose.msra.mxu0 0.0
        %3483 = vmatprep.subr.mxu0 0.0
        %3484 = vmatpush1.xpose.msra.mxu0 0.0
        %3485 = vmatprep.subr.mxu0 0.0
        %3486 = vmatpush1.xpose.msra.mxu0 0.0
        %3487 = vmatprep.subr.mxu0 0.0
        %3488 = vmatpush1.xpose.msra.mxu0 0.0
        %3489 = vmatprep.subr.mxu0 0.0
        %3490 = vmatpush1.xpose.msra.mxu0 0.0
        %3491 = vmatprep.subr.mxu0 0.0
        %3492 = vmatpush1.xpose.msra.mxu0 0.0
        %3493 = vmatprep.subr.mxu0 0.0
        %3494 = vmatpush1.xpose.msra.mxu0 0.0
        %3495 = vmatprep.subr.mxu0 0.0
        %3496 = vmatpush1.xpose.msra.mxu0 0.0
        %3497 = vmatprep.subr.mxu0 0.0
        %3498 = vmatpush1.xpose.msra.mxu0 0.0
        %3499 = vmatprep.subr.mxu0 0.0
        %3500 = vmatpush1.xpose.msra.mxu0 0.0
        %3501 = vmatprep.mubr.f32.mxu0 0.0
        %3502 = vmatmul.mubr.f32.gmra.mrb[0].mxu0 %v3431
        %v3503 = vpop.f32.mrb[0].mxu0
        %v3504 = vadd.f32 %v1241, %v3503
        %v3505 = vpop.f32.mrb[0].mxu0
        %3506 = vmatprep.mubr.f32.mxu0 0.0
        %3507 = vmatmul.mubr.f32.gmra.mrb[0].mxu0 %v3433
        %v3508 = vpop.f32.mrb[0].mxu0
        %v3509 = vadd.f32 %v1242, %v3508
        %v3510 = vpop.f32.mrb[0].mxu0
        %3511 = vdwg.mxu0
        %v3512 = vsel %vm1243, %v1178, 0
        %v3514 = vsel %vm1243, %v1180, 0
        %v3516 = vsel %vm1243, %v1234, 0
        %3518 = vmatprep.subr.mxu0 0.0
        %3519 = vmatpush1.xpose.msra.mxu0 %v3516
        %3520 = vmatprep.subr.mxu0 0.0
        %3521 = vmatpush1.xpose.msra.mxu0 0.0
        %3522 = vmatprep.subr.mxu0 0.0
        %3523 = vmatpush1.xpose.msra.mxu0 0.0
        %3524 = vmatprep.subr.mxu0 0.0
        %3525 = vmatpush1.xpose.msra.mxu0 0.0
        %3526 = vmatprep.subr.mxu0 0.0
        %3527 = vmatpush1.xpose.msra.mxu0 0.0
        %3528 = vmatprep.subr.mxu0 0.0
        %3529 = vmatpush1.xpose.msra.mxu0 0.0
        %3530 = vmatprep.subr.mxu0 0.0
        %3531 = vmatpush1.xpose.msra.mxu0 0.0
        %3532 = vmatprep.subr.mxu0 0.0
        %3533 = vmatpush1.xpose.msra.mxu0 0.0
        %3534 = vmatprep.subr.mxu0 0.0
        %3535 = vmatpush1.xpose.msra.mxu0 0.0
        %3536 = vmatprep.subr.mxu0 0.0
        %3537 = vmatpush1.xpose.msra.mxu0 0.0
        %3538 = vmatprep.subr.mxu0 0.0
        %3539 = vmatpush1.xpose.msra.mxu0 0.0
        %3540 = vmatprep.subr.mxu0 0.0
        %3541 = vmatpush1.xpose.msra.mxu0 0.0
        %3542 = vmatprep.subr.mxu0 0.0
        %3543 = vmatpush1.xpose.msra.mxu0 0.0
        %3544 = vmatprep.subr.mxu0 0.0
        %3545 = vmatpush1.xpose.msra.mxu0 0.0
        %3546 = vmatprep.subr.mxu0 0.0
        %3547 = vmatpush1.xpose.msra.mxu0 0.0
        %3548 = vmatprep.subr.mxu0 0.0
        %3549 = vmatpush1.xpose.msra.mxu0 0.0
        %3550 = vmatprep.subr.mxu0 0.0
        %3551 = vmatpush1.xpose.msra.mxu0 0.0
        %3552 = vmatprep.subr.mxu0 0.0
        %3553 = vmatpush1.xpose.msra.mxu0 0.0
        %3554 = vmatprep.subr.mxu0 0.0
        %3555 = vmatpush1.xpose.msra.mxu0 0.0
        %3556 = vmatprep.subr.mxu0 0.0
        %3557 = vmatpush1.xpose.msra.mxu0 0.0
        %3558 = vmatprep.subr.mxu0 0.0
        %3559 = vmatpush1.xpose.msra.mxu0 0.0
        %3560 = vmatprep.subr.mxu0 0.0
        %3561 = vmatpush1.xpose.msra.mxu0 0.0
        %3562 = vmatprep.subr.mxu0 0.0
        %3563 = vmatpush1.xpose.msra.mxu0 0.0
        %3564 = vmatprep.subr.mxu0 0.0
        %3565 = vmatpush1.xpose.msra.mxu0 0.0
        %3566 = vmatprep.subr.mxu0 0.0
        %3567 = vmatpush1.xpose.msra.mxu0 0.0
        %3568 = vmatprep.subr.mxu0 0.0
        %3569 = vmatpush1.xpose.msra.mxu0 0.0
        %3570 = vmatprep.subr.mxu0 0.0
        %3571 = vmatpush1.xpose.msra.mxu0 0.0
        %3572 = vmatprep.subr.mxu0 0.0
        %3573 = vmatpush1.xpose.msra.mxu0 0.0
        %3574 = vmatprep.subr.mxu0 0.0
        %3575 = vmatpush1.xpose.msra.mxu0 0.0
        %3576 = vmatprep.subr.mxu0 0.0
        %3577 = vmatpush1.xpose.msra.mxu0 0.0
        %3578 = vmatprep.subr.mxu0 0.0
        %3579 = vmatpush1.xpose.msra.mxu0 0.0
        %3580 = vmatprep.subr.mxu0 0.0
        %3581 = vmatpush1.xpose.msra.mxu0 0.0
        %3582 = vmatprep.mubr.f32.mxu0 0.0
        %3583 = vmatmul.mubr.f32.gmra.mrb[0].mxu0 %v3512
        %v3584 = vpop.f32.mrb[0].mxu0
        %v3585 = vadd.f32 %v1241, %v3584
        %v3586 = vpop.f32.mrb[0].mxu0
        %3587 = vmatprep.mubr.f32.mxu0 0.0
        %3588 = vmatmul.mubr.f32.gmra.mrb[0].mxu0 %v3514
        %v3589 = vpop.f32.mrb[0].mxu0
        %v3590 = vadd.f32 %v1242, %v3589
        %v3591 = vpop.f32.mrb[0].mxu0
        %3592 = vdwg.mxu0
        %v3593 = vsel %vm1243, %v1182, 0
        %v3595 = vsel %vm1243, %v1184, 0
        %v3597 = vsel %vm1243, %v1236, 0
        %3599 = vmatprep.subr.mxu0 0.0
        %3600 = vmatpush1.xpose.msra.mxu0 %v3597
        %3601 = vmatprep.subr.mxu0 0.0
        %3602 = vmatpush1.xpose.msra.mxu0 0.0
        %3603 = vmatprep.subr.mxu0 0.0
        %3604 = vmatpush1.xpose.msra.mxu0 0.0
        %3605 = vmatprep.subr.mxu0 0.0
        %3606 = vmatpush1.xpose.msra.mxu0 0.0
        %3607 = vmatprep.subr.mxu0 0.0
        %3608 = vmatpush1.xpose.msra.mxu0 0.0
        %3609 = vmatprep.subr.mxu0 0.0
        %3610 = vmatpush1.xpose.msra.mxu0 0.0
        %3611 = vmatprep.subr.mxu0 0.0
        %3612 = vmatpush1.xpose.msra.mxu0 0.0
        %3613 = vmatprep.subr.mxu0 0.0
        %3614 = vmatpush1.xpose.msra.mxu0 0.0
        %3615 = vmatprep.subr.mxu0 0.0
        %3616 = vmatpush1.xpose.msra.mxu0 0.0
        %3617 = vmatprep.subr.mxu0 0.0
        %3618 = vmatpush1.xpose.msra.mxu0 0.0
        %3619 = vmatprep.subr.mxu0 0.0
        %3620 = vmatpush1.xpose.msra.mxu0 0.0
        %3621 = vmatprep.subr.mxu0 0.0
        %3622 = vmatpush1.xpose.msra.mxu0 0.0
        %3623 = vmatprep.subr.mxu0 0.0
        %3624 = vmatpush1.xpose.msra.mxu0 0.0
        %3625 = vmatprep.subr.mxu0 0.0
        %3626 = vmatpush1.xpose.msra.mxu0 0.0
        %3627 = vmatprep.subr.mxu0 0.0
        %3628 = vmatpush1.xpose.msra.mxu0 0.0
        %3629 = vmatprep.subr.mxu0 0.0
        %3630 = vmatpush1.xpose.msra.mxu0 0.0
        %3631 = vmatprep.subr.mxu0 0.0
        %3632 = vmatpush1.xpose.msra.mxu0 0.0
        %3633 = vmatprep.subr.mxu0 0.0
        %3634 = vmatpush1.xpose.msra.mxu0 0.0
        %3635 = vmatprep.subr.mxu0 0.0
        %3636 = vmatpush1.xpose.msra.mxu0 0.0
        %3637 = vmatprep.subr.mxu0 0.0
        %3638 = vmatpush1.xpose.msra.mxu0 0.0
        %3639 = vmatprep.subr.mxu0 0.0
        %3640 = vmatpush1.xpose.msra.mxu0 0.0
        %3641 = vmatprep.subr.mxu0 0.0
        %3642 = vmatpush1.xpose.msra.mxu0 0.0
        %3643 = vmatprep.subr.mxu0 0.0
        %3644 = vmatpush1.xpose.msra.mxu0 0.0
        %3645 = vmatprep.subr.mxu0 0.0
        %3646 = vmatpush1.xpose.msra.mxu0 0.0
        %3647 = vmatprep.subr.mxu0 0.0
        %3648 = vmatpush1.xpose.msra.mxu0 0.0
        %3649 = vmatprep.subr.mxu0 0.0
        %3650 = vmatpush1.xpose.msra.mxu0 0.0
        %3651 = vmatprep.subr.mxu0 0.0
        %3652 = vmatpush1.xpose.msra.mxu0 0.0
        %3653 = vmatprep.subr.mxu0 0.0
        %3654 = vmatpush1.xpose.msra.mxu0 0.0
        %3655 = vmatprep.subr.mxu0 0.0
        %3656 = vmatpush1.xpose.msra.mxu0 0.0
        %3657 = vmatprep.subr.mxu0 0.0
        %3658 = vmatpush1.xpose.msra.mxu0 0.0
        %3659 = vmatprep.subr.mxu0 0.0
        %3660 = vmatpush1.xpose.msra.mxu0 0.0
        %3661 = vmatprep.subr.mxu0 0.0
        %3662 = vmatpush1.xpose.msra.mxu0 0.0
        %3663 = vmatprep.mubr.f32.mxu0 0.0
        %3664 = vmatmul.mubr.f32.gmra.mrb[0].mxu0 %v3593
        %v3665 = vpop.f32.mrb[0].mxu0
        %v3666 = vadd.f32 %v1241, %v3665
        %v3667 = vpop.f32.mrb[0].mxu0
        %3668 = vmatprep.mubr.f32.mxu0 0.0
        %3669 = vmatmul.mubr.f32.gmra.mrb[0].mxu0 %v3595
        %v3670 = vpop.f32.mrb[0].mxu0
        %v3671 = vadd.f32 %v1242, %v3670
        %v3672 = vpop.f32.mrb[0].mxu0
        %3673 = vdwg.mxu0
        %v3674 = vsel %vm1243, %v1186, 0
        %v3676 = vsel %vm1243, %v1188, 0
        %v3678 = vsel %vm1243, %v1238, 0
        %3680 = vmatprep.subr.mxu0 0.0
        %3681 = vmatpush1.xpose.msra.mxu0 %v3678
        %3682 = vmatprep.subr.mxu0 0.0
        %3683 = vmatpush1.xpose.msra.mxu0 0.0
        %3684 = vmatprep.subr.mxu0 0.0
        %3685 = vmatpush1.xpose.msra.mxu0 0.0
        %3686 = vmatprep.subr.mxu0 0.0
        %3687 = vmatpush1.xpose.msra.mxu0 0.0
        %3688 = vmatprep.subr.mxu0 0.0
        %3689 = vmatpush1.xpose.msra.mxu0 0.0
        %3690 = vmatprep.subr.mxu0 0.0
        %3691 = vmatpush1.xpose.msra.mxu0 0.0
        %3692 = vmatprep.subr.mxu0 0.0
        %3693 = vmatpush1.xpose.msra.mxu0 0.0
        %3694 = vmatprep.subr.mxu0 0.0
        %3695 = vmatpush1.xpose.msra.mxu0 0.0
        %3696 = vmatprep.subr.mxu0 0.0
        %3697 = vmatpush1.xpose.msra.mxu0 0.0
        %3698 = vmatprep.subr.mxu0 0.0
        %3699 = vmatpush1.xpose.msra.mxu0 0.0
        %3700 = vmatprep.subr.mxu0 0.0
        %3701 = vmatpush1.xpose.msra.mxu0 0.0
        %3702 = vmatprep.subr.mxu0 0.0
        %3703 = vmatpush1.xpose.msra.mxu0 0.0
        %3704 = vmatprep.subr.mxu0 0.0
        %3705 = vmatpush1.xpose.msra.mxu0 0.0
        %3706 = vmatprep.subr.mxu0 0.0
        %3707 = vmatpush1.xpose.msra.mxu0 0.0
        %3708 = vmatprep.subr.mxu0 0.0
        %3709 = vmatpush1.xpose.msra.mxu0 0.0
        %3710 = vmatprep.subr.mxu0 0.0
        %3711 = vmatpush1.xpose.msra.mxu0 0.0
        %3712 = vmatprep.subr.mxu0 0.0
        %3713 = vmatpush1.xpose.msra.mxu0 0.0
        %3714 = vmatprep.subr.mxu0 0.0
        %3715 = vmatpush1.xpose.msra.mxu0 0.0
        %3716 = vmatprep.subr.mxu0 0.0
        %3717 = vmatpush1.xpose.msra.mxu0 0.0
        %3718 = vmatprep.subr.mxu0 0.0
        %3719 = vmatpush1.xpose.msra.mxu0 0.0
        %3720 = vmatprep.subr.mxu0 0.0
        %3721 = vmatpush1.xpose.msra.mxu0 0.0
        %3722 = vmatprep.subr.mxu0 0.0
        %3723 = vmatpush1.xpose.msra.mxu0 0.0
        %3724 = vmatprep.subr.mxu0 0.0
        %3725 = vmatpush1.xpose.msra.mxu0 0.0
        %3726 = vmatprep.subr.mxu0 0.0
        %3727 = vmatpush1.xpose.msra.mxu0 0.0
        %3728 = vmatprep.subr.mxu0 0.0
        %3729 = vmatpush1.xpose.msra.mxu0 0.0
        %3730 = vmatprep.subr.mxu0 0.0
        %3731 = vmatpush1.xpose.msra.mxu0 0.0
        %3732 = vmatprep.subr.mxu0 0.0
        %3733 = vmatpush1.xpose.msra.mxu0 0.0
        %3734 = vmatprep.subr.mxu0 0.0
        %3735 = vmatpush1.xpose.msra.mxu0 0.0
        %3736 = vmatprep.subr.mxu0 0.0
        %3737 = vmatpush1.xpose.msra.mxu0 0.0
        %3738 = vmatprep.subr.mxu0 0.0
        %3739 = vmatpush1.xpose.msra.mxu0 0.0
        %3740 = vmatprep.subr.mxu0 0.0
        %3741 = vmatpush1.xpose.msra.mxu0 0.0
        %3742 = vmatprep.subr.mxu0 0.0
        %3743 = vmatpush1.xpose.msra.mxu0 0.0
        %3744 = vmatprep.mubr.f32.mxu0 0.0
        %3745 = vmatmul.mubr.f32.gmra.mrb[0].mxu0 %v3674
        %v3746 = vpop.f32.mrb[0].mxu0
        %v3747 = vadd.f32 %v1241, %v3746
        %v3748 = vpop.f32.mrb[0].mxu0
        %3749 = vmatprep.mubr.f32.mxu0 0.0
        %3750 = vmatmul.mubr.f32.gmra.mrb[0].mxu0 %v3676
        %v3751 = vpop.f32.mrb[0].mxu0
        %v3752 = vadd.f32 %v1242, %v3751
        %v3753 = vpop.f32.mrb[0].mxu0
        %3754 = vdwg.mxu0
        %v3755 = vsel %vm1243, %v1190, 0
        %v3757 = vsel %vm1243, %v1192, 0
        %v3759 = vsel %vm1243, %v1240, 0
        %3761 = vmatprep.subr.mxu0 0.0
        %3762 = vmatpush1.xpose.msra.mxu0 %v3759
        %3763 = vmatprep.subr.mxu0 0.0
        %3764 = vmatpush1.xpose.msra.mxu0 0.0
        %3765 = vmatprep.subr.mxu0 0.0
        %3766 = vmatpush1.xpose.msra.mxu0 0.0
        %3767 = vmatprep.subr.mxu0 0.0
        %3768 = vmatpush1.xpose.msra.mxu0 0.0
        %3769 = vmatprep.subr.mxu0 0.0
        %3770 = vmatpush1.xpose.msra.mxu0 0.0
        %3771 = vmatprep.subr.mxu0 0.0
        %3772 = vmatpush1.xpose.msra.mxu0 0.0
        %3773 = vmatprep.subr.mxu0 0.0
        %3774 = vmatpush1.xpose.msra.mxu0 0.0
        %3775 = vmatprep.subr.mxu0 0.0
        %3776 = vmatpush1.xpose.msra.mxu0 0.0
        %3777 = vmatprep.subr.mxu0 0.0
        %3778 = vmatpush1.xpose.msra.mxu0 0.0
        %3779 = vmatprep.subr.mxu0 0.0
        %3780 = vmatpush1.xpose.msra.mxu0 0.0
        %3781 = vmatprep.subr.mxu0 0.0
        %3782 = vmatpush1.xpose.msra.mxu0 0.0
        %3783 = vmatprep.subr.mxu0 0.0
        %3784 = vmatpush1.xpose.msra.mxu0 0.0
        %3785 = vmatprep.subr.mxu0 0.0
        %3786 = vmatpush1.xpose.msra.mxu0 0.0
        %3787 = vmatprep.subr.mxu0 0.0
        %3788 = vmatpush1.xpose.msra.mxu0 0.0
        %3789 = vmatprep.subr.mxu0 0.0
        %3790 = vmatpush1.xpose.msra.mxu0 0.0
        %3791 = vmatprep.subr.mxu0 0.0
        %3792 = vmatpush1.xpose.msra.mxu0 0.0
        %3793 = vmatprep.subr.mxu0 0.0
        %3794 = vmatpush1.xpose.msra.mxu0 0.0
        %3795 = vmatprep.subr.mxu0 0.0
        %3796 = vmatpush1.xpose.msra.mxu0 0.0
        %3797 = vmatprep.subr.mxu0 0.0
        %3798 = vmatpush1.xpose.msra.mxu0 0.0
        %3799 = vmatprep.subr.mxu0 0.0
        %3800 = vmatpush1.xpose.msra.mxu0 0.0
        %3801 = vmatprep.subr.mxu0 0.0
        %3802 = vmatpush1.xpose.msra.mxu0 0.0
        %3803 = vmatprep.subr.mxu0 0.0
        %3804 = vmatpush1.xpose.msra.mxu0 0.0
        %3805 = vmatprep.subr.mxu0 0.0
        %3806 = vmatpush1.xpose.msra.mxu0 0.0
        %3807 = vmatprep.subr.mxu0 0.0
        %3808 = vmatpush1.xpose.msra.mxu0 0.0
        %3809 = vmatprep.subr.mxu0 0.0
        %3810 = vmatpush1.xpose.msra.mxu0 0.0
        %3811 = vmatprep.subr.mxu0 0.0
        %3812 = vmatpush1.xpose.msra.mxu0 0.0
        %3813 = vmatprep.subr.mxu0 0.0
        %3814 = vmatpush1.xpose.msra.mxu0 0.0
        %3815 = vmatprep.subr.mxu0 0.0
        %3816 = vmatpush1.xpose.msra.mxu0 0.0
        %3817 = vmatprep.subr.mxu0 0.0
        %3818 = vmatpush1.xpose.msra.mxu0 0.0
        %3819 = vmatprep.subr.mxu0 0.0
        %3820 = vmatpush1.xpose.msra.mxu0 0.0
        %3821 = vmatprep.subr.mxu0 0.0
        %3822 = vmatpush1.xpose.msra.mxu0 0.0
        %3823 = vmatprep.subr.mxu0 0.0
        %3824 = vmatpush1.xpose.msra.mxu0 0.0
        %3825 = vmatprep.mubr.f32.mxu0 0.0
        %3826 = vmatmul.mubr.f32.gmra.mrb[0].mxu0 %v3755
        %v3827 = vpop.f32.mrb[0].mxu0
        %v3828 = vadd.f32 %v1241, %v3827
        %v3829 = vpop.f32.mrb[0].mxu0
        %3830 = vmatprep.mubr.f32.mxu0 0.0
        %3831 = vmatmul.mubr.f32.gmra.mrb[0].mxu0 %v3757
        %v3832 = vpop.f32.mrb[0].mxu0
        %v3833 = vadd.f32 %v1242, %v3832
        %v3834 = vpop.f32.mrb[0].mxu0
        %3835 = vdwg.mxu0
        %vm3836 = vcmask 64512
        %v3837 = vsel %vm3836, %v1317, -inf
        %3838 = vmax.xlane.f32.xlu0 %v3837
        %v3839 = vpop.xlane.xlu0 %3838
        %v3840 = vsel %vm3836, %v1322, -inf
        %3841 = vmax.xlane.f32.xlu0 %v3840
        %v3842 = vpop.xlane.xlu0 %3841
        %v3843 = vsel %vm3836, %v1398, -inf
        %3844 = vmax.xlane.f32.xlu0 %v3843
        %v3845 = vpop.xlane.xlu0 %3844
        %v3846 = vsel %vm3836, %v1403, -inf
        %3847 = vmax.xlane.f32.xlu0 %v3846
        %v3848 = vpop.xlane.xlu0 %3847
        %v3849 = vsel %vm3836, %v1479, -inf
        %3850 = vmax.xlane.f32.xlu0 %v3849
        %v3851 = vpop.xlane.xlu0 %3850
        %v3852 = vsel %vm3836, %v1484, -inf
        %3853 = vmax.xlane.f32.xlu0 %v3852
        %v3854 = vpop.xlane.xlu0 %3853
        %v3855 = vsel %vm3836, %v1560, -inf
        %3856 = vmax.xlane.f32.xlu0 %v3855
        %v3857 = vpop.xlane.xlu0 %3856
        %v3858 = vsel %vm3836, %v1565, -inf
        %3859 = vmax.xlane.f32.xlu0 %v3858
        %v3860 = vpop.xlane.xlu0 %3859
        %v3861 = vsel %vm3836, %v1641, -inf
        %3862 = vmax.xlane.f32.xlu0 %v3861
        %v3863 = vpop.xlane.xlu0 %3862
        %v3864 = vsel %vm3836, %v1646, -inf
        %3865 = vmax.xlane.f32.xlu0 %v3864
        %v3866 = vpop.xlane.xlu0 %3865
        %v3867 = vsel %vm3836, %v1722, -inf
        %3868 = vmax.xlane.f32.xlu0 %v3867
        %v3869 = vpop.xlane.xlu0 %3868
        %v3870 = vsel %vm3836, %v1727, -inf
        %3871 = vmax.xlane.f32.xlu0 %v3870
        %v3872 = vpop.xlane.xlu0 %3871
        %v3873 = vsel %vm3836, %v1803, -inf
        %3874 = vmax.xlane.f32.xlu0 %v3873
        %v3875 = vpop.xlane.xlu0 %3874
        %v3876 = vsel %vm3836, %v1808, -inf
        %3877 = vmax.xlane.f32.xlu0 %v3876
        %v3878 = vpop.xlane.xlu0 %3877
        %v3879 = vsel %vm3836, %v1884, -inf
        %3880 = vmax.xlane.f32.xlu0 %v3879
        %v3881 = vpop.xlane.xlu0 %3880
        %v3882 = vsel %vm3836, %v1889, -inf
        %3883 = vmax.xlane.f32.xlu0 %v3882
        %v3884 = vpop.xlane.xlu0 %3883
        %v3885 = vsel %vm3836, %v1965, -inf
        %3886 = vmax.xlane.f32.xlu0 %v3885
        %v3887 = vpop.xlane.xlu0 %3886
        %v3888 = vsel %vm3836, %v1970, -inf
        %3889 = vmax.xlane.f32.xlu0 %v3888
        %v3890 = vpop.xlane.xlu0 %3889
        %v3891 = vsel %vm3836, %v2046, -inf
        %3892 = vmax.xlane.f32.xlu0 %v3891
        %v3893 = vpop.xlane.xlu0 %3892
        %v3894 = vsel %vm3836, %v2051, -inf
        %3895 = vmax.xlane.f32.xlu0 %v3894
        %v3896 = vpop.xlane.xlu0 %3895
        %v3897 = vsel %vm3836, %v2127, -inf
        %3898 = vmax.xlane.f32.xlu0 %v3897
        %v3899 = vpop.xlane.xlu0 %3898
        %v3900 = vsel %vm3836, %v2132, -inf
        %3901 = vmax.xlane.f32.xlu0 %v3900
        %v3902 = vpop.xlane.xlu0 %3901
        %v3903 = vsel %vm3836, %v2208, -inf
        %3904 = vmax.xlane.f32.xlu0 %v3903
        %v3905 = vpop.xlane.xlu0 %3904
        %v3906 = vsel %vm3836, %v2213, -inf
        %3907 = vmax.xlane.f32.xlu0 %v3906
        %v3908 = vpop.xlane.xlu0 %3907
        %v3909 = vsel %vm3836, %v2289, -inf
        %3910 = vmax.xlane.f32.xlu0 %v3909
        %v3911 = vpop.xlane.xlu0 %3910
        %v3912 = vsel %vm3836, %v2294, -inf
        %3913 = vmax.xlane.f32.xlu0 %v3912
        %v3914 = vpop.xlane.xlu0 %3913
        %v3915 = vsel %vm3836, %v2370, -inf
        %3916 = vmax.xlane.f32.xlu0 %v3915
        %v3917 = vpop.xlane.xlu0 %3916
        %v3918 = vsel %vm3836, %v2375, -inf
        %3919 = vmax.xlane.f32.xlu0 %v3918
        %v3920 = vpop.xlane.xlu0 %3919
        %v3921 = vsel %vm3836, %v2451, -inf
        %3922 = vmax.xlane.f32.xlu0 %v3921
        %v3923 = vpop.xlane.xlu0 %3922
        %v3924 = vsel %vm3836, %v2456, -inf
        %3925 = vmax.xlane.f32.xlu0 %v3924
        %v3926 = vpop.xlane.xlu0 %3925
        %v3927 = vsel %vm3836, %v2532, -inf
        %3928 = vmax.xlane.f32.xlu0 %v3927
        %v3929 = vpop.xlane.xlu0 %3928
        %v3930 = vsel %vm3836, %v2537, -inf
        %3931 = vmax.xlane.f32.xlu0 %v3930
        %v3932 = vpop.xlane.xlu0 %3931
        %v3933 = vsel %vm3836, %v2613, -inf
        %3934 = vmax.xlane.f32.xlu0 %v3933
        %v3935 = vpop.xlane.xlu0 %3934
        %v3936 = vsel %vm3836, %v2618, -inf
        %3937 = vmax.xlane.f32.xlu0 %v3936
        %v3938 = vpop.xlane.xlu0 %3937
        %v3939 = vsel %vm3836, %v2694, -inf
        %3940 = vmax.xlane.f32.xlu0 %v3939
        %v3941 = vpop.xlane.xlu0 %3940
        %v3942 = vsel %vm3836, %v2699, -inf
        %3943 = vmax.xlane.f32.xlu0 %v3942
        %v3944 = vpop.xlane.xlu0 %3943
        %v3945 = vsel %vm3836, %v2775, -inf
        %3946 = vmax.xlane.f32.xlu0 %v3945
        %v3947 = vpop.xlane.xlu0 %3946
        %v3948 = vsel %vm3836, %v2780, -inf
        %3949 = vmax.xlane.f32.xlu0 %v3948
        %v3950 = vpop.xlane.xlu0 %3949
        %v3951 = vsel %vm3836, %v2856, -inf
        %3952 = vmax.xlane.f32.xlu0 %v3951
        %v3953 = vpop.xlane.xlu0 %3952
        %v3954 = vsel %vm3836, %v2861, -inf
        %3955 = vmax.xlane.f32.xlu0 %v3954
        %v3956 = vpop.xlane.xlu0 %3955
        %v3957 = vsel %vm3836, %v2937, -inf
        %3958 = vmax.xlane.f32.xlu0 %v3957
        %v3959 = vpop.xlane.xlu0 %3958
        %v3960 = vsel %vm3836, %v2942, -inf
        %3961 = vmax.xlane.f32.xlu0 %v3960
        %v3962 = vpop.xlane.xlu0 %3961
        %v3963 = vsel %vm3836, %v3018, -inf
        %3964 = vmax.xlane.f32.xlu0 %v3963
        %v3965 = vpop.xlane.xlu0 %3964
        %v3966 = vsel %vm3836, %v3023, -inf
        %3967 = vmax.xlane.f32.xlu0 %v3966
        %v3968 = vpop.xlane.xlu0 %3967
        %v3969 = vsel %vm3836, %v3099, -inf
        %3970 = vmax.xlane.f32.xlu0 %v3969
        %v3971 = vpop.xlane.xlu0 %3970
        %v3972 = vsel %vm3836, %v3104, -inf
        %3973 = vmax.xlane.f32.xlu0 %v3972
        %v3974 = vpop.xlane.xlu0 %3973
        %v3975 = vsel %vm3836, %v3180, -inf
        %3976 = vmax.xlane.f32.xlu0 %v3975
        %v3977 = vpop.xlane.xlu0 %3976
        %v3978 = vsel %vm3836, %v3185, -inf
        %3979 = vmax.xlane.f32.xlu0 %v3978
        %v3980 = vpop.xlane.xlu0 %3979
        %v3981 = vsel %vm3836, %v3261, -inf
        %3982 = vmax.xlane.f32.xlu0 %v3981
        %v3983 = vpop.xlane.xlu0 %3982
        %v3984 = vsel %vm3836, %v3266, -inf
        %3985 = vmax.xlane.f32.xlu0 %v3984
        %v3986 = vpop.xlane.xlu0 %3985
        %v3987 = vsel %vm3836, %v3342, -inf
        %3988 = vmax.xlane.f32.xlu0 %v3987
        %v3989 = vpop.xlane.xlu0 %3988
        %v3990 = vsel %vm3836, %v3347, -inf
        %3991 = vmax.xlane.f32.xlu0 %v3990
        %v3992 = vpop.xlane.xlu0 %3991
        %v3993 = vsel %vm3836, %v3423, -inf
        %3994 = vmax.xlane.f32.xlu0 %v3993
        %v3995 = vpop.xlane.xlu0 %3994
        %v3996 = vsel %vm3836, %v3428, -inf
        %3997 = vmax.xlane.f32.xlu0 %v3996
        %v3998 = vpop.xlane.xlu0 %3997
        %v3999 = vsel %vm3836, %v3504, -inf
        %4000 = vmax.xlane.f32.xlu0 %v3999
        %v4001 = vpop.xlane.xlu0 %4000
        %v4002 = vsel %vm3836, %v3509, -inf
        %4003 = vmax.xlane.f32.xlu0 %v4002
        %v4004 = vpop.xlane.xlu0 %4003
        %v4005 = vsel %vm3836, %v3585, -inf
        %4006 = vmax.xlane.f32.xlu0 %v4005
        %v4007 = vpop.xlane.xlu0 %4006
        %v4008 = vsel %vm3836, %v3590, -inf
        %4009 = vmax.xlane.f32.xlu0 %v4008
        %v4010 = vpop.xlane.xlu0 %4009
        %v4011 = vsel %vm3836, %v3666, -inf
        %4012 = vmax.xlane.f32.xlu0 %v4011
        %v4013 = vpop.xlane.xlu0 %4012
        %v4014 = vsel %vm3836, %v3671, -inf
        %4015 = vmax.xlane.f32.xlu0 %v4014
        %v4016 = vpop.xlane.xlu0 %4015
        %v4017 = vsel %vm3836, %v3747, -inf
        %4018 = vmax.xlane.f32.xlu0 %v4017
        %v4019 = vpop.xlane.xlu0 %4018
        %v4020 = vsel %vm3836, %v3752, -inf
        %4021 = vmax.xlane.f32.xlu0 %v4020
        %v4022 = vpop.xlane.xlu0 %4021
        %v4023 = vsel %vm3836, %v3828, -inf
        %4024 = vmax.xlane.f32.xlu0 %v4023
        %v4025 = vpop.xlane.xlu0 %4024
        %v4026 = vsel %vm3836, %v3833, -inf
        %4027 = vmax.xlane.f32.xlu0 %v4026
        %v4028 = vpop.xlane.xlu0 %4027
        %v4029 = vsub.f32 %v1317, %v3839
        %v4030 = vsub.f32 %v1322, %v3842
        %v4031 = vsub.f32 %v1398, %v3845
        %v4032 = vsub.f32 %v1403, %v3848
        %v4033 = vsub.f32 %v1479, %v3851
        %v4034 = vsub.f32 %v1484, %v3854
        %v4035 = vsub.f32 %v1560, %v3857
        %v4036 = vsub.f32 %v1565, %v3860
        %v4037 = vsub.f32 %v1641, %v3863
        %v4038 = vsub.f32 %v1646, %v3866
        %v4039 = vsub.f32 %v1722, %v3869
        %v4040 = vsub.f32 %v1727, %v3872
        %v4041 = vsub.f32 %v1803, %v3875
        %v4042 = vsub.f32 %v1808, %v3878
        %v4043 = vsub.f32 %v1884, %v3881
        %v4044 = vsub.f32 %v1889, %v3884
        %v4045 = vsub.f32 %v1965, %v3887
        %v4046 = vsub.f32 %v1970, %v3890
        %v4047 = vsub.f32 %v2046, %v3893
        %v4048 = vsub.f32 %v2051, %v3896
        %v4049 = vsub.f32 %v2127, %v3899
        %v4050 = vsub.f32 %v2132, %v3902
        %v4051 = vsub.f32 %v2208, %v3905
        %v4052 = vsub.f32 %v2213, %v3908
        %v4053 = vsub.f32 %v2289, %v3911
        %v4054 = vsub.f32 %v2294, %v3914
        %v4055 = vsub.f32 %v2370, %v3917
        %v4056 = vsub.f32 %v2375, %v3920
        %v4057 = vsub.f32 %v2451, %v3923
        %v4058 = vsub.f32 %v2456, %v3926
        %v4059 = vsub.f32 %v2532, %v3929
        %v4060 = vsub.f32 %v2537, %v3932
        %v4061 = vsub.f32 %v2613, %v3935
        %v4062 = vsub.f32 %v2618, %v3938
        %v4063 = vsub.f32 %v2694, %v3941
        %v4064 = vsub.f32 %v2699, %v3944
        %v4065 = vsub.f32 %v2775, %v3947
        %v4066 = vsub.f32 %v2780, %v3950
        %v4067 = vsub.f32 %v2856, %v3953
        %v4068 = vsub.f32 %v2861, %v3956
        %v4069 = vsub.f32 %v2937, %v3959
        %v4070 = vsub.f32 %v2942, %v3962
        %v4071 = vsub.f32 %v3018, %v3965
        %v4072 = vsub.f32 %v3023, %v3968
        %v4073 = vsub.f32 %v3099, %v3971
        %v4074 = vsub.f32 %v3104, %v3974
        %v4075 = vsub.f32 %v3180, %v3977
        %v4076 = vsub.f32 %v3185, %v3980
        %v4077 = vsub.f32 %v3261, %v3983
        %v4078 = vsub.f32 %v3266, %v3986
        %v4079 = vsub.f32 %v3342, %v3989
        %v4080 = vsub.f32 %v3347, %v3992
        %v4081 = vsub.f32 %v3423, %v3995
        %v4082 = vsub.f32 %v3428, %v3998
        %v4083 = vsub.f32 %v3504, %v4001
        %v4084 = vsub.f32 %v3509, %v4004
        %v4085 = vsub.f32 %v3585, %v4007
        %v4086 = vsub.f32 %v3590, %v4010
        %v4087 = vsub.f32 %v3666, %v4013
        %v4088 = vsub.f32 %v3671, %v4016
        %v4089 = vsub.f32 %v3747, %v4019
        %v4090 = vsub.f32 %v3752, %v4022
        %v4091 = vsub.f32 %v3828, %v4025
        %v4092 = vsub.f32 %v3833, %v4028
        %v4093 = vmul.f32 %v4029, 1.442695
        %v4094 = vpow.pop %v4093
        %v4095 = vmul.f32 %v4030, 1.442695
        %v4096 = vpow.pop %v4095
        %v4097 = vmul.f32 %v4031, 1.442695
        %v4098 = vpow.pop %v4097
        %v4099 = vmul.f32 %v4032, 1.442695
        %v4100 = vpow.pop %v4099
        %v4101 = vmul.f32 %v4033, 1.442695
        %v4102 = vpow.pop %v4101
        %v4103 = vmul.f32 %v4034, 1.442695
        %v4104 = vpow.pop %v4103
        %v4105 = vmul.f32 %v4035, 1.442695
        %v4106 = vpow.pop %v4105
        %v4107 = vmul.f32 %v4036, 1.442695
        %v4108 = vpow.pop %v4107
        %v4109 = vmul.f32 %v4037, 1.442695
        %v4110 = vpow.pop %v4109
        %v4111 = vmul.f32 %v4038, 1.442695
        %v4112 = vpow.pop %v4111
        %v4113 = vmul.f32 %v4039, 1.442695
        %v4114 = vpow.pop %v4113
        %v4115 = vmul.f32 %v4040, 1.442695
        %v4116 = vpow.pop %v4115
        %v4117 = vmul.f32 %v4041, 1.442695
        %v4118 = vpow.pop %v4117
        %v4119 = vmul.f32 %v4042, 1.442695
        %v4120 = vpow.pop %v4119
        %v4121 = vmul.f32 %v4043, 1.442695
        %v4122 = vpow.pop %v4121
        %v4123 = vmul.f32 %v4044, 1.442695
        %v4124 = vpow.pop %v4123
        %v4125 = vmul.f32 %v4045, 1.442695
        %v4126 = vpow.pop %v4125
        %v4127 = vmul.f32 %v4046, 1.442695
        %v4128 = vpow.pop %v4127
        %v4129 = vmul.f32 %v4047, 1.442695
        %v4130 = vpow.pop %v4129
        %v4131 = vmul.f32 %v4048, 1.442695
        %v4132 = vpow.pop %v4131
        %v4133 = vmul.f32 %v4049, 1.442695
        %v4134 = vpow.pop %v4133
        %v4135 = vmul.f32 %v4050, 1.442695
        %v4136 = vpow.pop %v4135
        %v4137 = vmul.f32 %v4051, 1.442695
        %v4138 = vpow.pop %v4137
        %v4139 = vmul.f32 %v4052, 1.442695
        %v4140 = vpow.pop %v4139
        %v4141 = vmul.f32 %v4053, 1.442695
        %v4142 = vpow.pop %v4141
        %v4143 = vmul.f32 %v4054, 1.442695
        %v4144 = vpow.pop %v4143
        %v4145 = vmul.f32 %v4055, 1.442695
        %v4146 = vpow.pop %v4145
        %v4147 = vmul.f32 %v4056, 1.442695
        %v4148 = vpow.pop %v4147
        %v4149 = vmul.f32 %v4057, 1.442695
        %v4150 = vpow.pop %v4149
        %v4151 = vmul.f32 %v4058, 1.442695
        %v4152 = vpow.pop %v4151
        %v4153 = vmul.f32 %v4059, 1.442695
        %v4154 = vpow.pop %v4153
        %v4155 = vmul.f32 %v4060, 1.442695
        %v4156 = vpow.pop %v4155
        %v4157 = vmul.f32 %v4061, 1.442695
        %v4158 = vpow.pop %v4157
        %v4159 = vmul.f32 %v4062, 1.442695
        %v4160 = vpow.pop %v4159
        %v4161 = vmul.f32 %v4063, 1.442695
        %v4162 = vpow.pop %v4161
        %v4163 = vmul.f32 %v4064, 1.442695
        %v4164 = vpow.pop %v4163
        %v4165 = vmul.f32 %v4065, 1.442695
        %v4166 = vpow.pop %v4165
        %v4167 = vmul.f32 %v4066, 1.442695
        %v4168 = vpow.pop %v4167
        %v4169 = vmul.f32 %v4067, 1.442695
        %v4170 = vpow.pop %v4169
        %v4171 = vmul.f32 %v4068, 1.442695
        %v4172 = vpow.pop %v4171
        %v4173 = vmul.f32 %v4069, 1.442695
        %v4174 = vpow.pop %v4173
        %v4175 = vmul.f32 %v4070, 1.442695
        %v4176 = vpow.pop %v4175
        %v4177 = vmul.f32 %v4071, 1.442695
        %v4178 = vpow.pop %v4177
        %v4179 = vmul.f32 %v4072, 1.442695
        %v4180 = vpow.pop %v4179
        %v4181 = vmul.f32 %v4073, 1.442695
        %v4182 = vpow.pop %v4181
        %v4183 = vmul.f32 %v4074, 1.442695
        %v4184 = vpow.pop %v4183
        %v4185 = vmul.f32 %v4075, 1.442695
        %v4186 = vpow.pop %v4185
        %v4187 = vmul.f32 %v4076, 1.442695
        %v4188 = vpow.pop %v4187
        %v4189 = vmul.f32 %v4077, 1.442695
        %v4190 = vpow.pop %v4189
        %v4191 = vmul.f32 %v4078, 1.442695
        %v4192 = vpow.pop %v4191
        %v4193 = vmul.f32 %v4079, 1.442695
        %v4194 = vpow.pop %v4193
        %v4195 = vmul.f32 %v4080, 1.442695
        %v4196 = vpow.pop %v4195
        %v4197 = vmul.f32 %v4081, 1.442695
        %v4198 = vpow.pop %v4197
        %v4199 = vmul.f32 %v4082, 1.442695
        %v4200 = vpow.pop %v4199
        %v4201 = vmul.f32 %v4083, 1.442695
        %v4202 = vpow.pop %v4201
        %v4203 = vmul.f32 %v4084, 1.442695
        %v4204 = vpow.pop %v4203
        %v4205 = vmul.f32 %v4085, 1.442695
        %v4206 = vpow.pop %v4205
        %v4207 = vmul.f32 %v4086, 1.442695
        %v4208 = vpow.pop %v4207
        %v4209 = vmul.f32 %v4087, 1.442695
        %v4210 = vpow.pop %v4209
        %v4211 = vmul.f32 %v4088, 1.442695
        %v4212 = vpow.pop %v4211
        %v4213 = vmul.f32 %v4089, 1.442695
        %v4214 = vpow.pop %v4213
        %v4215 = vmul.f32 %v4090, 1.442695
        %v4216 = vpow.pop %v4215
        %v4217 = vmul.f32 %v4091, 1.442695
        %v4218 = vpow.pop %v4217
        %v4219 = vmul.f32 %v4092, 1.442695
        %v4220 = vpow.pop %v4219
        %v4221 = vsel %vm3836, %v4094, 0.0
        %4222 = vadd.xlane.f32.xlu0 %v4221
        %v4223 = vpop.xlane.xlu0 %4222
        %v4224 = vsel %vm3836, %v4096, 0.0
        %4225 = vadd.xlane.f32.xlu0 %v4224
        %v4226 = vpop.xlane.xlu0 %4225
        %v4227 = vsel %vm3836, %v4098, 0.0
        %4228 = vadd.xlane.f32.xlu0 %v4227
        %v4229 = vpop.xlane.xlu0 %4228
        %v4230 = vsel %vm3836, %v4100, 0.0
        %4231 = vadd.xlane.f32.xlu0 %v4230
        %v4232 = vpop.xlane.xlu0 %4231
        %v4233 = vsel %vm3836, %v4102, 0.0
        %4234 = vadd.xlane.f32.xlu0 %v4233
        %v4235 = vpop.xlane.xlu0 %4234
        %v4236 = vsel %vm3836, %v4104, 0.0
        %4237 = vadd.xlane.f32.xlu0 %v4236
        %v4238 = vpop.xlane.xlu0 %4237
        %v4239 = vsel %vm3836, %v4106, 0.0
        %4240 = vadd.xlane.f32.xlu0 %v4239
        %v4241 = vpop.xlane.xlu0 %4240
        %v4242 = vsel %vm3836, %v4108, 0.0
        %4243 = vadd.xlane.f32.xlu0 %v4242
        %v4244 = vpop.xlane.xlu0 %4243
        %v4245 = vsel %vm3836, %v4110, 0.0
        %4246 = vadd.xlane.f32.xlu0 %v4245
        %v4247 = vpop.xlane.xlu0 %4246
        %v4248 = vsel %vm3836, %v4112, 0.0
        %4249 = vadd.xlane.f32.xlu0 %v4248
        %v4250 = vpop.xlane.xlu0 %4249
        %v4251 = vsel %vm3836, %v4114, 0.0
        %4252 = vadd.xlane.f32.xlu0 %v4251
        %v4253 = vpop.xlane.xlu0 %4252
        %v4254 = vsel %vm3836, %v4116, 0.0
        %4255 = vadd.xlane.f32.xlu0 %v4254
        %v4256 = vpop.xlane.xlu0 %4255
        %v4257 = vsel %vm3836, %v4118, 0.0
        %4258 = vadd.xlane.f32.xlu0 %v4257
        %v4259 = vpop.xlane.xlu0 %4258
        %v4260 = vsel %vm3836, %v4120, 0.0
        %4261 = vadd.xlane.f32.xlu0 %v4260
        %v4262 = vpop.xlane.xlu0 %4261
        %v4263 = vsel %vm3836, %v4122, 0.0
        %4264 = vadd.xlane.f32.xlu0 %v4263
        %v4265 = vpop.xlane.xlu0 %4264
        %v4266 = vsel %vm3836, %v4124, 0.0
        %4267 = vadd.xlane.f32.xlu0 %v4266
        %v4268 = vpop.xlane.xlu0 %4267
        %v4269 = vsel %vm3836, %v4126, 0.0
        %4270 = vadd.xlane.f32.xlu0 %v4269
        %v4271 = vpop.xlane.xlu0 %4270
        %v4272 = vsel %vm3836, %v4128, 0.0
        %4273 = vadd.xlane.f32.xlu0 %v4272
        %v4274 = vpop.xlane.xlu0 %4273
        %v4275 = vsel %vm3836, %v4130, 0.0
        %4276 = vadd.xlane.f32.xlu0 %v4275
        %v4277 = vpop.xlane.xlu0 %4276
        %v4278 = vsel %vm3836, %v4132, 0.0
        %4279 = vadd.xlane.f32.xlu0 %v4278
        %v4280 = vpop.xlane.xlu0 %4279
        %v4281 = vsel %vm3836, %v4134, 0.0
        %4282 = vadd.xlane.f32.xlu0 %v4281
        %v4283 = vpop.xlane.xlu0 %4282
        %v4284 = vsel %vm3836, %v4136, 0.0
        %4285 = vadd.xlane.f32.xlu0 %v4284
        %v4286 = vpop.xlane.xlu0 %4285
        %v4287 = vsel %vm3836, %v4138, 0.0
        %4288 = vadd.xlane.f32.xlu0 %v4287
        %v4289 = vpop.xlane.xlu0 %4288
        %v4290 = vsel %vm3836, %v4140, 0.0
        %4291 = vadd.xlane.f32.xlu0 %v4290
        %v4292 = vpop.xlane.xlu0 %4291
        %v4293 = vsel %vm3836, %v4142, 0.0
        %4294 = vadd.xlane.f32.xlu0 %v4293
        %v4295 = vpop.xlane.xlu0 %4294
        %v4296 = vsel %vm3836, %v4144, 0.0
        %4297 = vadd.xlane.f32.xlu0 %v4296
        %v4298 = vpop.xlane.xlu0 %4297
        %v4299 = vsel %vm3836, %v4146, 0.0
        %4300 = vadd.xlane.f32.xlu0 %v4299
        %v4301 = vpop.xlane.xlu0 %4300
        %v4302 = vsel %vm3836, %v4148, 0.0
        %4303 = vadd.xlane.f32.xlu0 %v4302
        %v4304 = vpop.xlane.xlu0 %4303
        %v4305 = vsel %vm3836, %v4150, 0.0
        %4306 = vadd.xlane.f32.xlu0 %v4305
        %v4307 = vpop.xlane.xlu0 %4306
        %v4308 = vsel %vm3836, %v4152, 0.0
        %4309 = vadd.xlane.f32.xlu0 %v4308
        %v4310 = vpop.xlane.xlu0 %4309
        %v4311 = vsel %vm3836, %v4154, 0.0
        %4312 = vadd.xlane.f32.xlu0 %v4311
        %v4313 = vpop.xlane.xlu0 %4312
        %v4314 = vsel %vm3836, %v4156, 0.0
        %4315 = vadd.xlane.f32.xlu0 %v4314
        %v4316 = vpop.xlane.xlu0 %4315
        %v4317 = vsel %vm3836, %v4158, 0.0
        %4318 = vadd.xlane.f32.xlu0 %v4317
        %v4319 = vpop.xlane.xlu0 %4318
        %v4320 = vsel %vm3836, %v4160, 0.0
        %4321 = vadd.xlane.f32.xlu0 %v4320
        %v4322 = vpop.xlane.xlu0 %4321
        %v4323 = vsel %vm3836, %v4162, 0.0
        %4324 = vadd.xlane.f32.xlu0 %v4323
        %v4325 = vpop.xlane.xlu0 %4324
        %v4326 = vsel %vm3836, %v4164, 0.0
        %4327 = vadd.xlane.f32.xlu0 %v4326
        %v4328 = vpop.xlane.xlu0 %4327
        %v4329 = vsel %vm3836, %v4166, 0.0
        %4330 = vadd.xlane.f32.xlu0 %v4329
        %v4331 = vpop.xlane.xlu0 %4330
        %v4332 = vsel %vm3836, %v4168, 0.0
        %4333 = vadd.xlane.f32.xlu0 %v4332
        %v4334 = vpop.xlane.xlu0 %4333
        %v4335 = vsel %vm3836, %v4170, 0.0
        %4336 = vadd.xlane.f32.xlu0 %v4335
        %v4337 = vpop.xlane.xlu0 %4336
        %v4338 = vsel %vm3836, %v4172, 0.0
        %4339 = vadd.xlane.f32.xlu0 %v4338
        %v4340 = vpop.xlane.xlu0 %4339
        %v4341 = vsel %vm3836, %v4174, 0.0
        %4342 = vadd.xlane.f32.xlu0 %v4341
        %v4343 = vpop.xlane.xlu0 %4342
        %v4344 = vsel %vm3836, %v4176, 0.0
        %4345 = vadd.xlane.f32.xlu0 %v4344
        %v4346 = vpop.xlane.xlu0 %4345
        %v4347 = vsel %vm3836, %v4178, 0.0
        %4348 = vadd.xlane.f32.xlu0 %v4347
        %v4349 = vpop.xlane.xlu0 %4348
        %v4350 = vsel %vm3836, %v4180, 0.0
        %4351 = vadd.xlane.f32.xlu0 %v4350
        %v4352 = vpop.xlane.xlu0 %4351
        %v4353 = vsel %vm3836, %v4182, 0.0
        %4354 = vadd.xlane.f32.xlu0 %v4353
        %v4355 = vpop.xlane.xlu0 %4354
        %v4356 = vsel %vm3836, %v4184, 0.0
        %4357 = vadd.xlane.f32.xlu0 %v4356
        %v4358 = vpop.xlane.xlu0 %4357
        %v4359 = vsel %vm3836, %v4186, 0.0
        %4360 = vadd.xlane.f32.xlu0 %v4359
        %v4361 = vpop.xlane.xlu0 %4360
        %v4362 = vsel %vm3836, %v4188, 0.0
        %4363 = vadd.xlane.f32.xlu0 %v4362
        %v4364 = vpop.xlane.xlu0 %4363
        %v4365 = vsel %vm3836, %v4190, 0.0
        %4366 = vadd.xlane.f32.xlu0 %v4365
        %v4367 = vpop.xlane.xlu0 %4366
        %v4368 = vsel %vm3836, %v4192, 0.0
        %4369 = vadd.xlane.f32.xlu0 %v4368
        %v4370 = vpop.xlane.xlu0 %4369
        %v4371 = vsel %vm3836, %v4194, 0.0
        %4372 = vadd.xlane.f32.xlu0 %v4371
        %v4373 = vpop.xlane.xlu0 %4372
        %v4374 = vsel %vm3836, %v4196, 0.0
        %4375 = vadd.xlane.f32.xlu0 %v4374
        %v4376 = vpop.xlane.xlu0 %4375
        %v4377 = vsel %vm3836, %v4198, 0.0
        %4378 = vadd.xlane.f32.xlu0 %v4377
        %v4379 = vpop.xlane.xlu0 %4378
        %v4380 = vsel %vm3836, %v4200, 0.0
        %4381 = vadd.xlane.f32.xlu0 %v4380
        %v4382 = vpop.xlane.xlu0 %4381
        %v4383 = vsel %vm3836, %v4202, 0.0
        %4384 = vadd.xlane.f32.xlu0 %v4383
        %v4385 = vpop.xlane.xlu0 %4384
        %v4386 = vsel %vm3836, %v4204, 0.0
        %4387 = vadd.xlane.f32.xlu0 %v4386
        %v4388 = vpop.xlane.xlu0 %4387
        %v4389 = vsel %vm3836, %v4206, 0.0
        %4390 = vadd.xlane.f32.xlu0 %v4389
        %v4391 = vpop.xlane.xlu0 %4390
        %v4392 = vsel %vm3836, %v4208, 0.0
        %4393 = vadd.xlane.f32.xlu0 %v4392
        %v4394 = vpop.xlane.xlu0 %4393
        %v4395 = vsel %vm3836, %v4210, 0.0
        %4396 = vadd.xlane.f32.xlu0 %v4395
        %v4397 = vpop.xlane.xlu0 %4396
        %v4398 = vsel %vm3836, %v4212, 0.0
        %4399 = vadd.xlane.f32.xlu0 %v4398
        %v4400 = vpop.xlane.xlu0 %4399
        %v4401 = vsel %vm3836, %v4214, 0.0
        %4402 = vadd.xlane.f32.xlu0 %v4401
        %v4403 = vpop.xlane.xlu0 %4402
        %v4404 = vsel %vm3836, %v4216, 0.0
        %4405 = vadd.xlane.f32.xlu0 %v4404
        %v4406 = vpop.xlane.xlu0 %4405
        %v4407 = vsel %vm3836, %v4218, 0.0
        %4408 = vadd.xlane.f32.xlu0 %v4407
        %v4409 = vpop.xlane.xlu0 %4408
        %v4410 = vsel %vm3836, %v4220, 0.0
        %4411 = vadd.xlane.f32.xlu0 %v4410
        %v4412 = vpop.xlane.xlu0 %4411
        %v4413 = vrcp.pop %v4223
        %v4414 = vmul.f32 %v4094, %v4413
        %v4415 = vrcp.pop %v4226
        %v4416 = vmul.f32 %v4096, %v4415
        %v4417 = vrcp.pop %v4229
        %v4418 = vmul.f32 %v4098, %v4417
        %v4419 = vrcp.pop %v4232
        %v4420 = vmul.f32 %v4100, %v4419
        %v4421 = vrcp.pop %v4235
        %v4422 = vmul.f32 %v4102, %v4421
        %v4423 = vrcp.pop %v4238
        %v4424 = vmul.f32 %v4104, %v4423
        %v4425 = vrcp.pop %v4241
        %v4426 = vmul.f32 %v4106, %v4425
        %v4427 = vrcp.pop %v4244
        %v4428 = vmul.f32 %v4108, %v4427
        %v4429 = vrcp.pop %v4247
        %v4430 = vmul.f32 %v4110, %v4429
        %v4431 = vrcp.pop %v4250
        %v4432 = vmul.f32 %v4112, %v4431
        %v4433 = vrcp.pop %v4253
        %v4434 = vmul.f32 %v4114, %v4433
        %v4435 = vrcp.pop %v4256
        %v4436 = vmul.f32 %v4116, %v4435
        %v4437 = vrcp.pop %v4259
        %v4438 = vmul.f32 %v4118, %v4437
        %v4439 = vrcp.pop %v4262
        %v4440 = vmul.f32 %v4120, %v4439
        %v4441 = vrcp.pop %v4265
        %v4442 = vmul.f32 %v4122, %v4441
        %v4443 = vrcp.pop %v4268
        %v4444 = vmul.f32 %v4124, %v4443
        %v4445 = vrcp.pop %v4271
        %v4446 = vmul.f32 %v4126, %v4445
        %v4447 = vrcp.pop %v4274
        %v4448 = vmul.f32 %v4128, %v4447
        %v4449 = vrcp.pop %v4277
        %v4450 = vmul.f32 %v4130, %v4449
        %v4451 = vrcp.pop %v4280
        %v4452 = vmul.f32 %v4132, %v4451
        %v4453 = vrcp.pop %v4283
        %v4454 = vmul.f32 %v4134, %v4453
        %v4455 = vrcp.pop %v4286
        %v4456 = vmul.f32 %v4136, %v4455
        %v4457 = vrcp.pop %v4289
        %v4458 = vmul.f32 %v4138, %v4457
        %v4459 = vrcp.pop %v4292
        %v4460 = vmul.f32 %v4140, %v4459
        %v4461 = vrcp.pop %v4295
        %v4462 = vmul.f32 %v4142, %v4461
        %v4463 = vrcp.pop %v4298
        %v4464 = vmul.f32 %v4144, %v4463
        %v4465 = vrcp.pop %v4301
        %v4466 = vmul.f32 %v4146, %v4465
        %v4467 = vrcp.pop %v4304
        %v4468 = vmul.f32 %v4148, %v4467
        %v4469 = vrcp.pop %v4307
        %v4470 = vmul.f32 %v4150, %v4469
        %v4471 = vrcp.pop %v4310
        %v4472 = vmul.f32 %v4152, %v4471
        %v4473 = vrcp.pop %v4313
        %v4474 = vmul.f32 %v4154, %v4473
        %v4475 = vrcp.pop %v4316
        %v4476 = vmul.f32 %v4156, %v4475
        %v4477 = vrcp.pop %v4319
        %v4478 = vmul.f32 %v4158, %v4477
        %v4479 = vrcp.pop %v4322
        %v4480 = vmul.f32 %v4160, %v4479
        %v4481 = vrcp.pop %v4325
        %v4482 = vmul.f32 %v4162, %v4481
        %v4483 = vrcp.pop %v4328
        %v4484 = vmul.f32 %v4164, %v4483
        %v4485 = vrcp.pop %v4331
        %v4486 = vmul.f32 %v4166, %v4485
        %v4487 = vrcp.pop %v4334
        %v4488 = vmul.f32 %v4168, %v4487
        %v4489 = vrcp.pop %v4337
        %v4490 = vmul.f32 %v4170, %v4489
        %v4491 = vrcp.pop %v4340
        %v4492 = vmul.f32 %v4172, %v4491
        %v4493 = vrcp.pop %v4343
        %v4494 = vmul.f32 %v4174, %v4493
        %v4495 = vrcp.pop %v4346
        %v4496 = vmul.f32 %v4176, %v4495
        %v4497 = vrcp.pop %v4349
        %v4498 = vmul.f32 %v4178, %v4497
        %v4499 = vrcp.pop %v4352
        %v4500 = vmul.f32 %v4180, %v4499
        %v4501 = vrcp.pop %v4355
        %v4502 = vmul.f32 %v4182, %v4501
        %v4503 = vrcp.pop %v4358
        %v4504 = vmul.f32 %v4184, %v4503
        %v4505 = vrcp.pop %v4361
        %v4506 = vmul.f32 %v4186, %v4505
        %v4507 = vrcp.pop %v4364
        %v4508 = vmul.f32 %v4188, %v4507
        %v4509 = vrcp.pop %v4367
        %v4510 = vmul.f32 %v4190, %v4509
        %v4511 = vrcp.pop %v4370
        %v4512 = vmul.f32 %v4192, %v4511
        %v4513 = vrcp.pop %v4373
        %v4514 = vmul.f32 %v4194, %v4513
        %v4515 = vrcp.pop %v4376
        %v4516 = vmul.f32 %v4196, %v4515
        %v4517 = vrcp.pop %v4379
        %v4518 = vmul.f32 %v4198, %v4517
        %v4519 = vrcp.pop %v4382
        %v4520 = vmul.f32 %v4200, %v4519
        %v4521 = vrcp.pop %v4385
        %v4522 = vmul.f32 %v4202, %v4521
        %v4523 = vrcp.pop %v4388
        %v4524 = vmul.f32 %v4204, %v4523
        %v4525 = vrcp.pop %v4391
        %v4526 = vmul.f32 %v4206, %v4525
        %v4527 = vrcp.pop %v4394
        %v4528 = vmul.f32 %v4208, %v4527
        %v4529 = vrcp.pop %v4397
        %v4530 = vmul.f32 %v4210, %v4529
        %v4531 = vrcp.pop %v4400
        %v4532 = vmul.f32 %v4212, %v4531
        %v4533 = vrcp.pop %v4403
        %v4534 = vmul.f32 %v4214, %v4533
        %v4535 = vrcp.pop %v4406
        %v4536 = vmul.f32 %v4216, %v4535
        %v4537 = vrcp.pop %v4409
        %v4538 = vmul.f32 %v4218, %v4537
        %v4539 = vrcp.pop %v4412
        %v4540 = vmul.f32 %v4220, %v4539
        %4541 = vrot.lane.b32.xlu0 %v1050, 64
        %v4542 = vpop.permute.xlu0 %4541
        %v4545 = vsel %vm3836, %v4414, 0
        %v4548 = vsel %vm3836, %v4416, 0
        %4550 = vmatprep.subr.mxu0 0.0
        %4551 = vmatpush1.msra.mxu0 %v4542
        %4552 = vmatprep.subr.mxu0 0.0
        %4553 = vmatpush1.msra.mxu0 0.0
        %4554 = vmatprep.subr.mxu0 0.0
        %4555 = vmatpush1.msra.mxu0 0.0
        %4556 = vmatprep.subr.mxu0 0.0
        %4557 = vmatpush1.msra.mxu0 0.0
        %4558 = vmatprep.subr.mxu0 0.0
        %4559 = vmatpush1.msra.mxu0 0.0
        %4560 = vmatprep.subr.mxu0 0.0
        %4561 = vmatpush1.msra.mxu0 0.0
        %4562 = vmatprep.subr.mxu0 0.0
        %4563 = vmatpush1.msra.mxu0 0.0
        %4564 = vmatprep.subr.mxu0 0.0
        %4565 = vmatpush1.msra.mxu0 0.0
        %4566 = vmatprep.subr.mxu0 0.0
        %4567 = vmatpush1.msra.mxu0 0.0
        %4568 = vmatprep.subr.mxu0 0.0
        %4569 = vmatpush1.msra.mxu0 0.0
        %4570 = vmatprep.subr.mxu0 0.0
        %4571 = vmatpush1.msra.mxu0 0.0
        %4572 = vmatprep.subr.mxu0 0.0
        %4573 = vmatpush1.msra.mxu0 0.0
        %4574 = vmatprep.subr.mxu0 0.0
        %4575 = vmatpush1.msra.mxu0 0.0
        %4576 = vmatprep.subr.mxu0 0.0
        %4577 = vmatpush1.msra.mxu0 0.0
        %4578 = vmatprep.subr.mxu0 0.0
        %4579 = vmatpush1.msra.mxu0 0.0
        %4580 = vmatprep.subr.mxu0 0.0
        %4581 = vmatpush1.msra.mxu0 0.0
        %4582 = vmatprep.subr.mxu0 0.0
        %4583 = vmatpush1.msra.mxu0 0.0
        %4584 = vmatprep.subr.mxu0 0.0
        %4585 = vmatpush1.msra.mxu0 0.0
        %4586 = vmatprep.subr.mxu0 0.0
        %4587 = vmatpush1.msra.mxu0 0.0
        %4588 = vmatprep.subr.mxu0 0.0
        %4589 = vmatpush1.msra.mxu0 0.0
        %4590 = vmatprep.subr.mxu0 0.0
        %4591 = vmatpush1.msra.mxu0 0.0
        %4592 = vmatprep.subr.mxu0 0.0
        %4593 = vmatpush1.msra.mxu0 0.0
        %4594 = vmatprep.subr.mxu0 0.0
        %4595 = vmatpush1.msra.mxu0 0.0
        %4596 = vmatprep.subr.mxu0 0.0
        %4597 = vmatpush1.msra.mxu0 0.0
        %4598 = vmatprep.subr.mxu0 0.0
        %4599 = vmatpush1.msra.mxu0 0.0
        %4600 = vmatprep.subr.mxu0 0.0
        %4601 = vmatpush1.msra.mxu0 0.0
        %4602 = vmatprep.subr.mxu0 0.0
        %4603 = vmatpush1.msra.mxu0 0.0
        %4604 = vmatprep.subr.mxu0 0.0
        %4605 = vmatpush1.msra.mxu0 0.0
        %4606 = vmatprep.subr.mxu0 0.0
        %4607 = vmatpush1.msra.mxu0 0.0
        %4608 = vmatprep.subr.mxu0 0.0
        %4609 = vmatpush1.msra.mxu0 0.0
        %4610 = vmatprep.subr.mxu0 0.0
        %4611 = vmatpush1.msra.mxu0 0.0
        %4612 = vmatprep.subr.mxu0 0.0
        %4613 = vmatpush1.msra.mxu0 0.0
        %4614 = vmatprep.mubr.f32.mxu0 0.0
        %4615 = vmatmul.mubr.f32.gmra.mrb[0].mxu0 %v4545
        %v4616 = vpop.f32.mrb[0].mxu0
        %v4617 = vadd.f32 0.0, %v4616
        %v4618 = vpop.f32.mrb[0].mxu0
        %4619 = vmatprep.mubr.f32.mxu0 0.0
        %4620 = vmatmul.mubr.f32.gmra.mrb[0].mxu0 %v4548
        %v4621 = vpop.f32.mrb[0].mxu0
        %v4622 = vadd.f32 0.0, %v4621
        %v4623 = vpop.f32.mrb[0].mxu0
        %4624 = vdwg.mxu0
        %4625 = vrot.lane.b32.xlu0 %v1052, 64
        %v4626 = vpop.permute.xlu0 %4625
        %v4629 = vsel %vm3836, %v4418, 0
        %v4632 = vsel %vm3836, %v4420, 0
        %4634 = vmatprep.subr.mxu0 0.0
        %4635 = vmatpush1.msra.mxu0 %v4626
        %4636 = vmatprep.subr.mxu0 0.0
        %4637 = vmatpush1.msra.mxu0 0.0
        %4638 = vmatprep.subr.mxu0 0.0
        %4639 = vmatpush1.msra.mxu0 0.0
        %4640 = vmatprep.subr.mxu0 0.0
        %4641 = vmatpush1.msra.mxu0 0.0
        %4642 = vmatprep.subr.mxu0 0.0
        %4643 = vmatpush1.msra.mxu0 0.0
        %4644 = vmatprep.subr.mxu0 0.0
        %4645 = vmatpush1.msra.mxu0 0.0
        %4646 = vmatprep.subr.mxu0 0.0
        %4647 = vmatpush1.msra.mxu0 0.0
        %4648 = vmatprep.subr.mxu0 0.0
        %4649 = vmatpush1.msra.mxu0 0.0
        %4650 = vmatprep.subr.mxu0 0.0
        %4651 = vmatpush1.msra.mxu0 0.0
        %4652 = vmatprep.subr.mxu0 0.0
        %4653 = vmatpush1.msra.mxu0 0.0
        %4654 = vmatprep.subr.mxu0 0.0
        %4655 = vmatpush1.msra.mxu0 0.0
        %4656 = vmatprep.subr.mxu0 0.0
        %4657 = vmatpush1.msra.mxu0 0.0
        %4658 = vmatprep.subr.mxu0 0.0
        %4659 = vmatpush1.msra.mxu0 0.0
        %4660 = vmatprep.subr.mxu0 0.0
        %4661 = vmatpush1.msra.mxu0 0.0
        %4662 = vmatprep.subr.mxu0 0.0
        %4663 = vmatpush1.msra.mxu0 0.0
        %4664 = vmatprep.subr.mxu0 0.0
        %4665 = vmatpush1.msra.mxu0 0.0
        %4666 = vmatprep.subr.mxu0 0.0
        %4667 = vmatpush1.msra.mxu0 0.0
        %4668 = vmatprep.subr.mxu0 0.0
        %4669 = vmatpush1.msra.mxu0 0.0
        %4670 = vmatprep.subr.mxu0 0.0
        %4671 = vmatpush1.msra.mxu0 0.0
        %4672 = vmatprep.subr.mxu0 0.0
        %4673 = vmatpush1.msra.mxu0 0.0
        %4674 = vmatprep.subr.mxu0 0.0
        %4675 = vmatpush1.msra.mxu0 0.0
        %4676 = vmatprep.subr.mxu0 0.0
        %4677 = vmatpush1.msra.mxu0 0.0
        %4678 = vmatprep.subr.mxu0 0.0
        %4679 = vmatpush1.msra.mxu0 0.0
        %4680 = vmatprep.subr.mxu0 0.0
        %4681 = vmatpush1.msra.mxu0 0.0
        %4682 = vmatprep.subr.mxu0 0.0
        %4683 = vmatpush1.msra.mxu0 0.0
        %4684 = vmatprep.subr.mxu0 0.0
        %4685 = vmatpush1.msra.mxu0 0.0
        %4686 = vmatprep.subr.mxu0 0.0
        %4687 = vmatpush1.msra.mxu0 0.0
        %4688 = vmatprep.subr.mxu0 0.0
        %4689 = vmatpush1.msra.mxu0 0.0
        %4690 = vmatprep.subr.mxu0 0.0
        %4691 = vmatpush1.msra.mxu0 0.0
        %4692 = vmatprep.subr.mxu0 0.0
        %4693 = vmatpush1.msra.mxu0 0.0
        %4694 = vmatprep.subr.mxu0 0.0
        %4695 = vmatpush1.msra.mxu0 0.0
        %4696 = vmatprep.subr.mxu0 0.0
        %4697 = vmatpush1.msra.mxu0 0.0
        %4698 = vmatprep.mubr.f32.mxu0 0.0
        %4699 = vmatmul.mubr.f32.gmra.mrb[0].mxu0 %v4629
        %v4700 = vpop.f32.mrb[0].mxu0
        %v4701 = vadd.f32 0.0, %v4700
        %v4702 = vpop.f32.mrb[0].mxu0
        %4703 = vmatprep.mubr.f32.mxu0 0.0
        %4704 = vmatmul.mubr.f32.gmra.mrb[0].mxu0 %v4632
        %v4705 = vpop.f32.mrb[0].mxu0
        %v4706 = vadd.f32 0.0, %v4705
        %v4707 = vpop.f32.mrb[0].mxu0
        %4708 = vdwg.mxu0
        %4709 = vrot.lane.b32.xlu0 %v1054, 64
        %v4710 = vpop.permute.xlu0 %4709
        %v4713 = vsel %vm3836, %v4422, 0
        %v4716 = vsel %vm3836, %v4424, 0
        %4718 = vmatprep.subr.mxu0 0.0
        %4719 = vmatpush1.msra.mxu0 %v4710
        %4720 = vmatprep.subr.mxu0 0.0
        %4721 = vmatpush1.msra.mxu0 0.0
        %4722 = vmatprep.subr.mxu0 0.0
        %4723 = vmatpush1.msra.mxu0 0.0
        %4724 = vmatprep.subr.mxu0 0.0
        %4725 = vmatpush1.msra.mxu0 0.0
        %4726 = vmatprep.subr.mxu0 0.0
        %4727 = vmatpush1.msra.mxu0 0.0
        %4728 = vmatprep.subr.mxu0 0.0
        %4729 = vmatpush1.msra.mxu0 0.0
        %4730 = vmatprep.subr.mxu0 0.0
        %4731 = vmatpush1.msra.mxu0 0.0
        %4732 = vmatprep.subr.mxu0 0.0
        %4733 = vmatpush1.msra.mxu0 0.0
        %4734 = vmatprep.subr.mxu0 0.0
        %4735 = vmatpush1.msra.mxu0 0.0
        %4736 = vmatprep.subr.mxu0 0.0
        %4737 = vmatpush1.msra.mxu0 0.0
        %4738 = vmatprep.subr.mxu0 0.0
        %4739 = vmatpush1.msra.mxu0 0.0
        %4740 = vmatprep.subr.mxu0 0.0
        %4741 = vmatpush1.msra.mxu0 0.0
        %4742 = vmatprep.subr.mxu0 0.0
        %4743 = vmatpush1.msra.mxu0 0.0
        %4744 = vmatprep.subr.mxu0 0.0
        %4745 = vmatpush1.msra.mxu0 0.0
        %4746 = vmatprep.subr.mxu0 0.0
        %4747 = vmatpush1.msra.mxu0 0.0
        %4748 = vmatprep.subr.mxu0 0.0
        %4749 = vmatpush1.msra.mxu0 0.0
        %4750 = vmatprep.subr.mxu0 0.0
        %4751 = vmatpush1.msra.mxu0 0.0
        %4752 = vmatprep.subr.mxu0 0.0
        %4753 = vmatpush1.msra.mxu0 0.0
        %4754 = vmatprep.subr.mxu0 0.0
        %4755 = vmatpush1.msra.mxu0 0.0
        %4756 = vmatprep.subr.mxu0 0.0
        %4757 = vmatpush1.msra.mxu0 0.0
        %4758 = vmatprep.subr.mxu0 0.0
        %4759 = vmatpush1.msra.mxu0 0.0
        %4760 = vmatprep.subr.mxu0 0.0
        %4761 = vmatpush1.msra.mxu0 0.0
        %4762 = vmatprep.subr.mxu0 0.0
        %4763 = vmatpush1.msra.mxu0 0.0
        %4764 = vmatprep.subr.mxu0 0.0
        %4765 = vmatpush1.msra.mxu0 0.0
        %4766 = vmatprep.subr.mxu0 0.0
        %4767 = vmatpush1.msra.mxu0 0.0
        %4768 = vmatprep.subr.mxu0 0.0
        %4769 = vmatpush1.msra.mxu0 0.0
        %4770 = vmatprep.subr.mxu0 0.0
        %4771 = vmatpush1.msra.mxu0 0.0
        %4772 = vmatprep.subr.mxu0 0.0
        %4773 = vmatpush1.msra.mxu0 0.0
        %4774 = vmatprep.subr.mxu0 0.0
        %4775 = vmatpush1.msra.mxu0 0.0
        %4776 = vmatprep.subr.mxu0 0.0
        %4777 = vmatpush1.msra.mxu0 0.0
        %4778 = vmatprep.subr.mxu0 0.0
        %4779 = vmatpush1.msra.mxu0 0.0
        %4780 = vmatprep.subr.mxu0 0.0
        %4781 = vmatpush1.msra.mxu0 0.0
        %4782 = vmatprep.mubr.f32.mxu0 0.0
        %4783 = vmatmul.mubr.f32.gmra.mrb[0].mxu0 %v4713
        %v4784 = vpop.f32.mrb[0].mxu0
        %v4785 = vadd.f32 0.0, %v4784
        %v4786 = vpop.f32.mrb[0].mxu0
        %4787 = vmatprep.mubr.f32.mxu0 0.0
        %4788 = vmatmul.mubr.f32.gmra.mrb[0].mxu0 %v4716
        %v4789 = vpop.f32.mrb[0].mxu0
        %v4790 = vadd.f32 0.0, %v4789
        %v4791 = vpop.f32.mrb[0].mxu0
        %4792 = vdwg.mxu0
        %4793 = vrot.lane.b32.xlu0 %v1056, 64
        %v4794 = vpop.permute.xlu0 %4793
        %v4797 = vsel %vm3836, %v4426, 0
        %v4800 = vsel %vm3836, %v4428, 0
        %4802 = vmatprep.subr.mxu0 0.0
        %4803 = vmatpush1.msra.mxu0 %v4794
        %4804 = vmatprep.subr.mxu0 0.0
        %4805 = vmatpush1.msra.mxu0 0.0
        %4806 = vmatprep.subr.mxu0 0.0
        %4807 = vmatpush1.msra.mxu0 0.0
        %4808 = vmatprep.subr.mxu0 0.0
        %4809 = vmatpush1.msra.mxu0 0.0
        %4810 = vmatprep.subr.mxu0 0.0
        %4811 = vmatpush1.msra.mxu0 0.0
        %4812 = vmatprep.subr.mxu0 0.0
        %4813 = vmatpush1.msra.mxu0 0.0
        %4814 = vmatprep.subr.mxu0 0.0
        %4815 = vmatpush1.msra.mxu0 0.0
        %4816 = vmatprep.subr.mxu0 0.0
        %4817 = vmatpush1.msra.mxu0 0.0
        %4818 = vmatprep.subr.mxu0 0.0
        %4819 = vmatpush1.msra.mxu0 0.0
        %4820 = vmatprep.subr.mxu0 0.0
        %4821 = vmatpush1.msra.mxu0 0.0
        %4822 = vmatprep.subr.mxu0 0.0
        %4823 = vmatpush1.msra.mxu0 0.0
        %4824 = vmatprep.subr.mxu0 0.0
        %4825 = vmatpush1.msra.mxu0 0.0
        %4826 = vmatprep.subr.mxu0 0.0
        %4827 = vmatpush1.msra.mxu0 0.0
        %4828 = vmatprep.subr.mxu0 0.0
        %4829 = vmatpush1.msra.mxu0 0.0
        %4830 = vmatprep.subr.mxu0 0.0
        %4831 = vmatpush1.msra.mxu0 0.0
        %4832 = vmatprep.subr.mxu0 0.0
        %4833 = vmatpush1.msra.mxu0 0.0
        %4834 = vmatprep.subr.mxu0 0.0
        %4835 = vmatpush1.msra.mxu0 0.0
        %4836 = vmatprep.subr.mxu0 0.0
        %4837 = vmatpush1.msra.mxu0 0.0
        %4838 = vmatprep.subr.mxu0 0.0
        %4839 = vmatpush1.msra.mxu0 0.0
        %4840 = vmatprep.subr.mxu0 0.0
        %4841 = vmatpush1.msra.mxu0 0.0
        %4842 = vmatprep.subr.mxu0 0.0
        %4843 = vmatpush1.msra.mxu0 0.0
        %4844 = vmatprep.subr.mxu0 0.0
        %4845 = vmatpush1.msra.mxu0 0.0
        %4846 = vmatprep.subr.mxu0 0.0
        %4847 = vmatpush1.msra.mxu0 0.0
        %4848 = vmatprep.subr.mxu0 0.0
        %4849 = vmatpush1.msra.mxu0 0.0
        %4850 = vmatprep.subr.mxu0 0.0
        %4851 = vmatpush1.msra.mxu0 0.0
        %4852 = vmatprep.subr.mxu0 0.0
        %4853 = vmatpush1.msra.mxu0 0.0
        %4854 = vmatprep.subr.mxu0 0.0
        %4855 = vmatpush1.msra.mxu0 0.0
        %4856 = vmatprep.subr.mxu0 0.0
        %4857 = vmatpush1.msra.mxu0 0.0
        %4858 = vmatprep.subr.mxu0 0.0
        %4859 = vmatpush1.msra.mxu0 0.0
        %4860 = vmatprep.subr.mxu0 0.0
        %4861 = vmatpush1.msra.mxu0 0.0
        %4862 = vmatprep.subr.mxu0 0.0
        %4863 = vmatpush1.msra.mxu0 0.0
        %4864 = vmatprep.subr.mxu0 0.0
        %4865 = vmatpush1.msra.mxu0 0.0
        %4866 = vmatprep.mubr.f32.mxu0 0.0
        %4867 = vmatmul.mubr.f32.gmra.mrb[0].mxu0 %v4797
        %v4868 = vpop.f32.mrb[0].mxu0
        %v4869 = vadd.f32 0.0, %v4868
        %v4870 = vpop.f32.mrb[0].mxu0
        %4871 = vmatprep.mubr.f32.mxu0 0.0
        %4872 = vmatmul.mubr.f32.gmra.mrb[0].mxu0 %v4800
        %v4873 = vpop.f32.mrb[0].mxu0
        %v4874 = vadd.f32 0.0, %v4873
        %v4875 = vpop.f32.mrb[0].mxu0
        %4876 = vdwg.mxu0
        %4877 = vrot.lane.b32.xlu0 %v1058, 64
        %v4878 = vpop.permute.xlu0 %4877
        %v4881 = vsel %vm3836, %v4430, 0
        %v4884 = vsel %vm3836, %v4432, 0
        %4886 = vmatprep.subr.mxu0 0.0
        %4887 = vmatpush1.msra.mxu0 %v4878
        %4888 = vmatprep.subr.mxu0 0.0
        %4889 = vmatpush1.msra.mxu0 0.0
        %4890 = vmatprep.subr.mxu0 0.0
        %4891 = vmatpush1.msra.mxu0 0.0
        %4892 = vmatprep.subr.mxu0 0.0
        %4893 = vmatpush1.msra.mxu0 0.0
        %4894 = vmatprep.subr.mxu0 0.0
        %4895 = vmatpush1.msra.mxu0 0.0
        %4896 = vmatprep.subr.mxu0 0.0
        %4897 = vmatpush1.msra.mxu0 0.0
        %4898 = vmatprep.subr.mxu0 0.0
        %4899 = vmatpush1.msra.mxu0 0.0
        %4900 = vmatprep.subr.mxu0 0.0
        %4901 = vmatpush1.msra.mxu0 0.0
        %4902 = vmatprep.subr.mxu0 0.0
        %4903 = vmatpush1.msra.mxu0 0.0
        %4904 = vmatprep.subr.mxu0 0.0
        %4905 = vmatpush1.msra.mxu0 0.0
        %4906 = vmatprep.subr.mxu0 0.0
        %4907 = vmatpush1.msra.mxu0 0.0
        %4908 = vmatprep.subr.mxu0 0.0
        %4909 = vmatpush1.msra.mxu0 0.0
        %4910 = vmatprep.subr.mxu0 0.0
        %4911 = vmatpush1.msra.mxu0 0.0
        %4912 = vmatprep.subr.mxu0 0.0
        %4913 = vmatpush1.msra.mxu0 0.0
        %4914 = vmatprep.subr.mxu0 0.0
        %4915 = vmatpush1.msra.mxu0 0.0
        %4916 = vmatprep.subr.mxu0 0.0
        %4917 = vmatpush1.msra.mxu0 0.0
        %4918 = vmatprep.subr.mxu0 0.0
        %4919 = vmatpush1.msra.mxu0 0.0
        %4920 = vmatprep.subr.mxu0 0.0
        %4921 = vmatpush1.msra.mxu0 0.0
        %4922 = vmatprep.subr.mxu0 0.0
        %4923 = vmatpush1.msra.mxu0 0.0
        %4924 = vmatprep.subr.mxu0 0.0
        %4925 = vmatpush1.msra.mxu0 0.0
        %4926 = vmatprep.subr.mxu0 0.0
        %4927 = vmatpush1.msra.mxu0 0.0
        %4928 = vmatprep.subr.mxu0 0.0
        %4929 = vmatpush1.msra.mxu0 0.0
        %4930 = vmatprep.subr.mxu0 0.0
        %4931 = vmatpush1.msra.mxu0 0.0
        %4932 = vmatprep.subr.mxu0 0.0
        %4933 = vmatpush1.msra.mxu0 0.0
        %4934 = vmatprep.subr.mxu0 0.0
        %4935 = vmatpush1.msra.mxu0 0.0
        %4936 = vmatprep.subr.mxu0 0.0
        %4937 = vmatpush1.msra.mxu0 0.0
        %4938 = vmatprep.subr.mxu0 0.0
        %4939 = vmatpush1.msra.mxu0 0.0
        %4940 = vmatprep.subr.mxu0 0.0
        %4941 = vmatpush1.msra.mxu0 0.0
        %4942 = vmatprep.subr.mxu0 0.0
        %4943 = vmatpush1.msra.mxu0 0.0
        %4944 = vmatprep.subr.mxu0 0.0
        %4945 = vmatpush1.msra.mxu0 0.0
        %4946 = vmatprep.subr.mxu0 0.0
        %4947 = vmatpush1.msra.mxu0 0.0
        %4948 = vmatprep.subr.mxu0 0.0
        %4949 = vmatpush1.msra.mxu0 0.0
        %4950 = vmatprep.mubr.f32.mxu0 0.0
        %4951 = vmatmul.mubr.f32.gmra.mrb[0].mxu0 %v4881
        %v4952 = vpop.f32.mrb[0].mxu0
        %v4953 = vadd.f32 0.0, %v4952
        %v4954 = vpop.f32.mrb[0].mxu0
        %4955 = vmatprep.mubr.f32.mxu0 0.0
        %4956 = vmatmul.mubr.f32.gmra.mrb[0].mxu0 %v4884
        %v4957 = vpop.f32.mrb[0].mxu0
        %v4958 = vadd.f32 0.0, %v4957
        %v4959 = vpop.f32.mrb[0].mxu0
        %4960 = vdwg.mxu0
        %4961 = vrot.lane.b32.xlu0 %v1060, 64
        %v4962 = vpop.permute.xlu0 %4961
        %v4965 = vsel %vm3836, %v4434, 0
        %v4968 = vsel %vm3836, %v4436, 0
        %4970 = vmatprep.subr.mxu0 0.0
        %4971 = vmatpush1.msra.mxu0 %v4962
        %4972 = vmatprep.subr.mxu0 0.0
        %4973 = vmatpush1.msra.mxu0 0.0
        %4974 = vmatprep.subr.mxu0 0.0
        %4975 = vmatpush1.msra.mxu0 0.0
        %4976 = vmatprep.subr.mxu0 0.0
        %4977 = vmatpush1.msra.mxu0 0.0
        %4978 = vmatprep.subr.mxu0 0.0
        %4979 = vmatpush1.msra.mxu0 0.0
        %4980 = vmatprep.subr.mxu0 0.0
        %4981 = vmatpush1.msra.mxu0 0.0
        %4982 = vmatprep.subr.mxu0 0.0
        %4983 = vmatpush1.msra.mxu0 0.0
        %4984 = vmatprep.subr.mxu0 0.0
        %4985 = vmatpush1.msra.mxu0 0.0
        %4986 = vmatprep.subr.mxu0 0.0
        %4987 = vmatpush1.msra.mxu0 0.0
        %4988 = vmatprep.subr.mxu0 0.0
        %4989 = vmatpush1.msra.mxu0 0.0
        %4990 = vmatprep.subr.mxu0 0.0
        %4991 = vmatpush1.msra.mxu0 0.0
        %4992 = vmatprep.subr.mxu0 0.0
        %4993 = vmatpush1.msra.mxu0 0.0
        %4994 = vmatprep.subr.mxu0 0.0
        %4995 = vmatpush1.msra.mxu0 0.0
        %4996 = vmatprep.subr.mxu0 0.0
        %4997 = vmatpush1.msra.mxu0 0.0
        %4998 = vmatprep.subr.mxu0 0.0
        %4999 = vmatpush1.msra.mxu0 0.0
        %5000 = vmatprep.subr.mxu0 0.0
        %5001 = vmatpush1.msra.mxu0 0.0
        %5002 = vmatprep.subr.mxu0 0.0
        %5003 = vmatpush1.msra.mxu0 0.0
        %5004 = vmatprep.subr.mxu0 0.0
        %5005 = vmatpush1.msra.mxu0 0.0
        %5006 = vmatprep.subr.mxu0 0.0
        %5007 = vmatpush1.msra.mxu0 0.0
        %5008 = vmatprep.subr.mxu0 0.0
        %5009 = vmatpush1.msra.mxu0 0.0
        %5010 = vmatprep.subr.mxu0 0.0
        %5011 = vmatpush1.msra.mxu0 0.0
        %5012 = vmatprep.subr.mxu0 0.0
        %5013 = vmatpush1.msra.mxu0 0.0
        %5014 = vmatprep.subr.mxu0 0.0
        %5015 = vmatpush1.msra.mxu0 0.0
        %5016 = vmatprep.subr.mxu0 0.0
        %5017 = vmatpush1.msra.mxu0 0.0
        %5018 = vmatprep.subr.mxu0 0.0
        %5019 = vmatpush1.msra.mxu0 0.0
        %5020 = vmatprep.subr.mxu0 0.0
        %5021 = vmatpush1.msra.mxu0 0.0
        %5022 = vmatprep.subr.mxu0 0.0
        %5023 = vmatpush1.msra.mxu0 0.0
        %5024 = vmatprep.subr.mxu0 0.0
        %5025 = vmatpush1.msra.mxu0 0.0
        %5026 = vmatprep.subr.mxu0 0.0
        %5027 = vmatpush1.msra.mxu0 0.0
        %5028 = vmatprep.subr.mxu0 0.0
        %5029 = vmatpush1.msra.mxu0 0.0
        %5030 = vmatprep.subr.mxu0 0.0
        %5031 = vmatpush1.msra.mxu0 0.0
        %5032 = vmatprep.subr.mxu0 0.0
        %5033 = vmatpush1.msra.mxu0 0.0
        %5034 = vmatprep.mubr.f32.mxu0 0.0
        %5035 = vmatmul.mubr.f32.gmra.mrb[0].mxu0 %v4965
        %v5036 = vpop.f32.mrb[0].mxu0
        %v5037 = vadd.f32 0.0, %v5036
        %v5038 = vpop.f32.mrb[0].mxu0
        %5039 = vmatprep.mubr.f32.mxu0 0.0
        %5040 = vmatmul.mubr.f32.gmra.mrb[0].mxu0 %v4968
        %v5041 = vpop.f32.mrb[0].mxu0
        %v5042 = vadd.f32 0.0, %v5041
        %v5043 = vpop.f32.mrb[0].mxu0
        %5044 = vdwg.mxu0
        %5045 = vrot.lane.b32.xlu0 %v1062, 64
        %v5046 = vpop.permute.xlu0 %5045
        %v5049 = vsel %vm3836, %v4438, 0
        %v5052 = vsel %vm3836, %v4440, 0
        %5054 = vmatprep.subr.mxu0 0.0
        %5055 = vmatpush1.msra.mxu0 %v5046
        %5056 = vmatprep.subr.mxu0 0.0
        %5057 = vmatpush1.msra.mxu0 0.0
        %5058 = vmatprep.subr.mxu0 0.0
        %5059 = vmatpush1.msra.mxu0 0.0
        %5060 = vmatprep.subr.mxu0 0.0
        %5061 = vmatpush1.msra.mxu0 0.0
        %5062 = vmatprep.subr.mxu0 0.0
        %5063 = vmatpush1.msra.mxu0 0.0
        %5064 = vmatprep.subr.mxu0 0.0
        %5065 = vmatpush1.msra.mxu0 0.0
        %5066 = vmatprep.subr.mxu0 0.0
        %5067 = vmatpush1.msra.mxu0 0.0
        %5068 = vmatprep.subr.mxu0 0.0
        %5069 = vmatpush1.msra.mxu0 0.0
        %5070 = vmatprep.subr.mxu0 0.0
        %5071 = vmatpush1.msra.mxu0 0.0
        %5072 = vmatprep.subr.mxu0 0.0
        %5073 = vmatpush1.msra.mxu0 0.0
        %5074 = vmatprep.subr.mxu0 0.0
        %5075 = vmatpush1.msra.mxu0 0.0
        %5076 = vmatprep.subr.mxu0 0.0
        %5077 = vmatpush1.msra.mxu0 0.0
        %5078 = vmatprep.subr.mxu0 0.0
        %5079 = vmatpush1.msra.mxu0 0.0
        %5080 = vmatprep.subr.mxu0 0.0
        %5081 = vmatpush1.msra.mxu0 0.0
        %5082 = vmatprep.subr.mxu0 0.0
        %5083 = vmatpush1.msra.mxu0 0.0
        %5084 = vmatprep.subr.mxu0 0.0
        %5085 = vmatpush1.msra.mxu0 0.0
        %5086 = vmatprep.subr.mxu0 0.0
        %5087 = vmatpush1.msra.mxu0 0.0
        %5088 = vmatprep.subr.mxu0 0.0
        %5089 = vmatpush1.msra.mxu0 0.0
        %5090 = vmatprep.subr.mxu0 0.0
        %5091 = vmatpush1.msra.mxu0 0.0
        %5092 = vmatprep.subr.mxu0 0.0
        %5093 = vmatpush1.msra.mxu0 0.0
        %5094 = vmatprep.subr.mxu0 0.0
        %5095 = vmatpush1.msra.mxu0 0.0
        %5096 = vmatprep.subr.mxu0 0.0
        %5097 = vmatpush1.msra.mxu0 0.0
        %5098 = vmatprep.subr.mxu0 0.0
        %5099 = vmatpush1.msra.mxu0 0.0
        %5100 = vmatprep.subr.mxu0 0.0
        %5101 = vmatpush1.msra.mxu0 0.0
        %5102 = vmatprep.subr.mxu0 0.0
        %5103 = vmatpush1.msra.mxu0 0.0
        %5104 = vmatprep.subr.mxu0 0.0
        %5105 = vmatpush1.msra.mxu0 0.0
        %5106 = vmatprep.subr.mxu0 0.0
        %5107 = vmatpush1.msra.mxu0 0.0
        %5108 = vmatprep.subr.mxu0 0.0
        %5109 = vmatpush1.msra.mxu0 0.0
        %5110 = vmatprep.subr.mxu0 0.0
        %5111 = vmatpush1.msra.mxu0 0.0
        %5112 = vmatprep.subr.mxu0 0.0
        %5113 = vmatpush1.msra.mxu0 0.0
        %5114 = vmatprep.subr.mxu0 0.0
        %5115 = vmatpush1.msra.mxu0 0.0
        %5116 = vmatprep.subr.mxu0 0.0
        %5117 = vmatpush1.msra.mxu0 0.0
        %5118 = vmatprep.mubr.f32.mxu0 0.0
        %5119 = vmatmul.mubr.f32.gmra.mrb[0].mxu0 %v5049
        %v5120 = vpop.f32.mrb[0].mxu0
        %v5121 = vadd.f32 0.0, %v5120
        %v5122 = vpop.f32.mrb[0].mxu0
        %5123 = vmatprep.mubr.f32.mxu0 0.0
        %5124 = vmatmul.mubr.f32.gmra.mrb[0].mxu0 %v5052
        %v5125 = vpop.f32.mrb[0].mxu0
        %v5126 = vadd.f32 0.0, %v5125
        %v5127 = vpop.f32.mrb[0].mxu0
        %5128 = vdwg.mxu0
        %5129 = vrot.lane.b32.xlu0 %v1064, 64
        %v5130 = vpop.permute.xlu0 %5129
        %v5133 = vsel %vm3836, %v4442, 0
        %v5136 = vsel %vm3836, %v4444, 0
        %5138 = vmatprep.subr.mxu0 0.0
        %5139 = vmatpush1.msra.mxu0 %v5130
        %5140 = vmatprep.subr.mxu0 0.0
        %5141 = vmatpush1.msra.mxu0 0.0
        %5142 = vmatprep.subr.mxu0 0.0
        %5143 = vmatpush1.msra.mxu0 0.0
        %5144 = vmatprep.subr.mxu0 0.0
        %5145 = vmatpush1.msra.mxu0 0.0
        %5146 = vmatprep.subr.mxu0 0.0
        %5147 = vmatpush1.msra.mxu0 0.0
        %5148 = vmatprep.subr.mxu0 0.0
        %5149 = vmatpush1.msra.mxu0 0.0
        %5150 = vmatprep.subr.mxu0 0.0
        %5151 = vmatpush1.msra.mxu0 0.0
        %5152 = vmatprep.subr.mxu0 0.0
        %5153 = vmatpush1.msra.mxu0 0.0
        %5154 = vmatprep.subr.mxu0 0.0
        %5155 = vmatpush1.msra.mxu0 0.0
        %5156 = vmatprep.subr.mxu0 0.0
        %5157 = vmatpush1.msra.mxu0 0.0
        %5158 = vmatprep.subr.mxu0 0.0
        %5159 = vmatpush1.msra.mxu0 0.0
        %5160 = vmatprep.subr.mxu0 0.0
        %5161 = vmatpush1.msra.mxu0 0.0
        %5162 = vmatprep.subr.mxu0 0.0
        %5163 = vmatpush1.msra.mxu0 0.0
        %5164 = vmatprep.subr.mxu0 0.0
        %5165 = vmatpush1.msra.mxu0 0.0
        %5166 = vmatprep.subr.mxu0 0.0
        %5167 = vmatpush1.msra.mxu0 0.0
        %5168 = vmatprep.subr.mxu0 0.0
        %5169 = vmatpush1.msra.mxu0 0.0
        %5170 = vmatprep.subr.mxu0 0.0
        %5171 = vmatpush1.msra.mxu0 0.0
        %5172 = vmatprep.subr.mxu0 0.0
        %5173 = vmatpush1.msra.mxu0 0.0
        %5174 = vmatprep.subr.mxu0 0.0
        %5175 = vmatpush1.msra.mxu0 0.0
        %5176 = vmatprep.subr.mxu0 0.0
        %5177 = vmatpush1.msra.mxu0 0.0
        %5178 = vmatprep.subr.mxu0 0.0
        %5179 = vmatpush1.msra.mxu0 0.0
        %5180 = vmatprep.subr.mxu0 0.0
        %5181 = vmatpush1.msra.mxu0 0.0
        %5182 = vmatprep.subr.mxu0 0.0
        %5183 = vmatpush1.msra.mxu0 0.0
        %5184 = vmatprep.subr.mxu0 0.0
        %5185 = vmatpush1.msra.mxu0 0.0
        %5186 = vmatprep.subr.mxu0 0.0
        %5187 = vmatpush1.msra.mxu0 0.0
        %5188 = vmatprep.subr.mxu0 0.0
        %5189 = vmatpush1.msra.mxu0 0.0
        %5190 = vmatprep.subr.mxu0 0.0
        %5191 = vmatpush1.msra.mxu0 0.0
        %5192 = vmatprep.subr.mxu0 0.0
        %5193 = vmatpush1.msra.mxu0 0.0
        %5194 = vmatprep.subr.mxu0 0.0
        %5195 = vmatpush1.msra.mxu0 0.0
        %5196 = vmatprep.subr.mxu0 0.0
        %5197 = vmatpush1.msra.mxu0 0.0
        %5198 = vmatprep.subr.mxu0 0.0
        %5199 = vmatpush1.msra.mxu0 0.0
        %5200 = vmatprep.subr.mxu0 0.0
        %5201 = vmatpush1.msra.mxu0 0.0
        %5202 = vmatprep.mubr.f32.mxu0 0.0
        %5203 = vmatmul.mubr.f32.gmra.mrb[0].mxu0 %v5133
        %v5204 = vpop.f32.mrb[0].mxu0
        %v5205 = vadd.f32 0.0, %v5204
        %v5206 = vpop.f32.mrb[0].mxu0
        %5207 = vmatprep.mubr.f32.mxu0 0.0
        %5208 = vmatmul.mubr.f32.gmra.mrb[0].mxu0 %v5136
        %v5209 = vpop.f32.mrb[0].mxu0
        %v5210 = vadd.f32 0.0, %v5209
        %v5211 = vpop.f32.mrb[0].mxu0
        %5212 = vdwg.mxu0
        %5213 = vrot.lane.b32.xlu0 %v1066, 64
        %v5214 = vpop.permute.xlu0 %5213
        %v5217 = vsel %vm3836, %v4446, 0
        %v5220 = vsel %vm3836, %v4448, 0
        %5222 = vmatprep.subr.mxu0 0.0
        %5223 = vmatpush1.msra.mxu0 %v5214
        %5224 = vmatprep.subr.mxu0 0.0
        %5225 = vmatpush1.msra.mxu0 0.0
        %5226 = vmatprep.subr.mxu0 0.0
        %5227 = vmatpush1.msra.mxu0 0.0
        %5228 = vmatprep.subr.mxu0 0.0
        %5229 = vmatpush1.msra.mxu0 0.0
        %5230 = vmatprep.subr.mxu0 0.0
        %5231 = vmatpush1.msra.mxu0 0.0
        %5232 = vmatprep.subr.mxu0 0.0
        %5233 = vmatpush1.msra.mxu0 0.0
        %5234 = vmatprep.subr.mxu0 0.0
        %5235 = vmatpush1.msra.mxu0 0.0
        %5236 = vmatprep.subr.mxu0 0.0
        %5237 = vmatpush1.msra.mxu0 0.0
        %5238 = vmatprep.subr.mxu0 0.0
        %5239 = vmatpush1.msra.mxu0 0.0
        %5240 = vmatprep.subr.mxu0 0.0
        %5241 = vmatpush1.msra.mxu0 0.0
        %5242 = vmatprep.subr.mxu0 0.0
        %5243 = vmatpush1.msra.mxu0 0.0
        %5244 = vmatprep.subr.mxu0 0.0
        %5245 = vmatpush1.msra.mxu0 0.0
        %5246 = vmatprep.subr.mxu0 0.0
        %5247 = vmatpush1.msra.mxu0 0.0
        %5248 = vmatprep.subr.mxu0 0.0
        %5249 = vmatpush1.msra.mxu0 0.0
        %5250 = vmatprep.subr.mxu0 0.0
        %5251 = vmatpush1.msra.mxu0 0.0
        %5252 = vmatprep.subr.mxu0 0.0
        %5253 = vmatpush1.msra.mxu0 0.0
        %5254 = vmatprep.subr.mxu0 0.0
        %5255 = vmatpush1.msra.mxu0 0.0
        %5256 = vmatprep.subr.mxu0 0.0
        %5257 = vmatpush1.msra.mxu0 0.0
        %5258 = vmatprep.subr.mxu0 0.0
        %5259 = vmatpush1.msra.mxu0 0.0
        %5260 = vmatprep.subr.mxu0 0.0
        %5261 = vmatpush1.msra.mxu0 0.0
        %5262 = vmatprep.subr.mxu0 0.0
        %5263 = vmatpush1.msra.mxu0 0.0
        %5264 = vmatprep.subr.mxu0 0.0
        %5265 = vmatpush1.msra.mxu0 0.0
        %5266 = vmatprep.subr.mxu0 0.0
        %5267 = vmatpush1.msra.mxu0 0.0
        %5268 = vmatprep.subr.mxu0 0.0
        %5269 = vmatpush1.msra.mxu0 0.0
        %5270 = vmatprep.subr.mxu0 0.0
        %5271 = vmatpush1.msra.mxu0 0.0
        %5272 = vmatprep.subr.mxu0 0.0
        %5273 = vmatpush1.msra.mxu0 0.0
        %5274 = vmatprep.subr.mxu0 0.0
        %5275 = vmatpush1.msra.mxu0 0.0
        %5276 = vmatprep.subr.mxu0 0.0
        %5277 = vmatpush1.msra.mxu0 0.0
        %5278 = vmatprep.subr.mxu0 0.0
        %5279 = vmatpush1.msra.mxu0 0.0
        %5280 = vmatprep.subr.mxu0 0.0
        %5281 = vmatpush1.msra.mxu0 0.0
        %5282 = vmatprep.subr.mxu0 0.0
        %5283 = vmatpush1.msra.mxu0 0.0
        %5284 = vmatprep.subr.mxu0 0.0
        %5285 = vmatpush1.msra.mxu0 0.0
        %5286 = vmatprep.mubr.f32.mxu0 0.0
        %5287 = vmatmul.mubr.f32.gmra.mrb[0].mxu0 %v5217
        %v5288 = vpop.f32.mrb[0].mxu0
        %v5289 = vadd.f32 0.0, %v5288
        %v5290 = vpop.f32.mrb[0].mxu0
        %5291 = vmatprep.mubr.f32.mxu0 0.0
        %5292 = vmatmul.mubr.f32.gmra.mrb[0].mxu0 %v5220
        %v5293 = vpop.f32.mrb[0].mxu0
        %v5294 = vadd.f32 0.0, %v5293
        %v5295 = vpop.f32.mrb[0].mxu0
        %5296 = vdwg.mxu0
        %5297 = vrot.lane.b32.xlu0 %v1068, 64
        %v5298 = vpop.permute.xlu0 %5297
        %v5301 = vsel %vm3836, %v4450, 0
        %v5304 = vsel %vm3836, %v4452, 0
        %5306 = vmatprep.subr.mxu0 0.0
        %5307 = vmatpush1.msra.mxu0 %v5298
        %5308 = vmatprep.subr.mxu0 0.0
        %5309 = vmatpush1.msra.mxu0 0.0
        %5310 = vmatprep.subr.mxu0 0.0
        %5311 = vmatpush1.msra.mxu0 0.0
        %5312 = vmatprep.subr.mxu0 0.0
        %5313 = vmatpush1.msra.mxu0 0.0
        %5314 = vmatprep.subr.mxu0 0.0
        %5315 = vmatpush1.msra.mxu0 0.0
        %5316 = vmatprep.subr.mxu0 0.0
        %5317 = vmatpush1.msra.mxu0 0.0
        %5318 = vmatprep.subr.mxu0 0.0
        %5319 = vmatpush1.msra.mxu0 0.0
        %5320 = vmatprep.subr.mxu0 0.0
        %5321 = vmatpush1.msra.mxu0 0.0
        %5322 = vmatprep.subr.mxu0 0.0
        %5323 = vmatpush1.msra.mxu0 0.0
        %5324 = vmatprep.subr.mxu0 0.0
        %5325 = vmatpush1.msra.mxu0 0.0
        %5326 = vmatprep.subr.mxu0 0.0
        %5327 = vmatpush1.msra.mxu0 0.0
        %5328 = vmatprep.subr.mxu0 0.0
        %5329 = vmatpush1.msra.mxu0 0.0
        %5330 = vmatprep.subr.mxu0 0.0
        %5331 = vmatpush1.msra.mxu0 0.0
        %5332 = vmatprep.subr.mxu0 0.0
        %5333 = vmatpush1.msra.mxu0 0.0
        %5334 = vmatprep.subr.mxu0 0.0
        %5335 = vmatpush1.msra.mxu0 0.0
        %5336 = vmatprep.subr.mxu0 0.0
        %5337 = vmatpush1.msra.mxu0 0.0
        %5338 = vmatprep.subr.mxu0 0.0
        %5339 = vmatpush1.msra.mxu0 0.0
        %5340 = vmatprep.subr.mxu0 0.0
        %5341 = vmatpush1.msra.mxu0 0.0
        %5342 = vmatprep.subr.mxu0 0.0
        %5343 = vmatpush1.msra.mxu0 0.0
        %5344 = vmatprep.subr.mxu0 0.0
        %5345 = vmatpush1.msra.mxu0 0.0
        %5346 = vmatprep.subr.mxu0 0.0
        %5347 = vmatpush1.msra.mxu0 0.0
        %5348 = vmatprep.subr.mxu0 0.0
        %5349 = vmatpush1.msra.mxu0 0.0
        %5350 = vmatprep.subr.mxu0 0.0
        %5351 = vmatpush1.msra.mxu0 0.0
        %5352 = vmatprep.subr.mxu0 0.0
        %5353 = vmatpush1.msra.mxu0 0.0
        %5354 = vmatprep.subr.mxu0 0.0
        %5355 = vmatpush1.msra.mxu0 0.0
        %5356 = vmatprep.subr.mxu0 0.0
        %5357 = vmatpush1.msra.mxu0 0.0
        %5358 = vmatprep.subr.mxu0 0.0
        %5359 = vmatpush1.msra.mxu0 0.0
        %5360 = vmatprep.subr.mxu0 0.0
        %5361 = vmatpush1.msra.mxu0 0.0
        %5362 = vmatprep.subr.mxu0 0.0
        %5363 = vmatpush1.msra.mxu0 0.0
        %5364 = vmatprep.subr.mxu0 0.0
        %5365 = vmatpush1.msra.mxu0 0.0
        %5366 = vmatprep.subr.mxu0 0.0
        %5367 = vmatpush1.msra.mxu0 0.0
        %5368 = vmatprep.subr.mxu0 0.0
        %5369 = vmatpush1.msra.mxu0 0.0
        %5370 = vmatprep.mubr.f32.mxu0 0.0
        %5371 = vmatmul.mubr.f32.gmra.mrb[0].mxu0 %v5301
        %v5372 = vpop.f32.mrb[0].mxu0
        %v5373 = vadd.f32 0.0, %v5372
        %v5374 = vpop.f32.mrb[0].mxu0
        %5375 = vmatprep.mubr.f32.mxu0 0.0
        %5376 = vmatmul.mubr.f32.gmra.mrb[0].mxu0 %v5304
        %v5377 = vpop.f32.mrb[0].mxu0
        %v5378 = vadd.f32 0.0, %v5377
        %v5379 = vpop.f32.mrb[0].mxu0
        %5380 = vdwg.mxu0
        %5381 = vrot.lane.b32.xlu0 %v1070, 64
        %v5382 = vpop.permute.xlu0 %5381
        %v5385 = vsel %vm3836, %v4454, 0
        %v5388 = vsel %vm3836, %v4456, 0
        %5390 = vmatprep.subr.mxu0 0.0
        %5391 = vmatpush1.msra.mxu0 %v5382
        %5392 = vmatprep.subr.mxu0 0.0
        %5393 = vmatpush1.msra.mxu0 0.0
        %5394 = vmatprep.subr.mxu0 0.0
        %5395 = vmatpush1.msra.mxu0 0.0
        %5396 = vmatprep.subr.mxu0 0.0
        %5397 = vmatpush1.msra.mxu0 0.0
        %5398 = vmatprep.subr.mxu0 0.0
        %5399 = vmatpush1.msra.mxu0 0.0
        %5400 = vmatprep.subr.mxu0 0.0
        %5401 = vmatpush1.msra.mxu0 0.0
        %5402 = vmatprep.subr.mxu0 0.0
        %5403 = vmatpush1.msra.mxu0 0.0
        %5404 = vmatprep.subr.mxu0 0.0
        %5405 = vmatpush1.msra.mxu0 0.0
        %5406 = vmatprep.subr.mxu0 0.0
        %5407 = vmatpush1.msra.mxu0 0.0
        %5408 = vmatprep.subr.mxu0 0.0
        %5409 = vmatpush1.msra.mxu0 0.0
        %5410 = vmatprep.subr.mxu0 0.0
        %5411 = vmatpush1.msra.mxu0 0.0
        %5412 = vmatprep.subr.mxu0 0.0
        %5413 = vmatpush1.msra.mxu0 0.0
        %5414 = vmatprep.subr.mxu0 0.0
        %5415 = vmatpush1.msra.mxu0 0.0
        %5416 = vmatprep.subr.mxu0 0.0
        %5417 = vmatpush1.msra.mxu0 0.0
        %5418 = vmatprep.subr.mxu0 0.0
        %5419 = vmatpush1.msra.mxu0 0.0
        %5420 = vmatprep.subr.mxu0 0.0
        %5421 = vmatpush1.msra.mxu0 0.0
        %5422 = vmatprep.subr.mxu0 0.0
        %5423 = vmatpush1.msra.mxu0 0.0
        %5424 = vmatprep.subr.mxu0 0.0
        %5425 = vmatpush1.msra.mxu0 0.0
        %5426 = vmatprep.subr.mxu0 0.0
        %5427 = vmatpush1.msra.mxu0 0.0
        %5428 = vmatprep.subr.mxu0 0.0
        %5429 = vmatpush1.msra.mxu0 0.0
        %5430 = vmatprep.subr.mxu0 0.0
        %5431 = vmatpush1.msra.mxu0 0.0
        %5432 = vmatprep.subr.mxu0 0.0
        %5433 = vmatpush1.msra.mxu0 0.0
        %5434 = vmatprep.subr.mxu0 0.0
        %5435 = vmatpush1.msra.mxu0 0.0
        %5436 = vmatprep.subr.mxu0 0.0
        %5437 = vmatpush1.msra.mxu0 0.0
        %5438 = vmatprep.subr.mxu0 0.0
        %5439 = vmatpush1.msra.mxu0 0.0
        %5440 = vmatprep.subr.mxu0 0.0
        %5441 = vmatpush1.msra.mxu0 0.0
        %5442 = vmatprep.subr.mxu0 0.0
        %5443 = vmatpush1.msra.mxu0 0.0
        %5444 = vmatprep.subr.mxu0 0.0
        %5445 = vmatpush1.msra.mxu0 0.0
        %5446 = vmatprep.subr.mxu0 0.0
        %5447 = vmatpush1.msra.mxu0 0.0
        %5448 = vmatprep.subr.mxu0 0.0
        %5449 = vmatpush1.msra.mxu0 0.0
        %5450 = vmatprep.subr.mxu0 0.0
        %5451 = vmatpush1.msra.mxu0 0.0
        %5452 = vmatprep.subr.mxu0 0.0
        %5453 = vmatpush1.msra.mxu0 0.0
        %5454 = vmatprep.mubr.f32.mxu0 0.0
        %5455 = vmatmul.mubr.f32.gmra.mrb[0].mxu0 %v5385
        %v5456 = vpop.f32.mrb[0].mxu0
        %v5457 = vadd.f32 0.0, %v5456
        %v5458 = vpop.f32.mrb[0].mxu0
        %5459 = vmatprep.mubr.f32.mxu0 0.0
        %5460 = vmatmul.mubr.f32.gmra.mrb[0].mxu0 %v5388
        %v5461 = vpop.f32.mrb[0].mxu0
        %v5462 = vadd.f32 0.0, %v5461
        %v5463 = vpop.f32.mrb[0].mxu0
        %5464 = vdwg.mxu0
        %5465 = vrot.lane.b32.xlu0 %v1072, 64
        %v5466 = vpop.permute.xlu0 %5465
        %v5469 = vsel %vm3836, %v4458, 0
        %v5472 = vsel %vm3836, %v4460, 0
        %5474 = vmatprep.subr.mxu0 0.0
        %5475 = vmatpush1.msra.mxu0 %v5466
        %5476 = vmatprep.subr.mxu0 0.0
        %5477 = vmatpush1.msra.mxu0 0.0
        %5478 = vmatprep.subr.mxu0 0.0
        %5479 = vmatpush1.msra.mxu0 0.0
        %5480 = vmatprep.subr.mxu0 0.0
        %5481 = vmatpush1.msra.mxu0 0.0
        %5482 = vmatprep.subr.mxu0 0.0
        %5483 = vmatpush1.msra.mxu0 0.0
        %5484 = vmatprep.subr.mxu0 0.0
        %5485 = vmatpush1.msra.mxu0 0.0
        %5486 = vmatprep.subr.mxu0 0.0
        %5487 = vmatpush1.msra.mxu0 0.0
        %5488 = vmatprep.subr.mxu0 0.0
        %5489 = vmatpush1.msra.mxu0 0.0
        %5490 = vmatprep.subr.mxu0 0.0
        %5491 = vmatpush1.msra.mxu0 0.0
        %5492 = vmatprep.subr.mxu0 0.0
        %5493 = vmatpush1.msra.mxu0 0.0
        %5494 = vmatprep.subr.mxu0 0.0
        %5495 = vmatpush1.msra.mxu0 0.0
        %5496 = vmatprep.subr.mxu0 0.0
        %5497 = vmatpush1.msra.mxu0 0.0
        %5498 = vmatprep.subr.mxu0 0.0
        %5499 = vmatpush1.msra.mxu0 0.0
        %5500 = vmatprep.subr.mxu0 0.0
        %5501 = vmatpush1.msra.mxu0 0.0
        %5502 = vmatprep.subr.mxu0 0.0
        %5503 = vmatpush1.msra.mxu0 0.0
        %5504 = vmatprep.subr.mxu0 0.0
        %5505 = vmatpush1.msra.mxu0 0.0
        %5506 = vmatprep.subr.mxu0 0.0
        %5507 = vmatpush1.msra.mxu0 0.0
        %5508 = vmatprep.subr.mxu0 0.0
        %5509 = vmatpush1.msra.mxu0 0.0
        %5510 = vmatprep.subr.mxu0 0.0
        %5511 = vmatpush1.msra.mxu0 0.0
        %5512 = vmatprep.subr.mxu0 0.0
        %5513 = vmatpush1.msra.mxu0 0.0
        %5514 = vmatprep.subr.mxu0 0.0
        %5515 = vmatpush1.msra.mxu0 0.0
        %5516 = vmatprep.subr.mxu0 0.0
        %5517 = vmatpush1.msra.mxu0 0.0
        %5518 = vmatprep.subr.mxu0 0.0
        %5519 = vmatpush1.msra.mxu0 0.0
        %5520 = vmatprep.subr.mxu0 0.0
        %5521 = vmatpush1.msra.mxu0 0.0
        %5522 = vmatprep.subr.mxu0 0.0
        %5523 = vmatpush1.msra.mxu0 0.0
        %5524 = vmatprep.subr.mxu0 0.0
        %5525 = vmatpush1.msra.mxu0 0.0
        %5526 = vmatprep.subr.mxu0 0.0
        %5527 = vmatpush1.msra.mxu0 0.0
        %5528 = vmatprep.subr.mxu0 0.0
        %5529 = vmatpush1.msra.mxu0 0.0
        %5530 = vmatprep.subr.mxu0 0.0
        %5531 = vmatpush1.msra.mxu0 0.0
        %5532 = vmatprep.subr.mxu0 0.0
        %5533 = vmatpush1.msra.mxu0 0.0
        %5534 = vmatprep.subr.mxu0 0.0
        %5535 = vmatpush1.msra.mxu0 0.0
        %5536 = vmatprep.subr.mxu0 0.0
        %5537 = vmatpush1.msra.mxu0 0.0
        %5538 = vmatprep.mubr.f32.mxu0 0.0
        %5539 = vmatmul.mubr.f32.gmra.mrb[0].mxu0 %v5469
        %v5540 = vpop.f32.mrb[0].mxu0
        %v5541 = vadd.f32 0.0, %v5540
        %v5542 = vpop.f32.mrb[0].mxu0
        %5543 = vmatprep.mubr.f32.mxu0 0.0
        %5544 = vmatmul.mubr.f32.gmra.mrb[0].mxu0 %v5472
        %v5545 = vpop.f32.mrb[0].mxu0
        %v5546 = vadd.f32 0.0, %v5545
        %v5547 = vpop.f32.mrb[0].mxu0
        %5548 = vdwg.mxu0
        %5549 = vrot.lane.b32.xlu0 %v1074, 64
        %v5550 = vpop.permute.xlu0 %5549
        %v5553 = vsel %vm3836, %v4462, 0
        %v5556 = vsel %vm3836, %v4464, 0
        %5558 = vmatprep.subr.mxu0 0.0
        %5559 = vmatpush1.msra.mxu0 %v5550
        %5560 = vmatprep.subr.mxu0 0.0
        %5561 = vmatpush1.msra.mxu0 0.0
        %5562 = vmatprep.subr.mxu0 0.0
        %5563 = vmatpush1.msra.mxu0 0.0
        %5564 = vmatprep.subr.mxu0 0.0
        %5565 = vmatpush1.msra.mxu0 0.0
        %5566 = vmatprep.subr.mxu0 0.0
        %5567 = vmatpush1.msra.mxu0 0.0
        %5568 = vmatprep.subr.mxu0 0.0
        %5569 = vmatpush1.msra.mxu0 0.0
        %5570 = vmatprep.subr.mxu0 0.0
        %5571 = vmatpush1.msra.mxu0 0.0
        %5572 = vmatprep.subr.mxu0 0.0
        %5573 = vmatpush1.msra.mxu0 0.0
        %5574 = vmatprep.subr.mxu0 0.0
        %5575 = vmatpush1.msra.mxu0 0.0
        %5576 = vmatprep.subr.mxu0 0.0
        %5577 = vmatpush1.msra.mxu0 0.0
        %5578 = vmatprep.subr.mxu0 0.0
        %5579 = vmatpush1.msra.mxu0 0.0
        %5580 = vmatprep.subr.mxu0 0.0
        %5581 = vmatpush1.msra.mxu0 0.0
        %5582 = vmatprep.subr.mxu0 0.0
        %5583 = vmatpush1.msra.mxu0 0.0
        %5584 = vmatprep.subr.mxu0 0.0
        %5585 = vmatpush1.msra.mxu0 0.0
        %5586 = vmatprep.subr.mxu0 0.0
        %5587 = vmatpush1.msra.mxu0 0.0
        %5588 = vmatprep.subr.mxu0 0.0
        %5589 = vmatpush1.msra.mxu0 0.0
        %5590 = vmatprep.subr.mxu0 0.0
        %5591 = vmatpush1.msra.mxu0 0.0
        %5592 = vmatprep.subr.mxu0 0.0
        %5593 = vmatpush1.msra.mxu0 0.0
        %5594 = vmatprep.subr.mxu0 0.0
        %5595 = vmatpush1.msra.mxu0 0.0
        %5596 = vmatprep.subr.mxu0 0.0
        %5597 = vmatpush1.msra.mxu0 0.0
        %5598 = vmatprep.subr.mxu0 0.0
        %5599 = vmatpush1.msra.mxu0 0.0
        %5600 = vmatprep.subr.mxu0 0.0
        %5601 = vmatpush1.msra.mxu0 0.0
        %5602 = vmatprep.subr.mxu0 0.0
        %5603 = vmatpush1.msra.mxu0 0.0
        %5604 = vmatprep.subr.mxu0 0.0
        %5605 = vmatpush1.msra.mxu0 0.0
        %5606 = vmatprep.subr.mxu0 0.0
        %5607 = vmatpush1.msra.mxu0 0.0
        %5608 = vmatprep.subr.mxu0 0.0
        %5609 = vmatpush1.msra.mxu0 0.0
        %5610 = vmatprep.subr.mxu0 0.0
        %5611 = vmatpush1.msra.mxu0 0.0
        %5612 = vmatprep.subr.mxu0 0.0
        %5613 = vmatpush1.msra.mxu0 0.0
        %5614 = vmatprep.subr.mxu0 0.0
        %5615 = vmatpush1.msra.mxu0 0.0
        %5616 = vmatprep.subr.mxu0 0.0
        %5617 = vmatpush1.msra.mxu0 0.0
        %5618 = vmatprep.subr.mxu0 0.0
        %5619 = vmatpush1.msra.mxu0 0.0
        %5620 = vmatprep.subr.mxu0 0.0
        %5621 = vmatpush1.msra.mxu0 0.0
        %5622 = vmatprep.mubr.f32.mxu0 0.0
        %5623 = vmatmul.mubr.f32.gmra.mrb[0].mxu0 %v5553
        %v5624 = vpop.f32.mrb[0].mxu0
        %v5625 = vadd.f32 0.0, %v5624
        %v5626 = vpop.f32.mrb[0].mxu0
        %5627 = vmatprep.mubr.f32.mxu0 0.0
        %5628 = vmatmul.mubr.f32.gmra.mrb[0].mxu0 %v5556
        %v5629 = vpop.f32.mrb[0].mxu0
        %v5630 = vadd.f32 0.0, %v5629
        %v5631 = vpop.f32.mrb[0].mxu0
        %5632 = vdwg.mxu0
        %5633 = vrot.lane.b32.xlu0 %v1076, 64
        %v5634 = vpop.permute.xlu0 %5633
        %v5637 = vsel %vm3836, %v4466, 0
        %v5640 = vsel %vm3836, %v4468, 0
        %5642 = vmatprep.subr.mxu0 0.0
        %5643 = vmatpush1.msra.mxu0 %v5634
        %5644 = vmatprep.subr.mxu0 0.0
        %5645 = vmatpush1.msra.mxu0 0.0
        %5646 = vmatprep.subr.mxu0 0.0
        %5647 = vmatpush1.msra.mxu0 0.0
        %5648 = vmatprep.subr.mxu0 0.0
        %5649 = vmatpush1.msra.mxu0 0.0
        %5650 = vmatprep.subr.mxu0 0.0
        %5651 = vmatpush1.msra.mxu0 0.0
        %5652 = vmatprep.subr.mxu0 0.0
        %5653 = vmatpush1.msra.mxu0 0.0
        %5654 = vmatprep.subr.mxu0 0.0
        %5655 = vmatpush1.msra.mxu0 0.0
        %5656 = vmatprep.subr.mxu0 0.0
        %5657 = vmatpush1.msra.mxu0 0.0
        %5658 = vmatprep.subr.mxu0 0.0
        %5659 = vmatpush1.msra.mxu0 0.0
        %5660 = vmatprep.subr.mxu0 0.0
        %5661 = vmatpush1.msra.mxu0 0.0
        %5662 = vmatprep.subr.mxu0 0.0
        %5663 = vmatpush1.msra.mxu0 0.0
        %5664 = vmatprep.subr.mxu0 0.0
        %5665 = vmatpush1.msra.mxu0 0.0
        %5666 = vmatprep.subr.mxu0 0.0
        %5667 = vmatpush1.msra.mxu0 0.0
        %5668 = vmatprep.subr.mxu0 0.0
        %5669 = vmatpush1.msra.mxu0 0.0
        %5670 = vmatprep.subr.mxu0 0.0
        %5671 = vmatpush1.msra.mxu0 0.0
        %5672 = vmatprep.subr.mxu0 0.0
        %5673 = vmatpush1.msra.mxu0 0.0
        %5674 = vmatprep.subr.mxu0 0.0
        %5675 = vmatpush1.msra.mxu0 0.0
        %5676 = vmatprep.subr.mxu0 0.0
        %5677 = vmatpush1.msra.mxu0 0.0
        %5678 = vmatprep.subr.mxu0 0.0
        %5679 = vmatpush1.msra.mxu0 0.0
        %5680 = vmatprep.subr.mxu0 0.0
        %5681 = vmatpush1.msra.mxu0 0.0
        %5682 = vmatprep.subr.mxu0 0.0
        %5683 = vmatpush1.msra.mxu0 0.0
        %5684 = vmatprep.subr.mxu0 0.0
        %5685 = vmatpush1.msra.mxu0 0.0
        %5686 = vmatprep.subr.mxu0 0.0
        %5687 = vmatpush1.msra.mxu0 0.0
        %5688 = vmatprep.subr.mxu0 0.0
        %5689 = vmatpush1.msra.mxu0 0.0
        %5690 = vmatprep.subr.mxu0 0.0
        %5691 = vmatpush1.msra.mxu0 0.0
        %5692 = vmatprep.subr.mxu0 0.0
        %5693 = vmatpush1.msra.mxu0 0.0
        %5694 = vmatprep.subr.mxu0 0.0
        %5695 = vmatpush1.msra.mxu0 0.0
        %5696 = vmatprep.subr.mxu0 0.0
        %5697 = vmatpush1.msra.mxu0 0.0
        %5698 = vmatprep.subr.mxu0 0.0
        %5699 = vmatpush1.msra.mxu0 0.0
        %5700 = vmatprep.subr.mxu0 0.0
        %5701 = vmatpush1.msra.mxu0 0.0
        %5702 = vmatprep.subr.mxu0 0.0
        %5703 = vmatpush1.msra.mxu0 0.0
        %5704 = vmatprep.subr.mxu0 0.0
        %5705 = vmatpush1.msra.mxu0 0.0
        %5706 = vmatprep.mubr.f32.mxu0 0.0
        %5707 = vmatmul.mubr.f32.gmra.mrb[0].mxu0 %v5637
        %v5708 = vpop.f32.mrb[0].mxu0
        %v5709 = vadd.f32 0.0, %v5708
        %v5710 = vpop.f32.mrb[0].mxu0
        %5711 = vmatprep.mubr.f32.mxu0 0.0
        %5712 = vmatmul.mubr.f32.gmra.mrb[0].mxu0 %v5640
        %v5713 = vpop.f32.mrb[0].mxu0
        %v5714 = vadd.f32 0.0, %v5713
        %v5715 = vpop.f32.mrb[0].mxu0
        %5716 = vdwg.mxu0
        %5717 = vrot.lane.b32.xlu0 %v1078, 64
        %v5718 = vpop.permute.xlu0 %5717
        %v5721 = vsel %vm3836, %v4470, 0
        %v5724 = vsel %vm3836, %v4472, 0
        %5726 = vmatprep.subr.mxu0 0.0
        %5727 = vmatpush1.msra.mxu0 %v5718
        %5728 = vmatprep.subr.mxu0 0.0
        %5729 = vmatpush1.msra.mxu0 0.0
        %5730 = vmatprep.subr.mxu0 0.0
        %5731 = vmatpush1.msra.mxu0 0.0
        %5732 = vmatprep.subr.mxu0 0.0
        %5733 = vmatpush1.msra.mxu0 0.0
        %5734 = vmatprep.subr.mxu0 0.0
        %5735 = vmatpush1.msra.mxu0 0.0
        %5736 = vmatprep.subr.mxu0 0.0
        %5737 = vmatpush1.msra.mxu0 0.0
        %5738 = vmatprep.subr.mxu0 0.0
        %5739 = vmatpush1.msra.mxu0 0.0
        %5740 = vmatprep.subr.mxu0 0.0
        %5741 = vmatpush1.msra.mxu0 0.0
        %5742 = vmatprep.subr.mxu0 0.0
        %5743 = vmatpush1.msra.mxu0 0.0
        %5744 = vmatprep.subr.mxu0 0.0
        %5745 = vmatpush1.msra.mxu0 0.0
        %5746 = vmatprep.subr.mxu0 0.0
        %5747 = vmatpush1.msra.mxu0 0.0
        %5748 = vmatprep.subr.mxu0 0.0
        %5749 = vmatpush1.msra.mxu0 0.0
        %5750 = vmatprep.subr.mxu0 0.0
        %5751 = vmatpush1.msra.mxu0 0.0
        %5752 = vmatprep.subr.mxu0 0.0
        %5753 = vmatpush1.msra.mxu0 0.0
        %5754 = vmatprep.subr.mxu0 0.0
        %5755 = vmatpush1.msra.mxu0 0.0
        %5756 = vmatprep.subr.mxu0 0.0
        %5757 = vmatpush1.msra.mxu0 0.0
        %5758 = vmatprep.subr.mxu0 0.0
        %5759 = vmatpush1.msra.mxu0 0.0
        %5760 = vmatprep.subr.mxu0 0.0
        %5761 = vmatpush1.msra.mxu0 0.0
        %5762 = vmatprep.subr.mxu0 0.0
        %5763 = vmatpush1.msra.mxu0 0.0
        %5764 = vmatprep.subr.mxu0 0.0
        %5765 = vmatpush1.msra.mxu0 0.0
        %5766 = vmatprep.subr.mxu0 0.0
        %5767 = vmatpush1.msra.mxu0 0.0
        %5768 = vmatprep.subr.mxu0 0.0
        %5769 = vmatpush1.msra.mxu0 0.0
        %5770 = vmatprep.subr.mxu0 0.0
        %5771 = vmatpush1.msra.mxu0 0.0
        %5772 = vmatprep.subr.mxu0 0.0
        %5773 = vmatpush1.msra.mxu0 0.0
        %5774 = vmatprep.subr.mxu0 0.0
        %5775 = vmatpush1.msra.mxu0 0.0
        %5776 = vmatprep.subr.mxu0 0.0
        %5777 = vmatpush1.msra.mxu0 0.0
        %5778 = vmatprep.subr.mxu0 0.0
        %5779 = vmatpush1.msra.mxu0 0.0
        %5780 = vmatprep.subr.mxu0 0.0
        %5781 = vmatpush1.msra.mxu0 0.0
        %5782 = vmatprep.subr.mxu0 0.0
        %5783 = vmatpush1.msra.mxu0 0.0
        %5784 = vmatprep.subr.mxu0 0.0
        %5785 = vmatpush1.msra.mxu0 0.0
        %5786 = vmatprep.subr.mxu0 0.0
        %5787 = vmatpush1.msra.mxu0 0.0
        %5788 = vmatprep.subr.mxu0 0.0
        %5789 = vmatpush1.msra.mxu0 0.0
        %5790 = vmatprep.mubr.f32.mxu0 0.0
        %5791 = vmatmul.mubr.f32.gmra.mrb[0].mxu0 %v5721
        %v5792 = vpop.f32.mrb[0].mxu0
        %v5793 = vadd.f32 0.0, %v5792
        %v5794 = vpop.f32.mrb[0].mxu0
        %5795 = vmatprep.mubr.f32.mxu0 0.0
        %5796 = vmatmul.mubr.f32.gmra.mrb[0].mxu0 %v5724
        %v5797 = vpop.f32.mrb[0].mxu0
        %v5798 = vadd.f32 0.0, %v5797
        %v5799 = vpop.f32.mrb[0].mxu0
        %5800 = vdwg.mxu0
        %5801 = vrot.lane.b32.xlu0 %v1080, 64
        %v5802 = vpop.permute.xlu0 %5801
        %v5805 = vsel %vm3836, %v4474, 0
        %v5808 = vsel %vm3836, %v4476, 0
        %5810 = vmatprep.subr.mxu0 0.0
        %5811 = vmatpush1.msra.mxu0 %v5802
        %5812 = vmatprep.subr.mxu0 0.0
        %5813 = vmatpush1.msra.mxu0 0.0
        %5814 = vmatprep.subr.mxu0 0.0
        %5815 = vmatpush1.msra.mxu0 0.0
        %5816 = vmatprep.subr.mxu0 0.0
        %5817 = vmatpush1.msra.mxu0 0.0
        %5818 = vmatprep.subr.mxu0 0.0
        %5819 = vmatpush1.msra.mxu0 0.0
        %5820 = vmatprep.subr.mxu0 0.0
        %5821 = vmatpush1.msra.mxu0 0.0
        %5822 = vmatprep.subr.mxu0 0.0
        %5823 = vmatpush1.msra.mxu0 0.0
        %5824 = vmatprep.subr.mxu0 0.0
        %5825 = vmatpush1.msra.mxu0 0.0
        %5826 = vmatprep.subr.mxu0 0.0
        %5827 = vmatpush1.msra.mxu0 0.0
        %5828 = vmatprep.subr.mxu0 0.0
        %5829 = vmatpush1.msra.mxu0 0.0
        %5830 = vmatprep.subr.mxu0 0.0
        %5831 = vmatpush1.msra.mxu0 0.0
        %5832 = vmatprep.subr.mxu0 0.0
        %5833 = vmatpush1.msra.mxu0 0.0
        %5834 = vmatprep.subr.mxu0 0.0
        %5835 = vmatpush1.msra.mxu0 0.0
        %5836 = vmatprep.subr.mxu0 0.0
        %5837 = vmatpush1.msra.mxu0 0.0
        %5838 = vmatprep.subr.mxu0 0.0
        %5839 = vmatpush1.msra.mxu0 0.0
        %5840 = vmatprep.subr.mxu0 0.0
        %5841 = vmatpush1.msra.mxu0 0.0
        %5842 = vmatprep.subr.mxu0 0.0
        %5843 = vmatpush1.msra.mxu0 0.0
        %5844 = vmatprep.subr.mxu0 0.0
        %5845 = vmatpush1.msra.mxu0 0.0
        %5846 = vmatprep.subr.mxu0 0.0
        %5847 = vmatpush1.msra.mxu0 0.0
        %5848 = vmatprep.subr.mxu0 0.0
        %5849 = vmatpush1.msra.mxu0 0.0
        %5850 = vmatprep.subr.mxu0 0.0
        %5851 = vmatpush1.msra.mxu0 0.0
        %5852 = vmatprep.subr.mxu0 0.0
        %5853 = vmatpush1.msra.mxu0 0.0
        %5854 = vmatprep.subr.mxu0 0.0
        %5855 = vmatpush1.msra.mxu0 0.0
        %5856 = vmatprep.subr.mxu0 0.0
        %5857 = vmatpush1.msra.mxu0 0.0
        %5858 = vmatprep.subr.mxu0 0.0
        %5859 = vmatpush1.msra.mxu0 0.0
        %5860 = vmatprep.subr.mxu0 0.0
        %5861 = vmatpush1.msra.mxu0 0.0
        %5862 = vmatprep.subr.mxu0 0.0
        %5863 = vmatpush1.msra.mxu0 0.0
        %5864 = vmatprep.subr.mxu0 0.0
        %5865 = vmatpush1.msra.mxu0 0.0
        %5866 = vmatprep.subr.mxu0 0.0
        %5867 = vmatpush1.msra.mxu0 0.0
        %5868 = vmatprep.subr.mxu0 0.0
        %5869 = vmatpush1.msra.mxu0 0.0
        %5870 = vmatprep.subr.mxu0 0.0
        %5871 = vmatpush1.msra.mxu0 0.0
        %5872 = vmatprep.subr.mxu0 0.0
        %5873 = vmatpush1.msra.mxu0 0.0
        %5874 = vmatprep.mubr.f32.mxu0 0.0
        %5875 = vmatmul.mubr.f32.gmra.mrb[0].mxu0 %v5805
        %v5876 = vpop.f32.mrb[0].mxu0
        %v5877 = vadd.f32 0.0, %v5876
        %v5878 = vpop.f32.mrb[0].mxu0
        %5879 = vmatprep.mubr.f32.mxu0 0.0
        %5880 = vmatmul.mubr.f32.gmra.mrb[0].mxu0 %v5808
        %v5881 = vpop.f32.mrb[0].mxu0
        %v5882 = vadd.f32 0.0, %v5881
        %v5883 = vpop.f32.mrb[0].mxu0
        %5884 = vdwg.mxu0
        %5885 = vrot.lane.b32.xlu0 %v1210, 64
        %v5886 = vpop.permute.xlu0 %5885
        %v5889 = vsel %vm3836, %v4478, 0
        %v5892 = vsel %vm3836, %v4480, 0
        %5894 = vmatprep.subr.mxu0 0.0
        %5895 = vmatpush1.msra.mxu0 %v5886
        %5896 = vmatprep.subr.mxu0 0.0
        %5897 = vmatpush1.msra.mxu0 0.0
        %5898 = vmatprep.subr.mxu0 0.0
        %5899 = vmatpush1.msra.mxu0 0.0
        %5900 = vmatprep.subr.mxu0 0.0
        %5901 = vmatpush1.msra.mxu0 0.0
        %5902 = vmatprep.subr.mxu0 0.0
        %5903 = vmatpush1.msra.mxu0 0.0
        %5904 = vmatprep.subr.mxu0 0.0
        %5905 = vmatpush1.msra.mxu0 0.0
        %5906 = vmatprep.subr.mxu0 0.0
        %5907 = vmatpush1.msra.mxu0 0.0
        %5908 = vmatprep.subr.mxu0 0.0
        %5909 = vmatpush1.msra.mxu0 0.0
        %5910 = vmatprep.subr.mxu0 0.0
        %5911 = vmatpush1.msra.mxu0 0.0
        %5912 = vmatprep.subr.mxu0 0.0
        %5913 = vmatpush1.msra.mxu0 0.0
        %5914 = vmatprep.subr.mxu0 0.0
        %5915 = vmatpush1.msra.mxu0 0.0
        %5916 = vmatprep.subr.mxu0 0.0
        %5917 = vmatpush1.msra.mxu0 0.0
        %5918 = vmatprep.subr.mxu0 0.0
        %5919 = vmatpush1.msra.mxu0 0.0
        %5920 = vmatprep.subr.mxu0 0.0
        %5921 = vmatpush1.msra.mxu0 0.0
        %5922 = vmatprep.subr.mxu0 0.0
        %5923 = vmatpush1.msra.mxu0 0.0
        %5924 = vmatprep.subr.mxu0 0.0
        %5925 = vmatpush1.msra.mxu0 0.0
        %5926 = vmatprep.subr.mxu0 0.0
        %5927 = vmatpush1.msra.mxu0 0.0
        %5928 = vmatprep.subr.mxu0 0.0
        %5929 = vmatpush1.msra.mxu0 0.0
        %5930 = vmatprep.subr.mxu0 0.0
        %5931 = vmatpush1.msra.mxu0 0.0
        %5932 = vmatprep.subr.mxu0 0.0
        %5933 = vmatpush1.msra.mxu0 0.0
        %5934 = vmatprep.subr.mxu0 0.0
        %5935 = vmatpush1.msra.mxu0 0.0
        %5936 = vmatprep.subr.mxu0 0.0
        %5937 = vmatpush1.msra.mxu0 0.0
        %5938 = vmatprep.subr.mxu0 0.0
        %5939 = vmatpush1.msra.mxu0 0.0
        %5940 = vmatprep.subr.mxu0 0.0
        %5941 = vmatpush1.msra.mxu0 0.0
        %5942 = vmatprep.subr.mxu0 0.0
        %5943 = vmatpush1.msra.mxu0 0.0
        %5944 = vmatprep.subr.mxu0 0.0
        %5945 = vmatpush1.msra.mxu0 0.0
        %5946 = vmatprep.subr.mxu0 0.0
        %5947 = vmatpush1.msra.mxu0 0.0
        %5948 = vmatprep.subr.mxu0 0.0
        %5949 = vmatpush1.msra.mxu0 0.0
        %5950 = vmatprep.subr.mxu0 0.0
        %5951 = vmatpush1.msra.mxu0 0.0
        %5952 = vmatprep.subr.mxu0 0.0
        %5953 = vmatpush1.msra.mxu0 0.0
        %5954 = vmatprep.subr.mxu0 0.0
        %5955 = vmatpush1.msra.mxu0 0.0
        %5956 = vmatprep.subr.mxu0 0.0
        %5957 = vmatpush1.msra.mxu0 0.0
        %5958 = vmatprep.mubr.f32.mxu0 0.0
        %5959 = vmatmul.mubr.f32.gmra.mrb[0].mxu0 %v5889
        %v5960 = vpop.f32.mrb[0].mxu0
        %v5961 = vadd.f32 0.0, %v5960
        %v5962 = vpop.f32.mrb[0].mxu0
        %5963 = vmatprep.mubr.f32.mxu0 0.0
        %5964 = vmatmul.mubr.f32.gmra.mrb[0].mxu0 %v5892
        %v5965 = vpop.f32.mrb[0].mxu0
        %v5966 = vadd.f32 0.0, %v5965
        %v5967 = vpop.f32.mrb[0].mxu0
        %5968 = vdwg.mxu0
        %5969 = vrot.lane.b32.xlu0 %v1212, 64
        %v5970 = vpop.permute.xlu0 %5969
        %v5973 = vsel %vm3836, %v4482, 0
        %v5976 = vsel %vm3836, %v4484, 0
        %5978 = vmatprep.subr.mxu0 0.0
        %5979 = vmatpush1.msra.mxu0 %v5970
        %5980 = vmatprep.subr.mxu0 0.0
        %5981 = vmatpush1.msra.mxu0 0.0
        %5982 = vmatprep.subr.mxu0 0.0
        %5983 = vmatpush1.msra.mxu0 0.0
        %5984 = vmatprep.subr.mxu0 0.0
        %5985 = vmatpush1.msra.mxu0 0.0
        %5986 = vmatprep.subr.mxu0 0.0
        %5987 = vmatpush1.msra.mxu0 0.0
        %5988 = vmatprep.subr.mxu0 0.0
        %5989 = vmatpush1.msra.mxu0 0.0
        %5990 = vmatprep.subr.mxu0 0.0
        %5991 = vmatpush1.msra.mxu0 0.0
        %5992 = vmatprep.subr.mxu0 0.0
        %5993 = vmatpush1.msra.mxu0 0.0
        %5994 = vmatprep.subr.mxu0 0.0
        %5995 = vmatpush1.msra.mxu0 0.0
        %5996 = vmatprep.subr.mxu0 0.0
        %5997 = vmatpush1.msra.mxu0 0.0
        %5998 = vmatprep.subr.mxu0 0.0
        %5999 = vmatpush1.msra.mxu0 0.0
        %6000 = vmatprep.subr.mxu0 0.0
        %6001 = vmatpush1.msra.mxu0 0.0
        %6002 = vmatprep.subr.mxu0 0.0
        %6003 = vmatpush1.msra.mxu0 0.0
        %6004 = vmatprep.subr.mxu0 0.0
        %6005 = vmatpush1.msra.mxu0 0.0
        %6006 = vmatprep.subr.mxu0 0.0
        %6007 = vmatpush1.msra.mxu0 0.0
        %6008 = vmatprep.subr.mxu0 0.0
        %6009 = vmatpush1.msra.mxu0 0.0
        %6010 = vmatprep.subr.mxu0 0.0
        %6011 = vmatpush1.msra.mxu0 0.0
        %6012 = vmatprep.subr.mxu0 0.0
        %6013 = vmatpush1.msra.mxu0 0.0
        %6014 = vmatprep.subr.mxu0 0.0
        %6015 = vmatpush1.msra.mxu0 0.0
        %6016 = vmatprep.subr.mxu0 0.0
        %6017 = vmatpush1.msra.mxu0 0.0
        %6018 = vmatprep.subr.mxu0 0.0
        %6019 = vmatpush1.msra.mxu0 0.0
        %6020 = vmatprep.subr.mxu0 0.0
        %6021 = vmatpush1.msra.mxu0 0.0
        %6022 = vmatprep.subr.mxu0 0.0
        %6023 = vmatpush1.msra.mxu0 0.0
        %6024 = vmatprep.subr.mxu0 0.0
        %6025 = vmatpush1.msra.mxu0 0.0
        %6026 = vmatprep.subr.mxu0 0.0
        %6027 = vmatpush1.msra.mxu0 0.0
        %6028 = vmatprep.subr.mxu0 0.0
        %6029 = vmatpush1.msra.mxu0 0.0
        %6030 = vmatprep.subr.mxu0 0.0
        %6031 = vmatpush1.msra.mxu0 0.0
        %6032 = vmatprep.subr.mxu0 0.0
        %6033 = vmatpush1.msra.mxu0 0.0
        %6034 = vmatprep.subr.mxu0 0.0
        %6035 = vmatpush1.msra.mxu0 0.0
        %6036 = vmatprep.subr.mxu0 0.0
        %6037 = vmatpush1.msra.mxu0 0.0
        %6038 = vmatprep.subr.mxu0 0.0
        %6039 = vmatpush1.msra.mxu0 0.0
        %6040 = vmatprep.subr.mxu0 0.0
        %6041 = vmatpush1.msra.mxu0 0.0
        %6042 = vmatprep.mubr.f32.mxu0 0.0
        %6043 = vmatmul.mubr.f32.gmra.mrb[0].mxu0 %v5973
        %v6044 = vpop.f32.mrb[0].mxu0
        %v6045 = vadd.f32 0.0, %v6044
        %v6046 = vpop.f32.mrb[0].mxu0
        %6047 = vmatprep.mubr.f32.mxu0 0.0
        %6048 = vmatmul.mubr.f32.gmra.mrb[0].mxu0 %v5976
        %v6049 = vpop.f32.mrb[0].mxu0
        %v6050 = vadd.f32 0.0, %v6049
        %v6051 = vpop.f32.mrb[0].mxu0
        %6052 = vdwg.mxu0
        %6053 = vrot.lane.b32.xlu0 %v1214, 64
        %v6054 = vpop.permute.xlu0 %6053
        %v6057 = vsel %vm3836, %v4486, 0
        %v6060 = vsel %vm3836, %v4488, 0
        %6062 = vmatprep.subr.mxu0 0.0
        %6063 = vmatpush1.msra.mxu0 %v6054
        %6064 = vmatprep.subr.mxu0 0.0
        %6065 = vmatpush1.msra.mxu0 0.0
        %6066 = vmatprep.subr.mxu0 0.0
        %6067 = vmatpush1.msra.mxu0 0.0
        %6068 = vmatprep.subr.mxu0 0.0
        %6069 = vmatpush1.msra.mxu0 0.0
        %6070 = vmatprep.subr.mxu0 0.0
        %6071 = vmatpush1.msra.mxu0 0.0
        %6072 = vmatprep.subr.mxu0 0.0
        %6073 = vmatpush1.msra.mxu0 0.0
        %6074 = vmatprep.subr.mxu0 0.0
        %6075 = vmatpush1.msra.mxu0 0.0
        %6076 = vmatprep.subr.mxu0 0.0
        %6077 = vmatpush1.msra.mxu0 0.0
        %6078 = vmatprep.subr.mxu0 0.0
        %6079 = vmatpush1.msra.mxu0 0.0
        %6080 = vmatprep.subr.mxu0 0.0
        %6081 = vmatpush1.msra.mxu0 0.0
        %6082 = vmatprep.subr.mxu0 0.0
        %6083 = vmatpush1.msra.mxu0 0.0
        %6084 = vmatprep.subr.mxu0 0.0
        %6085 = vmatpush1.msra.mxu0 0.0
        %6086 = vmatprep.subr.mxu0 0.0
        %6087 = vmatpush1.msra.mxu0 0.0
        %6088 = vmatprep.subr.mxu0 0.0
        %6089 = vmatpush1.msra.mxu0 0.0
        %6090 = vmatprep.subr.mxu0 0.0
        %6091 = vmatpush1.msra.mxu0 0.0
        %6092 = vmatprep.subr.mxu0 0.0
        %6093 = vmatpush1.msra.mxu0 0.0
        %6094 = vmatprep.subr.mxu0 0.0
        %6095 = vmatpush1.msra.mxu0 0.0
        %6096 = vmatprep.subr.mxu0 0.0
        %6097 = vmatpush1.msra.mxu0 0.0
        %6098 = vmatprep.subr.mxu0 0.0
        %6099 = vmatpush1.msra.mxu0 0.0
        %6100 = vmatprep.subr.mxu0 0.0
        %6101 = vmatpush1.msra.mxu0 0.0
        %6102 = vmatprep.subr.mxu0 0.0
        %6103 = vmatpush1.msra.mxu0 0.0
        %6104 = vmatprep.subr.mxu0 0.0
        %6105 = vmatpush1.msra.mxu0 0.0
        %6106 = vmatprep.subr.mxu0 0.0
        %6107 = vmatpush1.msra.mxu0 0.0
        %6108 = vmatprep.subr.mxu0 0.0
        %6109 = vmatpush1.msra.mxu0 0.0
        %6110 = vmatprep.subr.mxu0 0.0
        %6111 = vmatpush1.msra.mxu0 0.0
        %6112 = vmatprep.subr.mxu0 0.0
        %6113 = vmatpush1.msra.mxu0 0.0
        %6114 = vmatprep.subr.mxu0 0.0
        %6115 = vmatpush1.msra.mxu0 0.0
        %6116 = vmatprep.subr.mxu0 0.0
        %6117 = vmatpush1.msra.mxu0 0.0
        %6118 = vmatprep.subr.mxu0 0.0
        %6119 = vmatpush1.msra.mxu0 0.0
        %6120 = vmatprep.subr.mxu0 0.0
        %6121 = vmatpush1.msra.mxu0 0.0
        %6122 = vmatprep.subr.mxu0 0.0
        %6123 = vmatpush1.msra.mxu0 0.0
        %6124 = vmatprep.subr.mxu0 0.0
        %6125 = vmatpush1.msra.mxu0 0.0
        %6126 = vmatprep.mubr.f32.mxu0 0.0
        %6127 = vmatmul.mubr.f32.gmra.mrb[0].mxu0 %v6057
        %v6128 = vpop.f32.mrb[0].mxu0
        %v6129 = vadd.f32 0.0, %v6128
        %v6130 = vpop.f32.mrb[0].mxu0
        %6131 = vmatprep.mubr.f32.mxu0 0.0
        %6132 = vmatmul.mubr.f32.gmra.mrb[0].mxu0 %v6060
        %v6133 = vpop.f32.mrb[0].mxu0
        %v6134 = vadd.f32 0.0, %v6133
        %v6135 = vpop.f32.mrb[0].mxu0
        %6136 = vdwg.mxu0
        %6137 = vrot.lane.b32.xlu0 %v1216, 64
        %v6138 = vpop.permute.xlu0 %6137
        %v6141 = vsel %vm3836, %v4490, 0
        %v6144 = vsel %vm3836, %v4492, 0
        %6146 = vmatprep.subr.mxu0 0.0
        %6147 = vmatpush1.msra.mxu0 %v6138
        %6148 = vmatprep.subr.mxu0 0.0
        %6149 = vmatpush1.msra.mxu0 0.0
        %6150 = vmatprep.subr.mxu0 0.0
        %6151 = vmatpush1.msra.mxu0 0.0
        %6152 = vmatprep.subr.mxu0 0.0
        %6153 = vmatpush1.msra.mxu0 0.0
        %6154 = vmatprep.subr.mxu0 0.0
        %6155 = vmatpush1.msra.mxu0 0.0
        %6156 = vmatprep.subr.mxu0 0.0
        %6157 = vmatpush1.msra.mxu0 0.0
        %6158 = vmatprep.subr.mxu0 0.0
        %6159 = vmatpush1.msra.mxu0 0.0
        %6160 = vmatprep.subr.mxu0 0.0
        %6161 = vmatpush1.msra.mxu0 0.0
        %6162 = vmatprep.subr.mxu0 0.0
        %6163 = vmatpush1.msra.mxu0 0.0
        %6164 = vmatprep.subr.mxu0 0.0
        %6165 = vmatpush1.msra.mxu0 0.0
        %6166 = vmatprep.subr.mxu0 0.0
        %6167 = vmatpush1.msra.mxu0 0.0
        %6168 = vmatprep.subr.mxu0 0.0
        %6169 = vmatpush1.msra.mxu0 0.0
        %6170 = vmatprep.subr.mxu0 0.0
        %6171 = vmatpush1.msra.mxu0 0.0
        %6172 = vmatprep.subr.mxu0 0.0
        %6173 = vmatpush1.msra.mxu0 0.0
        %6174 = vmatprep.subr.mxu0 0.0
        %6175 = vmatpush1.msra.mxu0 0.0
        %6176 = vmatprep.subr.mxu0 0.0
        %6177 = vmatpush1.msra.mxu0 0.0
        %6178 = vmatprep.subr.mxu0 0.0
        %6179 = vmatpush1.msra.mxu0 0.0
        %6180 = vmatprep.subr.mxu0 0.0
        %6181 = vmatpush1.msra.mxu0 0.0
        %6182 = vmatprep.subr.mxu0 0.0
        %6183 = vmatpush1.msra.mxu0 0.0
        %6184 = vmatprep.subr.mxu0 0.0
        %6185 = vmatpush1.msra.mxu0 0.0
        %6186 = vmatprep.subr.mxu0 0.0
        %6187 = vmatpush1.msra.mxu0 0.0
        %6188 = vmatprep.subr.mxu0 0.0
        %6189 = vmatpush1.msra.mxu0 0.0
        %6190 = vmatprep.subr.mxu0 0.0
        %6191 = vmatpush1.msra.mxu0 0.0
        %6192 = vmatprep.subr.mxu0 0.0
        %6193 = vmatpush1.msra.mxu0 0.0
        %6194 = vmatprep.subr.mxu0 0.0
        %6195 = vmatpush1.msra.mxu0 0.0
        %6196 = vmatprep.subr.mxu0 0.0
        %6197 = vmatpush1.msra.mxu0 0.0
        %6198 = vmatprep.subr.mxu0 0.0
        %6199 = vmatpush1.msra.mxu0 0.0
        %6200 = vmatprep.subr.mxu0 0.0
        %6201 = vmatpush1.msra.mxu0 0.0
        %6202 = vmatprep.subr.mxu0 0.0
        %6203 = vmatpush1.msra.mxu0 0.0
        %6204 = vmatprep.subr.mxu0 0.0
        %6205 = vmatpush1.msra.mxu0 0.0
        %6206 = vmatprep.subr.mxu0 0.0
        %6207 = vmatpush1.msra.mxu0 0.0
        %6208 = vmatprep.subr.mxu0 0.0
        %6209 = vmatpush1.msra.mxu0 0.0
        %6210 = vmatprep.mubr.f32.mxu0 0.0
        %6211 = vmatmul.mubr.f32.gmra.mrb[0].mxu0 %v6141
        %v6212 = vpop.f32.mrb[0].mxu0
        %v6213 = vadd.f32 0.0, %v6212
        %v6214 = vpop.f32.mrb[0].mxu0
        %6215 = vmatprep.mubr.f32.mxu0 0.0
        %6216 = vmatmul.mubr.f32.gmra.mrb[0].mxu0 %v6144
        %v6217 = vpop.f32.mrb[0].mxu0
        %v6218 = vadd.f32 0.0, %v6217
        %v6219 = vpop.f32.mrb[0].mxu0
        %6220 = vdwg.mxu0
        %6221 = vrot.lane.b32.xlu0 %v1218, 64
        %v6222 = vpop.permute.xlu0 %6221
        %v6225 = vsel %vm3836, %v4494, 0
        %v6228 = vsel %vm3836, %v4496, 0
        %6230 = vmatprep.subr.mxu0 0.0
        %6231 = vmatpush1.msra.mxu0 %v6222
        %6232 = vmatprep.subr.mxu0 0.0
        %6233 = vmatpush1.msra.mxu0 0.0
        %6234 = vmatprep.subr.mxu0 0.0
        %6235 = vmatpush1.msra.mxu0 0.0
        %6236 = vmatprep.subr.mxu0 0.0
        %6237 = vmatpush1.msra.mxu0 0.0
        %6238 = vmatprep.subr.mxu0 0.0
        %6239 = vmatpush1.msra.mxu0 0.0
        %6240 = vmatprep.subr.mxu0 0.0
        %6241 = vmatpush1.msra.mxu0 0.0
        %6242 = vmatprep.subr.mxu0 0.0
        %6243 = vmatpush1.msra.mxu0 0.0
        %6244 = vmatprep.subr.mxu0 0.0
        %6245 = vmatpush1.msra.mxu0 0.0
        %6246 = vmatprep.subr.mxu0 0.0
        %6247 = vmatpush1.msra.mxu0 0.0
        %6248 = vmatprep.subr.mxu0 0.0
        %6249 = vmatpush1.msra.mxu0 0.0
        %6250 = vmatprep.subr.mxu0 0.0
        %6251 = vmatpush1.msra.mxu0 0.0
        %6252 = vmatprep.subr.mxu0 0.0
        %6253 = vmatpush1.msra.mxu0 0.0
        %6254 = vmatprep.subr.mxu0 0.0
        %6255 = vmatpush1.msra.mxu0 0.0
        %6256 = vmatprep.subr.mxu0 0.0
        %6257 = vmatpush1.msra.mxu0 0.0
        %6258 = vmatprep.subr.mxu0 0.0
        %6259 = vmatpush1.msra.mxu0 0.0
        %6260 = vmatprep.subr.mxu0 0.0
        %6261 = vmatpush1.msra.mxu0 0.0
        %6262 = vmatprep.subr.mxu0 0.0
        %6263 = vmatpush1.msra.mxu0 0.0
        %6264 = vmatprep.subr.mxu0 0.0
        %6265 = vmatpush1.msra.mxu0 0.0
        %6266 = vmatprep.subr.mxu0 0.0
        %6267 = vmatpush1.msra.mxu0 0.0
        %6268 = vmatprep.subr.mxu0 0.0
        %6269 = vmatpush1.msra.mxu0 0.0
        %6270 = vmatprep.subr.mxu0 0.0
        %6271 = vmatpush1.msra.mxu0 0.0
        %6272 = vmatprep.subr.mxu0 0.0
        %6273 = vmatpush1.msra.mxu0 0.0
        %6274 = vmatprep.subr.mxu0 0.0
        %6275 = vmatpush1.msra.mxu0 0.0
        %6276 = vmatprep.subr.mxu0 0.0
        %6277 = vmatpush1.msra.mxu0 0.0
        %6278 = vmatprep.subr.mxu0 0.0
        %6279 = vmatpush1.msra.mxu0 0.0
        %6280 = vmatprep.subr.mxu0 0.0
        %6281 = vmatpush1.msra.mxu0 0.0
        %6282 = vmatprep.subr.mxu0 0.0
        %6283 = vmatpush1.msra.mxu0 0.0
        %6284 = vmatprep.subr.mxu0 0.0
        %6285 = vmatpush1.msra.mxu0 0.0
        %6286 = vmatprep.subr.mxu0 0.0
        %6287 = vmatpush1.msra.mxu0 0.0
        %6288 = vmatprep.subr.mxu0 0.0
        %6289 = vmatpush1.msra.mxu0 0.0
        %6290 = vmatprep.subr.mxu0 0.0
        %6291 = vmatpush1.msra.mxu0 0.0
        %6292 = vmatprep.subr.mxu0 0.0
        %6293 = vmatpush1.msra.mxu0 0.0
        %6294 = vmatprep.mubr.f32.mxu0 0.0
        %6295 = vmatmul.mubr.f32.gmra.mrb[0].mxu0 %v6225
        %v6296 = vpop.f32.mrb[0].mxu0
        %v6297 = vadd.f32 0.0, %v6296
        %v6298 = vpop.f32.mrb[0].mxu0
        %6299 = vmatprep.mubr.f32.mxu0 0.0
        %6300 = vmatmul.mubr.f32.gmra.mrb[0].mxu0 %v6228
        %v6301 = vpop.f32.mrb[0].mxu0
        %v6302 = vadd.f32 0.0, %v6301
        %v6303 = vpop.f32.mrb[0].mxu0
        %6304 = vdwg.mxu0
        %6305 = vrot.lane.b32.xlu0 %v1220, 64
        %v6306 = vpop.permute.xlu0 %6305
        %v6309 = vsel %vm3836, %v4498, 0
        %v6312 = vsel %vm3836, %v4500, 0
        %6314 = vmatprep.subr.mxu0 0.0
        %6315 = vmatpush1.msra.mxu0 %v6306
        %6316 = vmatprep.subr.mxu0 0.0
        %6317 = vmatpush1.msra.mxu0 0.0
        %6318 = vmatprep.subr.mxu0 0.0
        %6319 = vmatpush1.msra.mxu0 0.0
        %6320 = vmatprep.subr.mxu0 0.0
        %6321 = vmatpush1.msra.mxu0 0.0
        %6322 = vmatprep.subr.mxu0 0.0
        %6323 = vmatpush1.msra.mxu0 0.0
        %6324 = vmatprep.subr.mxu0 0.0
        %6325 = vmatpush1.msra.mxu0 0.0
        %6326 = vmatprep.subr.mxu0 0.0
        %6327 = vmatpush1.msra.mxu0 0.0
        %6328 = vmatprep.subr.mxu0 0.0
        %6329 = vmatpush1.msra.mxu0 0.0
        %6330 = vmatprep.subr.mxu0 0.0
        %6331 = vmatpush1.msra.mxu0 0.0
        %6332 = vmatprep.subr.mxu0 0.0
        %6333 = vmatpush1.msra.mxu0 0.0
        %6334 = vmatprep.subr.mxu0 0.0
        %6335 = vmatpush1.msra.mxu0 0.0
        %6336 = vmatprep.subr.mxu0 0.0
        %6337 = vmatpush1.msra.mxu0 0.0
        %6338 = vmatprep.subr.mxu0 0.0
        %6339 = vmatpush1.msra.mxu0 0.0
        %6340 = vmatprep.subr.mxu0 0.0
        %6341 = vmatpush1.msra.mxu0 0.0
        %6342 = vmatprep.subr.mxu0 0.0
        %6343 = vmatpush1.msra.mxu0 0.0
        %6344 = vmatprep.subr.mxu0 0.0
        %6345 = vmatpush1.msra.mxu0 0.0
        %6346 = vmatprep.subr.mxu0 0.0
        %6347 = vmatpush1.msra.mxu0 0.0
        %6348 = vmatprep.subr.mxu0 0.0
        %6349 = vmatpush1.msra.mxu0 0.0
        %6350 = vmatprep.subr.mxu0 0.0
        %6351 = vmatpush1.msra.mxu0 0.0
        %6352 = vmatprep.subr.mxu0 0.0
        %6353 = vmatpush1.msra.mxu0 0.0
        %6354 = vmatprep.subr.mxu0 0.0
        %6355 = vmatpush1.msra.mxu0 0.0
        %6356 = vmatprep.subr.mxu0 0.0
        %6357 = vmatpush1.msra.mxu0 0.0
        %6358 = vmatprep.subr.mxu0 0.0
        %6359 = vmatpush1.msra.mxu0 0.0
        %6360 = vmatprep.subr.mxu0 0.0
        %6361 = vmatpush1.msra.mxu0 0.0
        %6362 = vmatprep.subr.mxu0 0.0
        %6363 = vmatpush1.msra.mxu0 0.0
        %6364 = vmatprep.subr.mxu0 0.0
        %6365 = vmatpush1.msra.mxu0 0.0
        %6366 = vmatprep.subr.mxu0 0.0
        %6367 = vmatpush1.msra.mxu0 0.0
        %6368 = vmatprep.subr.mxu0 0.0
        %6369 = vmatpush1.msra.mxu0 0.0
        %6370 = vmatprep.subr.mxu0 0.0
        %6371 = vmatpush1.msra.mxu0 0.0
        %6372 = vmatprep.subr.mxu0 0.0
        %6373 = vmatpush1.msra.mxu0 0.0
        %6374 = vmatprep.subr.mxu0 0.0
        %6375 = vmatpush1.msra.mxu0 0.0
        %6376 = vmatprep.subr.mxu0 0.0
        %6377 = vmatpush1.msra.mxu0 0.0
        %6378 = vmatprep.mubr.f32.mxu0 0.0
        %6379 = vmatmul.mubr.f32.gmra.mrb[0].mxu0 %v6309
        %v6380 = vpop.f32.mrb[0].mxu0
        %v6381 = vadd.f32 0.0, %v6380
        %v6382 = vpop.f32.mrb[0].mxu0
        %6383 = vmatprep.mubr.f32.mxu0 0.0
        %6384 = vmatmul.mubr.f32.gmra.mrb[0].mxu0 %v6312
        %v6385 = vpop.f32.mrb[0].mxu0
        %v6386 = vadd.f32 0.0, %v6385
        %v6387 = vpop.f32.mrb[0].mxu0
        %6388 = vdwg.mxu0
        %6389 = vrot.lane.b32.xlu0 %v1222, 64
        %v6390 = vpop.permute.xlu0 %6389
        %v6393 = vsel %vm3836, %v4502, 0
        %v6396 = vsel %vm3836, %v4504, 0
        %6398 = vmatprep.subr.mxu0 0.0
        %6399 = vmatpush1.msra.mxu0 %v6390
        %6400 = vmatprep.subr.mxu0 0.0
        %6401 = vmatpush1.msra.mxu0 0.0
        %6402 = vmatprep.subr.mxu0 0.0
        %6403 = vmatpush1.msra.mxu0 0.0
        %6404 = vmatprep.subr.mxu0 0.0
        %6405 = vmatpush1.msra.mxu0 0.0
        %6406 = vmatprep.subr.mxu0 0.0
        %6407 = vmatpush1.msra.mxu0 0.0
        %6408 = vmatprep.subr.mxu0 0.0
        %6409 = vmatpush1.msra.mxu0 0.0
        %6410 = vmatprep.subr.mxu0 0.0
        %6411 = vmatpush1.msra.mxu0 0.0
        %6412 = vmatprep.subr.mxu0 0.0
        %6413 = vmatpush1.msra.mxu0 0.0
        %6414 = vmatprep.subr.mxu0 0.0
        %6415 = vmatpush1.msra.mxu0 0.0
        %6416 = vmatprep.subr.mxu0 0.0
        %6417 = vmatpush1.msra.mxu0 0.0
        %6418 = vmatprep.subr.mxu0 0.0
        %6419 = vmatpush1.msra.mxu0 0.0
        %6420 = vmatprep.subr.mxu0 0.0
        %6421 = vmatpush1.msra.mxu0 0.0
        %6422 = vmatprep.subr.mxu0 0.0
        %6423 = vmatpush1.msra.mxu0 0.0
        %6424 = vmatprep.subr.mxu0 0.0
        %6425 = vmatpush1.msra.mxu0 0.0
        %6426 = vmatprep.subr.mxu0 0.0
        %6427 = vmatpush1.msra.mxu0 0.0
        %6428 = vmatprep.subr.mxu0 0.0
        %6429 = vmatpush1.msra.mxu0 0.0
        %6430 = vmatprep.subr.mxu0 0.0
        %6431 = vmatpush1.msra.mxu0 0.0
        %6432 = vmatprep.subr.mxu0 0.0
        %6433 = vmatpush1.msra.mxu0 0.0
        %6434 = vmatprep.subr.mxu0 0.0
        %6435 = vmatpush1.msra.mxu0 0.0
        %6436 = vmatprep.subr.mxu0 0.0
        %6437 = vmatpush1.msra.mxu0 0.0
        %6438 = vmatprep.subr.mxu0 0.0
        %6439 = vmatpush1.msra.mxu0 0.0
        %6440 = vmatprep.subr.mxu0 0.0
        %6441 = vmatpush1.msra.mxu0 0.0
        %6442 = vmatprep.subr.mxu0 0.0
        %6443 = vmatpush1.msra.mxu0 0.0
        %6444 = vmatprep.subr.mxu0 0.0
        %6445 = vmatpush1.msra.mxu0 0.0
        %6446 = vmatprep.subr.mxu0 0.0
        %6447 = vmatpush1.msra.mxu0 0.0
        %6448 = vmatprep.subr.mxu0 0.0
        %6449 = vmatpush1.msra.mxu0 0.0
        %6450 = vmatprep.subr.mxu0 0.0
        %6451 = vmatpush1.msra.mxu0 0.0
        %6452 = vmatprep.subr.mxu0 0.0
        %6453 = vmatpush1.msra.mxu0 0.0
        %6454 = vmatprep.subr.mxu0 0.0
        %6455 = vmatpush1.msra.mxu0 0.0
        %6456 = vmatprep.subr.mxu0 0.0
        %6457 = vmatpush1.msra.mxu0 0.0
        %6458 = vmatprep.subr.mxu0 0.0
        %6459 = vmatpush1.msra.mxu0 0.0
        %6460 = vmatprep.subr.mxu0 0.0
        %6461 = vmatpush1.msra.mxu0 0.0
        %6462 = vmatprep.mubr.f32.mxu0 0.0
        %6463 = vmatmul.mubr.f32.gmra.mrb[0].mxu0 %v6393
        %v6464 = vpop.f32.mrb[0].mxu0
        %v6465 = vadd.f32 0.0, %v6464
        %v6466 = vpop.f32.mrb[0].mxu0
        %6467 = vmatprep.mubr.f32.mxu0 0.0
        %6468 = vmatmul.mubr.f32.gmra.mrb[0].mxu0 %v6396
        %v6469 = vpop.f32.mrb[0].mxu0
        %v6470 = vadd.f32 0.0, %v6469
        %v6471 = vpop.f32.mrb[0].mxu0
        %6472 = vdwg.mxu0
        %6473 = vrot.lane.b32.xlu0 %v1224, 64
        %v6474 = vpop.permute.xlu0 %6473
        %v6477 = vsel %vm3836, %v4506, 0
        %v6480 = vsel %vm3836, %v4508, 0
        %6482 = vmatprep.subr.mxu0 0.0
        %6483 = vmatpush1.msra.mxu0 %v6474
        %6484 = vmatprep.subr.mxu0 0.0
        %6485 = vmatpush1.msra.mxu0 0.0
        %6486 = vmatprep.subr.mxu0 0.0
        %6487 = vmatpush1.msra.mxu0 0.0
        %6488 = vmatprep.subr.mxu0 0.0
        %6489 = vmatpush1.msra.mxu0 0.0
        %6490 = vmatprep.subr.mxu0 0.0
        %6491 = vmatpush1.msra.mxu0 0.0
        %6492 = vmatprep.subr.mxu0 0.0
        %6493 = vmatpush1.msra.mxu0 0.0
        %6494 = vmatprep.subr.mxu0 0.0
        %6495 = vmatpush1.msra.mxu0 0.0
        %6496 = vmatprep.subr.mxu0 0.0
        %6497 = vmatpush1.msra.mxu0 0.0
        %6498 = vmatprep.subr.mxu0 0.0
        %6499 = vmatpush1.msra.mxu0 0.0
        %6500 = vmatprep.subr.mxu0 0.0
        %6501 = vmatpush1.msra.mxu0 0.0
        %6502 = vmatprep.subr.mxu0 0.0
        %6503 = vmatpush1.msra.mxu0 0.0
        %6504 = vmatprep.subr.mxu0 0.0
        %6505 = vmatpush1.msra.mxu0 0.0
        %6506 = vmatprep.subr.mxu0 0.0
        %6507 = vmatpush1.msra.mxu0 0.0
        %6508 = vmatprep.subr.mxu0 0.0
        %6509 = vmatpush1.msra.mxu0 0.0
        %6510 = vmatprep.subr.mxu0 0.0
        %6511 = vmatpush1.msra.mxu0 0.0
        %6512 = vmatprep.subr.mxu0 0.0
        %6513 = vmatpush1.msra.mxu0 0.0
        %6514 = vmatprep.subr.mxu0 0.0
        %6515 = vmatpush1.msra.mxu0 0.0
        %6516 = vmatprep.subr.mxu0 0.0
        %6517 = vmatpush1.msra.mxu0 0.0
        %6518 = vmatprep.subr.mxu0 0.0
        %6519 = vmatpush1.msra.mxu0 0.0
        %6520 = vmatprep.subr.mxu0 0.0
        %6521 = vmatpush1.msra.mxu0 0.0
        %6522 = vmatprep.subr.mxu0 0.0
        %6523 = vmatpush1.msra.mxu0 0.0
        %6524 = vmatprep.subr.mxu0 0.0
        %6525 = vmatpush1.msra.mxu0 0.0
        %6526 = vmatprep.subr.mxu0 0.0
        %6527 = vmatpush1.msra.mxu0 0.0
        %6528 = vmatprep.subr.mxu0 0.0
        %6529 = vmatpush1.msra.mxu0 0.0
        %6530 = vmatprep.subr.mxu0 0.0
        %6531 = vmatpush1.msra.mxu0 0.0
        %6532 = vmatprep.subr.mxu0 0.0
        %6533 = vmatpush1.msra.mxu0 0.0
        %6534 = vmatprep.subr.mxu0 0.0
        %6535 = vmatpush1.msra.mxu0 0.0
        %6536 = vmatprep.subr.mxu0 0.0
        %6537 = vmatpush1.msra.mxu0 0.0
        %6538 = vmatprep.subr.mxu0 0.0
        %6539 = vmatpush1.msra.mxu0 0.0
        %6540 = vmatprep.subr.mxu0 0.0
        %6541 = vmatpush1.msra.mxu0 0.0
        %6542 = vmatprep.subr.mxu0 0.0
        %6543 = vmatpush1.msra.mxu0 0.0
        %6544 = vmatprep.subr.mxu0 0.0
        %6545 = vmatpush1.msra.mxu0 0.0
        %6546 = vmatprep.mubr.f32.mxu0 0.0
        %6547 = vmatmul.mubr.f32.gmra.mrb[0].mxu0 %v6477
        %v6548 = vpop.f32.mrb[0].mxu0
        %v6549 = vadd.f32 0.0, %v6548
        %v6550 = vpop.f32.mrb[0].mxu0
        %6551 = vmatprep.mubr.f32.mxu0 0.0
        %6552 = vmatmul.mubr.f32.gmra.mrb[0].mxu0 %v6480
        %v6553 = vpop.f32.mrb[0].mxu0
        %v6554 = vadd.f32 0.0, %v6553
        %v6555 = vpop.f32.mrb[0].mxu0
        %6556 = vdwg.mxu0
        %6557 = vrot.lane.b32.xlu0 %v1226, 64
        %v6558 = vpop.permute.xlu0 %6557
        %v6561 = vsel %vm3836, %v4510, 0
        %v6564 = vsel %vm3836, %v4512, 0
        %6566 = vmatprep.subr.mxu0 0.0
        %6567 = vmatpush1.msra.mxu0 %v6558
        %6568 = vmatprep.subr.mxu0 0.0
        %6569 = vmatpush1.msra.mxu0 0.0
        %6570 = vmatprep.subr.mxu0 0.0
        %6571 = vmatpush1.msra.mxu0 0.0
        %6572 = vmatprep.subr.mxu0 0.0
        %6573 = vmatpush1.msra.mxu0 0.0
        %6574 = vmatprep.subr.mxu0 0.0
        %6575 = vmatpush1.msra.mxu0 0.0
        %6576 = vmatprep.subr.mxu0 0.0
        %6577 = vmatpush1.msra.mxu0 0.0
        %6578 = vmatprep.subr.mxu0 0.0
        %6579 = vmatpush1.msra.mxu0 0.0
        %6580 = vmatprep.subr.mxu0 0.0
        %6581 = vmatpush1.msra.mxu0 0.0
        %6582 = vmatprep.subr.mxu0 0.0
        %6583 = vmatpush1.msra.mxu0 0.0
        %6584 = vmatprep.subr.mxu0 0.0
        %6585 = vmatpush1.msra.mxu0 0.0
        %6586 = vmatprep.subr.mxu0 0.0
        %6587 = vmatpush1.msra.mxu0 0.0
        %6588 = vmatprep.subr.mxu0 0.0
        %6589 = vmatpush1.msra.mxu0 0.0
        %6590 = vmatprep.subr.mxu0 0.0
        %6591 = vmatpush1.msra.mxu0 0.0
        %6592 = vmatprep.subr.mxu0 0.0
        %6593 = vmatpush1.msra.mxu0 0.0
        %6594 = vmatprep.subr.mxu0 0.0
        %6595 = vmatpush1.msra.mxu0 0.0
        %6596 = vmatprep.subr.mxu0 0.0
        %6597 = vmatpush1.msra.mxu0 0.0
        %6598 = vmatprep.subr.mxu0 0.0
        %6599 = vmatpush1.msra.mxu0 0.0
        %6600 = vmatprep.subr.mxu0 0.0
        %6601 = vmatpush1.msra.mxu0 0.0
        %6602 = vmatprep.subr.mxu0 0.0
        %6603 = vmatpush1.msra.mxu0 0.0
        %6604 = vmatprep.subr.mxu0 0.0
        %6605 = vmatpush1.msra.mxu0 0.0
        %6606 = vmatprep.subr.mxu0 0.0
        %6607 = vmatpush1.msra.mxu0 0.0
        %6608 = vmatprep.subr.mxu0 0.0
        %6609 = vmatpush1.msra.mxu0 0.0
        %6610 = vmatprep.subr.mxu0 0.0
        %6611 = vmatpush1.msra.mxu0 0.0
        %6612 = vmatprep.subr.mxu0 0.0
        %6613 = vmatpush1.msra.mxu0 0.0
        %6614 = vmatprep.subr.mxu0 0.0
        %6615 = vmatpush1.msra.mxu0 0.0
        %6616 = vmatprep.subr.mxu0 0.0
        %6617 = vmatpush1.msra.mxu0 0.0
        %6618 = vmatprep.subr.mxu0 0.0
        %6619 = vmatpush1.msra.mxu0 0.0
        %6620 = vmatprep.subr.mxu0 0.0
        %6621 = vmatpush1.msra.mxu0 0.0
        %6622 = vmatprep.subr.mxu0 0.0
        %6623 = vmatpush1.msra.mxu0 0.0
        %6624 = vmatprep.subr.mxu0 0.0
        %6625 = vmatpush1.msra.mxu0 0.0
        %6626 = vmatprep.subr.mxu0 0.0
        %6627 = vmatpush1.msra.mxu0 0.0
        %6628 = vmatprep.subr.mxu0 0.0
        %6629 = vmatpush1.msra.mxu0 0.0
        %6630 = vmatprep.mubr.f32.mxu0 0.0
        %6631 = vmatmul.mubr.f32.gmra.mrb[0].mxu0 %v6561
        %v6632 = vpop.f32.mrb[0].mxu0
        %v6633 = vadd.f32 0.0, %v6632
        %v6634 = vpop.f32.mrb[0].mxu0
        %6635 = vmatprep.mubr.f32.mxu0 0.0
        %6636 = vmatmul.mubr.f32.gmra.mrb[0].mxu0 %v6564
        %v6637 = vpop.f32.mrb[0].mxu0
        %v6638 = vadd.f32 0.0, %v6637
        %v6639 = vpop.f32.mrb[0].mxu0
        %6640 = vdwg.mxu0
        %6641 = vrot.lane.b32.xlu0 %v1228, 64
        %v6642 = vpop.permute.xlu0 %6641
        %v6645 = vsel %vm3836, %v4514, 0
        %v6648 = vsel %vm3836, %v4516, 0
        %6650 = vmatprep.subr.mxu0 0.0
        %6651 = vmatpush1.msra.mxu0 %v6642
        %6652 = vmatprep.subr.mxu0 0.0
        %6653 = vmatpush1.msra.mxu0 0.0
        %6654 = vmatprep.subr.mxu0 0.0
        %6655 = vmatpush1.msra.mxu0 0.0
        %6656 = vmatprep.subr.mxu0 0.0
        %6657 = vmatpush1.msra.mxu0 0.0
        %6658 = vmatprep.subr.mxu0 0.0
        %6659 = vmatpush1.msra.mxu0 0.0
        %6660 = vmatprep.subr.mxu0 0.0
        %6661 = vmatpush1.msra.mxu0 0.0
        %6662 = vmatprep.subr.mxu0 0.0
        %6663 = vmatpush1.msra.mxu0 0.0
        %6664 = vmatprep.subr.mxu0 0.0
        %6665 = vmatpush1.msra.mxu0 0.0
        %6666 = vmatprep.subr.mxu0 0.0
        %6667 = vmatpush1.msra.mxu0 0.0
        %6668 = vmatprep.subr.mxu0 0.0
        %6669 = vmatpush1.msra.mxu0 0.0
        %6670 = vmatprep.subr.mxu0 0.0
        %6671 = vmatpush1.msra.mxu0 0.0
        %6672 = vmatprep.subr.mxu0 0.0
        %6673 = vmatpush1.msra.mxu0 0.0
        %6674 = vmatprep.subr.mxu0 0.0
        %6675 = vmatpush1.msra.mxu0 0.0
        %6676 = vmatprep.subr.mxu0 0.0
        %6677 = vmatpush1.msra.mxu0 0.0
        %6678 = vmatprep.subr.mxu0 0.0
        %6679 = vmatpush1.msra.mxu0 0.0
        %6680 = vmatprep.subr.mxu0 0.0
        %6681 = vmatpush1.msra.mxu0 0.0
        %6682 = vmatprep.subr.mxu0 0.0
        %6683 = vmatpush1.msra.mxu0 0.0
        %6684 = vmatprep.subr.mxu0 0.0
        %6685 = vmatpush1.msra.mxu0 0.0
        %6686 = vmatprep.subr.mxu0 0.0
        %6687 = vmatpush1.msra.mxu0 0.0
        %6688 = vmatprep.subr.mxu0 0.0
        %6689 = vmatpush1.msra.mxu0 0.0
        %6690 = vmatprep.subr.mxu0 0.0
        %6691 = vmatpush1.msra.mxu0 0.0
        %6692 = vmatprep.subr.mxu0 0.0
        %6693 = vmatpush1.msra.mxu0 0.0
        %6694 = vmatprep.subr.mxu0 0.0
        %6695 = vmatpush1.msra.mxu0 0.0
        %6696 = vmatprep.subr.mxu0 0.0
        %6697 = vmatpush1.msra.mxu0 0.0
        %6698 = vmatprep.subr.mxu0 0.0
        %6699 = vmatpush1.msra.mxu0 0.0
        %6700 = vmatprep.subr.mxu0 0.0
        %6701 = vmatpush1.msra.mxu0 0.0
        %6702 = vmatprep.subr.mxu0 0.0
        %6703 = vmatpush1.msra.mxu0 0.0
        %6704 = vmatprep.subr.mxu0 0.0
        %6705 = vmatpush1.msra.mxu0 0.0
        %6706 = vmatprep.subr.mxu0 0.0
        %6707 = vmatpush1.msra.mxu0 0.0
        %6708 = vmatprep.subr.mxu0 0.0
        %6709 = vmatpush1.msra.mxu0 0.0
        %6710 = vmatprep.subr.mxu0 0.0
        %6711 = vmatpush1.msra.mxu0 0.0
        %6712 = vmatprep.subr.mxu0 0.0
        %6713 = vmatpush1.msra.mxu0 0.0
        %6714 = vmatprep.mubr.f32.mxu0 0.0
        %6715 = vmatmul.mubr.f32.gmra.mrb[0].mxu0 %v6645
        %v6716 = vpop.f32.mrb[0].mxu0
        %v6717 = vadd.f32 0.0, %v6716
        %v6718 = vpop.f32.mrb[0].mxu0
        %6719 = vmatprep.mubr.f32.mxu0 0.0
        %6720 = vmatmul.mubr.f32.gmra.mrb[0].mxu0 %v6648
        %v6721 = vpop.f32.mrb[0].mxu0
        %v6722 = vadd.f32 0.0, %v6721
        %v6723 = vpop.f32.mrb[0].mxu0
        %6724 = vdwg.mxu0
        %6725 = vrot.lane.b32.xlu0 %v1230, 64
        %v6726 = vpop.permute.xlu0 %6725
        %v6729 = vsel %vm3836, %v4518, 0
        %v6732 = vsel %vm3836, %v4520, 0
        %6734 = vmatprep.subr.mxu0 0.0
        %6735 = vmatpush1.msra.mxu0 %v6726
        %6736 = vmatprep.subr.mxu0 0.0
        %6737 = vmatpush1.msra.mxu0 0.0
        %6738 = vmatprep.subr.mxu0 0.0
        %6739 = vmatpush1.msra.mxu0 0.0
        %6740 = vmatprep.subr.mxu0 0.0
        %6741 = vmatpush1.msra.mxu0 0.0
        %6742 = vmatprep.subr.mxu0 0.0
        %6743 = vmatpush1.msra.mxu0 0.0
        %6744 = vmatprep.subr.mxu0 0.0
        %6745 = vmatpush1.msra.mxu0 0.0
        %6746 = vmatprep.subr.mxu0 0.0
        %6747 = vmatpush1.msra.mxu0 0.0
        %6748 = vmatprep.subr.mxu0 0.0
        %6749 = vmatpush1.msra.mxu0 0.0
        %6750 = vmatprep.subr.mxu0 0.0
        %6751 = vmatpush1.msra.mxu0 0.0
        %6752 = vmatprep.subr.mxu0 0.0
        %6753 = vmatpush1.msra.mxu0 0.0
        %6754 = vmatprep.subr.mxu0 0.0
        %6755 = vmatpush1.msra.mxu0 0.0
        %6756 = vmatprep.subr.mxu0 0.0
        %6757 = vmatpush1.msra.mxu0 0.0
        %6758 = vmatprep.subr.mxu0 0.0
        %6759 = vmatpush1.msra.mxu0 0.0
        %6760 = vmatprep.subr.mxu0 0.0
        %6761 = vmatpush1.msra.mxu0 0.0
        %6762 = vmatprep.subr.mxu0 0.0
        %6763 = vmatpush1.msra.mxu0 0.0
        %6764 = vmatprep.subr.mxu0 0.0
        %6765 = vmatpush1.msra.mxu0 0.0
        %6766 = vmatprep.subr.mxu0 0.0
        %6767 = vmatpush1.msra.mxu0 0.0
        %6768 = vmatprep.subr.mxu0 0.0
        %6769 = vmatpush1.msra.mxu0 0.0
        %6770 = vmatprep.subr.mxu0 0.0
        %6771 = vmatpush1.msra.mxu0 0.0
        %6772 = vmatprep.subr.mxu0 0.0
        %6773 = vmatpush1.msra.mxu0 0.0
        %6774 = vmatprep.subr.mxu0 0.0
        %6775 = vmatpush1.msra.mxu0 0.0
        %6776 = vmatprep.subr.mxu0 0.0
        %6777 = vmatpush1.msra.mxu0 0.0
        %6778 = vmatprep.subr.mxu0 0.0
        %6779 = vmatpush1.msra.mxu0 0.0
        %6780 = vmatprep.subr.mxu0 0.0
        %6781 = vmatpush1.msra.mxu0 0.0
        %6782 = vmatprep.subr.mxu0 0.0
        %6783 = vmatpush1.msra.mxu0 0.0
        %6784 = vmatprep.subr.mxu0 0.0
        %6785 = vmatpush1.msra.mxu0 0.0
        %6786 = vmatprep.subr.mxu0 0.0
        %6787 = vmatpush1.msra.mxu0 0.0
        %6788 = vmatprep.subr.mxu0 0.0
        %6789 = vmatpush1.msra.mxu0 0.0
        %6790 = vmatprep.subr.mxu0 0.0
        %6791 = vmatpush1.msra.mxu0 0.0
        %6792 = vmatprep.subr.mxu0 0.0
        %6793 = vmatpush1.msra.mxu0 0.0
        %6794 = vmatprep.subr.mxu0 0.0
        %6795 = vmatpush1.msra.mxu0 0.0
        %6796 = vmatprep.subr.mxu0 0.0
        %6797 = vmatpush1.msra.mxu0 0.0
        %6798 = vmatprep.mubr.f32.mxu0 0.0
        %6799 = vmatmul.mubr.f32.gmra.mrb[0].mxu0 %v6729
        %v6800 = vpop.f32.mrb[0].mxu0
        %v6801 = vadd.f32 0.0, %v6800
        %v6802 = vpop.f32.mrb[0].mxu0
        %6803 = vmatprep.mubr.f32.mxu0 0.0
        %6804 = vmatmul.mubr.f32.gmra.mrb[0].mxu0 %v6732
        %v6805 = vpop.f32.mrb[0].mxu0
        %v6806 = vadd.f32 0.0, %v6805
        %v6807 = vpop.f32.mrb[0].mxu0
        %6808 = vdwg.mxu0
        %6809 = vrot.lane.b32.xlu0 %v1232, 64
        %v6810 = vpop.permute.xlu0 %6809
        %v6813 = vsel %vm3836, %v4522, 0
        %v6816 = vsel %vm3836, %v4524, 0
        %6818 = vmatprep.subr.mxu0 0.0
        %6819 = vmatpush1.msra.mxu0 %v6810
        %6820 = vmatprep.subr.mxu0 0.0
        %6821 = vmatpush1.msra.mxu0 0.0
        %6822 = vmatprep.subr.mxu0 0.0
        %6823 = vmatpush1.msra.mxu0 0.0
        %6824 = vmatprep.subr.mxu0 0.0
        %6825 = vmatpush1.msra.mxu0 0.0
        %6826 = vmatprep.subr.mxu0 0.0
        %6827 = vmatpush1.msra.mxu0 0.0
        %6828 = vmatprep.subr.mxu0 0.0
        %6829 = vmatpush1.msra.mxu0 0.0
        %6830 = vmatprep.subr.mxu0 0.0
        %6831 = vmatpush1.msra.mxu0 0.0
        %6832 = vmatprep.subr.mxu0 0.0
        %6833 = vmatpush1.msra.mxu0 0.0
        %6834 = vmatprep.subr.mxu0 0.0
        %6835 = vmatpush1.msra.mxu0 0.0
        %6836 = vmatprep.subr.mxu0 0.0
        %6837 = vmatpush1.msra.mxu0 0.0
        %6838 = vmatprep.subr.mxu0 0.0
        %6839 = vmatpush1.msra.mxu0 0.0
        %6840 = vmatprep.subr.mxu0 0.0
        %6841 = vmatpush1.msra.mxu0 0.0
        %6842 = vmatprep.subr.mxu0 0.0
        %6843 = vmatpush1.msra.mxu0 0.0
        %6844 = vmatprep.subr.mxu0 0.0
        %6845 = vmatpush1.msra.mxu0 0.0
        %6846 = vmatprep.subr.mxu0 0.0
        %6847 = vmatpush1.msra.mxu0 0.0
        %6848 = vmatprep.subr.mxu0 0.0
        %6849 = vmatpush1.msra.mxu0 0.0
        %6850 = vmatprep.subr.mxu0 0.0
        %6851 = vmatpush1.msra.mxu0 0.0
        %6852 = vmatprep.subr.mxu0 0.0
        %6853 = vmatpush1.msra.mxu0 0.0
        %6854 = vmatprep.subr.mxu0 0.0
        %6855 = vmatpush1.msra.mxu0 0.0
        %6856 = vmatprep.subr.mxu0 0.0
        %6857 = vmatpush1.msra.mxu0 0.0
        %6858 = vmatprep.subr.mxu0 0.0
        %6859 = vmatpush1.msra.mxu0 0.0
        %6860 = vmatprep.subr.mxu0 0.0
        %6861 = vmatpush1.msra.mxu0 0.0
        %6862 = vmatprep.subr.mxu0 0.0
        %6863 = vmatpush1.msra.mxu0 0.0
        %6864 = vmatprep.subr.mxu0 0.0
        %6865 = vmatpush1.msra.mxu0 0.0
        %6866 = vmatprep.subr.mxu0 0.0
        %6867 = vmatpush1.msra.mxu0 0.0
        %6868 = vmatprep.subr.mxu0 0.0
        %6869 = vmatpush1.msra.mxu0 0.0
        %6870 = vmatprep.subr.mxu0 0.0
        %6871 = vmatpush1.msra.mxu0 0.0
        %6872 = vmatprep.subr.mxu0 0.0
        %6873 = vmatpush1.msra.mxu0 0.0
        %6874 = vmatprep.subr.mxu0 0.0
        %6875 = vmatpush1.msra.mxu0 0.0
        %6876 = vmatprep.subr.mxu0 0.0
        %6877 = vmatpush1.msra.mxu0 0.0
        %6878 = vmatprep.subr.mxu0 0.0
        %6879 = vmatpush1.msra.mxu0 0.0
        %6880 = vmatprep.subr.mxu0 0.0
        %6881 = vmatpush1.msra.mxu0 0.0
        %6882 = vmatprep.mubr.f32.mxu0 0.0
        %6883 = vmatmul.mubr.f32.gmra.mrb[0].mxu0 %v6813
        %v6884 = vpop.f32.mrb[0].mxu0
        %v6885 = vadd.f32 0.0, %v6884
        %v6886 = vpop.f32.mrb[0].mxu0
        %6887 = vmatprep.mubr.f32.mxu0 0.0
        %6888 = vmatmul.mubr.f32.gmra.mrb[0].mxu0 %v6816
        %v6889 = vpop.f32.mrb[0].mxu0
        %v6890 = vadd.f32 0.0, %v6889
        %v6891 = vpop.f32.mrb[0].mxu0
        %6892 = vdwg.mxu0
        %6893 = vrot.lane.b32.xlu0 %v1234, 64
        %v6894 = vpop.permute.xlu0 %6893
        %v6897 = vsel %vm3836, %v4526, 0
        %v6900 = vsel %vm3836, %v4528, 0
        %6902 = vmatprep.subr.mxu0 0.0
        %6903 = vmatpush1.msra.mxu0 %v6894
        %6904 = vmatprep.subr.mxu0 0.0
        %6905 = vmatpush1.msra.mxu0 0.0
        %6906 = vmatprep.subr.mxu0 0.0
        %6907 = vmatpush1.msra.mxu0 0.0
        %6908 = vmatprep.subr.mxu0 0.0
        %6909 = vmatpush1.msra.mxu0 0.0
        %6910 = vmatprep.subr.mxu0 0.0
        %6911 = vmatpush1.msra.mxu0 0.0
        %6912 = vmatprep.subr.mxu0 0.0
        %6913 = vmatpush1.msra.mxu0 0.0
        %6914 = vmatprep.subr.mxu0 0.0
        %6915 = vmatpush1.msra.mxu0 0.0
        %6916 = vmatprep.subr.mxu0 0.0
        %6917 = vmatpush1.msra.mxu0 0.0
        %6918 = vmatprep.subr.mxu0 0.0
        %6919 = vmatpush1.msra.mxu0 0.0
        %6920 = vmatprep.subr.mxu0 0.0
        %6921 = vmatpush1.msra.mxu0 0.0
        %6922 = vmatprep.subr.mxu0 0.0
        %6923 = vmatpush1.msra.mxu0 0.0
        %6924 = vmatprep.subr.mxu0 0.0
        %6925 = vmatpush1.msra.mxu0 0.0
        %6926 = vmatprep.subr.mxu0 0.0
        %6927 = vmatpush1.msra.mxu0 0.0
        %6928 = vmatprep.subr.mxu0 0.0
        %6929 = vmatpush1.msra.mxu0 0.0
        %6930 = vmatprep.subr.mxu0 0.0
        %6931 = vmatpush1.msra.mxu0 0.0
        %6932 = vmatprep.subr.mxu0 0.0
        %6933 = vmatpush1.msra.mxu0 0.0
        %6934 = vmatprep.subr.mxu0 0.0
        %6935 = vmatpush1.msra.mxu0 0.0
        %6936 = vmatprep.subr.mxu0 0.0
        %6937 = vmatpush1.msra.mxu0 0.0
        %6938 = vmatprep.subr.mxu0 0.0
        %6939 = vmatpush1.msra.mxu0 0.0
        %6940 = vmatprep.subr.mxu0 0.0
        %6941 = vmatpush1.msra.mxu0 0.0
        %6942 = vmatprep.subr.mxu0 0.0
        %6943 = vmatpush1.msra.mxu0 0.0
        %6944 = vmatprep.subr.mxu0 0.0
        %6945 = vmatpush1.msra.mxu0 0.0
        %6946 = vmatprep.subr.mxu0 0.0
        %6947 = vmatpush1.msra.mxu0 0.0
        %6948 = vmatprep.subr.mxu0 0.0
        %6949 = vmatpush1.msra.mxu0 0.0
        %6950 = vmatprep.subr.mxu0 0.0
        %6951 = vmatpush1.msra.mxu0 0.0
        %6952 = vmatprep.subr.mxu0 0.0
        %6953 = vmatpush1.msra.mxu0 0.0
        %6954 = vmatprep.subr.mxu0 0.0
        %6955 = vmatpush1.msra.mxu0 0.0
        %6956 = vmatprep.subr.mxu0 0.0
        %6957 = vmatpush1.msra.mxu0 0.0
        %6958 = vmatprep.subr.mxu0 0.0
        %6959 = vmatpush1.msra.mxu0 0.0
        %6960 = vmatprep.subr.mxu0 0.0
        %6961 = vmatpush1.msra.mxu0 0.0
        %6962 = vmatprep.subr.mxu0 0.0
        %6963 = vmatpush1.msra.mxu0 0.0
        %6964 = vmatprep.subr.mxu0 0.0
        %6965 = vmatpush1.msra.mxu0 0.0
        %6966 = vmatprep.mubr.f32.mxu0 0.0
        %6967 = vmatmul.mubr.f32.gmra.mrb[0].mxu0 %v6897
        %v6968 = vpop.f32.mrb[0].mxu0
        %v6969 = vadd.f32 0.0, %v6968
        %v6970 = vpop.f32.mrb[0].mxu0
        %6971 = vmatprep.mubr.f32.mxu0 0.0
        %6972 = vmatmul.mubr.f32.gmra.mrb[0].mxu0 %v6900
        %v6973 = vpop.f32.mrb[0].mxu0
        %v6974 = vadd.f32 0.0, %v6973
        %v6975 = vpop.f32.mrb[0].mxu0
        %6976 = vdwg.mxu0
        %6977 = vrot.lane.b32.xlu0 %v1236, 64
        %v6978 = vpop.permute.xlu0 %6977
        %v6981 = vsel %vm3836, %v4530, 0
        %v6984 = vsel %vm3836, %v4532, 0
        %6986 = vmatprep.subr.mxu0 0.0
        %6987 = vmatpush1.msra.mxu0 %v6978
        %6988 = vmatprep.subr.mxu0 0.0
        %6989 = vmatpush1.msra.mxu0 0.0
        %6990 = vmatprep.subr.mxu0 0.0
        %6991 = vmatpush1.msra.mxu0 0.0
        %6992 = vmatprep.subr.mxu0 0.0
        %6993 = vmatpush1.msra.mxu0 0.0
        %6994 = vmatprep.subr.mxu0 0.0
        %6995 = vmatpush1.msra.mxu0 0.0
        %6996 = vmatprep.subr.mxu0 0.0
        %6997 = vmatpush1.msra.mxu0 0.0
        %6998 = vmatprep.subr.mxu0 0.0
        %6999 = vmatpush1.msra.mxu0 0.0
        %7000 = vmatprep.subr.mxu0 0.0
        %7001 = vmatpush1.msra.mxu0 0.0
        %7002 = vmatprep.subr.mxu0 0.0
        %7003 = vmatpush1.msra.mxu0 0.0
        %7004 = vmatprep.subr.mxu0 0.0
        %7005 = vmatpush1.msra.mxu0 0.0
        %7006 = vmatprep.subr.mxu0 0.0
        %7007 = vmatpush1.msra.mxu0 0.0
        %7008 = vmatprep.subr.mxu0 0.0
        %7009 = vmatpush1.msra.mxu0 0.0
        %7010 = vmatprep.subr.mxu0 0.0
        %7011 = vmatpush1.msra.mxu0 0.0
        %7012 = vmatprep.subr.mxu0 0.0
        %7013 = vmatpush1.msra.mxu0 0.0
        %7014 = vmatprep.subr.mxu0 0.0
        %7015 = vmatpush1.msra.mxu0 0.0
        %7016 = vmatprep.subr.mxu0 0.0
        %7017 = vmatpush1.msra.mxu0 0.0
        %7018 = vmatprep.subr.mxu0 0.0
        %7019 = vmatpush1.msra.mxu0 0.0
        %7020 = vmatprep.subr.mxu0 0.0
        %7021 = vmatpush1.msra.mxu0 0.0
        %7022 = vmatprep.subr.mxu0 0.0
        %7023 = vmatpush1.msra.mxu0 0.0
        %7024 = vmatprep.subr.mxu0 0.0
        %7025 = vmatpush1.msra.mxu0 0.0
        %7026 = vmatprep.subr.mxu0 0.0
        %7027 = vmatpush1.msra.mxu0 0.0
        %7028 = vmatprep.subr.mxu0 0.0
        %7029 = vmatpush1.msra.mxu0 0.0
        %7030 = vmatprep.subr.mxu0 0.0
        %7031 = vmatpush1.msra.mxu0 0.0
        %7032 = vmatprep.subr.mxu0 0.0
        %7033 = vmatpush1.msra.mxu0 0.0
        %7034 = vmatprep.subr.mxu0 0.0
        %7035 = vmatpush1.msra.mxu0 0.0
        %7036 = vmatprep.subr.mxu0 0.0
        %7037 = vmatpush1.msra.mxu0 0.0
        %7038 = vmatprep.subr.mxu0 0.0
        %7039 = vmatpush1.msra.mxu0 0.0
        %7040 = vmatprep.subr.mxu0 0.0
        %7041 = vmatpush1.msra.mxu0 0.0
        %7042 = vmatprep.subr.mxu0 0.0
        %7043 = vmatpush1.msra.mxu0 0.0
        %7044 = vmatprep.subr.mxu0 0.0
        %7045 = vmatpush1.msra.mxu0 0.0
        %7046 = vmatprep.subr.mxu0 0.0
        %7047 = vmatpush1.msra.mxu0 0.0
        %7048 = vmatprep.subr.mxu0 0.0
        %7049 = vmatpush1.msra.mxu0 0.0
        %7050 = vmatprep.mubr.f32.mxu0 0.0
        %7051 = vmatmul.mubr.f32.gmra.mrb[0].mxu0 %v6981
        %v7052 = vpop.f32.mrb[0].mxu0
        %v7053 = vadd.f32 0.0, %v7052
        %v7054 = vpop.f32.mrb[0].mxu0
        %7055 = vmatprep.mubr.f32.mxu0 0.0
        %7056 = vmatmul.mubr.f32.gmra.mrb[0].mxu0 %v6984
        %v7057 = vpop.f32.mrb[0].mxu0
        %v7058 = vadd.f32 0.0, %v7057
        %v7059 = vpop.f32.mrb[0].mxu0
        %7060 = vdwg.mxu0
        %7061 = vrot.lane.b32.xlu0 %v1238, 64
        %v7062 = vpop.permute.xlu0 %7061
        %v7065 = vsel %vm3836, %v4534, 0
        %v7068 = vsel %vm3836, %v4536, 0
        %7070 = vmatprep.subr.mxu0 0.0
        %7071 = vmatpush1.msra.mxu0 %v7062
        %7072 = vmatprep.subr.mxu0 0.0
        %7073 = vmatpush1.msra.mxu0 0.0
        %7074 = vmatprep.subr.mxu0 0.0
        %7075 = vmatpush1.msra.mxu0 0.0
        %7076 = vmatprep.subr.mxu0 0.0
        %7077 = vmatpush1.msra.mxu0 0.0
        %7078 = vmatprep.subr.mxu0 0.0
        %7079 = vmatpush1.msra.mxu0 0.0
        %7080 = vmatprep.subr.mxu0 0.0
        %7081 = vmatpush1.msra.mxu0 0.0
        %7082 = vmatprep.subr.mxu0 0.0
        %7083 = vmatpush1.msra.mxu0 0.0
        %7084 = vmatprep.subr.mxu0 0.0
        %7085 = vmatpush1.msra.mxu0 0.0
        %7086 = vmatprep.subr.mxu0 0.0
        %7087 = vmatpush1.msra.mxu0 0.0
        %7088 = vmatprep.subr.mxu0 0.0
        %7089 = vmatpush1.msra.mxu0 0.0
        %7090 = vmatprep.subr.mxu0 0.0
        %7091 = vmatpush1.msra.mxu0 0.0
        %7092 = vmatprep.subr.mxu0 0.0
        %7093 = vmatpush1.msra.mxu0 0.0
        %7094 = vmatprep.subr.mxu0 0.0
        %7095 = vmatpush1.msra.mxu0 0.0
        %7096 = vmatprep.subr.mxu0 0.0
        %7097 = vmatpush1.msra.mxu0 0.0
        %7098 = vmatprep.subr.mxu0 0.0
        %7099 = vmatpush1.msra.mxu0 0.0
        %7100 = vmatprep.subr.mxu0 0.0
        %7101 = vmatpush1.msra.mxu0 0.0
        %7102 = vmatprep.subr.mxu0 0.0
        %7103 = vmatpush1.msra.mxu0 0.0
        %7104 = vmatprep.subr.mxu0 0.0
        %7105 = vmatpush1.msra.mxu0 0.0
        %7106 = vmatprep.subr.mxu0 0.0
        %7107 = vmatpush1.msra.mxu0 0.0
        %7108 = vmatprep.subr.mxu0 0.0
        %7109 = vmatpush1.msra.mxu0 0.0
        %7110 = vmatprep.subr.mxu0 0.0
        %7111 = vmatpush1.msra.mxu0 0.0
        %7112 = vmatprep.subr.mxu0 0.0
        %7113 = vmatpush1.msra.mxu0 0.0
        %7114 = vmatprep.subr.mxu0 0.0
        %7115 = vmatpush1.msra.mxu0 0.0
        %7116 = vmatprep.subr.mxu0 0.0
        %7117 = vmatpush1.msra.mxu0 0.0
        %7118 = vmatprep.subr.mxu0 0.0
        %7119 = vmatpush1.msra.mxu0 0.0
        %7120 = vmatprep.subr.mxu0 0.0
        %7121 = vmatpush1.msra.mxu0 0.0
        %7122 = vmatprep.subr.mxu0 0.0
        %7123 = vmatpush1.msra.mxu0 0.0
        %7124 = vmatprep.subr.mxu0 0.0
        %7125 = vmatpush1.msra.mxu0 0.0
        %7126 = vmatprep.subr.mxu0 0.0
        %7127 = vmatpush1.msra.mxu0 0.0
        %7128 = vmatprep.subr.mxu0 0.0
        %7129 = vmatpush1.msra.mxu0 0.0
        %7130 = vmatprep.subr.mxu0 0.0
        %7131 = vmatpush1.msra.mxu0 0.0
        %7132 = vmatprep.subr.mxu0 0.0
        %7133 = vmatpush1.msra.mxu0 0.0
        %7134 = vmatprep.mubr.f32.mxu0 0.0
        %7135 = vmatmul.mubr.f32.gmra.mrb[0].mxu0 %v7065
        %v7136 = vpop.f32.mrb[0].mxu0
        %v7137 = vadd.f32 0.0, %v7136
        %v7138 = vpop.f32.mrb[0].mxu0
        %7139 = vmatprep.mubr.f32.mxu0 0.0
        %7140 = vmatmul.mubr.f32.gmra.mrb[0].mxu0 %v7068
        %v7141 = vpop.f32.mrb[0].mxu0
        %v7142 = vadd.f32 0.0, %v7141
        %v7143 = vpop.f32.mrb[0].mxu0
        %7144 = vdwg.mxu0
        %7145 = vrot.lane.b32.xlu0 %v1240, 64
        %v7146 = vpop.permute.xlu0 %7145
        %v7149 = vsel %vm3836, %v4538, 0
        %v7152 = vsel %vm3836, %v4540, 0
        %7154 = vmatprep.subr.mxu0 0.0
        %7155 = vmatpush1.msra.mxu0 %v7146
        %7156 = vmatprep.subr.mxu0 0.0
        %7157 = vmatpush1.msra.mxu0 0.0
        %7158 = vmatprep.subr.mxu0 0.0
        %7159 = vmatpush1.msra.mxu0 0.0
        %7160 = vmatprep.subr.mxu0 0.0
        %7161 = vmatpush1.msra.mxu0 0.0
        %7162 = vmatprep.subr.mxu0 0.0
        %7163 = vmatpush1.msra.mxu0 0.0
        %7164 = vmatprep.subr.mxu0 0.0
        %7165 = vmatpush1.msra.mxu0 0.0
        %7166 = vmatprep.subr.mxu0 0.0
        %7167 = vmatpush1.msra.mxu0 0.0
        %7168 = vmatprep.subr.mxu0 0.0
        %7169 = vmatpush1.msra.mxu0 0.0
        %7170 = vmatprep.subr.mxu0 0.0
        %7171 = vmatpush1.msra.mxu0 0.0
        %7172 = vmatprep.subr.mxu0 0.0
        %7173 = vmatpush1.msra.mxu0 0.0
        %7174 = vmatprep.subr.mxu0 0.0
        %7175 = vmatpush1.msra.mxu0 0.0
        %7176 = vmatprep.subr.mxu0 0.0
        %7177 = vmatpush1.msra.mxu0 0.0
        %7178 = vmatprep.subr.mxu0 0.0
        %7179 = vmatpush1.msra.mxu0 0.0
        %7180 = vmatprep.subr.mxu0 0.0
        %7181 = vmatpush1.msra.mxu0 0.0
        %7182 = vmatprep.subr.mxu0 0.0
        %7183 = vmatpush1.msra.mxu0 0.0
        %7184 = vmatprep.subr.mxu0 0.0
        %7185 = vmatpush1.msra.mxu0 0.0
        %7186 = vmatprep.subr.mxu0 0.0
        %7187 = vmatpush1.msra.mxu0 0.0
        %7188 = vmatprep.subr.mxu0 0.0
        %7189 = vmatpush1.msra.mxu0 0.0
        %7190 = vmatprep.subr.mxu0 0.0
        %7191 = vmatpush1.msra.mxu0 0.0
        %7192 = vmatprep.subr.mxu0 0.0
        %7193 = vmatpush1.msra.mxu0 0.0
        %7194 = vmatprep.subr.mxu0 0.0
        %7195 = vmatpush1.msra.mxu0 0.0
        %7196 = vmatprep.subr.mxu0 0.0
        %7197 = vmatpush1.msra.mxu0 0.0
        %7198 = vmatprep.subr.mxu0 0.0
        %7199 = vmatpush1.msra.mxu0 0.0
        %7200 = vmatprep.subr.mxu0 0.0
        %7201 = vmatpush1.msra.mxu0 0.0
        %7202 = vmatprep.subr.mxu0 0.0
        %7203 = vmatpush1.msra.mxu0 0.0
        %7204 = vmatprep.subr.mxu0 0.0
        %7205 = vmatpush1.msra.mxu0 0.0
        %7206 = vmatprep.subr.mxu0 0.0
        %7207 = vmatpush1.msra.mxu0 0.0
        %7208 = vmatprep.subr.mxu0 0.0
        %7209 = vmatpush1.msra.mxu0 0.0
        %7210 = vmatprep.subr.mxu0 0.0
        %7211 = vmatpush1.msra.mxu0 0.0
        %7212 = vmatprep.subr.mxu0 0.0
        %7213 = vmatpush1.msra.mxu0 0.0
        %7214 = vmatprep.subr.mxu0 0.0
        %7215 = vmatpush1.msra.mxu0 0.0
        %7216 = vmatprep.subr.mxu0 0.0
        %7217 = vmatpush1.msra.mxu0 0.0
        %7218 = vmatprep.mubr.f32.mxu0 0.0
        %7219 = vmatmul.mubr.f32.gmra.mrb[0].mxu0 %v7149
        %v7220 = vpop.f32.mrb[0].mxu0
        %v7221 = vadd.f32 0.0, %v7220
        %v7222 = vpop.f32.mrb[0].mxu0
        %7223 = vmatprep.mubr.f32.mxu0 0.0
        %7224 = vmatmul.mubr.f32.gmra.mrb[0].mxu0 %v7152
        %v7225 = vpop.f32.mrb[0].mxu0
        %v7226 = vadd.f32 0.0, %v7225
        %v7227 = vpop.f32.mrb[0].mxu0
        %7228 = vdwg.mxu0
        %7245 = vrot.lane.b32.xlu0 %v4622, 32
        %v7246 = vpop.permute.xlu0 %7245
        %7247 = vrot.lane.b32.xlu0 %v4706, 32
        %v7248 = vpop.permute.xlu0 %7247
        %7249 = vrot.lane.b32.xlu0 %v4790, 32
        %v7250 = vpop.permute.xlu0 %7249
        %7251 = vrot.lane.b32.xlu0 %v4874, 32
        %v7252 = vpop.permute.xlu0 %7251
        %7253 = vrot.lane.b32.xlu0 %v4958, 32
        %v7254 = vpop.permute.xlu0 %7253
        %7255 = vrot.lane.b32.xlu0 %v5042, 32
        %v7256 = vpop.permute.xlu0 %7255
        %7257 = vrot.lane.b32.xlu0 %v5126, 32
        %v7258 = vpop.permute.xlu0 %7257
        %7259 = vrot.lane.b32.xlu0 %v5210, 32
        %v7260 = vpop.permute.xlu0 %7259
        %7261 = vrot.lane.b32.xlu0 %v5294, 32
        %v7262 = vpop.permute.xlu0 %7261
        %7263 = vrot.lane.b32.xlu0 %v5378, 32
        %v7264 = vpop.permute.xlu0 %7263
        %7265 = vrot.lane.b32.xlu0 %v5462, 32
        %v7266 = vpop.permute.xlu0 %7265
        %7267 = vrot.lane.b32.xlu0 %v5546, 32
        %v7268 = vpop.permute.xlu0 %7267
        %7269 = vrot.lane.b32.xlu0 %v5630, 32
        %v7270 = vpop.permute.xlu0 %7269
        %7271 = vrot.lane.b32.xlu0 %v5714, 32
        %v7272 = vpop.permute.xlu0 %7271
        %7273 = vrot.lane.b32.xlu0 %v5798, 32
        %v7274 = vpop.permute.xlu0 %7273
        %7275 = vrot.lane.b32.xlu0 %v5882, 32
        %v7276 = vpop.permute.xlu0 %7275
        %7309 = vrot.lane.b32.xlu0 %v5961, 64
        %v7310 = vpop.permute.xlu0 %7309
        %7311 = vrot.lane.b32.xlu0 %v6045, 64
        %v7312 = vpop.permute.xlu0 %7311
        %7313 = vrot.lane.b32.xlu0 %v6129, 64
        %v7314 = vpop.permute.xlu0 %7313
        %7315 = vrot.lane.b32.xlu0 %v6213, 64
        %v7316 = vpop.permute.xlu0 %7315
        %7317 = vrot.lane.b32.xlu0 %v6297, 64
        %v7318 = vpop.permute.xlu0 %7317
        %7319 = vrot.lane.b32.xlu0 %v6381, 64
        %v7320 = vpop.permute.xlu0 %7319
        %7321 = vrot.lane.b32.xlu0 %v6465, 64
        %v7322 = vpop.permute.xlu0 %7321
        %7323 = vrot.lane.b32.xlu0 %v6549, 64
        %v7324 = vpop.permute.xlu0 %7323
        %7325 = vrot.lane.b32.xlu0 %v6633, 64
        %v7326 = vpop.permute.xlu0 %7325
        %7327 = vrot.lane.b32.xlu0 %v6717, 64
        %v7328 = vpop.permute.xlu0 %7327
        %7329 = vrot.lane.b32.xlu0 %v6801, 64
        %v7330 = vpop.permute.xlu0 %7329
        %7331 = vrot.lane.b32.xlu0 %v6885, 64
        %v7332 = vpop.permute.xlu0 %7331
        %7333 = vrot.lane.b32.xlu0 %v6969, 64
        %v7334 = vpop.permute.xlu0 %7333
        %7335 = vrot.lane.b32.xlu0 %v7053, 64
        %v7336 = vpop.permute.xlu0 %7335
        %7337 = vrot.lane.b32.xlu0 %v7137, 64
        %v7338 = vpop.permute.xlu0 %7337
        %7339 = vrot.lane.b32.xlu0 %v7221, 64
        %v7340 = vpop.permute.xlu0 %7339
        %7373 = vrot.lane.b32.xlu0 %v5966, 96
        %v7374 = vpop.permute.xlu0 %7373
        %7375 = vrot.lane.b32.xlu0 %v6050, 96
        %v7376 = vpop.permute.xlu0 %7375
        %7377 = vrot.lane.b32.xlu0 %v6134, 96
        %v7378 = vpop.permute.xlu0 %7377
        %7379 = vrot.lane.b32.xlu0 %v6218, 96
        %v7380 = vpop.permute.xlu0 %7379
        %7381 = vrot.lane.b32.xlu0 %v6302, 96
        %v7382 = vpop.permute.xlu0 %7381
        %7383 = vrot.lane.b32.xlu0 %v6386, 96
        %v7384 = vpop.permute.xlu0 %7383
        %7385 = vrot.lane.b32.xlu0 %v6470, 96
        %v7386 = vpop.permute.xlu0 %7385
        %7387 = vrot.lane.b32.xlu0 %v6554, 96
        %v7388 = vpop.permute.xlu0 %7387
        %7389 = vrot.lane.b32.xlu0 %v6638, 96
        %v7390 = vpop.permute.xlu0 %7389
        %7391 = vrot.lane.b32.xlu0 %v6722, 96
        %v7392 = vpop.permute.xlu0 %7391
        %7393 = vrot.lane.b32.xlu0 %v6806, 96
        %v7394 = vpop.permute.xlu0 %7393
        %7395 = vrot.lane.b32.xlu0 %v6890, 96
        %v7396 = vpop.permute.xlu0 %7395
        %7397 = vrot.lane.b32.xlu0 %v6974, 96
        %v7398 = vpop.permute.xlu0 %7397
        %7399 = vrot.lane.b32.xlu0 %v7058, 96
        %v7400 = vpop.permute.xlu0 %7399
        %7401 = vrot.lane.b32.xlu0 %v7142, 96
        %v7402 = vpop.permute.xlu0 %7401
        %7403 = vrot.lane.b32.xlu0 %v7226, 96
        %v7404 = vpop.permute.xlu0 %7403
        %v7421 = vsel %vm1243, %v4617, %v7246
        %v7422 = vsel %vm1243, %v4701, %v7248
        %v7423 = vsel %vm1243, %v4785, %v7250
        %v7424 = vsel %vm1243, %v4869, %v7252
        %v7425 = vsel %vm1243, %v4953, %v7254
        %v7426 = vsel %vm1243, %v5037, %v7256
        %v7427 = vsel %vm1243, %v5121, %v7258
        %v7428 = vsel %vm1243, %v5205, %v7260
        %v7429 = vsel %vm1243, %v5289, %v7262
        %v7430 = vsel %vm1243, %v5373, %v7264
        %v7431 = vsel %vm1243, %v5457, %v7266
        %v7432 = vsel %vm1243, %v5541, %v7268
        %v7433 = vsel %vm1243, %v5625, %v7270
        %v7434 = vsel %vm1243, %v5709, %v7272
        %v7435 = vsel %vm1243, %v5793, %v7274
        %v7436 = vsel %vm1243, %v5877, %v7276
        %vm7437 = vcmask 523264
        %v7438 = vsel %vm7437, %v7421, %v7310
        %v7439 = vsel %vm7437, %v7422, %v7312
        %v7440 = vsel %vm7437, %v7423, %v7314
        %v7441 = vsel %vm7437, %v7424, %v7316
        %v7442 = vsel %vm7437, %v7425, %v7318
        %v7443 = vsel %vm7437, %v7426, %v7320
        %v7444 = vsel %vm7437, %v7427, %v7322
        %v7445 = vsel %vm7437, %v7428, %v7324
        %v7446 = vsel %vm7437, %v7429, %v7326
        %v7447 = vsel %vm7437, %v7430, %v7328
        %v7448 = vsel %vm7437, %v7431, %v7330
        %v7449 = vsel %vm7437, %v7432, %v7332
        %v7450 = vsel %vm7437, %v7433, %v7334
        %v7451 = vsel %vm7437, %v7434, %v7336
        %v7452 = vsel %vm7437, %v7435, %v7338
        %v7453 = vsel %vm7437, %v7436, %v7340
        %vm7454 = vcmask 785408
        %v7455 = vsel %vm7454, %v7438, %v7374
        %v7456 = vsel %vm7454, %v7439, %v7376
        %v7457 = vsel %vm7454, %v7440, %v7378
        %v7458 = vsel %vm7454, %v7441, %v7380
        %v7459 = vsel %vm7454, %v7442, %v7382
        %v7460 = vsel %vm7454, %v7443, %v7384
        %v7461 = vsel %vm7454, %v7444, %v7386
        %v7462 = vsel %vm7454, %v7445, %v7388
        %v7463 = vsel %vm7454, %v7446, %v7390
        %v7464 = vsel %vm7454, %v7447, %v7392
        %v7465 = vsel %vm7454, %v7448, %v7394
        %v7466 = vsel %vm7454, %v7449, %v7396
        %v7467 = vsel %vm7454, %v7450, %v7398
        %v7468 = vsel %vm7454, %v7451, %v7400
        %v7469 = vsel %vm7454, %v7452, %v7402
        %v7470 = vsel %vm7454, %v7453, %v7404
        %v7471 = vld [vmem:[#allocation11] sm:$0xff]
        %v7472 = vld [vmem:[#allocation11 + $0x8] sm:$0xff]
        %v7473 = vld [vmem:[#allocation11 + $0x10] sm:$0xff]
        %v7474 = vld [vmem:[#allocation11 + $0x18] sm:$0xff]
        %v7475 = vld [vmem:[#allocation11 + $0x20] sm:$0xff]
        %v7476 = vld [vmem:[#allocation11 + $0x28] sm:$0xff]
        %v7477 = vld [vmem:[#allocation11 + $0x30] sm:$0xff]
        %v7478 = vld [vmem:[#allocation11 + $0x38] sm:$0xff]
        %v7479 = vld [vmem:[#allocation11 + $0x40] sm:$0xff]
        %v7480 = vld [vmem:[#allocation11 + $0x48] sm:$0xff]
        %v7481 = vld [vmem:[#allocation11 + $0x50] sm:$0xff]
        %v7482 = vld [vmem:[#allocation11 + $0x58] sm:$0xff]
        %v7483 = vld [vmem:[#allocation11 + $0x60] sm:$0xff]
        %v7484 = vld [vmem:[#allocation11 + $0x68] sm:$0xff]
        %v7485 = vld [vmem:[#allocation11 + $0x70] sm:$0xff]
        %v7486 = vld [vmem:[#allocation11 + $0x78] sm:$0xff]
        %7487 = vmatprep.subr.mxu0 0.0
        %7488 = vmatpush1.msra.mxu0 %v7471
        %7489 = vmatprep.subr.mxu0 0.0
        %7490 = vmatpush1.msra.mxu0 %v7472
        %7491 = vmatprep.subr.mxu0 0.0
        %7492 = vmatpush1.msra.mxu0 %v7473
        %7493 = vmatprep.subr.mxu0 0.0
        %7494 = vmatpush1.msra.mxu0 %v7474
        %7495 = vmatprep.subr.mxu0 0.0
        %7496 = vmatpush1.msra.mxu0 %v7475
        %7497 = vmatprep.subr.mxu0 0.0
        %7498 = vmatpush1.msra.mxu0 %v7476
        %7499 = vmatprep.subr.mxu0 0.0
        %7500 = vmatpush1.msra.mxu0 %v7477
        %7501 = vmatprep.subr.mxu0 0.0
        %7502 = vmatpush1.msra.mxu0 %v7478
        %7503 = vmatprep.subr.mxu0 0.0
        %7504 = vmatpush1.msra.mxu0 %v7479
        %7505 = vmatprep.subr.mxu0 0.0
        %7506 = vmatpush1.msra.mxu0 %v7480
        %7507 = vmatprep.subr.mxu0 0.0
        %7508 = vmatpush1.msra.mxu0 %v7481
        %7509 = vmatprep.subr.mxu0 0.0
        %7510 = vmatpush1.msra.mxu0 %v7482
        %7511 = vmatprep.subr.mxu0 0.0
        %7512 = vmatpush1.msra.mxu0 %v7483
        %7513 = vmatprep.subr.mxu0 0.0
        %7514 = vmatpush1.msra.mxu0 %v7484
        %7515 = vmatprep.subr.mxu0 0.0
        %7516 = vmatpush1.msra.mxu0 %v7485
        %7517 = vmatprep.subr.mxu0 0.0
        %7518 = vmatpush1.msra.mxu0 %v7486
        %7519 = vmatprep.subr.mxu0 0.0
        %7520 = vmatpush1.msra.mxu0 0.0
        %7521 = vmatprep.subr.mxu0 0.0
        %7522 = vmatpush1.msra.mxu0 0.0
        %7523 = vmatprep.subr.mxu0 0.0
        %7524 = vmatpush1.msra.mxu0 0.0
        %7525 = vmatprep.subr.mxu0 0.0
        %7526 = vmatpush1.msra.mxu0 0.0
        %7527 = vmatprep.subr.mxu0 0.0
        %7528 = vmatpush1.msra.mxu0 0.0
        %7529 = vmatprep.subr.mxu0 0.0
        %7530 = vmatpush1.msra.mxu0 0.0
        %7531 = vmatprep.subr.mxu0 0.0
        %7532 = vmatpush1.msra.mxu0 0.0
        %7533 = vmatprep.subr.mxu0 0.0
        %7534 = vmatpush1.msra.mxu0 0.0
        %7535 = vmatprep.subr.mxu0 0.0
        %7536 = vmatpush1.msra.mxu0 0.0
        %7537 = vmatprep.subr.mxu0 0.0
        %7538 = vmatpush1.msra.mxu0 0.0
        %7539 = vmatprep.subr.mxu0 0.0
        %7540 = vmatpush1.msra.mxu0 0.0
        %7541 = vmatprep.subr.mxu0 0.0
        %7542 = vmatpush1.msra.mxu0 0.0
        %7543 = vmatprep.subr.mxu0 0.0
        %7544 = vmatpush1.msra.mxu0 0.0
        %7545 = vmatprep.subr.mxu0 0.0
        %7546 = vmatpush1.msra.mxu0 0.0
        %7547 = vmatprep.subr.mxu0 0.0
        %7548 = vmatpush1.msra.mxu0 0.0
        %7549 = vmatprep.subr.mxu0 0.0
        %7550 = vmatpush1.msra.mxu0 0.0
        %7551 = vmatprep.mubr.f32.mxu0 0.0
        %7552 = vmatmul.mubr.f32.gmra.mrb[0].mxu0 %v7455
        %v7553 = vpop.f32.mrb[0].mxu0
        %v7554 = vadd.f32 0.0, %v7553
        %v7555 = vpop.f32.mrb[0].mxu0
        %7556 = vmatprep.mubr.f32.mxu0 0.0
        %7557 = vmatmul.mubr.f32.gmra.mrb[0].mxu0 %v7456
        %v7558 = vpop.f32.mrb[0].mxu0
        %v7559 = vadd.f32 0.0, %v7558
        %v7560 = vpop.f32.mrb[0].mxu0
        %7561 = vmatprep.mubr.f32.mxu0 0.0
        %7562 = vmatmul.mubr.f32.gmra.mrb[0].mxu0 %v7457
        %v7563 = vpop.f32.mrb[0].mxu0
        %v7564 = vadd.f32 0.0, %v7563
        %v7565 = vpop.f32.mrb[0].mxu0
        %7566 = vmatprep.mubr.f32.mxu0 0.0
        %7567 = vmatmul.mubr.f32.gmra.mrb[0].mxu0 %v7458
        %v7568 = vpop.f32.mrb[0].mxu0
        %v7569 = vadd.f32 0.0, %v7568
        %v7570 = vpop.f32.mrb[0].mxu0
        %7571 = vmatprep.mubr.f32.mxu0 0.0
        %7572 = vmatmul.mubr.f32.gmra.mrb[0].mxu0 %v7459
        %v7573 = vpop.f32.mrb[0].mxu0
        %v7574 = vadd.f32 0.0, %v7573
        %v7575 = vpop.f32.mrb[0].mxu0
        %7576 = vmatprep.mubr.f32.mxu0 0.0
        %7577 = vmatmul.mubr.f32.gmra.mrb[0].mxu0 %v7460
        %v7578 = vpop.f32.mrb[0].mxu0
        %v7579 = vadd.f32 0.0, %v7578
        %v7580 = vpop.f32.mrb[0].mxu0
        %7581 = vmatprep.mubr.f32.mxu0 0.0
        %7582 = vmatmul.mubr.f32.gmra.mrb[0].mxu0 %v7461
        %v7583 = vpop.f32.mrb[0].mxu0
        %v7584 = vadd.f32 0.0, %v7583
        %v7585 = vpop.f32.mrb[0].mxu0
        %7586 = vmatprep.mubr.f32.mxu0 0.0
        %7587 = vmatmul.mubr.f32.gmra.mrb[0].mxu0 %v7462
        %v7588 = vpop.f32.mrb[0].mxu0
        %v7589 = vadd.f32 0.0, %v7588
        %v7590 = vpop.f32.mrb[0].mxu0
        %7591 = vmatprep.mubr.f32.mxu0 0.0
        %7592 = vmatmul.mubr.f32.gmra.mrb[0].mxu0 %v7463
        %v7593 = vpop.f32.mrb[0].mxu0
        %v7594 = vadd.f32 0.0, %v7593
        %v7595 = vpop.f32.mrb[0].mxu0
        %7596 = vmatprep.mubr.f32.mxu0 0.0
        %7597 = vmatmul.mubr.f32.gmra.mrb[0].mxu0 %v7464
        %v7598 = vpop.f32.mrb[0].mxu0
        %v7599 = vadd.f32 0.0, %v7598
        %v7600 = vpop.f32.mrb[0].mxu0
        %7601 = vmatprep.mubr.f32.mxu0 0.0
        %7602 = vmatmul.mubr.f32.gmra.mrb[0].mxu0 %v7465
        %v7603 = vpop.f32.mrb[0].mxu0
        %v7604 = vadd.f32 0.0, %v7603
        %v7605 = vpop.f32.mrb[0].mxu0
        %7606 = vmatprep.mubr.f32.mxu0 0.0
        %7607 = vmatmul.mubr.f32.gmra.mrb[0].mxu0 %v7466
        %v7608 = vpop.f32.mrb[0].mxu0
        %v7609 = vadd.f32 0.0, %v7608
        %v7610 = vpop.f32.mrb[0].mxu0
        %7611 = vmatprep.mubr.f32.mxu0 0.0
        %7612 = vmatmul.mubr.f32.gmra.mrb[0].mxu0 %v7467
        %v7613 = vpop.f32.mrb[0].mxu0
        %v7614 = vadd.f32 0.0, %v7613
        %v7615 = vpop.f32.mrb[0].mxu0
        %7616 = vmatprep.mubr.f32.mxu0 0.0
        %7617 = vmatmul.mubr.f32.gmra.mrb[0].mxu0 %v7468
        %v7618 = vpop.f32.mrb[0].mxu0
        %v7619 = vadd.f32 0.0, %v7618
        %v7620 = vpop.f32.mrb[0].mxu0
        %7621 = vmatprep.mubr.f32.mxu0 0.0
        %7622 = vmatmul.mubr.f32.gmra.mrb[0].mxu0 %v7469
        %v7623 = vpop.f32.mrb[0].mxu0
        %v7624 = vadd.f32 0.0, %v7623
        %v7625 = vpop.f32.mrb[0].mxu0
        %7626 = vmatprep.mubr.f32.mxu0 0.0
        %7627 = vmatmul.mubr.f32.gmra.mrb[0].mxu0 %v7470
        %v7628 = vpop.f32.mrb[0].mxu0
        %v7629 = vadd.f32 0.0, %v7628
        %v7630 = vpop.f32.mrb[0].mxu0
        %7631 = vdwg.mxu0
        %7632 = vst [vmem:[%s414] sm:$0xff] %v7554
        %7633 = vst [vmem:[%s414 + $0x8] sm:$0xff] %v7559
        %7634 = vst [vmem:[%s414 + $0x10] sm:$0xff] %v7564
        %7635 = vst [vmem:[%s414 + $0x18] sm:$0xff] %v7569
        %7636 = vst [vmem:[%s414 + $0x20] sm:$0xff] %v7574
        %7637 = vst [vmem:[%s414 + $0x28] sm:$0xff] %v7579
        %7638 = vst [vmem:[%s414 + $0x30] sm:$0xff] %v7584
        %7639 = vst [vmem:[%s414 + $0x38] sm:$0xff] %v7589
        %7640 = vst [vmem:[%s414 + $0x40] sm:$0xff] %v7594
        %7641 = vst [vmem:[%s414 + $0x48] sm:$0xff] %v7599
        %7642 = vst [vmem:[%s414 + $0x50] sm:$0xff] %v7604
        %7643 = vst [vmem:[%s414 + $0x58] sm:$0xff] %v7609
        %7644 = vst [vmem:[%s414 + $0x60] sm:$0xff] %v7614
        %7645 = vst [vmem:[%s414 + $0x68] sm:$0xff] %v7619
        %7646 = vst [vmem:[%s414 + $0x70] sm:$0xff] %v7624
        %7647 = vst [vmem:[%s414 + $0x78] sm:$0xff] %v7629
        %s7648 = sand.u32 %s218, 1
        %s7649 = scalar_lea.sflag [#allocation4], %s7648
        %s7650 = sand.u32 %s218, 1
        %s7651 = smul.addr %s7650, 128
        %s7652 = scalar_lea.vmem [#allocation13], %s7651
        // Predicated region
        $region73: #{tpu_custom_call.1} parent=47 // pred_check
          %p7653 = pneg %p228
        $region74: #{tpu_custom_call.1} parent=47 // pred_check_branch
          %7655 = sbr.rel (%p7653) target = $region76
        $region75: #{tpu_custom_call.1} parent=47 // pred_region
          %s7656 = smul.u32 16, %s32
          %s7658 = ssub.s32 2048, 2048
          %7659 = vsyncadd %s7649, %s7658
          %s7660 = smul.addr %s31, 16
          %s7661 = sadd.s32 %s7656, %s7660
          %s7662 = smul.addr %s7661, 128
          %s7663 = scalar_lea.hbm %s7, %s7662
          %s7664 = sshll.u32 %s7652, 4
          %s7665 = int_to_ptr.vmem [resolvable:$true] %s7664
          %7670 = dma.vmem_to_hbm [thread:$0]  %s7665, 2048, %s7663, %s7649, 128, 128, 8
        $region76: #{tpu_custom_call.1} parent=47 // pred_fallthru
          _
      $region48: #{tpu_custom_call.1} parent=5 // pred_fallthru
        _
      %p7671 = scmp.le.s32.totalorder 2, %s22
      // Predicated region
      $region77: #{tpu_custom_call.1} parent=5 // pred_check
        %p7672 = pneg %p7671
      $region78: #{tpu_custom_call.1} parent=5 // pred_check_branch
        %7674 = sbr.rel (%p7672) target = $region80
      $region79: #{tpu_custom_call.1} parent=5 // pred_region
        %s7675 = ssub.s32 %s22, 2
        // Predicated region
        $region81: #{tpu_custom_call.1} parent=79 // pred_check
          %p7676 = pneg %p234
        $region82: #{tpu_custom_call.1} parent=79 // pred_check_branch
          %7678 = sbr.rel (%p7676) target = $region84
        $region83: #{tpu_custom_call.1} parent=79 // pred_region
          %s7679 = sand.u32 %s219, 1
          %s7680 = scalar_lea.sflag [#allocation4], %s7679
          %s7681 = sand.u32 %s219, 1
          %s7682 = smul.addr %s7681, 128
          %s7683 = scalar_lea.vmem [#allocation13], %s7682
          %7684 = dma.done %s7680, 2048
        $region84: #{tpu_custom_call.1} parent=79 // pred_fallthru
          _
      $region80: #{tpu_custom_call.1} parent=5 // pred_fallthru
        _
    $region6: #{tpu_custom_call.1} parent=1 // loop_footer
      %s26 = sadd.s32 1, %s22
    $region7: #{tpu_custom_call.1} parent=1 // loop_footer_branch
      %21 = sbr.rel target = $region3
    $region8: #{tpu_custom_call.1} parent=1 // loop_exit
      _
    %7685 = vsyncpa [#allocation3], 1
    %s7686 = scalar_lea.sflag [#allocation3], 1
    %7687 = vsyncpa %s7686, 1
    %7688 = vsyncpa [#allocation6], 1
    %7689 = vsyncpa [#allocation9], 1
    %7690 = vsyncpa [#allocation12], 1
    %7691 = vsyncpa [#allocation4], 1
    %s7692 = scalar_lea.sflag [#allocation4], 1
    %7693 = vsyncpa %s7692, 1

</llo_original>
